<compile_context>
chip_gen: v6e
topology: v6e:2x2x1
jax: 0.10.0
libtpu: 0.0.40
codegen_flags: <defaults>
</compile_context>

<pallas_src>
import functools
import math

import jax
import jax.numpy as jnp
import numpy as np
from jax import lax
from jax.experimental import pallas as pl
from jax.experimental.pallas import tpu as pltpu

_MIB = 1024 * 1024
# Fill value for padded Lk columns: exp underflows to exactly 0, so the softmax over
# the padded width equals the softmax over the true width, even for rows whose real
# entries are all masked to -1e9 (the real entries remain the row max).
_PAD_NEG = -1.0e30


def _round_up(x, m):
    return ((x + m - 1) // m) * m


def _sdpa_kernel(q_ref, k_ref, v_ref, mask_ref, res_ref, ctx_ref, scores_ref, *, scale):
    # Block shapes:
    #   q_ref      [t_bh, tq, d_k]
    #   k_ref      [t_bh, Lk_pad, d_k]
    #   v_ref      [t_bh, Lk_pad, d_v]
    #   mask_ref   [t_bh, tq, Lk_pad]  int8 (nonzero == masked)
    #   res_ref    [t_bh, tq, Lk_pad]
    #   ctx_ref    [t_bh, tq, d_v]     f32
    #   scores_ref [t_bh, tq, Lk_pad]
    q = q_ref[...]
    k = k_ref[...]
    v = v_ref[...]

    # scores = (Q @ K^T) * (1/sqrt(d_k)) + res_att ; f32 MXU accumulation, no explicit
    # K transpose is materialized (contraction over trailing dims of both operands).
    s = jnp.einsum(
        "bqd,bkd->bqk", q, k,
        preferred_element_type=jnp.float32,
        precision=lax.Precision.HIGHEST,
    )
    s = s * scale + res_ref[...].astype(jnp.float32)
    # masked_fill(attn_mask, -1e9): masked positions become exactly -1e9.
    s = jnp.where(mask_ref[...] != 0, jnp.float32(-1.0e9), s)
    scores_ref[...] = s.astype(scores_ref.dtype)

    # Numerically stable softmax; the 1/denominator is folded into the context
    # epilogue so only the [tq, d_v] context is normalized, not the [tq, Lk] probs.
    m = jnp.max(s, axis=-1, keepdims=True)
    p = jnp.exp(s - m)
    denom = jnp.sum(p, axis=-1, keepdims=True)

    ctx = jnp.einsum(
        "bqk,bkd->bqd", p.astype(v.dtype), v,
        preferred_element_type=jnp.float32,
        precision=lax.Precision.HIGHEST,
    )
    ctx = ctx * pl.reciprocal(denom, approx=False)
    ctx_ref[...] = ctx.astype(ctx_ref.dtype)


def _vmem_capacity_bytes():
    """Per-core VMEM capacity; conservative fallback = 64 MiB (v7x per-core)."""
    try:
        info = pltpu.get_tpu_info()
        cap = getattr(info, "vmem_capacity_bytes", None)
        if cap:
            return int(cap)
    except Exception:
        pass
    return 64 * _MIB


def _per_head_vmem_bytes(tq, lk_pad, dk, dv, qkv_isz, sc_isz):
    """Per-head VMEM footprint of one grid step: double-buffered pipeline refs plus
    the in-kernel f32 softmax intermediates (s and p) that stay live in the body."""
    blocks = (
        tq * dk * qkv_isz          # Q block
        + lk_pad * dk * qkv_isz    # K block (resident across Lq tiles)
        + lk_pad * dv * qkv_isz    # V block
        + tq * lk_pad * 1          # attn_mask (int8)
        + tq * lk_pad * sc_isz     # res_att
        + tq * lk_pad * sc_isz     # scores out
        + tq * dv * 4              # context out (f32)
    )
    intermediates = 2 * tq * lk_pad * 4    # s and p live in f32 alongside the blocks
    return 2 * blocks + intermediates      # 2x: Pallas double-buffers the refs


def _pick_tiles(BH, lq, lk_pad, dk, dv, qkv_isz, sc_isz, usable_vmem):
    lq8 = _round_up(lq, 8)
    if lq8 <= 512:
        tq_candidates = [lq8]
    else:
        # Multiples of 32: sublane-friendly for f32 tiles and the int8 mask.
        tq_candidates = [512, 256, 128, 64, 32]
    tq = tq_candidates[-1]
    for cand in tq_candidates:
        if _per_head_vmem_bytes(cand, lk_pad, dk, dv, qkv_isz, sc_isz) <= usable_vmem:
            tq = cand
            break
    per_head = _per_head_vmem_bytes(tq, lk_pad, dk, dv, qkv_isz, sc_isz)
    t_bh = 1
    for t in (32, 16, 8, 4, 2, 1):
        if BH % t == 0 and t * per_head <= usable_vmem:
            t_bh = t
            break
    lq_pad = _round_up(lq, tq)
    return t_bh, tq, lq_pad, per_head


def scaled_dot_product_attention(Q, K, V, attn_mask, res_att, d_k, *,
                                 qkv_dtype=jnp.float32, scores_dtype=jnp.float32):
    """Returns (context [B,H,Lq,d_v] f32, scores [B,H,Lq,Lk] scores_dtype).

    qkv_dtype / scores_dtype = jnp.bfloat16 halves the dominant HBM streams
    (Q/K/V reads and the res_att read + scores write) while the softmax math and
    MXU accumulation stay in f32.
    """
    B, H, Lq, dk = Q.shape
    Lk = K.shape[2]
    dv = V.shape[3]
    assert dk == d_k
    BH = B * H

    qkv_dtype = jnp.dtype(qkv_dtype)
    scores_dtype = jnp.dtype(scores_dtype)

    # Flatten (B, H) so several heads can be processed per grid step.
    Qf = Q.reshape(BH, Lq, dk).astype(qkv_dtype)
    Kf = K.reshape(BH, Lk, dk).astype(qkv_dtype)
    Vf = V.reshape(BH, Lk, dv).astype(qkv_dtype)
    if attn_mask is None:
        maskf = jnp.zeros((BH, Lq, Lk), jnp.int8)
    else:
        maskf = attn_mask.reshape(BH, Lq, Lk).astype(jnp.int8)   # nonzero == masked
    resf = res_att.reshape(BH, Lq, Lk).astype(scores_dtype)

    # Generation-aware VMEM budget (v5e/v6e: 128 MiB, v7x: 64 MiB per core).
    vmem_cap = _vmem_capacity_bytes()
    usable = int(0.70 * vmem_cap)

    # Pad Lk to a multiple of 128: lane-dense scores/res/mask tiles, unmasked stores,
    # full MXU N dimension for Q @ K^T.
    lk_pad = max(128, _round_up(Lk, 128))
    t_bh, tq, lq_pad, per_head = _pick_tiles(
        BH, Lq, lk_pad, dk, dv, qkv_dtype.itemsize, scores_dtype.itemsize, usable)

    if lk_pad != Lk:
        pad_k = lk_pad - Lk
        Kf = jnp.pad(Kf, ((0, 0), (0, pad_k), (0, 0)))
        Vf = jnp.pad(Vf, ((0, 0), (0, pad_k), (0, 0)))
        maskf = jnp.pad(maskf, ((0, 0), (0, 0), (0, pad_k)))                      # unmasked
        resf = jnp.pad(resf, ((0, 0), (0, 0), (0, pad_k)), constant_values=_PAD_NEG)
    if lq_pad != Lq:
        pad_q = lq_pad - Lq
        Qf = jnp.pad(Qf, ((0, 0), (0, pad_q), (0, 0)))
        maskf = jnp.pad(maskf, ((0, 0), (0, pad_q), (0, 0)))
        resf = jnp.pad(resf, ((0, 0), (0, pad_q), (0, 0)))

    grid = (BH // t_bh, lq_pad // tq)
    scale = 1.0 / math.sqrt(d_k)
    kernel = functools.partial(_sdpa_kernel, scale=scale)

    q_map = lambda bh, qi: (bh, qi, 0)   # tiled over heads and Lq
    kv_map = lambda bh, qi: (bh, 0, 0)   # K/V block stays resident across Lq tiles

    # Advisory cost hint for the XLA scheduler.
    flops = 2 * BH * lq_pad * lk_pad * dk + 2 * BH * lq_pad * lk_pad * dv
    transcendentals = BH * lq_pad * lk_pad
    bytes_accessed = (
        Qf.size * qkv_dtype.itemsize
        + Kf.size * qkv_dtype.itemsize
        + Vf.size * qkv_dtype.itemsize
        + maskf.size
        + resf.size * scores_dtype.itemsize
        + BH * lq_pad * lk_pad * scores_dtype.itemsize   # scores out
        + BH * lq_pad * dv * 4                           # context out
    )

    # Actual footprint estimate + Mosaic scratch headroom, capped at 75% of capacity.
    vmem_limit = int(min(int(0.75 * vmem_cap),
                         max(16 * _MIB, t_bh * per_head + 8 * _MIB)))

    context, scores = pl.pallas_call(
        kernel,
        grid=grid,
        in_specs=[
            pl.BlockSpec((t_bh, tq, dk), q_map),        # Q
            pl.BlockSpec((t_bh, lk_pad, dk), kv_map),   # K
            pl.BlockSpec((t_bh, lk_pad, dv), kv_map),   # V
            pl.BlockSpec((t_bh, tq, lk_pad), q_map),    # attn_mask (int8)
            pl.BlockSpec((t_bh, tq, lk_pad), q_map),    # res_att
        ],
        out_specs=[
            pl.BlockSpec((t_bh, tq, dv), q_map),        # context
            pl.BlockSpec((t_bh, tq, lk_pad), q_map),    # scores (masked, pre-softmax)
        ],
        out_shape=[
            jax.ShapeDtypeStruct((BH, lq_pad, dv), jnp.float32),
            jax.ShapeDtypeStruct((BH, lq_pad, lk_pad), scores_dtype),
        ],
        compiler_params=pltpu.CompilerParams(
            # BH sharded across TensorCores (v7x megacore); the Lq-tile axis stays
            # sequential per core so the constant kv_map keeps K/V resident.
            dimension_semantics=("parallel", "arbitrary"),
            vmem_limit_bytes=vmem_limit,
        ),
        cost_estimate=pl.CostEstimate(
            flops=flops,
            transcendentals=transcendentals,
            bytes_accessed=bytes_accessed,
        ),
    )(Qf, Kf, Vf, maskf, resf)

    # TODO(synk): context stores stay lane-masked when d_v < 128; folding the head
    # axis into the last dim would make them lane-dense but needs an in-kernel
    # sublane->lane relayout, and context traffic is << the scores/res traffic here.
    context = context.reshape(B, H, lq_pad, dv)[:, :, :Lq, :]
    scores = scores.reshape(B, H, lq_pad, lk_pad)[:, :, :Lq, :Lk]
    return context, scores


def _reference(Q, K, V, attn_mask, res_att, d_k):
    prec = lax.Precision.HIGHEST
    scores = jnp.matmul(Q, jnp.swapaxes(K, -1, -2), precision=prec) / np.sqrt(d_k) + res_att
    scores = jnp.where(attn_mask, -1.0e9, scores)
    attn = jax.nn.softmax(scores, axis=3)
    context = jnp.matmul(attn, V, precision=prec)
    return context, scores


if __name__ == "__main__":
    # Small, deterministic shapes consistent with the module's forward.
    B, H, L, d_k, d_v = 2, 4, 16, 32, 32

    key = jax.random.PRNGKey(0)
    kq, kk, kv_, kr, km = jax.random.split(key, 5)

    Q = jax.random.normal(kq, (B, H, L, d_k), dtype=jnp.float32)
    K = jax.random.normal(kk, (B, H, L, d_k), dtype=jnp.float32)
    V = jax.random.normal(kv_, (B, H, L, d_v), dtype=jnp.float32)
    res_att = jax.random.normal(kr, (B, H, L, L), dtype=jnp.float32)
    attn_mask = jax.random.bernoulli(km, p=0.25, shape=(B, H, L, L))

    # Full-precision path (exact module semantics).
    context, scores = scaled_dot_product_attention(Q, K, V, attn_mask, res_att, d_k)
    jax.block_until_ready((context, scores))

    ctx_ref, sc_ref = _reference(Q, K, V, attn_mask, res_att, d_k)
    np.testing.assert_allclose(np.asarray(scores), np.asarray(sc_ref), rtol=1e-4, atol=1e-4)
    np.testing.assert_allclose(np.asarray(context), np.asarray(ctx_ref), rtol=1e-4, atol=1e-4)

    # Reduced-traffic path: bf16 Q/K/V and bf16 res_att/scores carriers, f32 softmax math.
    ctx_bf, sc_bf = scaled_dot_product_attention(
        Q, K, V, attn_mask, res_att, d_k,
        qkv_dtype=jnp.bfloat16, scores_dtype=jnp.bfloat16)
    jax.block_until_ready((ctx_bf, sc_bf))
    np.testing.assert_allclose(np.asarray(sc_bf.astype(jnp.float32)), np.asarray(sc_ref),
                               rtol=1e-1, atol=1e-1)
    np.testing.assert_allclose(np.asarray(ctx_bf.astype(jnp.float32)), np.asarray(ctx_ref),
                               rtol=1e-1, atol=1e-1)

    print("KERNEL_OK")
</pallas_src>

<mosaic_0001>
module attributes {stable_mosaic.version = 11 : i64} {
  func.func @_sdpa_kernel(%arg0: i32, %arg1: i32, %arg2: memref<8x16x32xf32, #tpu.memory_space<vmem>>, %arg3: memref<8x128x32xf32, #tpu.memory_space<vmem>>, %arg4: memref<8x128x32xf32, #tpu.memory_space<vmem>>, %arg5: memref<8x16x128xi8, #tpu.memory_space<vmem>>, %arg6: memref<8x16x128xf32, #tpu.memory_space<vmem>>, %arg7: memref<8x16x32xf32, #tpu.memory_space<vmem>>, %arg8: memref<8x16x128xf32, #tpu.memory_space<vmem>>) attributes {dimension_semantics = [#tpu.dimension_semantics<parallel>, #tpu.dimension_semantics<arbitrary>], iteration_bounds = array<i64: 1, 1>, scalar_prefetch = 0 : i64, scratch_operands = 0 : i64, tpu.core_type = #tpu.core_type<tc>, window_params = [{transform_indices = @transform_0, window_bounds = array<i64: 8, 16, 32>}, {transform_indices = @transform_1, window_bounds = array<i64: 8, 128, 32>}, {transform_indices = @transform_2, window_bounds = array<i64: 8, 128, 32>}, {transform_indices = @transform_3, window_bounds = array<i64: 8, 16, 128>}, {transform_indices = @transform_4, window_bounds = array<i64: 8, 16, 128>}, {transform_indices = @transform_5, window_bounds = array<i64: 8, 16, 32>}, {transform_indices = @transform_6, window_bounds = array<i64: 8, 16, 128>}]} {
    %c0 = arith.constant 0 : index
    %c0_0 = arith.constant 0 : index
    %c0_1 = arith.constant 0 : index
    %0 = vector.load %arg2[%c0, %c0_0, %c0_1] : memref<8x16x32xf32, #tpu.memory_space<vmem>>, vector<8x16x32xf32>
    %c0_2 = arith.constant 0 : index
    %c0_3 = arith.constant 0 : index
    %c0_4 = arith.constant 0 : index
    %1 = vector.load %arg3[%c0_2, %c0_3, %c0_4] : memref<8x128x32xf32, #tpu.memory_space<vmem>>, vector<8x128x32xf32>
    %c0_5 = arith.constant 0 : index
    %c0_6 = arith.constant 0 : index
    %c0_7 = arith.constant 0 : index
    %2 = vector.load %arg4[%c0_5, %c0_6, %c0_7] : memref<8x128x32xf32, #tpu.memory_space<vmem>>, vector<8x128x32xf32>
    "tpu.trace_start"() <{level = 10 : i32, message = "bqd,bkd->bqk"}> : () -> ()
    %cst = arith.constant dense<0.000000e+00> : vector<8x16x128xf32>
    %3 = tpu.matmul %0, %1, %cst {dimension_numbers = #tpu.dot_dimension_numbers<[2], [2], [1], [1], [0, 0, 0, 1, 1, 1], [0], [0]>, precision = #tpu.contract_precision<fp32>} : vector<8x16x32xf32>, vector<8x128x32xf32>, vector<8x16x128xf32> -> vector<8x16x128xf32>
    "tpu.trace_stop"() : () -> ()
    %cst_8 = arith.constant 0.176776692 : f32
    %4 = vector.broadcast %cst_8 : f32 to vector<8x16x128xf32>
    %5 = arith.mulf %3, %4 : vector<8x16x128xf32>
    %c0_9 = arith.constant 0 : index
    %c0_10 = arith.constant 0 : index
    %c0_11 = arith.constant 0 : index
    %6 = vector.load %arg6[%c0_9, %c0_10, %c0_11] : memref<8x16x128xf32, #tpu.memory_space<vmem>>, vector<8x16x128xf32>
    %7 = arith.addf %5, %6 : vector<8x16x128xf32>
    %c0_12 = arith.constant 0 : index
    %c0_13 = arith.constant 0 : index
    %c0_14 = arith.constant 0 : index
    %8 = vector.load %arg5[%c0_12, %c0_13, %c0_14] : memref<8x16x128xi8, #tpu.memory_space<vmem>>, vector<8x16x128xi8>
    %c0_i8 = arith.constant 0 : i8
    %9 = vector.broadcast %c0_i8 : i8 to vector<8x16x128xi8>
    %10 = arith.cmpi ne, %8, %9 : vector<8x16x128xi8>
    %cst_15 = arith.constant -1.000000e+09 : f32
    %11 = vector.broadcast %cst_15 : f32 to vector<8x16x128xf32>
    %12 = arith.select %10, %11, %7 : vector<8x16x128xi1>, vector<8x16x128xf32>
    %c0_16 = arith.constant 0 : index
    %c0_17 = arith.constant 0 : index
    %c0_18 = arith.constant 0 : index
    %13 = vector.load %arg8[%c0_16, %c0_17, %c0_18] : memref<8x16x128xf32, #tpu.memory_space<vmem>>, vector<8x16x128xf32>
    tpu.vector_store %arg8[%c0_16, %c0_17, %c0_18], %12 {strides = array<i32>} : memref<8x16x128xf32, #tpu.memory_space<vmem>>, vector<8x16x128xf32>,
    %cst_19 = arith.constant dense<0xFF800000> : vector<8x16xf32>
    %14 = vector.multi_reduction <maximumf>, %12, %cst_19 [2] : vector<8x16x128xf32> to vector<8x16xf32>
    %15 = vector.shape_cast %14 : vector<8x16xf32> to vector<8x16x1xf32>
    %16 = vector.broadcast %15 : vector<8x16x1xf32> to vector<8x16x128xf32>
    %17 = arith.subf %12, %16 : vector<8x16x128xf32>
    %18 = math.exp %17 : vector<8x16x128xf32>
    %cst_20 = arith.constant dense<0.000000e+00> : vector<8x16xf32>
    %19 = vector.multi_reduction <add>, %18, %cst_20 [2] : vector<8x16x128xf32> to vector<8x16xf32>
    %20 = vector.shape_cast %19 : vector<8x16xf32> to vector<8x16x1xf32>
    "tpu.trace_start"() <{level = 10 : i32, message = "bqk,bkd->bqd"}> : () -> ()
    %cst_21 = arith.constant dense<0.000000e+00> : vector<8x16x32xf32>
    %21 = tpu.matmul %18, %2, %cst_21 {dimension_numbers = #tpu.dot_dimension_numbers<[2], [1], [1], [2], [0, 0, 0, 1, 1, 2], [0], [0]>, precision = #tpu.contract_precision<fp32>} : vector<8x16x128xf32>, vector<8x128x32xf32>, vector<8x16x32xf32> -> vector<8x16x32xf32>
    "tpu.trace_stop"() : () -> ()
    %22 = tpu.reciprocal %20 : vector<8x16x1xf32> -> vector<8x16x1xf32>
    %23 = vector.broadcast %22 : vector<8x16x1xf32> to vector<8x16x32xf32>
    %24 = arith.mulf %21, %23 : vector<8x16x32xf32>
    %c0_22 = arith.constant 0 : index
    %c0_23 = arith.constant 0 : index
    %c0_24 = arith.constant 0 : index
    %25 = vector.load %arg7[%c0_22, %c0_23, %c0_24] : memref<8x16x32xf32, #tpu.memory_space<vmem>>, vector<8x16x32xf32>
    tpu.vector_store %arg7[%c0_22, %c0_23, %c0_24], %24 {strides = array<i32>} : memref<8x16x32xf32, #tpu.memory_space<vmem>>, vector<8x16x32xf32>,
    return
  }
  func.func @transform_0(%arg0: i32, %arg1: i32) -> (i32, i32, i32) {
    %c0_i32 = arith.constant 0 : i32
    %c0_i32_0 = arith.constant 0 : i32
    return %arg0, %arg1, %c0_i32 : i32, i32, i32
  }
  func.func @transform_1(%arg0: i32, %arg1: i32) -> (i32, i32, i32) {
    %c0_i32 = arith.constant 0 : i32
    %c0_i32_0 = arith.constant 0 : i32
    %c0_i32_1 = arith.constant 0 : i32
    return %arg0, %c0_i32, %c0_i32_0 : i32, i32, i32
  }
  func.func @transform_2(%arg0: i32, %arg1: i32) -> (i32, i32, i32) {
    %c0_i32 = arith.constant 0 : i32
    %c0_i32_0 = arith.constant 0 : i32
    %c0_i32_1 = arith.constant 0 : i32
    return %arg0, %c0_i32, %c0_i32_0 : i32, i32, i32
  }
  func.func @transform_3(%arg0: i32, %arg1: i32) -> (i32, i32, i32) {
    %c0_i32 = arith.constant 0 : i32
    %c0_i32_0 = arith.constant 0 : i32
    return %arg0, %arg1, %c0_i32 : i32, i32, i32
  }
  func.func @transform_4(%arg0: i32, %arg1: i32) -> (i32, i32, i32) {
    %c0_i32 = arith.constant 0 : i32
    %c0_i32_0 = arith.constant 0 : i32
    return %arg0, %arg1, %c0_i32 : i32, i32, i32
  }
  func.func @transform_5(%arg0: i32, %arg1: i32) -> (i32, i32, i32) {
    %c0_i32 = arith.constant 0 : i32
    %c0_i32_0 = arith.constant 0 : i32
    return %arg0, %arg1, %c0_i32 : i32, i32, i32
  }
  func.func @transform_6(%arg0: i32, %arg1: i32) -> (i32, i32, i32) {
    %c0_i32 = arith.constant 0 : i32
    %c0_i32_0 = arith.constant 0 : i32
    return %arg0, %arg1, %c0_i32 : i32, i32, i32
  }
}

</mosaic_0001>

<llo_original>
// kernel: tpu_custom_call.1
$region0: #{tpu_custom_call.1}
  #allocation0 [shape = 'u32[]', space=smem, size = 0x4, offset = 0x4, fixed_abs, tag = 'smem constant byte address 0x4 - core index']
  #allocation1 [shape = 'u32[144,128]{1,0:T(1,128)}', space=vmem, size = 0x12000, scoped, tag = 'internal scratch']
  %s0 = inlined_call_operand.vmem [shape: f32[8,16,32], index: 0, kind: input, shape index: {}]
  %s1 = inlined_call_operand.vmem [shape: f32[8,128,32], index: 1, kind: input, shape index: {}]
  %s2 = inlined_call_operand.vmem [shape: f32[8,128,32], index: 2, kind: input, shape index: {}]
  %s3 = inlined_call_operand.vmem [shape: s8[8,16,128], index: 3, kind: input, shape index: {}]
  %s4 = inlined_call_operand.vmem [shape: f32[8,16,128], index: 4, kind: input, shape index: {}]
  %s5 = inlined_call_operand.hbm [shape: f32[8,16,32], index: 5, kind: output, shape index: {0}]
  %s6 = inlined_call_operand.hbm [shape: f32[8,16,128], index: 6, kind: output, shape index: {1}]
  %7 = xla_tuple %s5, %s6
  %s8 = sld [smem:[#allocation0]]
  $region38: #{tpu_custom_call.1} parent=0
    _
  %s10 = ssub.s32 1, %s8
  %s11 = scalar_select 0, %s10, %s8
  $region1: #{tpu_custom_call.1} parent=0
    #allocation2 [shape = 'u8[65536]{0}', space=vmem, size = 0x10000, scoped, tag = 'output window, operand 0, single buffered']
    #allocation3 [shape = 's32[1]{0}', space=sflag, size = 0x4, scoped, tag = 'scoped memory for tpu_custom_call.1']
    #allocation4 [shape = 'u8[65536]{0}', space=vmem, size = 0x10000, scoped, tag = 'output window, operand 1, single buffered']
    #allocation5 [shape = 's32[1]{0}', space=sflag, size = 0x4, scoped, tag = 'scoped memory for tpu_custom_call.1']
    %12 = vsyncpa [#allocation3], 0
    %13 = vsyncpa [#allocation5], 0
    // Predicated region
    $region2: #{tpu_custom_call.1} parent=1 // pred_check
      _
    $region3: #{tpu_custom_call.1} parent=1 // pred_check_branch
      %15 = sbr.rel (0) target = $region5
    $region4: #{tpu_custom_call.1} parent=1 // pred_region
      _
    $region5: #{tpu_custom_call.1} parent=1 // pred_fallthru
      _
    // Predicated region
    $region6: #{tpu_custom_call.1} parent=1 // pred_check
      _
    $region7: #{tpu_custom_call.1} parent=1 // pred_check_branch
      %17 = sbr.rel (0) target = $region9
    $region8: #{tpu_custom_call.1} parent=1 // pred_region
      _
    $region9: #{tpu_custom_call.1} parent=1 // pred_fallthru
      _
    // Predicated region
    $region10: #{tpu_custom_call.1} parent=1 // pred_check
      _
    $region11: #{tpu_custom_call.1} parent=1 // pred_check_branch
      %19 = sbr.rel (0) target = $region13
    $region12: #{tpu_custom_call.1} parent=1 // pred_region
      _
    $region13: #{tpu_custom_call.1} parent=1 // pred_fallthru
      _
    // Predicated region
    $region14: #{tpu_custom_call.1} parent=1 // pred_check
      _
    $region15: #{tpu_custom_call.1} parent=1 // pred_check_branch
      %21 = sbr.rel (0) target = $region17
    $region16: #{tpu_custom_call.1} parent=1 // pred_region
      _
    $region17: #{tpu_custom_call.1} parent=1 // pred_fallthru
      _
    // Predicated region
    $region18: #{tpu_custom_call.1} parent=1 // pred_check
      _
    $region19: #{tpu_custom_call.1} parent=1 // pred_check_branch
      %23 = sbr.rel (0) target = $region21
    $region20: #{tpu_custom_call.1} parent=1 // pred_region
      _
    $region21: #{tpu_custom_call.1} parent=1 // pred_fallthru
      _
    %v26 = vld [vmem:[%s0] sm:$0xff]
    %v27 = vld [vmem:[%s0 + $0x8] sm:$0xff]
    %v28 = vld [vmem:[%s0 + $0x10] sm:$0xff]
    %v29 = vld [vmem:[%s0 + $0x18] sm:$0xff]
    %v30 = vld [vmem:[%s0 + $0x20] sm:$0xff]
    %v31 = vld [vmem:[%s0 + $0x28] sm:$0xff]
    %v32 = vld [vmem:[%s0 + $0x30] sm:$0xff]
    %v33 = vld [vmem:[%s0 + $0x38] sm:$0xff]
    %v34 = vld [vmem:[%s0 + $0x40] sm:$0xff]
    %v35 = vld [vmem:[%s0 + $0x48] sm:$0xff]
    %v36 = vld [vmem:[%s0 + $0x50] sm:$0xff]
    %v37 = vld [vmem:[%s0 + $0x58] sm:$0xff]
    %v38 = vld [vmem:[%s0 + $0x60] sm:$0xff]
    %v39 = vld [vmem:[%s0 + $0x68] sm:$0xff]
    %v40 = vld [vmem:[%s0 + $0x70] sm:$0xff]
    %v41 = vld [vmem:[%s0 + $0x78] sm:$0xff]
    %v42 = vld [vmem:[%s1] sm:$0xff]
    %v43 = vld [vmem:[%s1 + $0x8] sm:$0xff]
    %v44 = vld [vmem:[%s1 + $0x10] sm:$0xff]
    %v45 = vld [vmem:[%s1 + $0x18] sm:$0xff]
    %v46 = vld [vmem:[%s1 + $0x20] sm:$0xff]
    %v47 = vld [vmem:[%s1 + $0x28] sm:$0xff]
    %v48 = vld [vmem:[%s1 + $0x30] sm:$0xff]
    %v49 = vld [vmem:[%s1 + $0x38] sm:$0xff]
    %v50 = vld [vmem:[%s1 + $0x40] sm:$0xff]
    %v51 = vld [vmem:[%s1 + $0x48] sm:$0xff]
    %v52 = vld [vmem:[%s1 + $0x50] sm:$0xff]
    %v53 = vld [vmem:[%s1 + $0x58] sm:$0xff]
    %v54 = vld [vmem:[%s1 + $0x60] sm:$0xff]
    %v55 = vld [vmem:[%s1 + $0x68] sm:$0xff]
    %v56 = vld [vmem:[%s1 + $0x70] sm:$0xff]
    %v57 = vld [vmem:[%s1 + $0x78] sm:$0xff]
    %v58 = vld [vmem:[%s1 + $0x80] sm:$0xff]
    %v59 = vld [vmem:[%s1 + $0x88] sm:$0xff]
    %v60 = vld [vmem:[%s1 + $0x90] sm:$0xff]
    %v61 = vld [vmem:[%s1 + $0x98] sm:$0xff]
    %v62 = vld [vmem:[%s1 + $0xa0] sm:$0xff]
    %v63 = vld [vmem:[%s1 + $0xa8] sm:$0xff]
    %v64 = vld [vmem:[%s1 + $0xb0] sm:$0xff]
    %v65 = vld [vmem:[%s1 + $0xb8] sm:$0xff]
    %v66 = vld [vmem:[%s1 + $0xc0] sm:$0xff]
    %v67 = vld [vmem:[%s1 + $0xc8] sm:$0xff]
    %v68 = vld [vmem:[%s1 + $0xd0] sm:$0xff]
    %v69 = vld [vmem:[%s1 + $0xd8] sm:$0xff]
    %v70 = vld [vmem:[%s1 + $0xe0] sm:$0xff]
    %v71 = vld [vmem:[%s1 + $0xe8] sm:$0xff]
    %v72 = vld [vmem:[%s1 + $0xf0] sm:$0xff]
    %v73 = vld [vmem:[%s1 + $0xf8] sm:$0xff]
    %v74 = vld [vmem:[%s1 + $0x100] sm:$0xff]
    %v75 = vld [vmem:[%s1 + $0x108] sm:$0xff]
    %v76 = vld [vmem:[%s1 + $0x110] sm:$0xff]
    %v77 = vld [vmem:[%s1 + $0x118] sm:$0xff]
    %v78 = vld [vmem:[%s1 + $0x120] sm:$0xff]
    %v79 = vld [vmem:[%s1 + $0x128] sm:$0xff]
    %v80 = vld [vmem:[%s1 + $0x130] sm:$0xff]
    %v81 = vld [vmem:[%s1 + $0x138] sm:$0xff]
    %v82 = vld [vmem:[%s1 + $0x140] sm:$0xff]
    %v83 = vld [vmem:[%s1 + $0x148] sm:$0xff]
    %v84 = vld [vmem:[%s1 + $0x150] sm:$0xff]
    %v85 = vld [vmem:[%s1 + $0x158] sm:$0xff]
    %v86 = vld [vmem:[%s1 + $0x160] sm:$0xff]
    %v87 = vld [vmem:[%s1 + $0x168] sm:$0xff]
    %v88 = vld [vmem:[%s1 + $0x170] sm:$0xff]
    %v89 = vld [vmem:[%s1 + $0x178] sm:$0xff]
    %v90 = vld [vmem:[%s1 + $0x180] sm:$0xff]
    %v91 = vld [vmem:[%s1 + $0x188] sm:$0xff]
    %v92 = vld [vmem:[%s1 + $0x190] sm:$0xff]
    %v93 = vld [vmem:[%s1 + $0x198] sm:$0xff]
    %v94 = vld [vmem:[%s1 + $0x1a0] sm:$0xff]
    %v95 = vld [vmem:[%s1 + $0x1a8] sm:$0xff]
    %v96 = vld [vmem:[%s1 + $0x1b0] sm:$0xff]
    %v97 = vld [vmem:[%s1 + $0x1b8] sm:$0xff]
    %v98 = vld [vmem:[%s1 + $0x1c0] sm:$0xff]
    %v99 = vld [vmem:[%s1 + $0x1c8] sm:$0xff]
    %v100 = vld [vmem:[%s1 + $0x1d0] sm:$0xff]
    %v101 = vld [vmem:[%s1 + $0x1d8] sm:$0xff]
    %v102 = vld [vmem:[%s1 + $0x1e0] sm:$0xff]
    %v103 = vld [vmem:[%s1 + $0x1e8] sm:$0xff]
    %v104 = vld [vmem:[%s1 + $0x1f0] sm:$0xff]
    %v105 = vld [vmem:[%s1 + $0x1f8] sm:$0xff]
    %v106 = vld [vmem:[%s1 + $0x200] sm:$0xff]
    %v107 = vld [vmem:[%s1 + $0x208] sm:$0xff]
    %v108 = vld [vmem:[%s1 + $0x210] sm:$0xff]
    %v109 = vld [vmem:[%s1 + $0x218] sm:$0xff]
    %v110 = vld [vmem:[%s1 + $0x220] sm:$0xff]
    %v111 = vld [vmem:[%s1 + $0x228] sm:$0xff]
    %v112 = vld [vmem:[%s1 + $0x230] sm:$0xff]
    %v113 = vld [vmem:[%s1 + $0x238] sm:$0xff]
    %v114 = vld [vmem:[%s1 + $0x240] sm:$0xff]
    %v115 = vld [vmem:[%s1 + $0x248] sm:$0xff]
    %v116 = vld [vmem:[%s1 + $0x250] sm:$0xff]
    %v117 = vld [vmem:[%s1 + $0x258] sm:$0xff]
    %v118 = vld [vmem:[%s1 + $0x260] sm:$0xff]
    %v119 = vld [vmem:[%s1 + $0x268] sm:$0xff]
    %v120 = vld [vmem:[%s1 + $0x270] sm:$0xff]
    %v121 = vld [vmem:[%s1 + $0x278] sm:$0xff]
    %v122 = vld [vmem:[%s1 + $0x280] sm:$0xff]
    %v123 = vld [vmem:[%s1 + $0x288] sm:$0xff]
    %v124 = vld [vmem:[%s1 + $0x290] sm:$0xff]
    %v125 = vld [vmem:[%s1 + $0x298] sm:$0xff]
    %v126 = vld [vmem:[%s1 + $0x2a0] sm:$0xff]
    %v127 = vld [vmem:[%s1 + $0x2a8] sm:$0xff]
    %v128 = vld [vmem:[%s1 + $0x2b0] sm:$0xff]
    %v129 = vld [vmem:[%s1 + $0x2b8] sm:$0xff]
    %v130 = vld [vmem:[%s1 + $0x2c0] sm:$0xff]
    %v131 = vld [vmem:[%s1 + $0x2c8] sm:$0xff]
    %v132 = vld [vmem:[%s1 + $0x2d0] sm:$0xff]
    %v133 = vld [vmem:[%s1 + $0x2d8] sm:$0xff]
    %v134 = vld [vmem:[%s1 + $0x2e0] sm:$0xff]
    %v135 = vld [vmem:[%s1 + $0x2e8] sm:$0xff]
    %v136 = vld [vmem:[%s1 + $0x2f0] sm:$0xff]
    %v137 = vld [vmem:[%s1 + $0x2f8] sm:$0xff]
    %v138 = vld [vmem:[%s1 + $0x300] sm:$0xff]
    %v139 = vld [vmem:[%s1 + $0x308] sm:$0xff]
    %v140 = vld [vmem:[%s1 + $0x310] sm:$0xff]
    %v141 = vld [vmem:[%s1 + $0x318] sm:$0xff]
    %v142 = vld [vmem:[%s1 + $0x320] sm:$0xff]
    %v143 = vld [vmem:[%s1 + $0x328] sm:$0xff]
    %v144 = vld [vmem:[%s1 + $0x330] sm:$0xff]
    %v145 = vld [vmem:[%s1 + $0x338] sm:$0xff]
    %v146 = vld [vmem:[%s1 + $0x340] sm:$0xff]
    %v147 = vld [vmem:[%s1 + $0x348] sm:$0xff]
    %v148 = vld [vmem:[%s1 + $0x350] sm:$0xff]
    %v149 = vld [vmem:[%s1 + $0x358] sm:$0xff]
    %v150 = vld [vmem:[%s1 + $0x360] sm:$0xff]
    %v151 = vld [vmem:[%s1 + $0x368] sm:$0xff]
    %v152 = vld [vmem:[%s1 + $0x370] sm:$0xff]
    %v153 = vld [vmem:[%s1 + $0x378] sm:$0xff]
    %v154 = vld [vmem:[%s1 + $0x380] sm:$0xff]
    %v155 = vld [vmem:[%s1 + $0x388] sm:$0xff]
    %v156 = vld [vmem:[%s1 + $0x390] sm:$0xff]
    %v157 = vld [vmem:[%s1 + $0x398] sm:$0xff]
    %v158 = vld [vmem:[%s1 + $0x3a0] sm:$0xff]
    %v159 = vld [vmem:[%s1 + $0x3a8] sm:$0xff]
    %v160 = vld [vmem:[%s1 + $0x3b0] sm:$0xff]
    %v161 = vld [vmem:[%s1 + $0x3b8] sm:$0xff]
    %v162 = vld [vmem:[%s1 + $0x3c0] sm:$0xff]
    %v163 = vld [vmem:[%s1 + $0x3c8] sm:$0xff]
    %v164 = vld [vmem:[%s1 + $0x3d0] sm:$0xff]
    %v165 = vld [vmem:[%s1 + $0x3d8] sm:$0xff]
    %v166 = vld [vmem:[%s1 + $0x3e0] sm:$0xff]
    %v167 = vld [vmem:[%s1 + $0x3e8] sm:$0xff]
    %v168 = vld [vmem:[%s1 + $0x3f0] sm:$0xff]
    %v169 = vld [vmem:[%s1 + $0x3f8] sm:$0xff]
    %v170 = vld [vmem:[%s2] sm:$0xff]
    %v171 = vld [vmem:[%s2 + $0x8] sm:$0xff]
    %v172 = vld [vmem:[%s2 + $0x10] sm:$0xff]
    %v173 = vld [vmem:[%s2 + $0x18] sm:$0xff]
    %v174 = vld [vmem:[%s2 + $0x20] sm:$0xff]
    %v175 = vld [vmem:[%s2 + $0x28] sm:$0xff]
    %v176 = vld [vmem:[%s2 + $0x30] sm:$0xff]
    %v177 = vld [vmem:[%s2 + $0x38] sm:$0xff]
    %v178 = vld [vmem:[%s2 + $0x40] sm:$0xff]
    %v179 = vld [vmem:[%s2 + $0x48] sm:$0xff]
    %v180 = vld [vmem:[%s2 + $0x50] sm:$0xff]
    %v181 = vld [vmem:[%s2 + $0x58] sm:$0xff]
    %v182 = vld [vmem:[%s2 + $0x60] sm:$0xff]
    %v183 = vld [vmem:[%s2 + $0x68] sm:$0xff]
    %v184 = vld [vmem:[%s2 + $0x70] sm:$0xff]
    %v185 = vld [vmem:[%s2 + $0x78] sm:$0xff]
    %v186 = vld [vmem:[%s2 + $0x80] sm:$0xff]
    %v187 = vld [vmem:[%s2 + $0x88] sm:$0xff]
    %v188 = vld [vmem:[%s2 + $0x90] sm:$0xff]
    %v189 = vld [vmem:[%s2 + $0x98] sm:$0xff]
    %v190 = vld [vmem:[%s2 + $0xa0] sm:$0xff]
    %v191 = vld [vmem:[%s2 + $0xa8] sm:$0xff]
    %v192 = vld [vmem:[%s2 + $0xb0] sm:$0xff]
    %v193 = vld [vmem:[%s2 + $0xb8] sm:$0xff]
    %v194 = vld [vmem:[%s2 + $0xc0] sm:$0xff]
    %v195 = vld [vmem:[%s2 + $0xc8] sm:$0xff]
    %v196 = vld [vmem:[%s2 + $0xd0] sm:$0xff]
    %v197 = vld [vmem:[%s2 + $0xd8] sm:$0xff]
    %v198 = vld [vmem:[%s2 + $0xe0] sm:$0xff]
    %v199 = vld [vmem:[%s2 + $0xe8] sm:$0xff]
    %v200 = vld [vmem:[%s2 + $0xf0] sm:$0xff]
    %v201 = vld [vmem:[%s2 + $0xf8] sm:$0xff]
    %v202 = vld [vmem:[%s2 + $0x100] sm:$0xff]
    %v203 = vld [vmem:[%s2 + $0x108] sm:$0xff]
    %v204 = vld [vmem:[%s2 + $0x110] sm:$0xff]
    %v205 = vld [vmem:[%s2 + $0x118] sm:$0xff]
    %v206 = vld [vmem:[%s2 + $0x120] sm:$0xff]
    %v207 = vld [vmem:[%s2 + $0x128] sm:$0xff]
    %v208 = vld [vmem:[%s2 + $0x130] sm:$0xff]
    %v209 = vld [vmem:[%s2 + $0x138] sm:$0xff]
    %v210 = vld [vmem:[%s2 + $0x140] sm:$0xff]
    %v211 = vld [vmem:[%s2 + $0x148] sm:$0xff]
    %v212 = vld [vmem:[%s2 + $0x150] sm:$0xff]
    %v213 = vld [vmem:[%s2 + $0x158] sm:$0xff]
    %v214 = vld [vmem:[%s2 + $0x160] sm:$0xff]
    %v215 = vld [vmem:[%s2 + $0x168] sm:$0xff]
    %v216 = vld [vmem:[%s2 + $0x170] sm:$0xff]
    %v217 = vld [vmem:[%s2 + $0x178] sm:$0xff]
    %v218 = vld [vmem:[%s2 + $0x180] sm:$0xff]
    %v219 = vld [vmem:[%s2 + $0x188] sm:$0xff]
    %v220 = vld [vmem:[%s2 + $0x190] sm:$0xff]
    %v221 = vld [vmem:[%s2 + $0x198] sm:$0xff]
    %v222 = vld [vmem:[%s2 + $0x1a0] sm:$0xff]
    %v223 = vld [vmem:[%s2 + $0x1a8] sm:$0xff]
    %v224 = vld [vmem:[%s2 + $0x1b0] sm:$0xff]
    %v225 = vld [vmem:[%s2 + $0x1b8] sm:$0xff]
    %v226 = vld [vmem:[%s2 + $0x1c0] sm:$0xff]
    %v227 = vld [vmem:[%s2 + $0x1c8] sm:$0xff]
    %v228 = vld [vmem:[%s2 + $0x1d0] sm:$0xff]
    %v229 = vld [vmem:[%s2 + $0x1d8] sm:$0xff]
    %v230 = vld [vmem:[%s2 + $0x1e0] sm:$0xff]
    %v231 = vld [vmem:[%s2 + $0x1e8] sm:$0xff]
    %v232 = vld [vmem:[%s2 + $0x1f0] sm:$0xff]
    %v233 = vld [vmem:[%s2 + $0x1f8] sm:$0xff]
    %v234 = vld [vmem:[%s2 + $0x200] sm:$0xff]
    %v235 = vld [vmem:[%s2 + $0x208] sm:$0xff]
    %v236 = vld [vmem:[%s2 + $0x210] sm:$0xff]
    %v237 = vld [vmem:[%s2 + $0x218] sm:$0xff]
    %v238 = vld [vmem:[%s2 + $0x220] sm:$0xff]
    %v239 = vld [vmem:[%s2 + $0x228] sm:$0xff]
    %v240 = vld [vmem:[%s2 + $0x230] sm:$0xff]
    %v241 = vld [vmem:[%s2 + $0x238] sm:$0xff]
    %v242 = vld [vmem:[%s2 + $0x240] sm:$0xff]
    %v243 = vld [vmem:[%s2 + $0x248] sm:$0xff]
    %v244 = vld [vmem:[%s2 + $0x250] sm:$0xff]
    %v245 = vld [vmem:[%s2 + $0x258] sm:$0xff]
    %v246 = vld [vmem:[%s2 + $0x260] sm:$0xff]
    %v247 = vld [vmem:[%s2 + $0x268] sm:$0xff]
    %v248 = vld [vmem:[%s2 + $0x270] sm:$0xff]
    %v249 = vld [vmem:[%s2 + $0x278] sm:$0xff]
    %v250 = vld [vmem:[%s2 + $0x280] sm:$0xff]
    %v251 = vld [vmem:[%s2 + $0x288] sm:$0xff]
    %v252 = vld [vmem:[%s2 + $0x290] sm:$0xff]
    %v253 = vld [vmem:[%s2 + $0x298] sm:$0xff]
    %v254 = vld [vmem:[%s2 + $0x2a0] sm:$0xff]
    %v255 = vld [vmem:[%s2 + $0x2a8] sm:$0xff]
    %v256 = vld [vmem:[%s2 + $0x2b0] sm:$0xff]
    %v257 = vld [vmem:[%s2 + $0x2b8] sm:$0xff]
    %v258 = vld [vmem:[%s2 + $0x2c0] sm:$0xff]
    %v259 = vld [vmem:[%s2 + $0x2c8] sm:$0xff]
    %v260 = vld [vmem:[%s2 + $0x2d0] sm:$0xff]
    %v261 = vld [vmem:[%s2 + $0x2d8] sm:$0xff]
    %v262 = vld [vmem:[%s2 + $0x2e0] sm:$0xff]
    %v263 = vld [vmem:[%s2 + $0x2e8] sm:$0xff]
    %v264 = vld [vmem:[%s2 + $0x2f0] sm:$0xff]
    %v265 = vld [vmem:[%s2 + $0x2f8] sm:$0xff]
    %v266 = vld [vmem:[%s2 + $0x300] sm:$0xff]
    %v267 = vld [vmem:[%s2 + $0x308] sm:$0xff]
    %v268 = vld [vmem:[%s2 + $0x310] sm:$0xff]
    %v269 = vld [vmem:[%s2 + $0x318] sm:$0xff]
    %v270 = vld [vmem:[%s2 + $0x320] sm:$0xff]
    %v271 = vld [vmem:[%s2 + $0x328] sm:$0xff]
    %v272 = vld [vmem:[%s2 + $0x330] sm:$0xff]
    %v273 = vld [vmem:[%s2 + $0x338] sm:$0xff]
    %v274 = vld [vmem:[%s2 + $0x340] sm:$0xff]
    %v275 = vld [vmem:[%s2 + $0x348] sm:$0xff]
    %v276 = vld [vmem:[%s2 + $0x350] sm:$0xff]
    %v277 = vld [vmem:[%s2 + $0x358] sm:$0xff]
    %v278 = vld [vmem:[%s2 + $0x360] sm:$0xff]
    %v279 = vld [vmem:[%s2 + $0x368] sm:$0xff]
    %v280 = vld [vmem:[%s2 + $0x370] sm:$0xff]
    %v281 = vld [vmem:[%s2 + $0x378] sm:$0xff]
    %v282 = vld [vmem:[%s2 + $0x380] sm:$0xff]
    %v283 = vld [vmem:[%s2 + $0x388] sm:$0xff]
    %v284 = vld [vmem:[%s2 + $0x390] sm:$0xff]
    %v285 = vld [vmem:[%s2 + $0x398] sm:$0xff]
    %v286 = vld [vmem:[%s2 + $0x3a0] sm:$0xff]
    %v287 = vld [vmem:[%s2 + $0x3a8] sm:$0xff]
    %v288 = vld [vmem:[%s2 + $0x3b0] sm:$0xff]
    %v289 = vld [vmem:[%s2 + $0x3b8] sm:$0xff]
    %v290 = vld [vmem:[%s2 + $0x3c0] sm:$0xff]
    %v291 = vld [vmem:[%s2 + $0x3c8] sm:$0xff]
    %v292 = vld [vmem:[%s2 + $0x3d0] sm:$0xff]
    %v293 = vld [vmem:[%s2 + $0x3d8] sm:$0xff]
    %v294 = vld [vmem:[%s2 + $0x3e0] sm:$0xff]
    %v295 = vld [vmem:[%s2 + $0x3e8] sm:$0xff]
    %v296 = vld [vmem:[%s2 + $0x3f0] sm:$0xff]
    %v297 = vld [vmem:[%s2 + $0x3f8] sm:$0xff]
    %vm298 = vcmask 261120
    %v300 = vsel %vm298, %v26, 0
    %v303 = vsel %vm298, %v27, 0
    %v306 = vsel %vm298, %v42, 0
    %v309 = vsel %vm298, %v43, 0
    %v312 = vsel %vm298, %v44, 0
    %v315 = vsel %vm298, %v45, 0
    %v318 = vsel %vm298, %v46, 0
    %v321 = vsel %vm298, %v47, 0
    %v324 = vsel %vm298, %v48, 0
    %v327 = vsel %vm298, %v49, 0
    %v330 = vsel %vm298, %v50, 0
    %v333 = vsel %vm298, %v51, 0
    %v336 = vsel %vm298, %v52, 0
    %v339 = vsel %vm298, %v53, 0
    %v342 = vsel %vm298, %v54, 0
    %v345 = vsel %vm298, %v55, 0
    %v348 = vsel %vm298, %v56, 0
    %v351 = vsel %vm298, %v57, 0
    %353 = vmatprep.subr.mxu0 0.0
    %v354 = vand.u32 %v351, 4294901760
    %355 = vmatpush1.xpose.msra.mxu0 %v354
    %356 = vmatprep.subr.mxu0 0.0
    %v357 = vand.u32 %v348, 4294901760
    %358 = vmatpush1.xpose.msra.mxu0 %v357
    %359 = vmatprep.subr.mxu0 0.0
    %v360 = vand.u32 %v345, 4294901760
    %361 = vmatpush1.xpose.msra.mxu0 %v360
    %362 = vmatprep.subr.mxu0 0.0
    %v363 = vand.u32 %v342, 4294901760
    %364 = vmatpush1.xpose.msra.mxu0 %v363
    %365 = vmatprep.subr.mxu0 0.0
    %v366 = vand.u32 %v339, 4294901760
    %367 = vmatpush1.xpose.msra.mxu0 %v366
    %368 = vmatprep.subr.mxu0 0.0
    %v369 = vand.u32 %v336, 4294901760
    %370 = vmatpush1.xpose.msra.mxu0 %v369
    %371 = vmatprep.subr.mxu0 0.0
    %v372 = vand.u32 %v333, 4294901760
    %373 = vmatpush1.xpose.msra.mxu0 %v372
    %374 = vmatprep.subr.mxu0 0.0
    %v375 = vand.u32 %v330, 4294901760
    %376 = vmatpush1.xpose.msra.mxu0 %v375
    %377 = vmatprep.subr.mxu0 0.0
    %v378 = vand.u32 %v327, 4294901760
    %379 = vmatpush1.xpose.msra.mxu0 %v378
    %380 = vmatprep.subr.mxu0 0.0
    %v381 = vand.u32 %v324, 4294901760
    %382 = vmatpush1.xpose.msra.mxu0 %v381
    %383 = vmatprep.subr.mxu0 0.0
    %v384 = vand.u32 %v321, 4294901760
    %385 = vmatpush1.xpose.msra.mxu0 %v384
    %386 = vmatprep.subr.mxu0 0.0
    %v387 = vand.u32 %v318, 4294901760
    %388 = vmatpush1.xpose.msra.mxu0 %v387
    %389 = vmatprep.subr.mxu0 0.0
    %v390 = vand.u32 %v315, 4294901760
    %391 = vmatpush1.xpose.msra.mxu0 %v390
    %392 = vmatprep.subr.mxu0 0.0
    %v393 = vand.u32 %v312, 4294901760
    %394 = vmatpush1.xpose.msra.mxu0 %v393
    %395 = vmatprep.subr.mxu0 0.0
    %v396 = vand.u32 %v309, 4294901760
    %397 = vmatpush1.xpose.msra.mxu0 %v396
    %398 = vmatprep.subr.mxu0 0.0
    %v399 = vand.u32 %v306, 4294901760
    %400 = vmatpush1.xpose.msra.mxu0 %v399
    %401 = vmatprep.subr.mxu0 0.0
    %402 = vmatpush2.xpose.msra.mxu0 0.0
    %403 = vmatprep.subr.mxu0 0.0
    %404 = vmatpush2.xpose.msra.mxu0 0.0
    %405 = vmatprep.subr.mxu0 0.0
    %406 = vmatpush2.xpose.msra.mxu0 0.0
    %407 = vmatprep.subr.mxu0 0.0
    %408 = vmatpush2.xpose.msra.mxu0 0.0
    %409 = vmatprep.subr.mxu0 0.0
    %410 = vmatpush2.xpose.msra.mxu0 0.0
    %411 = vmatprep.subr.mxu0 0.0
    %412 = vmatpush2.xpose.msra.mxu0 0.0
    %413 = vmatprep.subr.mxu0 0.0
    %414 = vmatpush2.xpose.msra.mxu0 0.0
    %415 = vmatprep.subr.mxu0 0.0
    %416 = vmatpush2.xpose.msra.mxu0 0.0
    %417 = vmatprep.subr.mxu0 0.0
    %418 = vmatpush2.xpose.msra.mxu0 0.0
    %419 = vmatprep.subr.mxu0 0.0
    %420 = vmatpush2.xpose.msra.mxu0 0.0
    %421 = vmatprep.subr.mxu0 0.0
    %422 = vmatpush2.xpose.msra.mxu0 0.0
    %423 = vmatprep.subr.mxu0 0.0
    %424 = vmatpush2.xpose.msra.mxu0 0.0
    %425 = vmatprep.subr.mxu0 0.0
    %426 = vmatpush2.xpose.msra.mxu0 0.0
    %427 = vmatprep.subr.mxu0 0.0
    %428 = vmatpush2.xpose.msra.mxu0 0.0
    %429 = vmatprep.subr.mxu0 0.0
    %430 = vmatpush2.xpose.msra.mxu0 0.0
    %431 = vmatprep.subr.mxu0 0.0
    %432 = vmatpush2.xpose.msra.mxu0 0.0
    %433 = vmatprep.mubr.f32.mxu0 0.0
    %v434 = vand.u32 %v300, 4294901760
    %v435 = vsub.f32 %v300, %v434
    %v436 = vand.u32 %v435, 4294901760
    %v437 = vsub.f32 %v435, %v436
    %v438 = vand.u32 %v437, 4294901760
    %439 = vmatmul.mubr.f32.gmra.mxu0 %v438
    %v440 = vpop.f32.mrf.mxu0
    %v441 = vadd.f32 0.0, %v440
    %v442 = vpop.f32.mrf.mxu0
    %443 = vmatprep.mubr.f32.mxu0 0.0
    %v444 = vand.u32 %v303, 4294901760
    %v445 = vsub.f32 %v303, %v444
    %v446 = vand.u32 %v445, 4294901760
    %v447 = vsub.f32 %v445, %v446
    %v448 = vand.u32 %v447, 4294901760
    %449 = vmatmul.mubr.f32.gmra.mxu0 %v448
    %v450 = vpop.f32.mrf.mxu0
    %v451 = vadd.f32 0.0, %v450
    %v452 = vpop.f32.mrf.mxu0
    %453 = vdwg.mxu0
    %454 = vmatprep.subr.mxu0 0.0
    %v455 = vand.u32 %v351, 4294901760
    %v456 = vsub.f32 %v351, %v455
    %v457 = vand.u32 %v456, 4294901760
    %v458 = vsub.f32 %v456, %v457
    %v459 = vand.u32 %v458, 4294901760
    %460 = vmatpush1.xpose.msra.mxu0 %v459
    %461 = vmatprep.subr.mxu0 0.0
    %v462 = vand.u32 %v348, 4294901760
    %v463 = vsub.f32 %v348, %v462
    %v464 = vand.u32 %v463, 4294901760
    %v465 = vsub.f32 %v463, %v464
    %v466 = vand.u32 %v465, 4294901760
    %467 = vmatpush1.xpose.msra.mxu0 %v466
    %468 = vmatprep.subr.mxu0 0.0
    %v469 = vand.u32 %v345, 4294901760
    %v470 = vsub.f32 %v345, %v469
    %v471 = vand.u32 %v470, 4294901760
    %v472 = vsub.f32 %v470, %v471
    %v473 = vand.u32 %v472, 4294901760
    %474 = vmatpush1.xpose.msra.mxu0 %v473
    %475 = vmatprep.subr.mxu0 0.0
    %v476 = vand.u32 %v342, 4294901760
    %v477 = vsub.f32 %v342, %v476
    %v478 = vand.u32 %v477, 4294901760
    %v479 = vsub.f32 %v477, %v478
    %v480 = vand.u32 %v479, 4294901760
    %481 = vmatpush1.xpose.msra.mxu0 %v480
    %482 = vmatprep.subr.mxu0 0.0
    %v483 = vand.u32 %v339, 4294901760
    %v484 = vsub.f32 %v339, %v483
    %v485 = vand.u32 %v484, 4294901760
    %v486 = vsub.f32 %v484, %v485
    %v487 = vand.u32 %v486, 4294901760
    %488 = vmatpush1.xpose.msra.mxu0 %v487
    %489 = vmatprep.subr.mxu0 0.0
    %v490 = vand.u32 %v336, 4294901760
    %v491 = vsub.f32 %v336, %v490
    %v492 = vand.u32 %v491, 4294901760
    %v493 = vsub.f32 %v491, %v492
    %v494 = vand.u32 %v493, 4294901760
    %495 = vmatpush1.xpose.msra.mxu0 %v494
    %496 = vmatprep.subr.mxu0 0.0
    %v497 = vand.u32 %v333, 4294901760
    %v498 = vsub.f32 %v333, %v497
    %v499 = vand.u32 %v498, 4294901760
    %v500 = vsub.f32 %v498, %v499
    %v501 = vand.u32 %v500, 4294901760
    %502 = vmatpush1.xpose.msra.mxu0 %v501
    %503 = vmatprep.subr.mxu0 0.0
    %v504 = vand.u32 %v330, 4294901760
    %v505 = vsub.f32 %v330, %v504
    %v506 = vand.u32 %v505, 4294901760
    %v507 = vsub.f32 %v505, %v506
    %v508 = vand.u32 %v507, 4294901760
    %509 = vmatpush1.xpose.msra.mxu0 %v508
    %510 = vmatprep.subr.mxu0 0.0
    %v511 = vand.u32 %v327, 4294901760
    %v512 = vsub.f32 %v327, %v511
    %v513 = vand.u32 %v512, 4294901760
    %v514 = vsub.f32 %v512, %v513
    %v515 = vand.u32 %v514, 4294901760
    %516 = vmatpush1.xpose.msra.mxu0 %v515
    %517 = vmatprep.subr.mxu0 0.0
    %v518 = vand.u32 %v324, 4294901760
    %v519 = vsub.f32 %v324, %v518
    %v520 = vand.u32 %v519, 4294901760
    %v521 = vsub.f32 %v519, %v520
    %v522 = vand.u32 %v521, 4294901760
    %523 = vmatpush1.xpose.msra.mxu0 %v522
    %524 = vmatprep.subr.mxu0 0.0
    %v525 = vand.u32 %v321, 4294901760
    %v526 = vsub.f32 %v321, %v525
    %v527 = vand.u32 %v526, 4294901760
    %v528 = vsub.f32 %v526, %v527
    %v529 = vand.u32 %v528, 4294901760
    %530 = vmatpush1.xpose.msra.mxu0 %v529
    %531 = vmatprep.subr.mxu0 0.0
    %v532 = vand.u32 %v318, 4294901760
    %v533 = vsub.f32 %v318, %v532
    %v534 = vand.u32 %v533, 4294901760
    %v535 = vsub.f32 %v533, %v534
    %v536 = vand.u32 %v535, 4294901760
    %537 = vmatpush1.xpose.msra.mxu0 %v536
    %538 = vmatprep.subr.mxu0 0.0
    %v539 = vand.u32 %v315, 4294901760
    %v540 = vsub.f32 %v315, %v539
    %v541 = vand.u32 %v540, 4294901760
    %v542 = vsub.f32 %v540, %v541
    %v543 = vand.u32 %v542, 4294901760
    %544 = vmatpush1.xpose.msra.mxu0 %v543
    %545 = vmatprep.subr.mxu0 0.0
    %v546 = vand.u32 %v312, 4294901760
    %v547 = vsub.f32 %v312, %v546
    %v548 = vand.u32 %v547, 4294901760
    %v549 = vsub.f32 %v547, %v548
    %v550 = vand.u32 %v549, 4294901760
    %551 = vmatpush1.xpose.msra.mxu0 %v550
    %552 = vmatprep.subr.mxu0 0.0
    %v553 = vand.u32 %v309, 4294901760
    %v554 = vsub.f32 %v309, %v553
    %v555 = vand.u32 %v554, 4294901760
    %v556 = vsub.f32 %v554, %v555
    %v557 = vand.u32 %v556, 4294901760
    %558 = vmatpush1.xpose.msra.mxu0 %v557
    %559 = vmatprep.subr.mxu0 0.0
    %v560 = vand.u32 %v306, 4294901760
    %v561 = vsub.f32 %v306, %v560
    %v562 = vand.u32 %v561, 4294901760
    %v563 = vsub.f32 %v561, %v562
    %v564 = vand.u32 %v563, 4294901760
    %565 = vmatpush1.xpose.msra.mxu0 %v564
    %566 = vmatprep.subr.mxu0 0.0
    %567 = vmatpush2.xpose.msra.mxu0 0.0
    %568 = vmatprep.subr.mxu0 0.0
    %569 = vmatpush2.xpose.msra.mxu0 0.0
    %570 = vmatprep.subr.mxu0 0.0
    %571 = vmatpush2.xpose.msra.mxu0 0.0
    %572 = vmatprep.subr.mxu0 0.0
    %573 = vmatpush2.xpose.msra.mxu0 0.0
    %574 = vmatprep.subr.mxu0 0.0
    %575 = vmatpush2.xpose.msra.mxu0 0.0
    %576 = vmatprep.subr.mxu0 0.0
    %577 = vmatpush2.xpose.msra.mxu0 0.0
    %578 = vmatprep.subr.mxu0 0.0
    %579 = vmatpush2.xpose.msra.mxu0 0.0
    %580 = vmatprep.subr.mxu0 0.0
    %581 = vmatpush2.xpose.msra.mxu0 0.0
    %582 = vmatprep.subr.mxu0 0.0
    %583 = vmatpush2.xpose.msra.mxu0 0.0
    %584 = vmatprep.subr.mxu0 0.0
    %585 = vmatpush2.xpose.msra.mxu0 0.0
    %586 = vmatprep.subr.mxu0 0.0
    %587 = vmatpush2.xpose.msra.mxu0 0.0
    %588 = vmatprep.subr.mxu0 0.0
    %589 = vmatpush2.xpose.msra.mxu0 0.0
    %590 = vmatprep.subr.mxu0 0.0
    %591 = vmatpush2.xpose.msra.mxu0 0.0
    %592 = vmatprep.subr.mxu0 0.0
    %593 = vmatpush2.xpose.msra.mxu0 0.0
    %594 = vmatprep.subr.mxu0 0.0
    %595 = vmatpush2.xpose.msra.mxu0 0.0
    %596 = vmatprep.subr.mxu0 0.0
    %597 = vmatpush2.xpose.msra.mxu0 0.0
    %598 = vmatprep.mubr.f32.mxu0 0.0
    %v599 = vand.u32 %v300, 4294901760
    %600 = vmatmul.mubr.f32.gmra.mxu0 %v599
    %v601 = vpop.f32.mrf.mxu0
    %v602 = vadd.f32 %v441, %v601
    %v603 = vpop.f32.mrf.mxu0
    %604 = vmatprep.mubr.f32.mxu0 0.0
    %v605 = vand.u32 %v303, 4294901760
    %606 = vmatmul.mubr.f32.gmra.mxu0 %v605
    %v607 = vpop.f32.mrf.mxu0
    %v608 = vadd.f32 %v451, %v607
    %v609 = vpop.f32.mrf.mxu0
    %610 = vdwg.mxu0
    %611 = vmatprep.subr.mxu0 0.0
    %v612 = vand.u32 %v351, 4294901760
    %v613 = vsub.f32 %v351, %v612
    %614 = vmatpush1.xpose.msra.mxu0 %v613
    %615 = vmatprep.subr.mxu0 0.0
    %v616 = vand.u32 %v348, 4294901760
    %v617 = vsub.f32 %v348, %v616
    %618 = vmatpush1.xpose.msra.mxu0 %v617
    %619 = vmatprep.subr.mxu0 0.0
    %v620 = vand.u32 %v345, 4294901760
    %v621 = vsub.f32 %v345, %v620
    %622 = vmatpush1.xpose.msra.mxu0 %v621
    %623 = vmatprep.subr.mxu0 0.0
    %v624 = vand.u32 %v342, 4294901760
    %v625 = vsub.f32 %v342, %v624
    %626 = vmatpush1.xpose.msra.mxu0 %v625
    %627 = vmatprep.subr.mxu0 0.0
    %v628 = vand.u32 %v339, 4294901760
    %v629 = vsub.f32 %v339, %v628
    %630 = vmatpush1.xpose.msra.mxu0 %v629
    %631 = vmatprep.subr.mxu0 0.0
    %v632 = vand.u32 %v336, 4294901760
    %v633 = vsub.f32 %v336, %v632
    %634 = vmatpush1.xpose.msra.mxu0 %v633
    %635 = vmatprep.subr.mxu0 0.0
    %v636 = vand.u32 %v333, 4294901760
    %v637 = vsub.f32 %v333, %v636
    %638 = vmatpush1.xpose.msra.mxu0 %v637
    %639 = vmatprep.subr.mxu0 0.0
    %v640 = vand.u32 %v330, 4294901760
    %v641 = vsub.f32 %v330, %v640
    %642 = vmatpush1.xpose.msra.mxu0 %v641
    %643 = vmatprep.subr.mxu0 0.0
    %v644 = vand.u32 %v327, 4294901760
    %v645 = vsub.f32 %v327, %v644
    %646 = vmatpush1.xpose.msra.mxu0 %v645
    %647 = vmatprep.subr.mxu0 0.0
    %v648 = vand.u32 %v324, 4294901760
    %v649 = vsub.f32 %v324, %v648
    %650 = vmatpush1.xpose.msra.mxu0 %v649
    %651 = vmatprep.subr.mxu0 0.0
    %v652 = vand.u32 %v321, 4294901760
    %v653 = vsub.f32 %v321, %v652
    %654 = vmatpush1.xpose.msra.mxu0 %v653
    %655 = vmatprep.subr.mxu0 0.0
    %v656 = vand.u32 %v318, 4294901760
    %v657 = vsub.f32 %v318, %v656
    %658 = vmatpush1.xpose.msra.mxu0 %v657
    %659 = vmatprep.subr.mxu0 0.0
    %v660 = vand.u32 %v315, 4294901760
    %v661 = vsub.f32 %v315, %v660
    %662 = vmatpush1.xpose.msra.mxu0 %v661
    %663 = vmatprep.subr.mxu0 0.0
    %v664 = vand.u32 %v312, 4294901760
    %v665 = vsub.f32 %v312, %v664
    %666 = vmatpush1.xpose.msra.mxu0 %v665
    %667 = vmatprep.subr.mxu0 0.0
    %v668 = vand.u32 %v309, 4294901760
    %v669 = vsub.f32 %v309, %v668
    %670 = vmatpush1.xpose.msra.mxu0 %v669
    %671 = vmatprep.subr.mxu0 0.0
    %v672 = vand.u32 %v306, 4294901760
    %v673 = vsub.f32 %v306, %v672
    %674 = vmatpush1.xpose.msra.mxu0 %v673
    %675 = vmatprep.subr.mxu0 0.0
    %676 = vmatpush2.xpose.msra.mxu0 0.0
    %677 = vmatprep.subr.mxu0 0.0
    %678 = vmatpush2.xpose.msra.mxu0 0.0
    %679 = vmatprep.subr.mxu0 0.0
    %680 = vmatpush2.xpose.msra.mxu0 0.0
    %681 = vmatprep.subr.mxu0 0.0
    %682 = vmatpush2.xpose.msra.mxu0 0.0
    %683 = vmatprep.subr.mxu0 0.0
    %684 = vmatpush2.xpose.msra.mxu0 0.0
    %685 = vmatprep.subr.mxu0 0.0
    %686 = vmatpush2.xpose.msra.mxu0 0.0
    %687 = vmatprep.subr.mxu0 0.0
    %688 = vmatpush2.xpose.msra.mxu0 0.0
    %689 = vmatprep.subr.mxu0 0.0
    %690 = vmatpush2.xpose.msra.mxu0 0.0
    %691 = vmatprep.subr.mxu0 0.0
    %692 = vmatpush2.xpose.msra.mxu0 0.0
    %693 = vmatprep.subr.mxu0 0.0
    %694 = vmatpush2.xpose.msra.mxu0 0.0
    %695 = vmatprep.subr.mxu0 0.0
    %696 = vmatpush2.xpose.msra.mxu0 0.0
    %697 = vmatprep.subr.mxu0 0.0
    %698 = vmatpush2.xpose.msra.mxu0 0.0
    %699 = vmatprep.subr.mxu0 0.0
    %700 = vmatpush2.xpose.msra.mxu0 0.0
    %701 = vmatprep.subr.mxu0 0.0
    %702 = vmatpush2.xpose.msra.mxu0 0.0
    %703 = vmatprep.subr.mxu0 0.0
    %704 = vmatpush2.xpose.msra.mxu0 0.0
    %705 = vmatprep.subr.mxu0 0.0
    %706 = vmatpush2.xpose.msra.mxu0 0.0
    %707 = vmatprep.mubr.f32.mxu0 0.0
    %v708 = vand.u32 %v300, 4294901760
    %v709 = vsub.f32 %v300, %v708
    %710 = vmatmul.mubr.f32.gmra.mxu0 %v709
    %v711 = vpop.f32.mrf.mxu0
    %v712 = vadd.f32 %v602, %v711
    %v713 = vpop.f32.mrf.mxu0
    %714 = vmatprep.mubr.f32.mxu0 0.0
    %v715 = vand.u32 %v303, 4294901760
    %v716 = vsub.f32 %v303, %v715
    %717 = vmatmul.mubr.f32.gmra.mxu0 %v716
    %v718 = vpop.f32.mrf.mxu0
    %v719 = vadd.f32 %v608, %v718
    %v720 = vpop.f32.mrf.mxu0
    %721 = vdwg.mxu0
    %722 = vmatprep.subr.mxu0 0.0
    %v723 = vand.u32 %v351, 4294901760
    %724 = vmatpush1.xpose.msra.mxu0 %v723
    %725 = vmatprep.subr.mxu0 0.0
    %v726 = vand.u32 %v348, 4294901760
    %727 = vmatpush1.xpose.msra.mxu0 %v726
    %728 = vmatprep.subr.mxu0 0.0
    %v729 = vand.u32 %v345, 4294901760
    %730 = vmatpush1.xpose.msra.mxu0 %v729
    %731 = vmatprep.subr.mxu0 0.0
    %v732 = vand.u32 %v342, 4294901760
    %733 = vmatpush1.xpose.msra.mxu0 %v732
    %734 = vmatprep.subr.mxu0 0.0
    %v735 = vand.u32 %v339, 4294901760
    %736 = vmatpush1.xpose.msra.mxu0 %v735
    %737 = vmatprep.subr.mxu0 0.0
    %v738 = vand.u32 %v336, 4294901760
    %739 = vmatpush1.xpose.msra.mxu0 %v738
    %740 = vmatprep.subr.mxu0 0.0
    %v741 = vand.u32 %v333, 4294901760
    %742 = vmatpush1.xpose.msra.mxu0 %v741
    %743 = vmatprep.subr.mxu0 0.0
    %v744 = vand.u32 %v330, 4294901760
    %745 = vmatpush1.xpose.msra.mxu0 %v744
    %746 = vmatprep.subr.mxu0 0.0
    %v747 = vand.u32 %v327, 4294901760
    %748 = vmatpush1.xpose.msra.mxu0 %v747
    %749 = vmatprep.subr.mxu0 0.0
    %v750 = vand.u32 %v324, 4294901760
    %751 = vmatpush1.xpose.msra.mxu0 %v750
    %752 = vmatprep.subr.mxu0 0.0
    %v753 = vand.u32 %v321, 4294901760
    %754 = vmatpush1.xpose.msra.mxu0 %v753
    %755 = vmatprep.subr.mxu0 0.0
    %v756 = vand.u32 %v318, 4294901760
    %757 = vmatpush1.xpose.msra.mxu0 %v756
    %758 = vmatprep.subr.mxu0 0.0
    %v759 = vand.u32 %v315, 4294901760
    %760 = vmatpush1.xpose.msra.mxu0 %v759
    %761 = vmatprep.subr.mxu0 0.0
    %v762 = vand.u32 %v312, 4294901760
    %763 = vmatpush1.xpose.msra.mxu0 %v762
    %764 = vmatprep.subr.mxu0 0.0
    %v765 = vand.u32 %v309, 4294901760
    %766 = vmatpush1.xpose.msra.mxu0 %v765
    %767 = vmatprep.subr.mxu0 0.0
    %v768 = vand.u32 %v306, 4294901760
    %769 = vmatpush1.xpose.msra.mxu0 %v768
    %770 = vmatprep.subr.mxu0 0.0
    %771 = vmatpush2.xpose.msra.mxu0 0.0
    %772 = vmatprep.subr.mxu0 0.0
    %773 = vmatpush2.xpose.msra.mxu0 0.0
    %774 = vmatprep.subr.mxu0 0.0
    %775 = vmatpush2.xpose.msra.mxu0 0.0
    %776 = vmatprep.subr.mxu0 0.0
    %777 = vmatpush2.xpose.msra.mxu0 0.0
    %778 = vmatprep.subr.mxu0 0.0
    %779 = vmatpush2.xpose.msra.mxu0 0.0
    %780 = vmatprep.subr.mxu0 0.0
    %781 = vmatpush2.xpose.msra.mxu0 0.0
    %782 = vmatprep.subr.mxu0 0.0
    %783 = vmatpush2.xpose.msra.mxu0 0.0
    %784 = vmatprep.subr.mxu0 0.0
    %785 = vmatpush2.xpose.msra.mxu0 0.0
    %786 = vmatprep.subr.mxu0 0.0
    %787 = vmatpush2.xpose.msra.mxu0 0.0
    %788 = vmatprep.subr.mxu0 0.0
    %789 = vmatpush2.xpose.msra.mxu0 0.0
    %790 = vmatprep.subr.mxu0 0.0
    %791 = vmatpush2.xpose.msra.mxu0 0.0
    %792 = vmatprep.subr.mxu0 0.0
    %793 = vmatpush2.xpose.msra.mxu0 0.0
    %794 = vmatprep.subr.mxu0 0.0
    %795 = vmatpush2.xpose.msra.mxu0 0.0
    %796 = vmatprep.subr.mxu0 0.0
    %797 = vmatpush2.xpose.msra.mxu0 0.0
    %798 = vmatprep.subr.mxu0 0.0
    %799 = vmatpush2.xpose.msra.mxu0 0.0
    %800 = vmatprep.subr.mxu0 0.0
    %801 = vmatpush2.xpose.msra.mxu0 0.0
    %802 = vmatprep.mubr.f32.mxu0 0.0
    %v803 = vand.u32 %v300, 4294901760
    %v804 = vsub.f32 %v300, %v803
    %v805 = vand.u32 %v804, 4294901760
    %806 = vmatmul.mubr.f32.gmra.mxu0 %v805
    %v807 = vpop.f32.mrf.mxu0
    %v808 = vadd.f32 %v712, %v807
    %v809 = vpop.f32.mrf.mxu0
    %810 = vmatprep.mubr.f32.mxu0 0.0
    %v811 = vand.u32 %v303, 4294901760
    %v812 = vsub.f32 %v303, %v811
    %v813 = vand.u32 %v812, 4294901760
    %814 = vmatmul.mubr.f32.gmra.mxu0 %v813
    %v815 = vpop.f32.mrf.mxu0
    %v816 = vadd.f32 %v719, %v815
    %v817 = vpop.f32.mrf.mxu0
    %818 = vdwg.mxu0
    %819 = vmatprep.subr.mxu0 0.0
    %v820 = vand.u32 %v351, 4294901760
    %v821 = vsub.f32 %v351, %v820
    %v822 = vand.u32 %v821, 4294901760
    %823 = vmatpush1.xpose.msra.mxu0 %v822
    %824 = vmatprep.subr.mxu0 0.0
    %v825 = vand.u32 %v348, 4294901760
    %v826 = vsub.f32 %v348, %v825
    %v827 = vand.u32 %v826, 4294901760
    %828 = vmatpush1.xpose.msra.mxu0 %v827
    %829 = vmatprep.subr.mxu0 0.0
    %v830 = vand.u32 %v345, 4294901760
    %v831 = vsub.f32 %v345, %v830
    %v832 = vand.u32 %v831, 4294901760
    %833 = vmatpush1.xpose.msra.mxu0 %v832
    %834 = vmatprep.subr.mxu0 0.0
    %v835 = vand.u32 %v342, 4294901760
    %v836 = vsub.f32 %v342, %v835
    %v837 = vand.u32 %v836, 4294901760
    %838 = vmatpush1.xpose.msra.mxu0 %v837
    %839 = vmatprep.subr.mxu0 0.0
    %v840 = vand.u32 %v339, 4294901760
    %v841 = vsub.f32 %v339, %v840
    %v842 = vand.u32 %v841, 4294901760
    %843 = vmatpush1.xpose.msra.mxu0 %v842
    %844 = vmatprep.subr.mxu0 0.0
    %v845 = vand.u32 %v336, 4294901760
    %v846 = vsub.f32 %v336, %v845
    %v847 = vand.u32 %v846, 4294901760
    %848 = vmatpush1.xpose.msra.mxu0 %v847
    %849 = vmatprep.subr.mxu0 0.0
    %v850 = vand.u32 %v333, 4294901760
    %v851 = vsub.f32 %v333, %v850
    %v852 = vand.u32 %v851, 4294901760
    %853 = vmatpush1.xpose.msra.mxu0 %v852
    %854 = vmatprep.subr.mxu0 0.0
    %v855 = vand.u32 %v330, 4294901760
    %v856 = vsub.f32 %v330, %v855
    %v857 = vand.u32 %v856, 4294901760
    %858 = vmatpush1.xpose.msra.mxu0 %v857
    %859 = vmatprep.subr.mxu0 0.0
    %v860 = vand.u32 %v327, 4294901760
    %v861 = vsub.f32 %v327, %v860
    %v862 = vand.u32 %v861, 4294901760
    %863 = vmatpush1.xpose.msra.mxu0 %v862
    %864 = vmatprep.subr.mxu0 0.0
    %v865 = vand.u32 %v324, 4294901760
    %v866 = vsub.f32 %v324, %v865
    %v867 = vand.u32 %v866, 4294901760
    %868 = vmatpush1.xpose.msra.mxu0 %v867
    %869 = vmatprep.subr.mxu0 0.0
    %v870 = vand.u32 %v321, 4294901760
    %v871 = vsub.f32 %v321, %v870
    %v872 = vand.u32 %v871, 4294901760
    %873 = vmatpush1.xpose.msra.mxu0 %v872
    %874 = vmatprep.subr.mxu0 0.0
    %v875 = vand.u32 %v318, 4294901760
    %v876 = vsub.f32 %v318, %v875
    %v877 = vand.u32 %v876, 4294901760
    %878 = vmatpush1.xpose.msra.mxu0 %v877
    %879 = vmatprep.subr.mxu0 0.0
    %v880 = vand.u32 %v315, 4294901760
    %v881 = vsub.f32 %v315, %v880
    %v882 = vand.u32 %v881, 4294901760
    %883 = vmatpush1.xpose.msra.mxu0 %v882
    %884 = vmatprep.subr.mxu0 0.0
    %v885 = vand.u32 %v312, 4294901760
    %v886 = vsub.f32 %v312, %v885
    %v887 = vand.u32 %v886, 4294901760
    %888 = vmatpush1.xpose.msra.mxu0 %v887
    %889 = vmatprep.subr.mxu0 0.0
    %v890 = vand.u32 %v309, 4294901760
    %v891 = vsub.f32 %v309, %v890
    %v892 = vand.u32 %v891, 4294901760
    %893 = vmatpush1.xpose.msra.mxu0 %v892
    %894 = vmatprep.subr.mxu0 0.0
    %v895 = vand.u32 %v306, 4294901760
    %v896 = vsub.f32 %v306, %v895
    %v897 = vand.u32 %v896, 4294901760
    %898 = vmatpush1.xpose.msra.mxu0 %v897
    %899 = vmatprep.subr.mxu0 0.0
    %900 = vmatpush2.xpose.msra.mxu0 0.0
    %901 = vmatprep.subr.mxu0 0.0
    %902 = vmatpush2.xpose.msra.mxu0 0.0
    %903 = vmatprep.subr.mxu0 0.0
    %904 = vmatpush2.xpose.msra.mxu0 0.0
    %905 = vmatprep.subr.mxu0 0.0
    %906 = vmatpush2.xpose.msra.mxu0 0.0
    %907 = vmatprep.subr.mxu0 0.0
    %908 = vmatpush2.xpose.msra.mxu0 0.0
    %909 = vmatprep.subr.mxu0 0.0
    %910 = vmatpush2.xpose.msra.mxu0 0.0
    %911 = vmatprep.subr.mxu0 0.0
    %912 = vmatpush2.xpose.msra.mxu0 0.0
    %913 = vmatprep.subr.mxu0 0.0
    %914 = vmatpush2.xpose.msra.mxu0 0.0
    %915 = vmatprep.subr.mxu0 0.0
    %916 = vmatpush2.xpose.msra.mxu0 0.0
    %917 = vmatprep.subr.mxu0 0.0
    %918 = vmatpush2.xpose.msra.mxu0 0.0
    %919 = vmatprep.subr.mxu0 0.0
    %920 = vmatpush2.xpose.msra.mxu0 0.0
    %921 = vmatprep.subr.mxu0 0.0
    %922 = vmatpush2.xpose.msra.mxu0 0.0
    %923 = vmatprep.subr.mxu0 0.0
    %924 = vmatpush2.xpose.msra.mxu0 0.0
    %925 = vmatprep.subr.mxu0 0.0
    %926 = vmatpush2.xpose.msra.mxu0 0.0
    %927 = vmatprep.subr.mxu0 0.0
    %928 = vmatpush2.xpose.msra.mxu0 0.0
    %929 = vmatprep.subr.mxu0 0.0
    %930 = vmatpush2.xpose.msra.mxu0 0.0
    %931 = vmatprep.mubr.f32.mxu0 0.0
    %v932 = vand.u32 %v300, 4294901760
    %933 = vmatmul.mubr.f32.gmra.mxu0 %v932
    %v934 = vpop.f32.mrf.mxu0
    %v935 = vadd.f32 %v808, %v934
    %v936 = vpop.f32.mrf.mxu0
    %937 = vmatprep.mubr.f32.mxu0 0.0
    %v938 = vand.u32 %v303, 4294901760
    %939 = vmatmul.mubr.f32.gmra.mxu0 %v938
    %v940 = vpop.f32.mrf.mxu0
    %v941 = vadd.f32 %v816, %v940
    %v942 = vpop.f32.mrf.mxu0
    %943 = vdwg.mxu0
    %944 = vmatprep.subr.mxu0 0.0
    %v945 = vand.u32 %v351, 4294901760
    %946 = vmatpush1.xpose.msra.mxu0 %v945
    %947 = vmatprep.subr.mxu0 0.0
    %v948 = vand.u32 %v348, 4294901760
    %949 = vmatpush1.xpose.msra.mxu0 %v948
    %950 = vmatprep.subr.mxu0 0.0
    %v951 = vand.u32 %v345, 4294901760
    %952 = vmatpush1.xpose.msra.mxu0 %v951
    %953 = vmatprep.subr.mxu0 0.0
    %v954 = vand.u32 %v342, 4294901760
    %955 = vmatpush1.xpose.msra.mxu0 %v954
    %956 = vmatprep.subr.mxu0 0.0
    %v957 = vand.u32 %v339, 4294901760
    %958 = vmatpush1.xpose.msra.mxu0 %v957
    %959 = vmatprep.subr.mxu0 0.0
    %v960 = vand.u32 %v336, 4294901760
    %961 = vmatpush1.xpose.msra.mxu0 %v960
    %962 = vmatprep.subr.mxu0 0.0
    %v963 = vand.u32 %v333, 4294901760
    %964 = vmatpush1.xpose.msra.mxu0 %v963
    %965 = vmatprep.subr.mxu0 0.0
    %v966 = vand.u32 %v330, 4294901760
    %967 = vmatpush1.xpose.msra.mxu0 %v966
    %968 = vmatprep.subr.mxu0 0.0
    %v969 = vand.u32 %v327, 4294901760
    %970 = vmatpush1.xpose.msra.mxu0 %v969
    %971 = vmatprep.subr.mxu0 0.0
    %v972 = vand.u32 %v324, 4294901760
    %973 = vmatpush1.xpose.msra.mxu0 %v972
    %974 = vmatprep.subr.mxu0 0.0
    %v975 = vand.u32 %v321, 4294901760
    %976 = vmatpush1.xpose.msra.mxu0 %v975
    %977 = vmatprep.subr.mxu0 0.0
    %v978 = vand.u32 %v318, 4294901760
    %979 = vmatpush1.xpose.msra.mxu0 %v978
    %980 = vmatprep.subr.mxu0 0.0
    %v981 = vand.u32 %v315, 4294901760
    %982 = vmatpush1.xpose.msra.mxu0 %v981
    %983 = vmatprep.subr.mxu0 0.0
    %v984 = vand.u32 %v312, 4294901760
    %985 = vmatpush1.xpose.msra.mxu0 %v984
    %986 = vmatprep.subr.mxu0 0.0
    %v987 = vand.u32 %v309, 4294901760
    %988 = vmatpush1.xpose.msra.mxu0 %v987
    %989 = vmatprep.subr.mxu0 0.0
    %v990 = vand.u32 %v306, 4294901760
    %991 = vmatpush1.xpose.msra.mxu0 %v990
    %992 = vmatprep.subr.mxu0 0.0
    %993 = vmatpush2.xpose.msra.mxu0 0.0
    %994 = vmatprep.subr.mxu0 0.0
    %995 = vmatpush2.xpose.msra.mxu0 0.0
    %996 = vmatprep.subr.mxu0 0.0
    %997 = vmatpush2.xpose.msra.mxu0 0.0
    %998 = vmatprep.subr.mxu0 0.0
    %999 = vmatpush2.xpose.msra.mxu0 0.0
    %1000 = vmatprep.subr.mxu0 0.0
    %1001 = vmatpush2.xpose.msra.mxu0 0.0
    %1002 = vmatprep.subr.mxu0 0.0
    %1003 = vmatpush2.xpose.msra.mxu0 0.0
    %1004 = vmatprep.subr.mxu0 0.0
    %1005 = vmatpush2.xpose.msra.mxu0 0.0
    %1006 = vmatprep.subr.mxu0 0.0
    %1007 = vmatpush2.xpose.msra.mxu0 0.0
    %1008 = vmatprep.subr.mxu0 0.0
    %1009 = vmatpush2.xpose.msra.mxu0 0.0
    %1010 = vmatprep.subr.mxu0 0.0
    %1011 = vmatpush2.xpose.msra.mxu0 0.0
    %1012 = vmatprep.subr.mxu0 0.0
    %1013 = vmatpush2.xpose.msra.mxu0 0.0
    %1014 = vmatprep.subr.mxu0 0.0
    %1015 = vmatpush2.xpose.msra.mxu0 0.0
    %1016 = vmatprep.subr.mxu0 0.0
    %1017 = vmatpush2.xpose.msra.mxu0 0.0
    %1018 = vmatprep.subr.mxu0 0.0
    %1019 = vmatpush2.xpose.msra.mxu0 0.0
    %1020 = vmatprep.subr.mxu0 0.0
    %1021 = vmatpush2.xpose.msra.mxu0 0.0
    %1022 = vmatprep.subr.mxu0 0.0
    %1023 = vmatpush2.xpose.msra.mxu0 0.0
    %1024 = vmatprep.mubr.f32.mxu0 0.0
    %v1025 = vand.u32 %v300, 4294901760
    %1026 = vmatmul.mubr.f32.gmra.mxu0 %v1025
    %v1027 = vpop.f32.mrf.mxu0
    %v1028 = vadd.f32 %v935, %v1027
    %v1029 = vpop.f32.mrf.mxu0
    %1030 = vmatprep.mubr.f32.mxu0 0.0
    %v1031 = vand.u32 %v303, 4294901760
    %1032 = vmatmul.mubr.f32.gmra.mxu0 %v1031
    %v1033 = vpop.f32.mrf.mxu0
    %v1034 = vadd.f32 %v941, %v1033
    %v1035 = vpop.f32.mrf.mxu0
    %1036 = vdwg.mxu0
    %v1038 = vsel %vm298, %v28, 0
    %v1041 = vsel %vm298, %v29, 0
    %v1044 = vsel %vm298, %v58, 0
    %v1047 = vsel %vm298, %v59, 0
    %v1050 = vsel %vm298, %v60, 0
    %v1053 = vsel %vm298, %v61, 0
    %v1056 = vsel %vm298, %v62, 0
    %v1059 = vsel %vm298, %v63, 0
    %v1062 = vsel %vm298, %v64, 0
    %v1065 = vsel %vm298, %v65, 0
    %v1068 = vsel %vm298, %v66, 0
    %v1071 = vsel %vm298, %v67, 0
    %v1074 = vsel %vm298, %v68, 0
    %v1077 = vsel %vm298, %v69, 0
    %v1080 = vsel %vm298, %v70, 0
    %v1083 = vsel %vm298, %v71, 0
    %v1086 = vsel %vm298, %v72, 0
    %v1089 = vsel %vm298, %v73, 0
    %1091 = vmatprep.subr.mxu0 0.0
    %v1092 = vand.u32 %v1089, 4294901760
    %1093 = vmatpush1.xpose.msra.mxu0 %v1092
    %1094 = vmatprep.subr.mxu0 0.0
    %v1095 = vand.u32 %v1086, 4294901760
    %1096 = vmatpush1.xpose.msra.mxu0 %v1095
    %1097 = vmatprep.subr.mxu0 0.0
    %v1098 = vand.u32 %v1083, 4294901760
    %1099 = vmatpush1.xpose.msra.mxu0 %v1098
    %1100 = vmatprep.subr.mxu0 0.0
    %v1101 = vand.u32 %v1080, 4294901760
    %1102 = vmatpush1.xpose.msra.mxu0 %v1101
    %1103 = vmatprep.subr.mxu0 0.0
    %v1104 = vand.u32 %v1077, 4294901760
    %1105 = vmatpush1.xpose.msra.mxu0 %v1104
    %1106 = vmatprep.subr.mxu0 0.0
    %v1107 = vand.u32 %v1074, 4294901760
    %1108 = vmatpush1.xpose.msra.mxu0 %v1107
    %1109 = vmatprep.subr.mxu0 0.0
    %v1110 = vand.u32 %v1071, 4294901760
    %1111 = vmatpush1.xpose.msra.mxu0 %v1110
    %1112 = vmatprep.subr.mxu0 0.0
    %v1113 = vand.u32 %v1068, 4294901760
    %1114 = vmatpush1.xpose.msra.mxu0 %v1113
    %1115 = vmatprep.subr.mxu0 0.0
    %v1116 = vand.u32 %v1065, 4294901760
    %1117 = vmatpush1.xpose.msra.mxu0 %v1116
    %1118 = vmatprep.subr.mxu0 0.0
    %v1119 = vand.u32 %v1062, 4294901760
    %1120 = vmatpush1.xpose.msra.mxu0 %v1119
    %1121 = vmatprep.subr.mxu0 0.0
    %v1122 = vand.u32 %v1059, 4294901760
    %1123 = vmatpush1.xpose.msra.mxu0 %v1122
    %1124 = vmatprep.subr.mxu0 0.0
    %v1125 = vand.u32 %v1056, 4294901760
    %1126 = vmatpush1.xpose.msra.mxu0 %v1125
    %1127 = vmatprep.subr.mxu0 0.0
    %v1128 = vand.u32 %v1053, 4294901760
    %1129 = vmatpush1.xpose.msra.mxu0 %v1128
    %1130 = vmatprep.subr.mxu0 0.0
    %v1131 = vand.u32 %v1050, 4294901760
    %1132 = vmatpush1.xpose.msra.mxu0 %v1131
    %1133 = vmatprep.subr.mxu0 0.0
    %v1134 = vand.u32 %v1047, 4294901760
    %1135 = vmatpush1.xpose.msra.mxu0 %v1134
    %1136 = vmatprep.subr.mxu0 0.0
    %v1137 = vand.u32 %v1044, 4294901760
    %1138 = vmatpush1.xpose.msra.mxu0 %v1137
    %1139 = vmatprep.subr.mxu0 0.0
    %1140 = vmatpush2.xpose.msra.mxu0 0.0
    %1141 = vmatprep.subr.mxu0 0.0
    %1142 = vmatpush2.xpose.msra.mxu0 0.0
    %1143 = vmatprep.subr.mxu0 0.0
    %1144 = vmatpush2.xpose.msra.mxu0 0.0
    %1145 = vmatprep.subr.mxu0 0.0
    %1146 = vmatpush2.xpose.msra.mxu0 0.0
    %1147 = vmatprep.subr.mxu0 0.0
    %1148 = vmatpush2.xpose.msra.mxu0 0.0
    %1149 = vmatprep.subr.mxu0 0.0
    %1150 = vmatpush2.xpose.msra.mxu0 0.0
    %1151 = vmatprep.subr.mxu0 0.0
    %1152 = vmatpush2.xpose.msra.mxu0 0.0
    %1153 = vmatprep.subr.mxu0 0.0
    %1154 = vmatpush2.xpose.msra.mxu0 0.0
    %1155 = vmatprep.subr.mxu0 0.0
    %1156 = vmatpush2.xpose.msra.mxu0 0.0
    %1157 = vmatprep.subr.mxu0 0.0
    %1158 = vmatpush2.xpose.msra.mxu0 0.0
    %1159 = vmatprep.subr.mxu0 0.0
    %1160 = vmatpush2.xpose.msra.mxu0 0.0
    %1161 = vmatprep.subr.mxu0 0.0
    %1162 = vmatpush2.xpose.msra.mxu0 0.0
    %1163 = vmatprep.subr.mxu0 0.0
    %1164 = vmatpush2.xpose.msra.mxu0 0.0
    %1165 = vmatprep.subr.mxu0 0.0
    %1166 = vmatpush2.xpose.msra.mxu0 0.0
    %1167 = vmatprep.subr.mxu0 0.0
    %1168 = vmatpush2.xpose.msra.mxu0 0.0
    %1169 = vmatprep.subr.mxu0 0.0
    %1170 = vmatpush2.xpose.msra.mxu0 0.0
    %1171 = vmatprep.mubr.f32.mxu0 0.0
    %v1172 = vand.u32 %v1038, 4294901760
    %v1173 = vsub.f32 %v1038, %v1172
    %v1174 = vand.u32 %v1173, 4294901760
    %v1175 = vsub.f32 %v1173, %v1174
    %v1176 = vand.u32 %v1175, 4294901760
    %1177 = vmatmul.mubr.f32.gmra.mxu0 %v1176
    %v1178 = vpop.f32.mrf.mxu0
    %v1179 = vadd.f32 0.0, %v1178
    %v1180 = vpop.f32.mrf.mxu0
    %1181 = vmatprep.mubr.f32.mxu0 0.0
    %v1182 = vand.u32 %v1041, 4294901760
    %v1183 = vsub.f32 %v1041, %v1182
    %v1184 = vand.u32 %v1183, 4294901760
    %v1185 = vsub.f32 %v1183, %v1184
    %v1186 = vand.u32 %v1185, 4294901760
    %1187 = vmatmul.mubr.f32.gmra.mxu0 %v1186
    %v1188 = vpop.f32.mrf.mxu0
    %v1189 = vadd.f32 0.0, %v1188
    %v1190 = vpop.f32.mrf.mxu0
    %1191 = vdwg.mxu0
    %1192 = vmatprep.subr.mxu0 0.0
    %v1193 = vand.u32 %v1089, 4294901760
    %v1194 = vsub.f32 %v1089, %v1193
    %v1195 = vand.u32 %v1194, 4294901760
    %v1196 = vsub.f32 %v1194, %v1195
    %v1197 = vand.u32 %v1196, 4294901760
    %1198 = vmatpush1.xpose.msra.mxu0 %v1197
    %1199 = vmatprep.subr.mxu0 0.0
    %v1200 = vand.u32 %v1086, 4294901760
    %v1201 = vsub.f32 %v1086, %v1200
    %v1202 = vand.u32 %v1201, 4294901760
    %v1203 = vsub.f32 %v1201, %v1202
    %v1204 = vand.u32 %v1203, 4294901760
    %1205 = vmatpush1.xpose.msra.mxu0 %v1204
    %1206 = vmatprep.subr.mxu0 0.0
    %v1207 = vand.u32 %v1083, 4294901760
    %v1208 = vsub.f32 %v1083, %v1207
    %v1209 = vand.u32 %v1208, 4294901760
    %v1210 = vsub.f32 %v1208, %v1209
    %v1211 = vand.u32 %v1210, 4294901760
    %1212 = vmatpush1.xpose.msra.mxu0 %v1211
    %1213 = vmatprep.subr.mxu0 0.0
    %v1214 = vand.u32 %v1080, 4294901760
    %v1215 = vsub.f32 %v1080, %v1214
    %v1216 = vand.u32 %v1215, 4294901760
    %v1217 = vsub.f32 %v1215, %v1216
    %v1218 = vand.u32 %v1217, 4294901760
    %1219 = vmatpush1.xpose.msra.mxu0 %v1218
    %1220 = vmatprep.subr.mxu0 0.0
    %v1221 = vand.u32 %v1077, 4294901760
    %v1222 = vsub.f32 %v1077, %v1221
    %v1223 = vand.u32 %v1222, 4294901760
    %v1224 = vsub.f32 %v1222, %v1223
    %v1225 = vand.u32 %v1224, 4294901760
    %1226 = vmatpush1.xpose.msra.mxu0 %v1225
    %1227 = vmatprep.subr.mxu0 0.0
    %v1228 = vand.u32 %v1074, 4294901760
    %v1229 = vsub.f32 %v1074, %v1228
    %v1230 = vand.u32 %v1229, 4294901760
    %v1231 = vsub.f32 %v1229, %v1230
    %v1232 = vand.u32 %v1231, 4294901760
    %1233 = vmatpush1.xpose.msra.mxu0 %v1232
    %1234 = vmatprep.subr.mxu0 0.0
    %v1235 = vand.u32 %v1071, 4294901760
    %v1236 = vsub.f32 %v1071, %v1235
    %v1237 = vand.u32 %v1236, 4294901760
    %v1238 = vsub.f32 %v1236, %v1237
    %v1239 = vand.u32 %v1238, 4294901760
    %1240 = vmatpush1.xpose.msra.mxu0 %v1239
    %1241 = vmatprep.subr.mxu0 0.0
    %v1242 = vand.u32 %v1068, 4294901760
    %v1243 = vsub.f32 %v1068, %v1242
    %v1244 = vand.u32 %v1243, 4294901760
    %v1245 = vsub.f32 %v1243, %v1244
    %v1246 = vand.u32 %v1245, 4294901760
    %1247 = vmatpush1.xpose.msra.mxu0 %v1246
    %1248 = vmatprep.subr.mxu0 0.0
    %v1249 = vand.u32 %v1065, 4294901760
    %v1250 = vsub.f32 %v1065, %v1249
    %v1251 = vand.u32 %v1250, 4294901760
    %v1252 = vsub.f32 %v1250, %v1251
    %v1253 = vand.u32 %v1252, 4294901760
    %1254 = vmatpush1.xpose.msra.mxu0 %v1253
    %1255 = vmatprep.subr.mxu0 0.0
    %v1256 = vand.u32 %v1062, 4294901760
    %v1257 = vsub.f32 %v1062, %v1256
    %v1258 = vand.u32 %v1257, 4294901760
    %v1259 = vsub.f32 %v1257, %v1258
    %v1260 = vand.u32 %v1259, 4294901760
    %1261 = vmatpush1.xpose.msra.mxu0 %v1260
    %1262 = vmatprep.subr.mxu0 0.0
    %v1263 = vand.u32 %v1059, 4294901760
    %v1264 = vsub.f32 %v1059, %v1263
    %v1265 = vand.u32 %v1264, 4294901760
    %v1266 = vsub.f32 %v1264, %v1265
    %v1267 = vand.u32 %v1266, 4294901760
    %1268 = vmatpush1.xpose.msra.mxu0 %v1267
    %1269 = vmatprep.subr.mxu0 0.0
    %v1270 = vand.u32 %v1056, 4294901760
    %v1271 = vsub.f32 %v1056, %v1270
    %v1272 = vand.u32 %v1271, 4294901760
    %v1273 = vsub.f32 %v1271, %v1272
    %v1274 = vand.u32 %v1273, 4294901760
    %1275 = vmatpush1.xpose.msra.mxu0 %v1274
    %1276 = vmatprep.subr.mxu0 0.0
    %v1277 = vand.u32 %v1053, 4294901760
    %v1278 = vsub.f32 %v1053, %v1277
    %v1279 = vand.u32 %v1278, 4294901760
    %v1280 = vsub.f32 %v1278, %v1279
    %v1281 = vand.u32 %v1280, 4294901760
    %1282 = vmatpush1.xpose.msra.mxu0 %v1281
    %1283 = vmatprep.subr.mxu0 0.0
    %v1284 = vand.u32 %v1050, 4294901760
    %v1285 = vsub.f32 %v1050, %v1284
    %v1286 = vand.u32 %v1285, 4294901760
    %v1287 = vsub.f32 %v1285, %v1286
    %v1288 = vand.u32 %v1287, 4294901760
    %1289 = vmatpush1.xpose.msra.mxu0 %v1288
    %1290 = vmatprep.subr.mxu0 0.0
    %v1291 = vand.u32 %v1047, 4294901760
    %v1292 = vsub.f32 %v1047, %v1291
    %v1293 = vand.u32 %v1292, 4294901760
    %v1294 = vsub.f32 %v1292, %v1293
    %v1295 = vand.u32 %v1294, 4294901760
    %1296 = vmatpush1.xpose.msra.mxu0 %v1295
    %1297 = vmatprep.subr.mxu0 0.0
    %v1298 = vand.u32 %v1044, 4294901760
    %v1299 = vsub.f32 %v1044, %v1298
    %v1300 = vand.u32 %v1299, 4294901760
    %v1301 = vsub.f32 %v1299, %v1300
    %v1302 = vand.u32 %v1301, 4294901760
    %1303 = vmatpush1.xpose.msra.mxu0 %v1302
    %1304 = vmatprep.subr.mxu0 0.0
    %1305 = vmatpush2.xpose.msra.mxu0 0.0
    %1306 = vmatprep.subr.mxu0 0.0
    %1307 = vmatpush2.xpose.msra.mxu0 0.0
    %1308 = vmatprep.subr.mxu0 0.0
    %1309 = vmatpush2.xpose.msra.mxu0 0.0
    %1310 = vmatprep.subr.mxu0 0.0
    %1311 = vmatpush2.xpose.msra.mxu0 0.0
    %1312 = vmatprep.subr.mxu0 0.0
    %1313 = vmatpush2.xpose.msra.mxu0 0.0
    %1314 = vmatprep.subr.mxu0 0.0
    %1315 = vmatpush2.xpose.msra.mxu0 0.0
    %1316 = vmatprep.subr.mxu0 0.0
    %1317 = vmatpush2.xpose.msra.mxu0 0.0
    %1318 = vmatprep.subr.mxu0 0.0
    %1319 = vmatpush2.xpose.msra.mxu0 0.0
    %1320 = vmatprep.subr.mxu0 0.0
    %1321 = vmatpush2.xpose.msra.mxu0 0.0
    %1322 = vmatprep.subr.mxu0 0.0
    %1323 = vmatpush2.xpose.msra.mxu0 0.0
    %1324 = vmatprep.subr.mxu0 0.0
    %1325 = vmatpush2.xpose.msra.mxu0 0.0
    %1326 = vmatprep.subr.mxu0 0.0
    %1327 = vmatpush2.xpose.msra.mxu0 0.0
    %1328 = vmatprep.subr.mxu0 0.0
    %1329 = vmatpush2.xpose.msra.mxu0 0.0
    %1330 = vmatprep.subr.mxu0 0.0
    %1331 = vmatpush2.xpose.msra.mxu0 0.0
    %1332 = vmatprep.subr.mxu0 0.0
    %1333 = vmatpush2.xpose.msra.mxu0 0.0
    %1334 = vmatprep.subr.mxu0 0.0
    %1335 = vmatpush2.xpose.msra.mxu0 0.0
    %1336 = vmatprep.mubr.f32.mxu0 0.0
    %v1337 = vand.u32 %v1038, 4294901760
    %1338 = vmatmul.mubr.f32.gmra.mxu0 %v1337
    %v1339 = vpop.f32.mrf.mxu0
    %v1340 = vadd.f32 %v1179, %v1339
    %v1341 = vpop.f32.mrf.mxu0
    %1342 = vmatprep.mubr.f32.mxu0 0.0
    %v1343 = vand.u32 %v1041, 4294901760
    %1344 = vmatmul.mubr.f32.gmra.mxu0 %v1343
    %v1345 = vpop.f32.mrf.mxu0
    %v1346 = vadd.f32 %v1189, %v1345
    %v1347 = vpop.f32.mrf.mxu0
    %1348 = vdwg.mxu0
    %1349 = vmatprep.subr.mxu0 0.0
    %v1350 = vand.u32 %v1089, 4294901760
    %v1351 = vsub.f32 %v1089, %v1350
    %1352 = vmatpush1.xpose.msra.mxu0 %v1351
    %1353 = vmatprep.subr.mxu0 0.0
    %v1354 = vand.u32 %v1086, 4294901760
    %v1355 = vsub.f32 %v1086, %v1354
    %1356 = vmatpush1.xpose.msra.mxu0 %v1355
    %1357 = vmatprep.subr.mxu0 0.0
    %v1358 = vand.u32 %v1083, 4294901760
    %v1359 = vsub.f32 %v1083, %v1358
    %1360 = vmatpush1.xpose.msra.mxu0 %v1359
    %1361 = vmatprep.subr.mxu0 0.0
    %v1362 = vand.u32 %v1080, 4294901760
    %v1363 = vsub.f32 %v1080, %v1362
    %1364 = vmatpush1.xpose.msra.mxu0 %v1363
    %1365 = vmatprep.subr.mxu0 0.0
    %v1366 = vand.u32 %v1077, 4294901760
    %v1367 = vsub.f32 %v1077, %v1366
    %1368 = vmatpush1.xpose.msra.mxu0 %v1367
    %1369 = vmatprep.subr.mxu0 0.0
    %v1370 = vand.u32 %v1074, 4294901760
    %v1371 = vsub.f32 %v1074, %v1370
    %1372 = vmatpush1.xpose.msra.mxu0 %v1371
    %1373 = vmatprep.subr.mxu0 0.0
    %v1374 = vand.u32 %v1071, 4294901760
    %v1375 = vsub.f32 %v1071, %v1374
    %1376 = vmatpush1.xpose.msra.mxu0 %v1375
    %1377 = vmatprep.subr.mxu0 0.0
    %v1378 = vand.u32 %v1068, 4294901760
    %v1379 = vsub.f32 %v1068, %v1378
    %1380 = vmatpush1.xpose.msra.mxu0 %v1379
    %1381 = vmatprep.subr.mxu0 0.0
    %v1382 = vand.u32 %v1065, 4294901760
    %v1383 = vsub.f32 %v1065, %v1382
    %1384 = vmatpush1.xpose.msra.mxu0 %v1383
    %1385 = vmatprep.subr.mxu0 0.0
    %v1386 = vand.u32 %v1062, 4294901760
    %v1387 = vsub.f32 %v1062, %v1386
    %1388 = vmatpush1.xpose.msra.mxu0 %v1387
    %1389 = vmatprep.subr.mxu0 0.0
    %v1390 = vand.u32 %v1059, 4294901760
    %v1391 = vsub.f32 %v1059, %v1390
    %1392 = vmatpush1.xpose.msra.mxu0 %v1391
    %1393 = vmatprep.subr.mxu0 0.0
    %v1394 = vand.u32 %v1056, 4294901760
    %v1395 = vsub.f32 %v1056, %v1394
    %1396 = vmatpush1.xpose.msra.mxu0 %v1395
    %1397 = vmatprep.subr.mxu0 0.0
    %v1398 = vand.u32 %v1053, 4294901760
    %v1399 = vsub.f32 %v1053, %v1398
    %1400 = vmatpush1.xpose.msra.mxu0 %v1399
    %1401 = vmatprep.subr.mxu0 0.0
    %v1402 = vand.u32 %v1050, 4294901760
    %v1403 = vsub.f32 %v1050, %v1402
    %1404 = vmatpush1.xpose.msra.mxu0 %v1403
    %1405 = vmatprep.subr.mxu0 0.0
    %v1406 = vand.u32 %v1047, 4294901760
    %v1407 = vsub.f32 %v1047, %v1406
    %1408 = vmatpush1.xpose.msra.mxu0 %v1407
    %1409 = vmatprep.subr.mxu0 0.0
    %v1410 = vand.u32 %v1044, 4294901760
    %v1411 = vsub.f32 %v1044, %v1410
    %1412 = vmatpush1.xpose.msra.mxu0 %v1411
    %1413 = vmatprep.subr.mxu0 0.0
    %1414 = vmatpush2.xpose.msra.mxu0 0.0
    %1415 = vmatprep.subr.mxu0 0.0
    %1416 = vmatpush2.xpose.msra.mxu0 0.0
    %1417 = vmatprep.subr.mxu0 0.0
    %1418 = vmatpush2.xpose.msra.mxu0 0.0
    %1419 = vmatprep.subr.mxu0 0.0
    %1420 = vmatpush2.xpose.msra.mxu0 0.0
    %1421 = vmatprep.subr.mxu0 0.0
    %1422 = vmatpush2.xpose.msra.mxu0 0.0
    %1423 = vmatprep.subr.mxu0 0.0
    %1424 = vmatpush2.xpose.msra.mxu0 0.0
    %1425 = vmatprep.subr.mxu0 0.0
    %1426 = vmatpush2.xpose.msra.mxu0 0.0
    %1427 = vmatprep.subr.mxu0 0.0
    %1428 = vmatpush2.xpose.msra.mxu0 0.0
    %1429 = vmatprep.subr.mxu0 0.0
    %1430 = vmatpush2.xpose.msra.mxu0 0.0
    %1431 = vmatprep.subr.mxu0 0.0
    %1432 = vmatpush2.xpose.msra.mxu0 0.0
    %1433 = vmatprep.subr.mxu0 0.0
    %1434 = vmatpush2.xpose.msra.mxu0 0.0
    %1435 = vmatprep.subr.mxu0 0.0
    %1436 = vmatpush2.xpose.msra.mxu0 0.0
    %1437 = vmatprep.subr.mxu0 0.0
    %1438 = vmatpush2.xpose.msra.mxu0 0.0
    %1439 = vmatprep.subr.mxu0 0.0
    %1440 = vmatpush2.xpose.msra.mxu0 0.0
    %1441 = vmatprep.subr.mxu0 0.0
    %1442 = vmatpush2.xpose.msra.mxu0 0.0
    %1443 = vmatprep.subr.mxu0 0.0
    %1444 = vmatpush2.xpose.msra.mxu0 0.0
    %1445 = vmatprep.mubr.f32.mxu0 0.0
    %v1446 = vand.u32 %v1038, 4294901760
    %v1447 = vsub.f32 %v1038, %v1446
    %1448 = vmatmul.mubr.f32.gmra.mxu0 %v1447
    %v1449 = vpop.f32.mrf.mxu0
    %v1450 = vadd.f32 %v1340, %v1449
    %v1451 = vpop.f32.mrf.mxu0
    %1452 = vmatprep.mubr.f32.mxu0 0.0
    %v1453 = vand.u32 %v1041, 4294901760
    %v1454 = vsub.f32 %v1041, %v1453
    %1455 = vmatmul.mubr.f32.gmra.mxu0 %v1454
    %v1456 = vpop.f32.mrf.mxu0
    %v1457 = vadd.f32 %v1346, %v1456
    %v1458 = vpop.f32.mrf.mxu0
    %1459 = vdwg.mxu0
    %1460 = vmatprep.subr.mxu0 0.0
    %v1461 = vand.u32 %v1089, 4294901760
    %1462 = vmatpush1.xpose.msra.mxu0 %v1461
    %1463 = vmatprep.subr.mxu0 0.0
    %v1464 = vand.u32 %v1086, 4294901760
    %1465 = vmatpush1.xpose.msra.mxu0 %v1464
    %1466 = vmatprep.subr.mxu0 0.0
    %v1467 = vand.u32 %v1083, 4294901760
    %1468 = vmatpush1.xpose.msra.mxu0 %v1467
    %1469 = vmatprep.subr.mxu0 0.0
    %v1470 = vand.u32 %v1080, 4294901760
    %1471 = vmatpush1.xpose.msra.mxu0 %v1470
    %1472 = vmatprep.subr.mxu0 0.0
    %v1473 = vand.u32 %v1077, 4294901760
    %1474 = vmatpush1.xpose.msra.mxu0 %v1473
    %1475 = vmatprep.subr.mxu0 0.0
    %v1476 = vand.u32 %v1074, 4294901760
    %1477 = vmatpush1.xpose.msra.mxu0 %v1476
    %1478 = vmatprep.subr.mxu0 0.0
    %v1479 = vand.u32 %v1071, 4294901760
    %1480 = vmatpush1.xpose.msra.mxu0 %v1479
    %1481 = vmatprep.subr.mxu0 0.0
    %v1482 = vand.u32 %v1068, 4294901760
    %1483 = vmatpush1.xpose.msra.mxu0 %v1482
    %1484 = vmatprep.subr.mxu0 0.0
    %v1485 = vand.u32 %v1065, 4294901760
    %1486 = vmatpush1.xpose.msra.mxu0 %v1485
    %1487 = vmatprep.subr.mxu0 0.0
    %v1488 = vand.u32 %v1062, 4294901760
    %1489 = vmatpush1.xpose.msra.mxu0 %v1488
    %1490 = vmatprep.subr.mxu0 0.0
    %v1491 = vand.u32 %v1059, 4294901760
    %1492 = vmatpush1.xpose.msra.mxu0 %v1491
    %1493 = vmatprep.subr.mxu0 0.0
    %v1494 = vand.u32 %v1056, 4294901760
    %1495 = vmatpush1.xpose.msra.mxu0 %v1494
    %1496 = vmatprep.subr.mxu0 0.0
    %v1497 = vand.u32 %v1053, 4294901760
    %1498 = vmatpush1.xpose.msra.mxu0 %v1497
    %1499 = vmatprep.subr.mxu0 0.0
    %v1500 = vand.u32 %v1050, 4294901760
    %1501 = vmatpush1.xpose.msra.mxu0 %v1500
    %1502 = vmatprep.subr.mxu0 0.0
    %v1503 = vand.u32 %v1047, 4294901760
    %1504 = vmatpush1.xpose.msra.mxu0 %v1503
    %1505 = vmatprep.subr.mxu0 0.0
    %v1506 = vand.u32 %v1044, 4294901760
    %1507 = vmatpush1.xpose.msra.mxu0 %v1506
    %1508 = vmatprep.subr.mxu0 0.0
    %1509 = vmatpush2.xpose.msra.mxu0 0.0
    %1510 = vmatprep.subr.mxu0 0.0
    %1511 = vmatpush2.xpose.msra.mxu0 0.0
    %1512 = vmatprep.subr.mxu0 0.0
    %1513 = vmatpush2.xpose.msra.mxu0 0.0
    %1514 = vmatprep.subr.mxu0 0.0
    %1515 = vmatpush2.xpose.msra.mxu0 0.0
    %1516 = vmatprep.subr.mxu0 0.0
    %1517 = vmatpush2.xpose.msra.mxu0 0.0
    %1518 = vmatprep.subr.mxu0 0.0
    %1519 = vmatpush2.xpose.msra.mxu0 0.0
    %1520 = vmatprep.subr.mxu0 0.0
    %1521 = vmatpush2.xpose.msra.mxu0 0.0
    %1522 = vmatprep.subr.mxu0 0.0
    %1523 = vmatpush2.xpose.msra.mxu0 0.0
    %1524 = vmatprep.subr.mxu0 0.0
    %1525 = vmatpush2.xpose.msra.mxu0 0.0
    %1526 = vmatprep.subr.mxu0 0.0
    %1527 = vmatpush2.xpose.msra.mxu0 0.0
    %1528 = vmatprep.subr.mxu0 0.0
    %1529 = vmatpush2.xpose.msra.mxu0 0.0
    %1530 = vmatprep.subr.mxu0 0.0
    %1531 = vmatpush2.xpose.msra.mxu0 0.0
    %1532 = vmatprep.subr.mxu0 0.0
    %1533 = vmatpush2.xpose.msra.mxu0 0.0
    %1534 = vmatprep.subr.mxu0 0.0
    %1535 = vmatpush2.xpose.msra.mxu0 0.0
    %1536 = vmatprep.subr.mxu0 0.0
    %1537 = vmatpush2.xpose.msra.mxu0 0.0
    %1538 = vmatprep.subr.mxu0 0.0
    %1539 = vmatpush2.xpose.msra.mxu0 0.0
    %1540 = vmatprep.mubr.f32.mxu0 0.0
    %v1541 = vand.u32 %v1038, 4294901760
    %v1542 = vsub.f32 %v1038, %v1541
    %v1543 = vand.u32 %v1542, 4294901760
    %1544 = vmatmul.mubr.f32.gmra.mxu0 %v1543
    %v1545 = vpop.f32.mrf.mxu0
    %v1546 = vadd.f32 %v1450, %v1545
    %v1547 = vpop.f32.mrf.mxu0
    %1548 = vmatprep.mubr.f32.mxu0 0.0
    %v1549 = vand.u32 %v1041, 4294901760
    %v1550 = vsub.f32 %v1041, %v1549
    %v1551 = vand.u32 %v1550, 4294901760
    %1552 = vmatmul.mubr.f32.gmra.mxu0 %v1551
    %v1553 = vpop.f32.mrf.mxu0
    %v1554 = vadd.f32 %v1457, %v1553
    %v1555 = vpop.f32.mrf.mxu0
    %1556 = vdwg.mxu0
    %1557 = vmatprep.subr.mxu0 0.0
    %v1558 = vand.u32 %v1089, 4294901760
    %v1559 = vsub.f32 %v1089, %v1558
    %v1560 = vand.u32 %v1559, 4294901760
    %1561 = vmatpush1.xpose.msra.mxu0 %v1560
    %1562 = vmatprep.subr.mxu0 0.0
    %v1563 = vand.u32 %v1086, 4294901760
    %v1564 = vsub.f32 %v1086, %v1563
    %v1565 = vand.u32 %v1564, 4294901760
    %1566 = vmatpush1.xpose.msra.mxu0 %v1565
    %1567 = vmatprep.subr.mxu0 0.0
    %v1568 = vand.u32 %v1083, 4294901760
    %v1569 = vsub.f32 %v1083, %v1568
    %v1570 = vand.u32 %v1569, 4294901760
    %1571 = vmatpush1.xpose.msra.mxu0 %v1570
    %1572 = vmatprep.subr.mxu0 0.0
    %v1573 = vand.u32 %v1080, 4294901760
    %v1574 = vsub.f32 %v1080, %v1573
    %v1575 = vand.u32 %v1574, 4294901760
    %1576 = vmatpush1.xpose.msra.mxu0 %v1575
    %1577 = vmatprep.subr.mxu0 0.0
    %v1578 = vand.u32 %v1077, 4294901760
    %v1579 = vsub.f32 %v1077, %v1578
    %v1580 = vand.u32 %v1579, 4294901760
    %1581 = vmatpush1.xpose.msra.mxu0 %v1580
    %1582 = vmatprep.subr.mxu0 0.0
    %v1583 = vand.u32 %v1074, 4294901760
    %v1584 = vsub.f32 %v1074, %v1583
    %v1585 = vand.u32 %v1584, 4294901760
    %1586 = vmatpush1.xpose.msra.mxu0 %v1585
    %1587 = vmatprep.subr.mxu0 0.0
    %v1588 = vand.u32 %v1071, 4294901760
    %v1589 = vsub.f32 %v1071, %v1588
    %v1590 = vand.u32 %v1589, 4294901760
    %1591 = vmatpush1.xpose.msra.mxu0 %v1590
    %1592 = vmatprep.subr.mxu0 0.0
    %v1593 = vand.u32 %v1068, 4294901760
    %v1594 = vsub.f32 %v1068, %v1593
    %v1595 = vand.u32 %v1594, 4294901760
    %1596 = vmatpush1.xpose.msra.mxu0 %v1595
    %1597 = vmatprep.subr.mxu0 0.0
    %v1598 = vand.u32 %v1065, 4294901760
    %v1599 = vsub.f32 %v1065, %v1598
    %v1600 = vand.u32 %v1599, 4294901760
    %1601 = vmatpush1.xpose.msra.mxu0 %v1600
    %1602 = vmatprep.subr.mxu0 0.0
    %v1603 = vand.u32 %v1062, 4294901760
    %v1604 = vsub.f32 %v1062, %v1603
    %v1605 = vand.u32 %v1604, 4294901760
    %1606 = vmatpush1.xpose.msra.mxu0 %v1605
    %1607 = vmatprep.subr.mxu0 0.0
    %v1608 = vand.u32 %v1059, 4294901760
    %v1609 = vsub.f32 %v1059, %v1608
    %v1610 = vand.u32 %v1609, 4294901760
    %1611 = vmatpush1.xpose.msra.mxu0 %v1610
    %1612 = vmatprep.subr.mxu0 0.0
    %v1613 = vand.u32 %v1056, 4294901760
    %v1614 = vsub.f32 %v1056, %v1613
    %v1615 = vand.u32 %v1614, 4294901760
    %1616 = vmatpush1.xpose.msra.mxu0 %v1615
    %1617 = vmatprep.subr.mxu0 0.0
    %v1618 = vand.u32 %v1053, 4294901760
    %v1619 = vsub.f32 %v1053, %v1618
    %v1620 = vand.u32 %v1619, 4294901760
    %1621 = vmatpush1.xpose.msra.mxu0 %v1620
    %1622 = vmatprep.subr.mxu0 0.0
    %v1623 = vand.u32 %v1050, 4294901760
    %v1624 = vsub.f32 %v1050, %v1623
    %v1625 = vand.u32 %v1624, 4294901760
    %1626 = vmatpush1.xpose.msra.mxu0 %v1625
    %1627 = vmatprep.subr.mxu0 0.0
    %v1628 = vand.u32 %v1047, 4294901760
    %v1629 = vsub.f32 %v1047, %v1628
    %v1630 = vand.u32 %v1629, 4294901760
    %1631 = vmatpush1.xpose.msra.mxu0 %v1630
    %1632 = vmatprep.subr.mxu0 0.0
    %v1633 = vand.u32 %v1044, 4294901760
    %v1634 = vsub.f32 %v1044, %v1633
    %v1635 = vand.u32 %v1634, 4294901760
    %1636 = vmatpush1.xpose.msra.mxu0 %v1635
    %1637 = vmatprep.subr.mxu0 0.0
    %1638 = vmatpush2.xpose.msra.mxu0 0.0
    %1639 = vmatprep.subr.mxu0 0.0
    %1640 = vmatpush2.xpose.msra.mxu0 0.0
    %1641 = vmatprep.subr.mxu0 0.0
    %1642 = vmatpush2.xpose.msra.mxu0 0.0
    %1643 = vmatprep.subr.mxu0 0.0
    %1644 = vmatpush2.xpose.msra.mxu0 0.0
    %1645 = vmatprep.subr.mxu0 0.0
    %1646 = vmatpush2.xpose.msra.mxu0 0.0
    %1647 = vmatprep.subr.mxu0 0.0
    %1648 = vmatpush2.xpose.msra.mxu0 0.0
    %1649 = vmatprep.subr.mxu0 0.0
    %1650 = vmatpush2.xpose.msra.mxu0 0.0
    %1651 = vmatprep.subr.mxu0 0.0
    %1652 = vmatpush2.xpose.msra.mxu0 0.0
    %1653 = vmatprep.subr.mxu0 0.0
    %1654 = vmatpush2.xpose.msra.mxu0 0.0
    %1655 = vmatprep.subr.mxu0 0.0
    %1656 = vmatpush2.xpose.msra.mxu0 0.0
    %1657 = vmatprep.subr.mxu0 0.0
    %1658 = vmatpush2.xpose.msra.mxu0 0.0
    %1659 = vmatprep.subr.mxu0 0.0
    %1660 = vmatpush2.xpose.msra.mxu0 0.0
    %1661 = vmatprep.subr.mxu0 0.0
    %1662 = vmatpush2.xpose.msra.mxu0 0.0
    %1663 = vmatprep.subr.mxu0 0.0
    %1664 = vmatpush2.xpose.msra.mxu0 0.0
    %1665 = vmatprep.subr.mxu0 0.0
    %1666 = vmatpush2.xpose.msra.mxu0 0.0
    %1667 = vmatprep.subr.mxu0 0.0
    %1668 = vmatpush2.xpose.msra.mxu0 0.0
    %1669 = vmatprep.mubr.f32.mxu0 0.0
    %v1670 = vand.u32 %v1038, 4294901760
    %1671 = vmatmul.mubr.f32.gmra.mxu0 %v1670
    %v1672 = vpop.f32.mrf.mxu0
    %v1673 = vadd.f32 %v1546, %v1672
    %v1674 = vpop.f32.mrf.mxu0
    %1675 = vmatprep.mubr.f32.mxu0 0.0
    %v1676 = vand.u32 %v1041, 4294901760
    %1677 = vmatmul.mubr.f32.gmra.mxu0 %v1676
    %v1678 = vpop.f32.mrf.mxu0
    %v1679 = vadd.f32 %v1554, %v1678
    %v1680 = vpop.f32.mrf.mxu0
    %1681 = vdwg.mxu0
    %1682 = vmatprep.subr.mxu0 0.0
    %v1683 = vand.u32 %v1089, 4294901760
    %1684 = vmatpush1.xpose.msra.mxu0 %v1683
    %1685 = vmatprep.subr.mxu0 0.0
    %v1686 = vand.u32 %v1086, 4294901760
    %1687 = vmatpush1.xpose.msra.mxu0 %v1686
    %1688 = vmatprep.subr.mxu0 0.0
    %v1689 = vand.u32 %v1083, 4294901760
    %1690 = vmatpush1.xpose.msra.mxu0 %v1689
    %1691 = vmatprep.subr.mxu0 0.0
    %v1692 = vand.u32 %v1080, 4294901760
    %1693 = vmatpush1.xpose.msra.mxu0 %v1692
    %1694 = vmatprep.subr.mxu0 0.0
    %v1695 = vand.u32 %v1077, 4294901760
    %1696 = vmatpush1.xpose.msra.mxu0 %v1695
    %1697 = vmatprep.subr.mxu0 0.0
    %v1698 = vand.u32 %v1074, 4294901760
    %1699 = vmatpush1.xpose.msra.mxu0 %v1698
    %1700 = vmatprep.subr.mxu0 0.0
    %v1701 = vand.u32 %v1071, 4294901760
    %1702 = vmatpush1.xpose.msra.mxu0 %v1701
    %1703 = vmatprep.subr.mxu0 0.0
    %v1704 = vand.u32 %v1068, 4294901760
    %1705 = vmatpush1.xpose.msra.mxu0 %v1704
    %1706 = vmatprep.subr.mxu0 0.0
    %v1707 = vand.u32 %v1065, 4294901760
    %1708 = vmatpush1.xpose.msra.mxu0 %v1707
    %1709 = vmatprep.subr.mxu0 0.0
    %v1710 = vand.u32 %v1062, 4294901760
    %1711 = vmatpush1.xpose.msra.mxu0 %v1710
    %1712 = vmatprep.subr.mxu0 0.0
    %v1713 = vand.u32 %v1059, 4294901760
    %1714 = vmatpush1.xpose.msra.mxu0 %v1713
    %1715 = vmatprep.subr.mxu0 0.0
    %v1716 = vand.u32 %v1056, 4294901760
    %1717 = vmatpush1.xpose.msra.mxu0 %v1716
    %1718 = vmatprep.subr.mxu0 0.0
    %v1719 = vand.u32 %v1053, 4294901760
    %1720 = vmatpush1.xpose.msra.mxu0 %v1719
    %1721 = vmatprep.subr.mxu0 0.0
    %v1722 = vand.u32 %v1050, 4294901760
    %1723 = vmatpush1.xpose.msra.mxu0 %v1722
    %1724 = vmatprep.subr.mxu0 0.0
    %v1725 = vand.u32 %v1047, 4294901760
    %1726 = vmatpush1.xpose.msra.mxu0 %v1725
    %1727 = vmatprep.subr.mxu0 0.0
    %v1728 = vand.u32 %v1044, 4294901760
    %1729 = vmatpush1.xpose.msra.mxu0 %v1728
    %1730 = vmatprep.subr.mxu0 0.0
    %1731 = vmatpush2.xpose.msra.mxu0 0.0
    %1732 = vmatprep.subr.mxu0 0.0
    %1733 = vmatpush2.xpose.msra.mxu0 0.0
    %1734 = vmatprep.subr.mxu0 0.0
    %1735 = vmatpush2.xpose.msra.mxu0 0.0
    %1736 = vmatprep.subr.mxu0 0.0
    %1737 = vmatpush2.xpose.msra.mxu0 0.0
    %1738 = vmatprep.subr.mxu0 0.0
    %1739 = vmatpush2.xpose.msra.mxu0 0.0
    %1740 = vmatprep.subr.mxu0 0.0
    %1741 = vmatpush2.xpose.msra.mxu0 0.0
    %1742 = vmatprep.subr.mxu0 0.0
    %1743 = vmatpush2.xpose.msra.mxu0 0.0
    %1744 = vmatprep.subr.mxu0 0.0
    %1745 = vmatpush2.xpose.msra.mxu0 0.0
    %1746 = vmatprep.subr.mxu0 0.0
    %1747 = vmatpush2.xpose.msra.mxu0 0.0
    %1748 = vmatprep.subr.mxu0 0.0
    %1749 = vmatpush2.xpose.msra.mxu0 0.0
    %1750 = vmatprep.subr.mxu0 0.0
    %1751 = vmatpush2.xpose.msra.mxu0 0.0
    %1752 = vmatprep.subr.mxu0 0.0
    %1753 = vmatpush2.xpose.msra.mxu0 0.0
    %1754 = vmatprep.subr.mxu0 0.0
    %1755 = vmatpush2.xpose.msra.mxu0 0.0
    %1756 = vmatprep.subr.mxu0 0.0
    %1757 = vmatpush2.xpose.msra.mxu0 0.0
    %1758 = vmatprep.subr.mxu0 0.0
    %1759 = vmatpush2.xpose.msra.mxu0 0.0
    %1760 = vmatprep.subr.mxu0 0.0
    %1761 = vmatpush2.xpose.msra.mxu0 0.0
    %1762 = vmatprep.mubr.f32.mxu0 0.0
    %v1763 = vand.u32 %v1038, 4294901760
    %1764 = vmatmul.mubr.f32.gmra.mxu0 %v1763
    %v1765 = vpop.f32.mrf.mxu0
    %v1766 = vadd.f32 %v1673, %v1765
    %v1767 = vpop.f32.mrf.mxu0
    %1768 = vmatprep.mubr.f32.mxu0 0.0
    %v1769 = vand.u32 %v1041, 4294901760
    %1770 = vmatmul.mubr.f32.gmra.mxu0 %v1769
    %v1771 = vpop.f32.mrf.mxu0
    %v1772 = vadd.f32 %v1679, %v1771
    %v1773 = vpop.f32.mrf.mxu0
    %1774 = vdwg.mxu0
    %v1776 = vsel %vm298, %v30, 0
    %v1779 = vsel %vm298, %v31, 0
    %v1782 = vsel %vm298, %v74, 0
    %v1785 = vsel %vm298, %v75, 0
    %v1788 = vsel %vm298, %v76, 0
    %v1791 = vsel %vm298, %v77, 0
    %v1794 = vsel %vm298, %v78, 0
    %v1797 = vsel %vm298, %v79, 0
    %v1800 = vsel %vm298, %v80, 0
    %v1803 = vsel %vm298, %v81, 0
    %v1806 = vsel %vm298, %v82, 0
    %v1809 = vsel %vm298, %v83, 0
    %v1812 = vsel %vm298, %v84, 0
    %v1815 = vsel %vm298, %v85, 0
    %v1818 = vsel %vm298, %v86, 0
    %v1821 = vsel %vm298, %v87, 0
    %v1824 = vsel %vm298, %v88, 0
    %v1827 = vsel %vm298, %v89, 0
    %1829 = vmatprep.subr.mxu0 0.0
    %v1830 = vand.u32 %v1827, 4294901760
    %1831 = vmatpush1.xpose.msra.mxu0 %v1830
    %1832 = vmatprep.subr.mxu0 0.0
    %v1833 = vand.u32 %v1824, 4294901760
    %1834 = vmatpush1.xpose.msra.mxu0 %v1833
    %1835 = vmatprep.subr.mxu0 0.0
    %v1836 = vand.u32 %v1821, 4294901760
    %1837 = vmatpush1.xpose.msra.mxu0 %v1836
    %1838 = vmatprep.subr.mxu0 0.0
    %v1839 = vand.u32 %v1818, 4294901760
    %1840 = vmatpush1.xpose.msra.mxu0 %v1839
    %1841 = vmatprep.subr.mxu0 0.0
    %v1842 = vand.u32 %v1815, 4294901760
    %1843 = vmatpush1.xpose.msra.mxu0 %v1842
    %1844 = vmatprep.subr.mxu0 0.0
    %v1845 = vand.u32 %v1812, 4294901760
    %1846 = vmatpush1.xpose.msra.mxu0 %v1845
    %1847 = vmatprep.subr.mxu0 0.0
    %v1848 = vand.u32 %v1809, 4294901760
    %1849 = vmatpush1.xpose.msra.mxu0 %v1848
    %1850 = vmatprep.subr.mxu0 0.0
    %v1851 = vand.u32 %v1806, 4294901760
    %1852 = vmatpush1.xpose.msra.mxu0 %v1851
    %1853 = vmatprep.subr.mxu0 0.0
    %v1854 = vand.u32 %v1803, 4294901760
    %1855 = vmatpush1.xpose.msra.mxu0 %v1854
    %1856 = vmatprep.subr.mxu0 0.0
    %v1857 = vand.u32 %v1800, 4294901760
    %1858 = vmatpush1.xpose.msra.mxu0 %v1857
    %1859 = vmatprep.subr.mxu0 0.0
    %v1860 = vand.u32 %v1797, 4294901760
    %1861 = vmatpush1.xpose.msra.mxu0 %v1860
    %1862 = vmatprep.subr.mxu0 0.0
    %v1863 = vand.u32 %v1794, 4294901760
    %1864 = vmatpush1.xpose.msra.mxu0 %v1863
    %1865 = vmatprep.subr.mxu0 0.0
    %v1866 = vand.u32 %v1791, 4294901760
    %1867 = vmatpush1.xpose.msra.mxu0 %v1866
    %1868 = vmatprep.subr.mxu0 0.0
    %v1869 = vand.u32 %v1788, 4294901760
    %1870 = vmatpush1.xpose.msra.mxu0 %v1869
    %1871 = vmatprep.subr.mxu0 0.0
    %v1872 = vand.u32 %v1785, 4294901760
    %1873 = vmatpush1.xpose.msra.mxu0 %v1872
    %1874 = vmatprep.subr.mxu0 0.0
    %v1875 = vand.u32 %v1782, 4294901760
    %1876 = vmatpush1.xpose.msra.mxu0 %v1875
    %1877 = vmatprep.subr.mxu0 0.0
    %1878 = vmatpush2.xpose.msra.mxu0 0.0
    %1879 = vmatprep.subr.mxu0 0.0
    %1880 = vmatpush2.xpose.msra.mxu0 0.0
    %1881 = vmatprep.subr.mxu0 0.0
    %1882 = vmatpush2.xpose.msra.mxu0 0.0
    %1883 = vmatprep.subr.mxu0 0.0
    %1884 = vmatpush2.xpose.msra.mxu0 0.0
    %1885 = vmatprep.subr.mxu0 0.0
    %1886 = vmatpush2.xpose.msra.mxu0 0.0
    %1887 = vmatprep.subr.mxu0 0.0
    %1888 = vmatpush2.xpose.msra.mxu0 0.0
    %1889 = vmatprep.subr.mxu0 0.0
    %1890 = vmatpush2.xpose.msra.mxu0 0.0
    %1891 = vmatprep.subr.mxu0 0.0
    %1892 = vmatpush2.xpose.msra.mxu0 0.0
    %1893 = vmatprep.subr.mxu0 0.0
    %1894 = vmatpush2.xpose.msra.mxu0 0.0
    %1895 = vmatprep.subr.mxu0 0.0
    %1896 = vmatpush2.xpose.msra.mxu0 0.0
    %1897 = vmatprep.subr.mxu0 0.0
    %1898 = vmatpush2.xpose.msra.mxu0 0.0
    %1899 = vmatprep.subr.mxu0 0.0
    %1900 = vmatpush2.xpose.msra.mxu0 0.0
    %1901 = vmatprep.subr.mxu0 0.0
    %1902 = vmatpush2.xpose.msra.mxu0 0.0
    %1903 = vmatprep.subr.mxu0 0.0
    %1904 = vmatpush2.xpose.msra.mxu0 0.0
    %1905 = vmatprep.subr.mxu0 0.0
    %1906 = vmatpush2.xpose.msra.mxu0 0.0
    %1907 = vmatprep.subr.mxu0 0.0
    %1908 = vmatpush2.xpose.msra.mxu0 0.0
    %1909 = vmatprep.mubr.f32.mxu0 0.0
    %v1910 = vand.u32 %v1776, 4294901760
    %v1911 = vsub.f32 %v1776, %v1910
    %v1912 = vand.u32 %v1911, 4294901760
    %v1913 = vsub.f32 %v1911, %v1912
    %v1914 = vand.u32 %v1913, 4294901760
    %1915 = vmatmul.mubr.f32.gmra.mxu0 %v1914
    %v1916 = vpop.f32.mrf.mxu0
    %v1917 = vadd.f32 0.0, %v1916
    %v1918 = vpop.f32.mrf.mxu0
    %1919 = vmatprep.mubr.f32.mxu0 0.0
    %v1920 = vand.u32 %v1779, 4294901760
    %v1921 = vsub.f32 %v1779, %v1920
    %v1922 = vand.u32 %v1921, 4294901760
    %v1923 = vsub.f32 %v1921, %v1922
    %v1924 = vand.u32 %v1923, 4294901760
    %1925 = vmatmul.mubr.f32.gmra.mxu0 %v1924
    %v1926 = vpop.f32.mrf.mxu0
    %v1927 = vadd.f32 0.0, %v1926
    %v1928 = vpop.f32.mrf.mxu0
    %1929 = vdwg.mxu0
    %1930 = vmatprep.subr.mxu0 0.0
    %v1931 = vand.u32 %v1827, 4294901760
    %v1932 = vsub.f32 %v1827, %v1931
    %v1933 = vand.u32 %v1932, 4294901760
    %v1934 = vsub.f32 %v1932, %v1933
    %v1935 = vand.u32 %v1934, 4294901760
    %1936 = vmatpush1.xpose.msra.mxu0 %v1935
    %1937 = vmatprep.subr.mxu0 0.0
    %v1938 = vand.u32 %v1824, 4294901760
    %v1939 = vsub.f32 %v1824, %v1938
    %v1940 = vand.u32 %v1939, 4294901760
    %v1941 = vsub.f32 %v1939, %v1940
    %v1942 = vand.u32 %v1941, 4294901760
    %1943 = vmatpush1.xpose.msra.mxu0 %v1942
    %1944 = vmatprep.subr.mxu0 0.0
    %v1945 = vand.u32 %v1821, 4294901760
    %v1946 = vsub.f32 %v1821, %v1945
    %v1947 = vand.u32 %v1946, 4294901760
    %v1948 = vsub.f32 %v1946, %v1947
    %v1949 = vand.u32 %v1948, 4294901760
    %1950 = vmatpush1.xpose.msra.mxu0 %v1949
    %1951 = vmatprep.subr.mxu0 0.0
    %v1952 = vand.u32 %v1818, 4294901760
    %v1953 = vsub.f32 %v1818, %v1952
    %v1954 = vand.u32 %v1953, 4294901760
    %v1955 = vsub.f32 %v1953, %v1954
    %v1956 = vand.u32 %v1955, 4294901760
    %1957 = vmatpush1.xpose.msra.mxu0 %v1956
    %1958 = vmatprep.subr.mxu0 0.0
    %v1959 = vand.u32 %v1815, 4294901760
    %v1960 = vsub.f32 %v1815, %v1959
    %v1961 = vand.u32 %v1960, 4294901760
    %v1962 = vsub.f32 %v1960, %v1961
    %v1963 = vand.u32 %v1962, 4294901760
    %1964 = vmatpush1.xpose.msra.mxu0 %v1963
    %1965 = vmatprep.subr.mxu0 0.0
    %v1966 = vand.u32 %v1812, 4294901760
    %v1967 = vsub.f32 %v1812, %v1966
    %v1968 = vand.u32 %v1967, 4294901760
    %v1969 = vsub.f32 %v1967, %v1968
    %v1970 = vand.u32 %v1969, 4294901760
    %1971 = vmatpush1.xpose.msra.mxu0 %v1970
    %1972 = vmatprep.subr.mxu0 0.0
    %v1973 = vand.u32 %v1809, 4294901760
    %v1974 = vsub.f32 %v1809, %v1973
    %v1975 = vand.u32 %v1974, 4294901760
    %v1976 = vsub.f32 %v1974, %v1975
    %v1977 = vand.u32 %v1976, 4294901760
    %1978 = vmatpush1.xpose.msra.mxu0 %v1977
    %1979 = vmatprep.subr.mxu0 0.0
    %v1980 = vand.u32 %v1806, 4294901760
    %v1981 = vsub.f32 %v1806, %v1980
    %v1982 = vand.u32 %v1981, 4294901760
    %v1983 = vsub.f32 %v1981, %v1982
    %v1984 = vand.u32 %v1983, 4294901760
    %1985 = vmatpush1.xpose.msra.mxu0 %v1984
    %1986 = vmatprep.subr.mxu0 0.0
    %v1987 = vand.u32 %v1803, 4294901760
    %v1988 = vsub.f32 %v1803, %v1987
    %v1989 = vand.u32 %v1988, 4294901760
    %v1990 = vsub.f32 %v1988, %v1989
    %v1991 = vand.u32 %v1990, 4294901760
    %1992 = vmatpush1.xpose.msra.mxu0 %v1991
    %1993 = vmatprep.subr.mxu0 0.0
    %v1994 = vand.u32 %v1800, 4294901760
    %v1995 = vsub.f32 %v1800, %v1994
    %v1996 = vand.u32 %v1995, 4294901760
    %v1997 = vsub.f32 %v1995, %v1996
    %v1998 = vand.u32 %v1997, 4294901760
    %1999 = vmatpush1.xpose.msra.mxu0 %v1998
    %2000 = vmatprep.subr.mxu0 0.0
    %v2001 = vand.u32 %v1797, 4294901760
    %v2002 = vsub.f32 %v1797, %v2001
    %v2003 = vand.u32 %v2002, 4294901760
    %v2004 = vsub.f32 %v2002, %v2003
    %v2005 = vand.u32 %v2004, 4294901760
    %2006 = vmatpush1.xpose.msra.mxu0 %v2005
    %2007 = vmatprep.subr.mxu0 0.0
    %v2008 = vand.u32 %v1794, 4294901760
    %v2009 = vsub.f32 %v1794, %v2008
    %v2010 = vand.u32 %v2009, 4294901760
    %v2011 = vsub.f32 %v2009, %v2010
    %v2012 = vand.u32 %v2011, 4294901760
    %2013 = vmatpush1.xpose.msra.mxu0 %v2012
    %2014 = vmatprep.subr.mxu0 0.0
    %v2015 = vand.u32 %v1791, 4294901760
    %v2016 = vsub.f32 %v1791, %v2015
    %v2017 = vand.u32 %v2016, 4294901760
    %v2018 = vsub.f32 %v2016, %v2017
    %v2019 = vand.u32 %v2018, 4294901760
    %2020 = vmatpush1.xpose.msra.mxu0 %v2019
    %2021 = vmatprep.subr.mxu0 0.0
    %v2022 = vand.u32 %v1788, 4294901760
    %v2023 = vsub.f32 %v1788, %v2022
    %v2024 = vand.u32 %v2023, 4294901760
    %v2025 = vsub.f32 %v2023, %v2024
    %v2026 = vand.u32 %v2025, 4294901760
    %2027 = vmatpush1.xpose.msra.mxu0 %v2026
    %2028 = vmatprep.subr.mxu0 0.0
    %v2029 = vand.u32 %v1785, 4294901760
    %v2030 = vsub.f32 %v1785, %v2029
    %v2031 = vand.u32 %v2030, 4294901760
    %v2032 = vsub.f32 %v2030, %v2031
    %v2033 = vand.u32 %v2032, 4294901760
    %2034 = vmatpush1.xpose.msra.mxu0 %v2033
    %2035 = vmatprep.subr.mxu0 0.0
    %v2036 = vand.u32 %v1782, 4294901760
    %v2037 = vsub.f32 %v1782, %v2036
    %v2038 = vand.u32 %v2037, 4294901760
    %v2039 = vsub.f32 %v2037, %v2038
    %v2040 = vand.u32 %v2039, 4294901760
    %2041 = vmatpush1.xpose.msra.mxu0 %v2040
    %2042 = vmatprep.subr.mxu0 0.0
    %2043 = vmatpush2.xpose.msra.mxu0 0.0
    %2044 = vmatprep.subr.mxu0 0.0
    %2045 = vmatpush2.xpose.msra.mxu0 0.0
    %2046 = vmatprep.subr.mxu0 0.0
    %2047 = vmatpush2.xpose.msra.mxu0 0.0
    %2048 = vmatprep.subr.mxu0 0.0
    %2049 = vmatpush2.xpose.msra.mxu0 0.0
    %2050 = vmatprep.subr.mxu0 0.0
    %2051 = vmatpush2.xpose.msra.mxu0 0.0
    %2052 = vmatprep.subr.mxu0 0.0
    %2053 = vmatpush2.xpose.msra.mxu0 0.0
    %2054 = vmatprep.subr.mxu0 0.0
    %2055 = vmatpush2.xpose.msra.mxu0 0.0
    %2056 = vmatprep.subr.mxu0 0.0
    %2057 = vmatpush2.xpose.msra.mxu0 0.0
    %2058 = vmatprep.subr.mxu0 0.0
    %2059 = vmatpush2.xpose.msra.mxu0 0.0
    %2060 = vmatprep.subr.mxu0 0.0
    %2061 = vmatpush2.xpose.msra.mxu0 0.0
    %2062 = vmatprep.subr.mxu0 0.0
    %2063 = vmatpush2.xpose.msra.mxu0 0.0
    %2064 = vmatprep.subr.mxu0 0.0
    %2065 = vmatpush2.xpose.msra.mxu0 0.0
    %2066 = vmatprep.subr.mxu0 0.0
    %2067 = vmatpush2.xpose.msra.mxu0 0.0
    %2068 = vmatprep.subr.mxu0 0.0
    %2069 = vmatpush2.xpose.msra.mxu0 0.0
    %2070 = vmatprep.subr.mxu0 0.0
    %2071 = vmatpush2.xpose.msra.mxu0 0.0
    %2072 = vmatprep.subr.mxu0 0.0
    %2073 = vmatpush2.xpose.msra.mxu0 0.0
    %2074 = vmatprep.mubr.f32.mxu0 0.0
    %v2075 = vand.u32 %v1776, 4294901760
    %2076 = vmatmul.mubr.f32.gmra.mxu0 %v2075
    %v2077 = vpop.f32.mrf.mxu0
    %v2078 = vadd.f32 %v1917, %v2077
    %v2079 = vpop.f32.mrf.mxu0
    %2080 = vmatprep.mubr.f32.mxu0 0.0
    %v2081 = vand.u32 %v1779, 4294901760
    %2082 = vmatmul.mubr.f32.gmra.mxu0 %v2081
    %v2083 = vpop.f32.mrf.mxu0
    %v2084 = vadd.f32 %v1927, %v2083
    %v2085 = vpop.f32.mrf.mxu0
    %2086 = vdwg.mxu0
    %2087 = vmatprep.subr.mxu0 0.0
    %v2088 = vand.u32 %v1827, 4294901760
    %v2089 = vsub.f32 %v1827, %v2088
    %2090 = vmatpush1.xpose.msra.mxu0 %v2089
    %2091 = vmatprep.subr.mxu0 0.0
    %v2092 = vand.u32 %v1824, 4294901760
    %v2093 = vsub.f32 %v1824, %v2092
    %2094 = vmatpush1.xpose.msra.mxu0 %v2093
    %2095 = vmatprep.subr.mxu0 0.0
    %v2096 = vand.u32 %v1821, 4294901760
    %v2097 = vsub.f32 %v1821, %v2096
    %2098 = vmatpush1.xpose.msra.mxu0 %v2097
    %2099 = vmatprep.subr.mxu0 0.0
    %v2100 = vand.u32 %v1818, 4294901760
    %v2101 = vsub.f32 %v1818, %v2100
    %2102 = vmatpush1.xpose.msra.mxu0 %v2101
    %2103 = vmatprep.subr.mxu0 0.0
    %v2104 = vand.u32 %v1815, 4294901760
    %v2105 = vsub.f32 %v1815, %v2104
    %2106 = vmatpush1.xpose.msra.mxu0 %v2105
    %2107 = vmatprep.subr.mxu0 0.0
    %v2108 = vand.u32 %v1812, 4294901760
    %v2109 = vsub.f32 %v1812, %v2108
    %2110 = vmatpush1.xpose.msra.mxu0 %v2109
    %2111 = vmatprep.subr.mxu0 0.0
    %v2112 = vand.u32 %v1809, 4294901760
    %v2113 = vsub.f32 %v1809, %v2112
    %2114 = vmatpush1.xpose.msra.mxu0 %v2113
    %2115 = vmatprep.subr.mxu0 0.0
    %v2116 = vand.u32 %v1806, 4294901760
    %v2117 = vsub.f32 %v1806, %v2116
    %2118 = vmatpush1.xpose.msra.mxu0 %v2117
    %2119 = vmatprep.subr.mxu0 0.0
    %v2120 = vand.u32 %v1803, 4294901760
    %v2121 = vsub.f32 %v1803, %v2120
    %2122 = vmatpush1.xpose.msra.mxu0 %v2121
    %2123 = vmatprep.subr.mxu0 0.0
    %v2124 = vand.u32 %v1800, 4294901760
    %v2125 = vsub.f32 %v1800, %v2124
    %2126 = vmatpush1.xpose.msra.mxu0 %v2125
    %2127 = vmatprep.subr.mxu0 0.0
    %v2128 = vand.u32 %v1797, 4294901760
    %v2129 = vsub.f32 %v1797, %v2128
    %2130 = vmatpush1.xpose.msra.mxu0 %v2129
    %2131 = vmatprep.subr.mxu0 0.0
    %v2132 = vand.u32 %v1794, 4294901760
    %v2133 = vsub.f32 %v1794, %v2132
    %2134 = vmatpush1.xpose.msra.mxu0 %v2133
    %2135 = vmatprep.subr.mxu0 0.0
    %v2136 = vand.u32 %v1791, 4294901760
    %v2137 = vsub.f32 %v1791, %v2136
    %2138 = vmatpush1.xpose.msra.mxu0 %v2137
    %2139 = vmatprep.subr.mxu0 0.0
    %v2140 = vand.u32 %v1788, 4294901760
    %v2141 = vsub.f32 %v1788, %v2140
    %2142 = vmatpush1.xpose.msra.mxu0 %v2141
    %2143 = vmatprep.subr.mxu0 0.0
    %v2144 = vand.u32 %v1785, 4294901760
    %v2145 = vsub.f32 %v1785, %v2144
    %2146 = vmatpush1.xpose.msra.mxu0 %v2145
    %2147 = vmatprep.subr.mxu0 0.0
    %v2148 = vand.u32 %v1782, 4294901760
    %v2149 = vsub.f32 %v1782, %v2148
    %2150 = vmatpush1.xpose.msra.mxu0 %v2149
    %2151 = vmatprep.subr.mxu0 0.0
    %2152 = vmatpush2.xpose.msra.mxu0 0.0
    %2153 = vmatprep.subr.mxu0 0.0
    %2154 = vmatpush2.xpose.msra.mxu0 0.0
    %2155 = vmatprep.subr.mxu0 0.0
    %2156 = vmatpush2.xpose.msra.mxu0 0.0
    %2157 = vmatprep.subr.mxu0 0.0
    %2158 = vmatpush2.xpose.msra.mxu0 0.0
    %2159 = vmatprep.subr.mxu0 0.0
    %2160 = vmatpush2.xpose.msra.mxu0 0.0
    %2161 = vmatprep.subr.mxu0 0.0
    %2162 = vmatpush2.xpose.msra.mxu0 0.0
    %2163 = vmatprep.subr.mxu0 0.0
    %2164 = vmatpush2.xpose.msra.mxu0 0.0
    %2165 = vmatprep.subr.mxu0 0.0
    %2166 = vmatpush2.xpose.msra.mxu0 0.0
    %2167 = vmatprep.subr.mxu0 0.0
    %2168 = vmatpush2.xpose.msra.mxu0 0.0
    %2169 = vmatprep.subr.mxu0 0.0
    %2170 = vmatpush2.xpose.msra.mxu0 0.0
    %2171 = vmatprep.subr.mxu0 0.0
    %2172 = vmatpush2.xpose.msra.mxu0 0.0
    %2173 = vmatprep.subr.mxu0 0.0
    %2174 = vmatpush2.xpose.msra.mxu0 0.0
    %2175 = vmatprep.subr.mxu0 0.0
    %2176 = vmatpush2.xpose.msra.mxu0 0.0
    %2177 = vmatprep.subr.mxu0 0.0
    %2178 = vmatpush2.xpose.msra.mxu0 0.0
    %2179 = vmatprep.subr.mxu0 0.0
    %2180 = vmatpush2.xpose.msra.mxu0 0.0
    %2181 = vmatprep.subr.mxu0 0.0
    %2182 = vmatpush2.xpose.msra.mxu0 0.0
    %2183 = vmatprep.mubr.f32.mxu0 0.0
    %v2184 = vand.u32 %v1776, 4294901760
    %v2185 = vsub.f32 %v1776, %v2184
    %2186 = vmatmul.mubr.f32.gmra.mxu0 %v2185
    %v2187 = vpop.f32.mrf.mxu0
    %v2188 = vadd.f32 %v2078, %v2187
    %v2189 = vpop.f32.mrf.mxu0
    %2190 = vmatprep.mubr.f32.mxu0 0.0
    %v2191 = vand.u32 %v1779, 4294901760
    %v2192 = vsub.f32 %v1779, %v2191
    %2193 = vmatmul.mubr.f32.gmra.mxu0 %v2192
    %v2194 = vpop.f32.mrf.mxu0
    %v2195 = vadd.f32 %v2084, %v2194
    %v2196 = vpop.f32.mrf.mxu0
    %2197 = vdwg.mxu0
    %2198 = vmatprep.subr.mxu0 0.0
    %v2199 = vand.u32 %v1827, 4294901760
    %2200 = vmatpush1.xpose.msra.mxu0 %v2199
    %2201 = vmatprep.subr.mxu0 0.0
    %v2202 = vand.u32 %v1824, 4294901760
    %2203 = vmatpush1.xpose.msra.mxu0 %v2202
    %2204 = vmatprep.subr.mxu0 0.0
    %v2205 = vand.u32 %v1821, 4294901760
    %2206 = vmatpush1.xpose.msra.mxu0 %v2205
    %2207 = vmatprep.subr.mxu0 0.0
    %v2208 = vand.u32 %v1818, 4294901760
    %2209 = vmatpush1.xpose.msra.mxu0 %v2208
    %2210 = vmatprep.subr.mxu0 0.0
    %v2211 = vand.u32 %v1815, 4294901760
    %2212 = vmatpush1.xpose.msra.mxu0 %v2211
    %2213 = vmatprep.subr.mxu0 0.0
    %v2214 = vand.u32 %v1812, 4294901760
    %2215 = vmatpush1.xpose.msra.mxu0 %v2214
    %2216 = vmatprep.subr.mxu0 0.0
    %v2217 = vand.u32 %v1809, 4294901760
    %2218 = vmatpush1.xpose.msra.mxu0 %v2217
    %2219 = vmatprep.subr.mxu0 0.0
    %v2220 = vand.u32 %v1806, 4294901760
    %2221 = vmatpush1.xpose.msra.mxu0 %v2220
    %2222 = vmatprep.subr.mxu0 0.0
    %v2223 = vand.u32 %v1803, 4294901760
    %2224 = vmatpush1.xpose.msra.mxu0 %v2223
    %2225 = vmatprep.subr.mxu0 0.0
    %v2226 = vand.u32 %v1800, 4294901760
    %2227 = vmatpush1.xpose.msra.mxu0 %v2226
    %2228 = vmatprep.subr.mxu0 0.0
    %v2229 = vand.u32 %v1797, 4294901760
    %2230 = vmatpush1.xpose.msra.mxu0 %v2229
    %2231 = vmatprep.subr.mxu0 0.0
    %v2232 = vand.u32 %v1794, 4294901760
    %2233 = vmatpush1.xpose.msra.mxu0 %v2232
    %2234 = vmatprep.subr.mxu0 0.0
    %v2235 = vand.u32 %v1791, 4294901760
    %2236 = vmatpush1.xpose.msra.mxu0 %v2235
    %2237 = vmatprep.subr.mxu0 0.0
    %v2238 = vand.u32 %v1788, 4294901760
    %2239 = vmatpush1.xpose.msra.mxu0 %v2238
    %2240 = vmatprep.subr.mxu0 0.0
    %v2241 = vand.u32 %v1785, 4294901760
    %2242 = vmatpush1.xpose.msra.mxu0 %v2241
    %2243 = vmatprep.subr.mxu0 0.0
    %v2244 = vand.u32 %v1782, 4294901760
    %2245 = vmatpush1.xpose.msra.mxu0 %v2244
    %2246 = vmatprep.subr.mxu0 0.0
    %2247 = vmatpush2.xpose.msra.mxu0 0.0
    %2248 = vmatprep.subr.mxu0 0.0
    %2249 = vmatpush2.xpose.msra.mxu0 0.0
    %2250 = vmatprep.subr.mxu0 0.0
    %2251 = vmatpush2.xpose.msra.mxu0 0.0
    %2252 = vmatprep.subr.mxu0 0.0
    %2253 = vmatpush2.xpose.msra.mxu0 0.0
    %2254 = vmatprep.subr.mxu0 0.0
    %2255 = vmatpush2.xpose.msra.mxu0 0.0
    %2256 = vmatprep.subr.mxu0 0.0
    %2257 = vmatpush2.xpose.msra.mxu0 0.0
    %2258 = vmatprep.subr.mxu0 0.0
    %2259 = vmatpush2.xpose.msra.mxu0 0.0
    %2260 = vmatprep.subr.mxu0 0.0
    %2261 = vmatpush2.xpose.msra.mxu0 0.0
    %2262 = vmatprep.subr.mxu0 0.0
    %2263 = vmatpush2.xpose.msra.mxu0 0.0
    %2264 = vmatprep.subr.mxu0 0.0
    %2265 = vmatpush2.xpose.msra.mxu0 0.0
    %2266 = vmatprep.subr.mxu0 0.0
    %2267 = vmatpush2.xpose.msra.mxu0 0.0
    %2268 = vmatprep.subr.mxu0 0.0
    %2269 = vmatpush2.xpose.msra.mxu0 0.0
    %2270 = vmatprep.subr.mxu0 0.0
    %2271 = vmatpush2.xpose.msra.mxu0 0.0
    %2272 = vmatprep.subr.mxu0 0.0
    %2273 = vmatpush2.xpose.msra.mxu0 0.0
    %2274 = vmatprep.subr.mxu0 0.0
    %2275 = vmatpush2.xpose.msra.mxu0 0.0
    %2276 = vmatprep.subr.mxu0 0.0
    %2277 = vmatpush2.xpose.msra.mxu0 0.0
    %2278 = vmatprep.mubr.f32.mxu0 0.0
    %v2279 = vand.u32 %v1776, 4294901760
    %v2280 = vsub.f32 %v1776, %v2279
    %v2281 = vand.u32 %v2280, 4294901760
    %2282 = vmatmul.mubr.f32.gmra.mxu0 %v2281
    %v2283 = vpop.f32.mrf.mxu0
    %v2284 = vadd.f32 %v2188, %v2283
    %v2285 = vpop.f32.mrf.mxu0
    %2286 = vmatprep.mubr.f32.mxu0 0.0
    %v2287 = vand.u32 %v1779, 4294901760
    %v2288 = vsub.f32 %v1779, %v2287
    %v2289 = vand.u32 %v2288, 4294901760
    %2290 = vmatmul.mubr.f32.gmra.mxu0 %v2289
    %v2291 = vpop.f32.mrf.mxu0
    %v2292 = vadd.f32 %v2195, %v2291
    %v2293 = vpop.f32.mrf.mxu0
    %2294 = vdwg.mxu0
    %2295 = vmatprep.subr.mxu0 0.0
    %v2296 = vand.u32 %v1827, 4294901760
    %v2297 = vsub.f32 %v1827, %v2296
    %v2298 = vand.u32 %v2297, 4294901760
    %2299 = vmatpush1.xpose.msra.mxu0 %v2298
    %2300 = vmatprep.subr.mxu0 0.0
    %v2301 = vand.u32 %v1824, 4294901760
    %v2302 = vsub.f32 %v1824, %v2301
    %v2303 = vand.u32 %v2302, 4294901760
    %2304 = vmatpush1.xpose.msra.mxu0 %v2303
    %2305 = vmatprep.subr.mxu0 0.0
    %v2306 = vand.u32 %v1821, 4294901760
    %v2307 = vsub.f32 %v1821, %v2306
    %v2308 = vand.u32 %v2307, 4294901760
    %2309 = vmatpush1.xpose.msra.mxu0 %v2308
    %2310 = vmatprep.subr.mxu0 0.0
    %v2311 = vand.u32 %v1818, 4294901760
    %v2312 = vsub.f32 %v1818, %v2311
    %v2313 = vand.u32 %v2312, 4294901760
    %2314 = vmatpush1.xpose.msra.mxu0 %v2313
    %2315 = vmatprep.subr.mxu0 0.0
    %v2316 = vand.u32 %v1815, 4294901760
    %v2317 = vsub.f32 %v1815, %v2316
    %v2318 = vand.u32 %v2317, 4294901760
    %2319 = vmatpush1.xpose.msra.mxu0 %v2318
    %2320 = vmatprep.subr.mxu0 0.0
    %v2321 = vand.u32 %v1812, 4294901760
    %v2322 = vsub.f32 %v1812, %v2321
    %v2323 = vand.u32 %v2322, 4294901760
    %2324 = vmatpush1.xpose.msra.mxu0 %v2323
    %2325 = vmatprep.subr.mxu0 0.0
    %v2326 = vand.u32 %v1809, 4294901760
    %v2327 = vsub.f32 %v1809, %v2326
    %v2328 = vand.u32 %v2327, 4294901760
    %2329 = vmatpush1.xpose.msra.mxu0 %v2328
    %2330 = vmatprep.subr.mxu0 0.0
    %v2331 = vand.u32 %v1806, 4294901760
    %v2332 = vsub.f32 %v1806, %v2331
    %v2333 = vand.u32 %v2332, 4294901760
    %2334 = vmatpush1.xpose.msra.mxu0 %v2333
    %2335 = vmatprep.subr.mxu0 0.0
    %v2336 = vand.u32 %v1803, 4294901760
    %v2337 = vsub.f32 %v1803, %v2336
    %v2338 = vand.u32 %v2337, 4294901760
    %2339 = vmatpush1.xpose.msra.mxu0 %v2338
    %2340 = vmatprep.subr.mxu0 0.0
    %v2341 = vand.u32 %v1800, 4294901760
    %v2342 = vsub.f32 %v1800, %v2341
    %v2343 = vand.u32 %v2342, 4294901760
    %2344 = vmatpush1.xpose.msra.mxu0 %v2343
    %2345 = vmatprep.subr.mxu0 0.0
    %v2346 = vand.u32 %v1797, 4294901760
    %v2347 = vsub.f32 %v1797, %v2346
    %v2348 = vand.u32 %v2347, 4294901760
    %2349 = vmatpush1.xpose.msra.mxu0 %v2348
    %2350 = vmatprep.subr.mxu0 0.0
    %v2351 = vand.u32 %v1794, 4294901760
    %v2352 = vsub.f32 %v1794, %v2351
    %v2353 = vand.u32 %v2352, 4294901760
    %2354 = vmatpush1.xpose.msra.mxu0 %v2353
    %2355 = vmatprep.subr.mxu0 0.0
    %v2356 = vand.u32 %v1791, 4294901760
    %v2357 = vsub.f32 %v1791, %v2356
    %v2358 = vand.u32 %v2357, 4294901760
    %2359 = vmatpush1.xpose.msra.mxu0 %v2358
    %2360 = vmatprep.subr.mxu0 0.0
    %v2361 = vand.u32 %v1788, 4294901760
    %v2362 = vsub.f32 %v1788, %v2361
    %v2363 = vand.u32 %v2362, 4294901760
    %2364 = vmatpush1.xpose.msra.mxu0 %v2363
    %2365 = vmatprep.subr.mxu0 0.0
    %v2366 = vand.u32 %v1785, 4294901760
    %v2367 = vsub.f32 %v1785, %v2366
    %v2368 = vand.u32 %v2367, 4294901760
    %2369 = vmatpush1.xpose.msra.mxu0 %v2368
    %2370 = vmatprep.subr.mxu0 0.0
    %v2371 = vand.u32 %v1782, 4294901760
    %v2372 = vsub.f32 %v1782, %v2371
    %v2373 = vand.u32 %v2372, 4294901760
    %2374 = vmatpush1.xpose.msra.mxu0 %v2373
    %2375 = vmatprep.subr.mxu0 0.0
    %2376 = vmatpush2.xpose.msra.mxu0 0.0
    %2377 = vmatprep.subr.mxu0 0.0
    %2378 = vmatpush2.xpose.msra.mxu0 0.0
    %2379 = vmatprep.subr.mxu0 0.0
    %2380 = vmatpush2.xpose.msra.mxu0 0.0
    %2381 = vmatprep.subr.mxu0 0.0
    %2382 = vmatpush2.xpose.msra.mxu0 0.0
    %2383 = vmatprep.subr.mxu0 0.0
    %2384 = vmatpush2.xpose.msra.mxu0 0.0
    %2385 = vmatprep.subr.mxu0 0.0
    %2386 = vmatpush2.xpose.msra.mxu0 0.0
    %2387 = vmatprep.subr.mxu0 0.0
    %2388 = vmatpush2.xpose.msra.mxu0 0.0
    %2389 = vmatprep.subr.mxu0 0.0
    %2390 = vmatpush2.xpose.msra.mxu0 0.0
    %2391 = vmatprep.subr.mxu0 0.0
    %2392 = vmatpush2.xpose.msra.mxu0 0.0
    %2393 = vmatprep.subr.mxu0 0.0
    %2394 = vmatpush2.xpose.msra.mxu0 0.0
    %2395 = vmatprep.subr.mxu0 0.0
    %2396 = vmatpush2.xpose.msra.mxu0 0.0
    %2397 = vmatprep.subr.mxu0 0.0
    %2398 = vmatpush2.xpose.msra.mxu0 0.0
    %2399 = vmatprep.subr.mxu0 0.0
    %2400 = vmatpush2.xpose.msra.mxu0 0.0
    %2401 = vmatprep.subr.mxu0 0.0
    %2402 = vmatpush2.xpose.msra.mxu0 0.0
    %2403 = vmatprep.subr.mxu0 0.0
    %2404 = vmatpush2.xpose.msra.mxu0 0.0
    %2405 = vmatprep.subr.mxu0 0.0
    %2406 = vmatpush2.xpose.msra.mxu0 0.0
    %2407 = vmatprep.mubr.f32.mxu0 0.0
    %v2408 = vand.u32 %v1776, 4294901760
    %2409 = vmatmul.mubr.f32.gmra.mxu0 %v2408
    %v2410 = vpop.f32.mrf.mxu0
    %v2411 = vadd.f32 %v2284, %v2410
    %v2412 = vpop.f32.mrf.mxu0
    %2413 = vmatprep.mubr.f32.mxu0 0.0
    %v2414 = vand.u32 %v1779, 4294901760
    %2415 = vmatmul.mubr.f32.gmra.mxu0 %v2414
    %v2416 = vpop.f32.mrf.mxu0
    %v2417 = vadd.f32 %v2292, %v2416
    %v2418 = vpop.f32.mrf.mxu0
    %2419 = vdwg.mxu0
    %2420 = vmatprep.subr.mxu0 0.0
    %v2421 = vand.u32 %v1827, 4294901760
    %2422 = vmatpush1.xpose.msra.mxu0 %v2421
    %2423 = vmatprep.subr.mxu0 0.0
    %v2424 = vand.u32 %v1824, 4294901760
    %2425 = vmatpush1.xpose.msra.mxu0 %v2424
    %2426 = vmatprep.subr.mxu0 0.0
    %v2427 = vand.u32 %v1821, 4294901760
    %2428 = vmatpush1.xpose.msra.mxu0 %v2427
    %2429 = vmatprep.subr.mxu0 0.0
    %v2430 = vand.u32 %v1818, 4294901760
    %2431 = vmatpush1.xpose.msra.mxu0 %v2430
    %2432 = vmatprep.subr.mxu0 0.0
    %v2433 = vand.u32 %v1815, 4294901760
    %2434 = vmatpush1.xpose.msra.mxu0 %v2433
    %2435 = vmatprep.subr.mxu0 0.0
    %v2436 = vand.u32 %v1812, 4294901760
    %2437 = vmatpush1.xpose.msra.mxu0 %v2436
    %2438 = vmatprep.subr.mxu0 0.0
    %v2439 = vand.u32 %v1809, 4294901760
    %2440 = vmatpush1.xpose.msra.mxu0 %v2439
    %2441 = vmatprep.subr.mxu0 0.0
    %v2442 = vand.u32 %v1806, 4294901760
    %2443 = vmatpush1.xpose.msra.mxu0 %v2442
    %2444 = vmatprep.subr.mxu0 0.0
    %v2445 = vand.u32 %v1803, 4294901760
    %2446 = vmatpush1.xpose.msra.mxu0 %v2445
    %2447 = vmatprep.subr.mxu0 0.0
    %v2448 = vand.u32 %v1800, 4294901760
    %2449 = vmatpush1.xpose.msra.mxu0 %v2448
    %2450 = vmatprep.subr.mxu0 0.0
    %v2451 = vand.u32 %v1797, 4294901760
    %2452 = vmatpush1.xpose.msra.mxu0 %v2451
    %2453 = vmatprep.subr.mxu0 0.0
    %v2454 = vand.u32 %v1794, 4294901760
    %2455 = vmatpush1.xpose.msra.mxu0 %v2454
    %2456 = vmatprep.subr.mxu0 0.0
    %v2457 = vand.u32 %v1791, 4294901760
    %2458 = vmatpush1.xpose.msra.mxu0 %v2457
    %2459 = vmatprep.subr.mxu0 0.0
    %v2460 = vand.u32 %v1788, 4294901760
    %2461 = vmatpush1.xpose.msra.mxu0 %v2460
    %2462 = vmatprep.subr.mxu0 0.0
    %v2463 = vand.u32 %v1785, 4294901760
    %2464 = vmatpush1.xpose.msra.mxu0 %v2463
    %2465 = vmatprep.subr.mxu0 0.0
    %v2466 = vand.u32 %v1782, 4294901760
    %2467 = vmatpush1.xpose.msra.mxu0 %v2466
    %2468 = vmatprep.subr.mxu0 0.0
    %2469 = vmatpush2.xpose.msra.mxu0 0.0
    %2470 = vmatprep.subr.mxu0 0.0
    %2471 = vmatpush2.xpose.msra.mxu0 0.0
    %2472 = vmatprep.subr.mxu0 0.0
    %2473 = vmatpush2.xpose.msra.mxu0 0.0
    %2474 = vmatprep.subr.mxu0 0.0
    %2475 = vmatpush2.xpose.msra.mxu0 0.0
    %2476 = vmatprep.subr.mxu0 0.0
    %2477 = vmatpush2.xpose.msra.mxu0 0.0
    %2478 = vmatprep.subr.mxu0 0.0
    %2479 = vmatpush2.xpose.msra.mxu0 0.0
    %2480 = vmatprep.subr.mxu0 0.0
    %2481 = vmatpush2.xpose.msra.mxu0 0.0
    %2482 = vmatprep.subr.mxu0 0.0
    %2483 = vmatpush2.xpose.msra.mxu0 0.0
    %2484 = vmatprep.subr.mxu0 0.0
    %2485 = vmatpush2.xpose.msra.mxu0 0.0
    %2486 = vmatprep.subr.mxu0 0.0
    %2487 = vmatpush2.xpose.msra.mxu0 0.0
    %2488 = vmatprep.subr.mxu0 0.0
    %2489 = vmatpush2.xpose.msra.mxu0 0.0
    %2490 = vmatprep.subr.mxu0 0.0
    %2491 = vmatpush2.xpose.msra.mxu0 0.0
    %2492 = vmatprep.subr.mxu0 0.0
    %2493 = vmatpush2.xpose.msra.mxu0 0.0
    %2494 = vmatprep.subr.mxu0 0.0
    %2495 = vmatpush2.xpose.msra.mxu0 0.0
    %2496 = vmatprep.subr.mxu0 0.0
    %2497 = vmatpush2.xpose.msra.mxu0 0.0
    %2498 = vmatprep.subr.mxu0 0.0
    %2499 = vmatpush2.xpose.msra.mxu0 0.0
    %2500 = vmatprep.mubr.f32.mxu0 0.0
    %v2501 = vand.u32 %v1776, 4294901760
    %2502 = vmatmul.mubr.f32.gmra.mxu0 %v2501
    %v2503 = vpop.f32.mrf.mxu0
    %v2504 = vadd.f32 %v2411, %v2503
    %v2505 = vpop.f32.mrf.mxu0
    %2506 = vmatprep.mubr.f32.mxu0 0.0
    %v2507 = vand.u32 %v1779, 4294901760
    %2508 = vmatmul.mubr.f32.gmra.mxu0 %v2507
    %v2509 = vpop.f32.mrf.mxu0
    %v2510 = vadd.f32 %v2417, %v2509
    %v2511 = vpop.f32.mrf.mxu0
    %2512 = vdwg.mxu0
    %v2514 = vsel %vm298, %v32, 0
    %v2517 = vsel %vm298, %v33, 0
    %v2520 = vsel %vm298, %v90, 0
    %v2523 = vsel %vm298, %v91, 0
    %v2526 = vsel %vm298, %v92, 0
    %v2529 = vsel %vm298, %v93, 0
    %v2532 = vsel %vm298, %v94, 0
    %v2535 = vsel %vm298, %v95, 0
    %v2538 = vsel %vm298, %v96, 0
    %v2541 = vsel %vm298, %v97, 0
    %v2544 = vsel %vm298, %v98, 0
    %v2547 = vsel %vm298, %v99, 0
    %v2550 = vsel %vm298, %v100, 0
    %v2553 = vsel %vm298, %v101, 0
    %v2556 = vsel %vm298, %v102, 0
    %v2559 = vsel %vm298, %v103, 0
    %v2562 = vsel %vm298, %v104, 0
    %v2565 = vsel %vm298, %v105, 0
    %2567 = vmatprep.subr.mxu0 0.0
    %v2568 = vand.u32 %v2565, 4294901760
    %2569 = vmatpush1.xpose.msra.mxu0 %v2568
    %2570 = vmatprep.subr.mxu0 0.0
    %v2571 = vand.u32 %v2562, 4294901760
    %2572 = vmatpush1.xpose.msra.mxu0 %v2571
    %2573 = vmatprep.subr.mxu0 0.0
    %v2574 = vand.u32 %v2559, 4294901760
    %2575 = vmatpush1.xpose.msra.mxu0 %v2574
    %2576 = vmatprep.subr.mxu0 0.0
    %v2577 = vand.u32 %v2556, 4294901760
    %2578 = vmatpush1.xpose.msra.mxu0 %v2577
    %2579 = vmatprep.subr.mxu0 0.0
    %v2580 = vand.u32 %v2553, 4294901760
    %2581 = vmatpush1.xpose.msra.mxu0 %v2580
    %2582 = vmatprep.subr.mxu0 0.0
    %v2583 = vand.u32 %v2550, 4294901760
    %2584 = vmatpush1.xpose.msra.mxu0 %v2583
    %2585 = vmatprep.subr.mxu0 0.0
    %v2586 = vand.u32 %v2547, 4294901760
    %2587 = vmatpush1.xpose.msra.mxu0 %v2586
    %2588 = vmatprep.subr.mxu0 0.0
    %v2589 = vand.u32 %v2544, 4294901760
    %2590 = vmatpush1.xpose.msra.mxu0 %v2589
    %2591 = vmatprep.subr.mxu0 0.0
    %v2592 = vand.u32 %v2541, 4294901760
    %2593 = vmatpush1.xpose.msra.mxu0 %v2592
    %2594 = vmatprep.subr.mxu0 0.0
    %v2595 = vand.u32 %v2538, 4294901760
    %2596 = vmatpush1.xpose.msra.mxu0 %v2595
    %2597 = vmatprep.subr.mxu0 0.0
    %v2598 = vand.u32 %v2535, 4294901760
    %2599 = vmatpush1.xpose.msra.mxu0 %v2598
    %2600 = vmatprep.subr.mxu0 0.0
    %v2601 = vand.u32 %v2532, 4294901760
    %2602 = vmatpush1.xpose.msra.mxu0 %v2601
    %2603 = vmatprep.subr.mxu0 0.0
    %v2604 = vand.u32 %v2529, 4294901760
    %2605 = vmatpush1.xpose.msra.mxu0 %v2604
    %2606 = vmatprep.subr.mxu0 0.0
    %v2607 = vand.u32 %v2526, 4294901760
    %2608 = vmatpush1.xpose.msra.mxu0 %v2607
    %2609 = vmatprep.subr.mxu0 0.0
    %v2610 = vand.u32 %v2523, 4294901760
    %2611 = vmatpush1.xpose.msra.mxu0 %v2610
    %2612 = vmatprep.subr.mxu0 0.0
    %v2613 = vand.u32 %v2520, 4294901760
    %2614 = vmatpush1.xpose.msra.mxu0 %v2613
    %2615 = vmatprep.subr.mxu0 0.0
    %2616 = vmatpush2.xpose.msra.mxu0 0.0
    %2617 = vmatprep.subr.mxu0 0.0
    %2618 = vmatpush2.xpose.msra.mxu0 0.0
    %2619 = vmatprep.subr.mxu0 0.0
    %2620 = vmatpush2.xpose.msra.mxu0 0.0
    %2621 = vmatprep.subr.mxu0 0.0
    %2622 = vmatpush2.xpose.msra.mxu0 0.0
    %2623 = vmatprep.subr.mxu0 0.0
    %2624 = vmatpush2.xpose.msra.mxu0 0.0
    %2625 = vmatprep.subr.mxu0 0.0
    %2626 = vmatpush2.xpose.msra.mxu0 0.0
    %2627 = vmatprep.subr.mxu0 0.0
    %2628 = vmatpush2.xpose.msra.mxu0 0.0
    %2629 = vmatprep.subr.mxu0 0.0
    %2630 = vmatpush2.xpose.msra.mxu0 0.0
    %2631 = vmatprep.subr.mxu0 0.0
    %2632 = vmatpush2.xpose.msra.mxu0 0.0
    %2633 = vmatprep.subr.mxu0 0.0
    %2634 = vmatpush2.xpose.msra.mxu0 0.0
    %2635 = vmatprep.subr.mxu0 0.0
    %2636 = vmatpush2.xpose.msra.mxu0 0.0
    %2637 = vmatprep.subr.mxu0 0.0
    %2638 = vmatpush2.xpose.msra.mxu0 0.0
    %2639 = vmatprep.subr.mxu0 0.0
    %2640 = vmatpush2.xpose.msra.mxu0 0.0
    %2641 = vmatprep.subr.mxu0 0.0
    %2642 = vmatpush2.xpose.msra.mxu0 0.0
    %2643 = vmatprep.subr.mxu0 0.0
    %2644 = vmatpush2.xpose.msra.mxu0 0.0
    %2645 = vmatprep.subr.mxu0 0.0
    %2646 = vmatpush2.xpose.msra.mxu0 0.0
    %2647 = vmatprep.mubr.f32.mxu0 0.0
    %v2648 = vand.u32 %v2514, 4294901760
    %v2649 = vsub.f32 %v2514, %v2648
    %v2650 = vand.u32 %v2649, 4294901760
    %v2651 = vsub.f32 %v2649, %v2650
    %v2652 = vand.u32 %v2651, 4294901760
    %2653 = vmatmul.mubr.f32.gmra.mxu0 %v2652
    %v2654 = vpop.f32.mrf.mxu0
    %v2655 = vadd.f32 0.0, %v2654
    %v2656 = vpop.f32.mrf.mxu0
    %2657 = vmatprep.mubr.f32.mxu0 0.0
    %v2658 = vand.u32 %v2517, 4294901760
    %v2659 = vsub.f32 %v2517, %v2658
    %v2660 = vand.u32 %v2659, 4294901760
    %v2661 = vsub.f32 %v2659, %v2660
    %v2662 = vand.u32 %v2661, 4294901760
    %2663 = vmatmul.mubr.f32.gmra.mxu0 %v2662
    %v2664 = vpop.f32.mrf.mxu0
    %v2665 = vadd.f32 0.0, %v2664
    %v2666 = vpop.f32.mrf.mxu0
    %2667 = vdwg.mxu0
    %2668 = vmatprep.subr.mxu0 0.0
    %v2669 = vand.u32 %v2565, 4294901760
    %v2670 = vsub.f32 %v2565, %v2669
    %v2671 = vand.u32 %v2670, 4294901760
    %v2672 = vsub.f32 %v2670, %v2671
    %v2673 = vand.u32 %v2672, 4294901760
    %2674 = vmatpush1.xpose.msra.mxu0 %v2673
    %2675 = vmatprep.subr.mxu0 0.0
    %v2676 = vand.u32 %v2562, 4294901760
    %v2677 = vsub.f32 %v2562, %v2676
    %v2678 = vand.u32 %v2677, 4294901760
    %v2679 = vsub.f32 %v2677, %v2678
    %v2680 = vand.u32 %v2679, 4294901760
    %2681 = vmatpush1.xpose.msra.mxu0 %v2680
    %2682 = vmatprep.subr.mxu0 0.0
    %v2683 = vand.u32 %v2559, 4294901760
    %v2684 = vsub.f32 %v2559, %v2683
    %v2685 = vand.u32 %v2684, 4294901760
    %v2686 = vsub.f32 %v2684, %v2685
    %v2687 = vand.u32 %v2686, 4294901760
    %2688 = vmatpush1.xpose.msra.mxu0 %v2687
    %2689 = vmatprep.subr.mxu0 0.0
    %v2690 = vand.u32 %v2556, 4294901760
    %v2691 = vsub.f32 %v2556, %v2690
    %v2692 = vand.u32 %v2691, 4294901760
    %v2693 = vsub.f32 %v2691, %v2692
    %v2694 = vand.u32 %v2693, 4294901760
    %2695 = vmatpush1.xpose.msra.mxu0 %v2694
    %2696 = vmatprep.subr.mxu0 0.0
    %v2697 = vand.u32 %v2553, 4294901760
    %v2698 = vsub.f32 %v2553, %v2697
    %v2699 = vand.u32 %v2698, 4294901760
    %v2700 = vsub.f32 %v2698, %v2699
    %v2701 = vand.u32 %v2700, 4294901760
    %2702 = vmatpush1.xpose.msra.mxu0 %v2701
    %2703 = vmatprep.subr.mxu0 0.0
    %v2704 = vand.u32 %v2550, 4294901760
    %v2705 = vsub.f32 %v2550, %v2704
    %v2706 = vand.u32 %v2705, 4294901760
    %v2707 = vsub.f32 %v2705, %v2706
    %v2708 = vand.u32 %v2707, 4294901760
    %2709 = vmatpush1.xpose.msra.mxu0 %v2708
    %2710 = vmatprep.subr.mxu0 0.0
    %v2711 = vand.u32 %v2547, 4294901760
    %v2712 = vsub.f32 %v2547, %v2711
    %v2713 = vand.u32 %v2712, 4294901760
    %v2714 = vsub.f32 %v2712, %v2713
    %v2715 = vand.u32 %v2714, 4294901760
    %2716 = vmatpush1.xpose.msra.mxu0 %v2715
    %2717 = vmatprep.subr.mxu0 0.0
    %v2718 = vand.u32 %v2544, 4294901760
    %v2719 = vsub.f32 %v2544, %v2718
    %v2720 = vand.u32 %v2719, 4294901760
    %v2721 = vsub.f32 %v2719, %v2720
    %v2722 = vand.u32 %v2721, 4294901760
    %2723 = vmatpush1.xpose.msra.mxu0 %v2722
    %2724 = vmatprep.subr.mxu0 0.0
    %v2725 = vand.u32 %v2541, 4294901760
    %v2726 = vsub.f32 %v2541, %v2725
    %v2727 = vand.u32 %v2726, 4294901760
    %v2728 = vsub.f32 %v2726, %v2727
    %v2729 = vand.u32 %v2728, 4294901760
    %2730 = vmatpush1.xpose.msra.mxu0 %v2729
    %2731 = vmatprep.subr.mxu0 0.0
    %v2732 = vand.u32 %v2538, 4294901760
    %v2733 = vsub.f32 %v2538, %v2732
    %v2734 = vand.u32 %v2733, 4294901760
    %v2735 = vsub.f32 %v2733, %v2734
    %v2736 = vand.u32 %v2735, 4294901760
    %2737 = vmatpush1.xpose.msra.mxu0 %v2736
    %2738 = vmatprep.subr.mxu0 0.0
    %v2739 = vand.u32 %v2535, 4294901760
    %v2740 = vsub.f32 %v2535, %v2739
    %v2741 = vand.u32 %v2740, 4294901760
    %v2742 = vsub.f32 %v2740, %v2741
    %v2743 = vand.u32 %v2742, 4294901760
    %2744 = vmatpush1.xpose.msra.mxu0 %v2743
    %2745 = vmatprep.subr.mxu0 0.0
    %v2746 = vand.u32 %v2532, 4294901760
    %v2747 = vsub.f32 %v2532, %v2746
    %v2748 = vand.u32 %v2747, 4294901760
    %v2749 = vsub.f32 %v2747, %v2748
    %v2750 = vand.u32 %v2749, 4294901760
    %2751 = vmatpush1.xpose.msra.mxu0 %v2750
    %2752 = vmatprep.subr.mxu0 0.0
    %v2753 = vand.u32 %v2529, 4294901760
    %v2754 = vsub.f32 %v2529, %v2753
    %v2755 = vand.u32 %v2754, 4294901760
    %v2756 = vsub.f32 %v2754, %v2755
    %v2757 = vand.u32 %v2756, 4294901760
    %2758 = vmatpush1.xpose.msra.mxu0 %v2757
    %2759 = vmatprep.subr.mxu0 0.0
    %v2760 = vand.u32 %v2526, 4294901760
    %v2761 = vsub.f32 %v2526, %v2760
    %v2762 = vand.u32 %v2761, 4294901760
    %v2763 = vsub.f32 %v2761, %v2762
    %v2764 = vand.u32 %v2763, 4294901760
    %2765 = vmatpush1.xpose.msra.mxu0 %v2764
    %2766 = vmatprep.subr.mxu0 0.0
    %v2767 = vand.u32 %v2523, 4294901760
    %v2768 = vsub.f32 %v2523, %v2767
    %v2769 = vand.u32 %v2768, 4294901760
    %v2770 = vsub.f32 %v2768, %v2769
    %v2771 = vand.u32 %v2770, 4294901760
    %2772 = vmatpush1.xpose.msra.mxu0 %v2771
    %2773 = vmatprep.subr.mxu0 0.0
    %v2774 = vand.u32 %v2520, 4294901760
    %v2775 = vsub.f32 %v2520, %v2774
    %v2776 = vand.u32 %v2775, 4294901760
    %v2777 = vsub.f32 %v2775, %v2776
    %v2778 = vand.u32 %v2777, 4294901760
    %2779 = vmatpush1.xpose.msra.mxu0 %v2778
    %2780 = vmatprep.subr.mxu0 0.0
    %2781 = vmatpush2.xpose.msra.mxu0 0.0
    %2782 = vmatprep.subr.mxu0 0.0
    %2783 = vmatpush2.xpose.msra.mxu0 0.0
    %2784 = vmatprep.subr.mxu0 0.0
    %2785 = vmatpush2.xpose.msra.mxu0 0.0
    %2786 = vmatprep.subr.mxu0 0.0
    %2787 = vmatpush2.xpose.msra.mxu0 0.0
    %2788 = vmatprep.subr.mxu0 0.0
    %2789 = vmatpush2.xpose.msra.mxu0 0.0
    %2790 = vmatprep.subr.mxu0 0.0
    %2791 = vmatpush2.xpose.msra.mxu0 0.0
    %2792 = vmatprep.subr.mxu0 0.0
    %2793 = vmatpush2.xpose.msra.mxu0 0.0
    %2794 = vmatprep.subr.mxu0 0.0
    %2795 = vmatpush2.xpose.msra.mxu0 0.0
    %2796 = vmatprep.subr.mxu0 0.0
    %2797 = vmatpush2.xpose.msra.mxu0 0.0
    %2798 = vmatprep.subr.mxu0 0.0
    %2799 = vmatpush2.xpose.msra.mxu0 0.0
    %2800 = vmatprep.subr.mxu0 0.0
    %2801 = vmatpush2.xpose.msra.mxu0 0.0
    %2802 = vmatprep.subr.mxu0 0.0
    %2803 = vmatpush2.xpose.msra.mxu0 0.0
    %2804 = vmatprep.subr.mxu0 0.0
    %2805 = vmatpush2.xpose.msra.mxu0 0.0
    %2806 = vmatprep.subr.mxu0 0.0
    %2807 = vmatpush2.xpose.msra.mxu0 0.0
    %2808 = vmatprep.subr.mxu0 0.0
    %2809 = vmatpush2.xpose.msra.mxu0 0.0
    %2810 = vmatprep.subr.mxu0 0.0
    %2811 = vmatpush2.xpose.msra.mxu0 0.0
    %2812 = vmatprep.mubr.f32.mxu0 0.0
    %v2813 = vand.u32 %v2514, 4294901760
    %2814 = vmatmul.mubr.f32.gmra.mxu0 %v2813
    %v2815 = vpop.f32.mrf.mxu0
    %v2816 = vadd.f32 %v2655, %v2815
    %v2817 = vpop.f32.mrf.mxu0
    %2818 = vmatprep.mubr.f32.mxu0 0.0
    %v2819 = vand.u32 %v2517, 4294901760
    %2820 = vmatmul.mubr.f32.gmra.mxu0 %v2819
    %v2821 = vpop.f32.mrf.mxu0
    %v2822 = vadd.f32 %v2665, %v2821
    %v2823 = vpop.f32.mrf.mxu0
    %2824 = vdwg.mxu0
    %2825 = vmatprep.subr.mxu0 0.0
    %v2826 = vand.u32 %v2565, 4294901760
    %v2827 = vsub.f32 %v2565, %v2826
    %2828 = vmatpush1.xpose.msra.mxu0 %v2827
    %2829 = vmatprep.subr.mxu0 0.0
    %v2830 = vand.u32 %v2562, 4294901760
    %v2831 = vsub.f32 %v2562, %v2830
    %2832 = vmatpush1.xpose.msra.mxu0 %v2831
    %2833 = vmatprep.subr.mxu0 0.0
    %v2834 = vand.u32 %v2559, 4294901760
    %v2835 = vsub.f32 %v2559, %v2834
    %2836 = vmatpush1.xpose.msra.mxu0 %v2835
    %2837 = vmatprep.subr.mxu0 0.0
    %v2838 = vand.u32 %v2556, 4294901760
    %v2839 = vsub.f32 %v2556, %v2838
    %2840 = vmatpush1.xpose.msra.mxu0 %v2839
    %2841 = vmatprep.subr.mxu0 0.0
    %v2842 = vand.u32 %v2553, 4294901760
    %v2843 = vsub.f32 %v2553, %v2842
    %2844 = vmatpush1.xpose.msra.mxu0 %v2843
    %2845 = vmatprep.subr.mxu0 0.0
    %v2846 = vand.u32 %v2550, 4294901760
    %v2847 = vsub.f32 %v2550, %v2846
    %2848 = vmatpush1.xpose.msra.mxu0 %v2847
    %2849 = vmatprep.subr.mxu0 0.0
    %v2850 = vand.u32 %v2547, 4294901760
    %v2851 = vsub.f32 %v2547, %v2850
    %2852 = vmatpush1.xpose.msra.mxu0 %v2851
    %2853 = vmatprep.subr.mxu0 0.0
    %v2854 = vand.u32 %v2544, 4294901760
    %v2855 = vsub.f32 %v2544, %v2854
    %2856 = vmatpush1.xpose.msra.mxu0 %v2855
    %2857 = vmatprep.subr.mxu0 0.0
    %v2858 = vand.u32 %v2541, 4294901760
    %v2859 = vsub.f32 %v2541, %v2858
    %2860 = vmatpush1.xpose.msra.mxu0 %v2859
    %2861 = vmatprep.subr.mxu0 0.0
    %v2862 = vand.u32 %v2538, 4294901760
    %v2863 = vsub.f32 %v2538, %v2862
    %2864 = vmatpush1.xpose.msra.mxu0 %v2863
    %2865 = vmatprep.subr.mxu0 0.0
    %v2866 = vand.u32 %v2535, 4294901760
    %v2867 = vsub.f32 %v2535, %v2866
    %2868 = vmatpush1.xpose.msra.mxu0 %v2867
    %2869 = vmatprep.subr.mxu0 0.0
    %v2870 = vand.u32 %v2532, 4294901760
    %v2871 = vsub.f32 %v2532, %v2870
    %2872 = vmatpush1.xpose.msra.mxu0 %v2871
    %2873 = vmatprep.subr.mxu0 0.0
    %v2874 = vand.u32 %v2529, 4294901760
    %v2875 = vsub.f32 %v2529, %v2874
    %2876 = vmatpush1.xpose.msra.mxu0 %v2875
    %2877 = vmatprep.subr.mxu0 0.0
    %v2878 = vand.u32 %v2526, 4294901760
    %v2879 = vsub.f32 %v2526, %v2878
    %2880 = vmatpush1.xpose.msra.mxu0 %v2879
    %2881 = vmatprep.subr.mxu0 0.0
    %v2882 = vand.u32 %v2523, 4294901760
    %v2883 = vsub.f32 %v2523, %v2882
    %2884 = vmatpush1.xpose.msra.mxu0 %v2883
    %2885 = vmatprep.subr.mxu0 0.0
    %v2886 = vand.u32 %v2520, 4294901760
    %v2887 = vsub.f32 %v2520, %v2886
    %2888 = vmatpush1.xpose.msra.mxu0 %v2887
    %2889 = vmatprep.subr.mxu0 0.0
    %2890 = vmatpush2.xpose.msra.mxu0 0.0
    %2891 = vmatprep.subr.mxu0 0.0
    %2892 = vmatpush2.xpose.msra.mxu0 0.0
    %2893 = vmatprep.subr.mxu0 0.0
    %2894 = vmatpush2.xpose.msra.mxu0 0.0
    %2895 = vmatprep.subr.mxu0 0.0
    %2896 = vmatpush2.xpose.msra.mxu0 0.0
    %2897 = vmatprep.subr.mxu0 0.0
    %2898 = vmatpush2.xpose.msra.mxu0 0.0
    %2899 = vmatprep.subr.mxu0 0.0
    %2900 = vmatpush2.xpose.msra.mxu0 0.0
    %2901 = vmatprep.subr.mxu0 0.0
    %2902 = vmatpush2.xpose.msra.mxu0 0.0
    %2903 = vmatprep.subr.mxu0 0.0
    %2904 = vmatpush2.xpose.msra.mxu0 0.0
    %2905 = vmatprep.subr.mxu0 0.0
    %2906 = vmatpush2.xpose.msra.mxu0 0.0
    %2907 = vmatprep.subr.mxu0 0.0
    %2908 = vmatpush2.xpose.msra.mxu0 0.0
    %2909 = vmatprep.subr.mxu0 0.0
    %2910 = vmatpush2.xpose.msra.mxu0 0.0
    %2911 = vmatprep.subr.mxu0 0.0
    %2912 = vmatpush2.xpose.msra.mxu0 0.0
    %2913 = vmatprep.subr.mxu0 0.0
    %2914 = vmatpush2.xpose.msra.mxu0 0.0
    %2915 = vmatprep.subr.mxu0 0.0
    %2916 = vmatpush2.xpose.msra.mxu0 0.0
    %2917 = vmatprep.subr.mxu0 0.0
    %2918 = vmatpush2.xpose.msra.mxu0 0.0
    %2919 = vmatprep.subr.mxu0 0.0
    %2920 = vmatpush2.xpose.msra.mxu0 0.0
    %2921 = vmatprep.mubr.f32.mxu0 0.0
    %v2922 = vand.u32 %v2514, 4294901760
    %v2923 = vsub.f32 %v2514, %v2922
    %2924 = vmatmul.mubr.f32.gmra.mxu0 %v2923
    %v2925 = vpop.f32.mrf.mxu0
    %v2926 = vadd.f32 %v2816, %v2925
    %v2927 = vpop.f32.mrf.mxu0
    %2928 = vmatprep.mubr.f32.mxu0 0.0
    %v2929 = vand.u32 %v2517, 4294901760
    %v2930 = vsub.f32 %v2517, %v2929
    %2931 = vmatmul.mubr.f32.gmra.mxu0 %v2930
    %v2932 = vpop.f32.mrf.mxu0
    %v2933 = vadd.f32 %v2822, %v2932
    %v2934 = vpop.f32.mrf.mxu0
    %2935 = vdwg.mxu0
    %2936 = vmatprep.subr.mxu0 0.0
    %v2937 = vand.u32 %v2565, 4294901760
    %2938 = vmatpush1.xpose.msra.mxu0 %v2937
    %2939 = vmatprep.subr.mxu0 0.0
    %v2940 = vand.u32 %v2562, 4294901760
    %2941 = vmatpush1.xpose.msra.mxu0 %v2940
    %2942 = vmatprep.subr.mxu0 0.0
    %v2943 = vand.u32 %v2559, 4294901760
    %2944 = vmatpush1.xpose.msra.mxu0 %v2943
    %2945 = vmatprep.subr.mxu0 0.0
    %v2946 = vand.u32 %v2556, 4294901760
    %2947 = vmatpush1.xpose.msra.mxu0 %v2946
    %2948 = vmatprep.subr.mxu0 0.0
    %v2949 = vand.u32 %v2553, 4294901760
    %2950 = vmatpush1.xpose.msra.mxu0 %v2949
    %2951 = vmatprep.subr.mxu0 0.0
    %v2952 = vand.u32 %v2550, 4294901760
    %2953 = vmatpush1.xpose.msra.mxu0 %v2952
    %2954 = vmatprep.subr.mxu0 0.0
    %v2955 = vand.u32 %v2547, 4294901760
    %2956 = vmatpush1.xpose.msra.mxu0 %v2955
    %2957 = vmatprep.subr.mxu0 0.0
    %v2958 = vand.u32 %v2544, 4294901760
    %2959 = vmatpush1.xpose.msra.mxu0 %v2958
    %2960 = vmatprep.subr.mxu0 0.0
    %v2961 = vand.u32 %v2541, 4294901760
    %2962 = vmatpush1.xpose.msra.mxu0 %v2961
    %2963 = vmatprep.subr.mxu0 0.0
    %v2964 = vand.u32 %v2538, 4294901760
    %2965 = vmatpush1.xpose.msra.mxu0 %v2964
    %2966 = vmatprep.subr.mxu0 0.0
    %v2967 = vand.u32 %v2535, 4294901760
    %2968 = vmatpush1.xpose.msra.mxu0 %v2967
    %2969 = vmatprep.subr.mxu0 0.0
    %v2970 = vand.u32 %v2532, 4294901760
    %2971 = vmatpush1.xpose.msra.mxu0 %v2970
    %2972 = vmatprep.subr.mxu0 0.0
    %v2973 = vand.u32 %v2529, 4294901760
    %2974 = vmatpush1.xpose.msra.mxu0 %v2973
    %2975 = vmatprep.subr.mxu0 0.0
    %v2976 = vand.u32 %v2526, 4294901760
    %2977 = vmatpush1.xpose.msra.mxu0 %v2976
    %2978 = vmatprep.subr.mxu0 0.0
    %v2979 = vand.u32 %v2523, 4294901760
    %2980 = vmatpush1.xpose.msra.mxu0 %v2979
    %2981 = vmatprep.subr.mxu0 0.0
    %v2982 = vand.u32 %v2520, 4294901760
    %2983 = vmatpush1.xpose.msra.mxu0 %v2982
    %2984 = vmatprep.subr.mxu0 0.0
    %2985 = vmatpush2.xpose.msra.mxu0 0.0
    %2986 = vmatprep.subr.mxu0 0.0
    %2987 = vmatpush2.xpose.msra.mxu0 0.0
    %2988 = vmatprep.subr.mxu0 0.0
    %2989 = vmatpush2.xpose.msra.mxu0 0.0
    %2990 = vmatprep.subr.mxu0 0.0
    %2991 = vmatpush2.xpose.msra.mxu0 0.0
    %2992 = vmatprep.subr.mxu0 0.0
    %2993 = vmatpush2.xpose.msra.mxu0 0.0
    %2994 = vmatprep.subr.mxu0 0.0
    %2995 = vmatpush2.xpose.msra.mxu0 0.0
    %2996 = vmatprep.subr.mxu0 0.0
    %2997 = vmatpush2.xpose.msra.mxu0 0.0
    %2998 = vmatprep.subr.mxu0 0.0
    %2999 = vmatpush2.xpose.msra.mxu0 0.0
    %3000 = vmatprep.subr.mxu0 0.0
    %3001 = vmatpush2.xpose.msra.mxu0 0.0
    %3002 = vmatprep.subr.mxu0 0.0
    %3003 = vmatpush2.xpose.msra.mxu0 0.0
    %3004 = vmatprep.subr.mxu0 0.0
    %3005 = vmatpush2.xpose.msra.mxu0 0.0
    %3006 = vmatprep.subr.mxu0 0.0
    %3007 = vmatpush2.xpose.msra.mxu0 0.0
    %3008 = vmatprep.subr.mxu0 0.0
    %3009 = vmatpush2.xpose.msra.mxu0 0.0
    %3010 = vmatprep.subr.mxu0 0.0
    %3011 = vmatpush2.xpose.msra.mxu0 0.0
    %3012 = vmatprep.subr.mxu0 0.0
    %3013 = vmatpush2.xpose.msra.mxu0 0.0
    %3014 = vmatprep.subr.mxu0 0.0
    %3015 = vmatpush2.xpose.msra.mxu0 0.0
    %3016 = vmatprep.mubr.f32.mxu0 0.0
    %v3017 = vand.u32 %v2514, 4294901760
    %v3018 = vsub.f32 %v2514, %v3017
    %v3019 = vand.u32 %v3018, 4294901760
    %3020 = vmatmul.mubr.f32.gmra.mxu0 %v3019
    %v3021 = vpop.f32.mrf.mxu0
    %v3022 = vadd.f32 %v2926, %v3021
    %v3023 = vpop.f32.mrf.mxu0
    %3024 = vmatprep.mubr.f32.mxu0 0.0
    %v3025 = vand.u32 %v2517, 4294901760
    %v3026 = vsub.f32 %v2517, %v3025
    %v3027 = vand.u32 %v3026, 4294901760
    %3028 = vmatmul.mubr.f32.gmra.mxu0 %v3027
    %v3029 = vpop.f32.mrf.mxu0
    %v3030 = vadd.f32 %v2933, %v3029
    %v3031 = vpop.f32.mrf.mxu0
    %3032 = vdwg.mxu0
    %3033 = vmatprep.subr.mxu0 0.0
    %v3034 = vand.u32 %v2565, 4294901760
    %v3035 = vsub.f32 %v2565, %v3034
    %v3036 = vand.u32 %v3035, 4294901760
    %3037 = vmatpush1.xpose.msra.mxu0 %v3036
    %3038 = vmatprep.subr.mxu0 0.0
    %v3039 = vand.u32 %v2562, 4294901760
    %v3040 = vsub.f32 %v2562, %v3039
    %v3041 = vand.u32 %v3040, 4294901760
    %3042 = vmatpush1.xpose.msra.mxu0 %v3041
    %3043 = vmatprep.subr.mxu0 0.0
    %v3044 = vand.u32 %v2559, 4294901760
    %v3045 = vsub.f32 %v2559, %v3044
    %v3046 = vand.u32 %v3045, 4294901760
    %3047 = vmatpush1.xpose.msra.mxu0 %v3046
    %3048 = vmatprep.subr.mxu0 0.0
    %v3049 = vand.u32 %v2556, 4294901760
    %v3050 = vsub.f32 %v2556, %v3049
    %v3051 = vand.u32 %v3050, 4294901760
    %3052 = vmatpush1.xpose.msra.mxu0 %v3051
    %3053 = vmatprep.subr.mxu0 0.0
    %v3054 = vand.u32 %v2553, 4294901760
    %v3055 = vsub.f32 %v2553, %v3054
    %v3056 = vand.u32 %v3055, 4294901760
    %3057 = vmatpush1.xpose.msra.mxu0 %v3056
    %3058 = vmatprep.subr.mxu0 0.0
    %v3059 = vand.u32 %v2550, 4294901760
    %v3060 = vsub.f32 %v2550, %v3059
    %v3061 = vand.u32 %v3060, 4294901760
    %3062 = vmatpush1.xpose.msra.mxu0 %v3061
    %3063 = vmatprep.subr.mxu0 0.0
    %v3064 = vand.u32 %v2547, 4294901760
    %v3065 = vsub.f32 %v2547, %v3064
    %v3066 = vand.u32 %v3065, 4294901760
    %3067 = vmatpush1.xpose.msra.mxu0 %v3066
    %3068 = vmatprep.subr.mxu0 0.0
    %v3069 = vand.u32 %v2544, 4294901760
    %v3070 = vsub.f32 %v2544, %v3069
    %v3071 = vand.u32 %v3070, 4294901760
    %3072 = vmatpush1.xpose.msra.mxu0 %v3071
    %3073 = vmatprep.subr.mxu0 0.0
    %v3074 = vand.u32 %v2541, 4294901760
    %v3075 = vsub.f32 %v2541, %v3074
    %v3076 = vand.u32 %v3075, 4294901760
    %3077 = vmatpush1.xpose.msra.mxu0 %v3076
    %3078 = vmatprep.subr.mxu0 0.0
    %v3079 = vand.u32 %v2538, 4294901760
    %v3080 = vsub.f32 %v2538, %v3079
    %v3081 = vand.u32 %v3080, 4294901760
    %3082 = vmatpush1.xpose.msra.mxu0 %v3081
    %3083 = vmatprep.subr.mxu0 0.0
    %v3084 = vand.u32 %v2535, 4294901760
    %v3085 = vsub.f32 %v2535, %v3084
    %v3086 = vand.u32 %v3085, 4294901760
    %3087 = vmatpush1.xpose.msra.mxu0 %v3086
    %3088 = vmatprep.subr.mxu0 0.0
    %v3089 = vand.u32 %v2532, 4294901760
    %v3090 = vsub.f32 %v2532, %v3089
    %v3091 = vand.u32 %v3090, 4294901760
    %3092 = vmatpush1.xpose.msra.mxu0 %v3091
    %3093 = vmatprep.subr.mxu0 0.0
    %v3094 = vand.u32 %v2529, 4294901760
    %v3095 = vsub.f32 %v2529, %v3094
    %v3096 = vand.u32 %v3095, 4294901760
    %3097 = vmatpush1.xpose.msra.mxu0 %v3096
    %3098 = vmatprep.subr.mxu0 0.0
    %v3099 = vand.u32 %v2526, 4294901760
    %v3100 = vsub.f32 %v2526, %v3099
    %v3101 = vand.u32 %v3100, 4294901760
    %3102 = vmatpush1.xpose.msra.mxu0 %v3101
    %3103 = vmatprep.subr.mxu0 0.0
    %v3104 = vand.u32 %v2523, 4294901760
    %v3105 = vsub.f32 %v2523, %v3104
    %v3106 = vand.u32 %v3105, 4294901760
    %3107 = vmatpush1.xpose.msra.mxu0 %v3106
    %3108 = vmatprep.subr.mxu0 0.0
    %v3109 = vand.u32 %v2520, 4294901760
    %v3110 = vsub.f32 %v2520, %v3109
    %v3111 = vand.u32 %v3110, 4294901760
    %3112 = vmatpush1.xpose.msra.mxu0 %v3111
    %3113 = vmatprep.subr.mxu0 0.0
    %3114 = vmatpush2.xpose.msra.mxu0 0.0
    %3115 = vmatprep.subr.mxu0 0.0
    %3116 = vmatpush2.xpose.msra.mxu0 0.0
    %3117 = vmatprep.subr.mxu0 0.0
    %3118 = vmatpush2.xpose.msra.mxu0 0.0
    %3119 = vmatprep.subr.mxu0 0.0
    %3120 = vmatpush2.xpose.msra.mxu0 0.0
    %3121 = vmatprep.subr.mxu0 0.0
    %3122 = vmatpush2.xpose.msra.mxu0 0.0
    %3123 = vmatprep.subr.mxu0 0.0
    %3124 = vmatpush2.xpose.msra.mxu0 0.0
    %3125 = vmatprep.subr.mxu0 0.0
    %3126 = vmatpush2.xpose.msra.mxu0 0.0
    %3127 = vmatprep.subr.mxu0 0.0
    %3128 = vmatpush2.xpose.msra.mxu0 0.0
    %3129 = vmatprep.subr.mxu0 0.0
    %3130 = vmatpush2.xpose.msra.mxu0 0.0
    %3131 = vmatprep.subr.mxu0 0.0
    %3132 = vmatpush2.xpose.msra.mxu0 0.0
    %3133 = vmatprep.subr.mxu0 0.0
    %3134 = vmatpush2.xpose.msra.mxu0 0.0
    %3135 = vmatprep.subr.mxu0 0.0
    %3136 = vmatpush2.xpose.msra.mxu0 0.0
    %3137 = vmatprep.subr.mxu0 0.0
    %3138 = vmatpush2.xpose.msra.mxu0 0.0
    %3139 = vmatprep.subr.mxu0 0.0
    %3140 = vmatpush2.xpose.msra.mxu0 0.0
    %3141 = vmatprep.subr.mxu0 0.0
    %3142 = vmatpush2.xpose.msra.mxu0 0.0
    %3143 = vmatprep.subr.mxu0 0.0
    %3144 = vmatpush2.xpose.msra.mxu0 0.0
    %3145 = vmatprep.mubr.f32.mxu0 0.0
    %v3146 = vand.u32 %v2514, 4294901760
    %3147 = vmatmul.mubr.f32.gmra.mxu0 %v3146
    %v3148 = vpop.f32.mrf.mxu0
    %v3149 = vadd.f32 %v3022, %v3148
    %v3150 = vpop.f32.mrf.mxu0
    %3151 = vmatprep.mubr.f32.mxu0 0.0
    %v3152 = vand.u32 %v2517, 4294901760
    %3153 = vmatmul.mubr.f32.gmra.mxu0 %v3152
    %v3154 = vpop.f32.mrf.mxu0
    %v3155 = vadd.f32 %v3030, %v3154
    %v3156 = vpop.f32.mrf.mxu0
    %3157 = vdwg.mxu0
    %3158 = vmatprep.subr.mxu0 0.0
    %v3159 = vand.u32 %v2565, 4294901760
    %3160 = vmatpush1.xpose.msra.mxu0 %v3159
    %3161 = vmatprep.subr.mxu0 0.0
    %v3162 = vand.u32 %v2562, 4294901760
    %3163 = vmatpush1.xpose.msra.mxu0 %v3162
    %3164 = vmatprep.subr.mxu0 0.0
    %v3165 = vand.u32 %v2559, 4294901760
    %3166 = vmatpush1.xpose.msra.mxu0 %v3165
    %3167 = vmatprep.subr.mxu0 0.0
    %v3168 = vand.u32 %v2556, 4294901760
    %3169 = vmatpush1.xpose.msra.mxu0 %v3168
    %3170 = vmatprep.subr.mxu0 0.0
    %v3171 = vand.u32 %v2553, 4294901760
    %3172 = vmatpush1.xpose.msra.mxu0 %v3171
    %3173 = vmatprep.subr.mxu0 0.0
    %v3174 = vand.u32 %v2550, 4294901760
    %3175 = vmatpush1.xpose.msra.mxu0 %v3174
    %3176 = vmatprep.subr.mxu0 0.0
    %v3177 = vand.u32 %v2547, 4294901760
    %3178 = vmatpush1.xpose.msra.mxu0 %v3177
    %3179 = vmatprep.subr.mxu0 0.0
    %v3180 = vand.u32 %v2544, 4294901760
    %3181 = vmatpush1.xpose.msra.mxu0 %v3180
    %3182 = vmatprep.subr.mxu0 0.0
    %v3183 = vand.u32 %v2541, 4294901760
    %3184 = vmatpush1.xpose.msra.mxu0 %v3183
    %3185 = vmatprep.subr.mxu0 0.0
    %v3186 = vand.u32 %v2538, 4294901760
    %3187 = vmatpush1.xpose.msra.mxu0 %v3186
    %3188 = vmatprep.subr.mxu0 0.0
    %v3189 = vand.u32 %v2535, 4294901760
    %3190 = vmatpush1.xpose.msra.mxu0 %v3189
    %3191 = vmatprep.subr.mxu0 0.0
    %v3192 = vand.u32 %v2532, 4294901760
    %3193 = vmatpush1.xpose.msra.mxu0 %v3192
    %3194 = vmatprep.subr.mxu0 0.0
    %v3195 = vand.u32 %v2529, 4294901760
    %3196 = vmatpush1.xpose.msra.mxu0 %v3195
    %3197 = vmatprep.subr.mxu0 0.0
    %v3198 = vand.u32 %v2526, 4294901760
    %3199 = vmatpush1.xpose.msra.mxu0 %v3198
    %3200 = vmatprep.subr.mxu0 0.0
    %v3201 = vand.u32 %v2523, 4294901760
    %3202 = vmatpush1.xpose.msra.mxu0 %v3201
    %3203 = vmatprep.subr.mxu0 0.0
    %v3204 = vand.u32 %v2520, 4294901760
    %3205 = vmatpush1.xpose.msra.mxu0 %v3204
    %3206 = vmatprep.subr.mxu0 0.0
    %3207 = vmatpush2.xpose.msra.mxu0 0.0
    %3208 = vmatprep.subr.mxu0 0.0
    %3209 = vmatpush2.xpose.msra.mxu0 0.0
    %3210 = vmatprep.subr.mxu0 0.0
    %3211 = vmatpush2.xpose.msra.mxu0 0.0
    %3212 = vmatprep.subr.mxu0 0.0
    %3213 = vmatpush2.xpose.msra.mxu0 0.0
    %3214 = vmatprep.subr.mxu0 0.0
    %3215 = vmatpush2.xpose.msra.mxu0 0.0
    %3216 = vmatprep.subr.mxu0 0.0
    %3217 = vmatpush2.xpose.msra.mxu0 0.0
    %3218 = vmatprep.subr.mxu0 0.0
    %3219 = vmatpush2.xpose.msra.mxu0 0.0
    %3220 = vmatprep.subr.mxu0 0.0
    %3221 = vmatpush2.xpose.msra.mxu0 0.0
    %3222 = vmatprep.subr.mxu0 0.0
    %3223 = vmatpush2.xpose.msra.mxu0 0.0
    %3224 = vmatprep.subr.mxu0 0.0
    %3225 = vmatpush2.xpose.msra.mxu0 0.0
    %3226 = vmatprep.subr.mxu0 0.0
    %3227 = vmatpush2.xpose.msra.mxu0 0.0
    %3228 = vmatprep.subr.mxu0 0.0
    %3229 = vmatpush2.xpose.msra.mxu0 0.0
    %3230 = vmatprep.subr.mxu0 0.0
    %3231 = vmatpush2.xpose.msra.mxu0 0.0
    %3232 = vmatprep.subr.mxu0 0.0
    %3233 = vmatpush2.xpose.msra.mxu0 0.0
    %3234 = vmatprep.subr.mxu0 0.0
    %3235 = vmatpush2.xpose.msra.mxu0 0.0
    %3236 = vmatprep.subr.mxu0 0.0
    %3237 = vmatpush2.xpose.msra.mxu0 0.0
    %3238 = vmatprep.mubr.f32.mxu0 0.0
    %v3239 = vand.u32 %v2514, 4294901760
    %3240 = vmatmul.mubr.f32.gmra.mxu0 %v3239
    %v3241 = vpop.f32.mrf.mxu0
    %v3242 = vadd.f32 %v3149, %v3241
    %v3243 = vpop.f32.mrf.mxu0
    %3244 = vmatprep.mubr.f32.mxu0 0.0
    %v3245 = vand.u32 %v2517, 4294901760
    %3246 = vmatmul.mubr.f32.gmra.mxu0 %v3245
    %v3247 = vpop.f32.mrf.mxu0
    %v3248 = vadd.f32 %v3155, %v3247
    %v3249 = vpop.f32.mrf.mxu0
    %3250 = vdwg.mxu0
    %v3252 = vsel %vm298, %v34, 0
    %v3255 = vsel %vm298, %v35, 0
    %v3258 = vsel %vm298, %v106, 0
    %v3261 = vsel %vm298, %v107, 0
    %v3264 = vsel %vm298, %v108, 0
    %v3267 = vsel %vm298, %v109, 0
    %v3270 = vsel %vm298, %v110, 0
    %v3273 = vsel %vm298, %v111, 0
    %v3276 = vsel %vm298, %v112, 0
    %v3279 = vsel %vm298, %v113, 0
    %v3282 = vsel %vm298, %v114, 0
    %v3285 = vsel %vm298, %v115, 0
    %v3288 = vsel %vm298, %v116, 0
    %v3291 = vsel %vm298, %v117, 0
    %v3294 = vsel %vm298, %v118, 0
    %v3297 = vsel %vm298, %v119, 0
    %v3300 = vsel %vm298, %v120, 0
    %v3303 = vsel %vm298, %v121, 0
    %3305 = vmatprep.subr.mxu0 0.0
    %v3306 = vand.u32 %v3303, 4294901760
    %3307 = vmatpush1.xpose.msra.mxu0 %v3306
    %3308 = vmatprep.subr.mxu0 0.0
    %v3309 = vand.u32 %v3300, 4294901760
    %3310 = vmatpush1.xpose.msra.mxu0 %v3309
    %3311 = vmatprep.subr.mxu0 0.0
    %v3312 = vand.u32 %v3297, 4294901760
    %3313 = vmatpush1.xpose.msra.mxu0 %v3312
    %3314 = vmatprep.subr.mxu0 0.0
    %v3315 = vand.u32 %v3294, 4294901760
    %3316 = vmatpush1.xpose.msra.mxu0 %v3315
    %3317 = vmatprep.subr.mxu0 0.0
    %v3318 = vand.u32 %v3291, 4294901760
    %3319 = vmatpush1.xpose.msra.mxu0 %v3318
    %3320 = vmatprep.subr.mxu0 0.0
    %v3321 = vand.u32 %v3288, 4294901760
    %3322 = vmatpush1.xpose.msra.mxu0 %v3321
    %3323 = vmatprep.subr.mxu0 0.0
    %v3324 = vand.u32 %v3285, 4294901760
    %3325 = vmatpush1.xpose.msra.mxu0 %v3324
    %3326 = vmatprep.subr.mxu0 0.0
    %v3327 = vand.u32 %v3282, 4294901760
    %3328 = vmatpush1.xpose.msra.mxu0 %v3327
    %3329 = vmatprep.subr.mxu0 0.0
    %v3330 = vand.u32 %v3279, 4294901760
    %3331 = vmatpush1.xpose.msra.mxu0 %v3330
    %3332 = vmatprep.subr.mxu0 0.0
    %v3333 = vand.u32 %v3276, 4294901760
    %3334 = vmatpush1.xpose.msra.mxu0 %v3333
    %3335 = vmatprep.subr.mxu0 0.0
    %v3336 = vand.u32 %v3273, 4294901760
    %3337 = vmatpush1.xpose.msra.mxu0 %v3336
    %3338 = vmatprep.subr.mxu0 0.0
    %v3339 = vand.u32 %v3270, 4294901760
    %3340 = vmatpush1.xpose.msra.mxu0 %v3339
    %3341 = vmatprep.subr.mxu0 0.0
    %v3342 = vand.u32 %v3267, 4294901760
    %3343 = vmatpush1.xpose.msra.mxu0 %v3342
    %3344 = vmatprep.subr.mxu0 0.0
    %v3345 = vand.u32 %v3264, 4294901760
    %3346 = vmatpush1.xpose.msra.mxu0 %v3345
    %3347 = vmatprep.subr.mxu0 0.0
    %v3348 = vand.u32 %v3261, 4294901760
    %3349 = vmatpush1.xpose.msra.mxu0 %v3348
    %3350 = vmatprep.subr.mxu0 0.0
    %v3351 = vand.u32 %v3258, 4294901760
    %3352 = vmatpush1.xpose.msra.mxu0 %v3351
    %3353 = vmatprep.subr.mxu0 0.0
    %3354 = vmatpush2.xpose.msra.mxu0 0.0
    %3355 = vmatprep.subr.mxu0 0.0
    %3356 = vmatpush2.xpose.msra.mxu0 0.0
    %3357 = vmatprep.subr.mxu0 0.0
    %3358 = vmatpush2.xpose.msra.mxu0 0.0
    %3359 = vmatprep.subr.mxu0 0.0
    %3360 = vmatpush2.xpose.msra.mxu0 0.0
    %3361 = vmatprep.subr.mxu0 0.0
    %3362 = vmatpush2.xpose.msra.mxu0 0.0
    %3363 = vmatprep.subr.mxu0 0.0
    %3364 = vmatpush2.xpose.msra.mxu0 0.0
    %3365 = vmatprep.subr.mxu0 0.0
    %3366 = vmatpush2.xpose.msra.mxu0 0.0
    %3367 = vmatprep.subr.mxu0 0.0
    %3368 = vmatpush2.xpose.msra.mxu0 0.0
    %3369 = vmatprep.subr.mxu0 0.0
    %3370 = vmatpush2.xpose.msra.mxu0 0.0
    %3371 = vmatprep.subr.mxu0 0.0
    %3372 = vmatpush2.xpose.msra.mxu0 0.0
    %3373 = vmatprep.subr.mxu0 0.0
    %3374 = vmatpush2.xpose.msra.mxu0 0.0
    %3375 = vmatprep.subr.mxu0 0.0
    %3376 = vmatpush2.xpose.msra.mxu0 0.0
    %3377 = vmatprep.subr.mxu0 0.0
    %3378 = vmatpush2.xpose.msra.mxu0 0.0
    %3379 = vmatprep.subr.mxu0 0.0
    %3380 = vmatpush2.xpose.msra.mxu0 0.0
    %3381 = vmatprep.subr.mxu0 0.0
    %3382 = vmatpush2.xpose.msra.mxu0 0.0
    %3383 = vmatprep.subr.mxu0 0.0
    %3384 = vmatpush2.xpose.msra.mxu0 0.0
    %3385 = vmatprep.mubr.f32.mxu0 0.0
    %v3386 = vand.u32 %v3252, 4294901760
    %v3387 = vsub.f32 %v3252, %v3386
    %v3388 = vand.u32 %v3387, 4294901760
    %v3389 = vsub.f32 %v3387, %v3388
    %v3390 = vand.u32 %v3389, 4294901760
    %3391 = vmatmul.mubr.f32.gmra.mxu0 %v3390
    %v3392 = vpop.f32.mrf.mxu0
    %v3393 = vadd.f32 0.0, %v3392
    %v3394 = vpop.f32.mrf.mxu0
    %3395 = vmatprep.mubr.f32.mxu0 0.0
    %v3396 = vand.u32 %v3255, 4294901760
    %v3397 = vsub.f32 %v3255, %v3396
    %v3398 = vand.u32 %v3397, 4294901760
    %v3399 = vsub.f32 %v3397, %v3398
    %v3400 = vand.u32 %v3399, 4294901760
    %3401 = vmatmul.mubr.f32.gmra.mxu0 %v3400
    %v3402 = vpop.f32.mrf.mxu0
    %v3403 = vadd.f32 0.0, %v3402
    %v3404 = vpop.f32.mrf.mxu0
    %3405 = vdwg.mxu0
    %3406 = vmatprep.subr.mxu0 0.0
    %v3407 = vand.u32 %v3303, 4294901760
    %v3408 = vsub.f32 %v3303, %v3407
    %v3409 = vand.u32 %v3408, 4294901760
    %v3410 = vsub.f32 %v3408, %v3409
    %v3411 = vand.u32 %v3410, 4294901760
    %3412 = vmatpush1.xpose.msra.mxu0 %v3411
    %3413 = vmatprep.subr.mxu0 0.0
    %v3414 = vand.u32 %v3300, 4294901760
    %v3415 = vsub.f32 %v3300, %v3414
    %v3416 = vand.u32 %v3415, 4294901760
    %v3417 = vsub.f32 %v3415, %v3416
    %v3418 = vand.u32 %v3417, 4294901760
    %3419 = vmatpush1.xpose.msra.mxu0 %v3418
    %3420 = vmatprep.subr.mxu0 0.0
    %v3421 = vand.u32 %v3297, 4294901760
    %v3422 = vsub.f32 %v3297, %v3421
    %v3423 = vand.u32 %v3422, 4294901760
    %v3424 = vsub.f32 %v3422, %v3423
    %v3425 = vand.u32 %v3424, 4294901760
    %3426 = vmatpush1.xpose.msra.mxu0 %v3425
    %3427 = vmatprep.subr.mxu0 0.0
    %v3428 = vand.u32 %v3294, 4294901760
    %v3429 = vsub.f32 %v3294, %v3428
    %v3430 = vand.u32 %v3429, 4294901760
    %v3431 = vsub.f32 %v3429, %v3430
    %v3432 = vand.u32 %v3431, 4294901760
    %3433 = vmatpush1.xpose.msra.mxu0 %v3432
    %3434 = vmatprep.subr.mxu0 0.0
    %v3435 = vand.u32 %v3291, 4294901760
    %v3436 = vsub.f32 %v3291, %v3435
    %v3437 = vand.u32 %v3436, 4294901760
    %v3438 = vsub.f32 %v3436, %v3437
    %v3439 = vand.u32 %v3438, 4294901760
    %3440 = vmatpush1.xpose.msra.mxu0 %v3439
    %3441 = vmatprep.subr.mxu0 0.0
    %v3442 = vand.u32 %v3288, 4294901760
    %v3443 = vsub.f32 %v3288, %v3442
    %v3444 = vand.u32 %v3443, 4294901760
    %v3445 = vsub.f32 %v3443, %v3444
    %v3446 = vand.u32 %v3445, 4294901760
    %3447 = vmatpush1.xpose.msra.mxu0 %v3446
    %3448 = vmatprep.subr.mxu0 0.0
    %v3449 = vand.u32 %v3285, 4294901760
    %v3450 = vsub.f32 %v3285, %v3449
    %v3451 = vand.u32 %v3450, 4294901760
    %v3452 = vsub.f32 %v3450, %v3451
    %v3453 = vand.u32 %v3452, 4294901760
    %3454 = vmatpush1.xpose.msra.mxu0 %v3453
    %3455 = vmatprep.subr.mxu0 0.0
    %v3456 = vand.u32 %v3282, 4294901760
    %v3457 = vsub.f32 %v3282, %v3456
    %v3458 = vand.u32 %v3457, 4294901760
    %v3459 = vsub.f32 %v3457, %v3458
    %v3460 = vand.u32 %v3459, 4294901760
    %3461 = vmatpush1.xpose.msra.mxu0 %v3460
    %3462 = vmatprep.subr.mxu0 0.0
    %v3463 = vand.u32 %v3279, 4294901760
    %v3464 = vsub.f32 %v3279, %v3463
    %v3465 = vand.u32 %v3464, 4294901760
    %v3466 = vsub.f32 %v3464, %v3465
    %v3467 = vand.u32 %v3466, 4294901760
    %3468 = vmatpush1.xpose.msra.mxu0 %v3467
    %3469 = vmatprep.subr.mxu0 0.0
    %v3470 = vand.u32 %v3276, 4294901760
    %v3471 = vsub.f32 %v3276, %v3470
    %v3472 = vand.u32 %v3471, 4294901760
    %v3473 = vsub.f32 %v3471, %v3472
    %v3474 = vand.u32 %v3473, 4294901760
    %3475 = vmatpush1.xpose.msra.mxu0 %v3474
    %3476 = vmatprep.subr.mxu0 0.0
    %v3477 = vand.u32 %v3273, 4294901760
    %v3478 = vsub.f32 %v3273, %v3477
    %v3479 = vand.u32 %v3478, 4294901760
    %v3480 = vsub.f32 %v3478, %v3479
    %v3481 = vand.u32 %v3480, 4294901760
    %3482 = vmatpush1.xpose.msra.mxu0 %v3481
    %3483 = vmatprep.subr.mxu0 0.0
    %v3484 = vand.u32 %v3270, 4294901760
    %v3485 = vsub.f32 %v3270, %v3484
    %v3486 = vand.u32 %v3485, 4294901760
    %v3487 = vsub.f32 %v3485, %v3486
    %v3488 = vand.u32 %v3487, 4294901760
    %3489 = vmatpush1.xpose.msra.mxu0 %v3488
    %3490 = vmatprep.subr.mxu0 0.0
    %v3491 = vand.u32 %v3267, 4294901760
    %v3492 = vsub.f32 %v3267, %v3491
    %v3493 = vand.u32 %v3492, 4294901760
    %v3494 = vsub.f32 %v3492, %v3493
    %v3495 = vand.u32 %v3494, 4294901760
    %3496 = vmatpush1.xpose.msra.mxu0 %v3495
    %3497 = vmatprep.subr.mxu0 0.0
    %v3498 = vand.u32 %v3264, 4294901760
    %v3499 = vsub.f32 %v3264, %v3498
    %v3500 = vand.u32 %v3499, 4294901760
    %v3501 = vsub.f32 %v3499, %v3500
    %v3502 = vand.u32 %v3501, 4294901760
    %3503 = vmatpush1.xpose.msra.mxu0 %v3502
    %3504 = vmatprep.subr.mxu0 0.0
    %v3505 = vand.u32 %v3261, 4294901760
    %v3506 = vsub.f32 %v3261, %v3505
    %v3507 = vand.u32 %v3506, 4294901760
    %v3508 = vsub.f32 %v3506, %v3507
    %v3509 = vand.u32 %v3508, 4294901760
    %3510 = vmatpush1.xpose.msra.mxu0 %v3509
    %3511 = vmatprep.subr.mxu0 0.0
    %v3512 = vand.u32 %v3258, 4294901760
    %v3513 = vsub.f32 %v3258, %v3512
    %v3514 = vand.u32 %v3513, 4294901760
    %v3515 = vsub.f32 %v3513, %v3514
    %v3516 = vand.u32 %v3515, 4294901760
    %3517 = vmatpush1.xpose.msra.mxu0 %v3516
    %3518 = vmatprep.subr.mxu0 0.0
    %3519 = vmatpush2.xpose.msra.mxu0 0.0
    %3520 = vmatprep.subr.mxu0 0.0
    %3521 = vmatpush2.xpose.msra.mxu0 0.0
    %3522 = vmatprep.subr.mxu0 0.0
    %3523 = vmatpush2.xpose.msra.mxu0 0.0
    %3524 = vmatprep.subr.mxu0 0.0
    %3525 = vmatpush2.xpose.msra.mxu0 0.0
    %3526 = vmatprep.subr.mxu0 0.0
    %3527 = vmatpush2.xpose.msra.mxu0 0.0
    %3528 = vmatprep.subr.mxu0 0.0
    %3529 = vmatpush2.xpose.msra.mxu0 0.0
    %3530 = vmatprep.subr.mxu0 0.0
    %3531 = vmatpush2.xpose.msra.mxu0 0.0
    %3532 = vmatprep.subr.mxu0 0.0
    %3533 = vmatpush2.xpose.msra.mxu0 0.0
    %3534 = vmatprep.subr.mxu0 0.0
    %3535 = vmatpush2.xpose.msra.mxu0 0.0
    %3536 = vmatprep.subr.mxu0 0.0
    %3537 = vmatpush2.xpose.msra.mxu0 0.0
    %3538 = vmatprep.subr.mxu0 0.0
    %3539 = vmatpush2.xpose.msra.mxu0 0.0
    %3540 = vmatprep.subr.mxu0 0.0
    %3541 = vmatpush2.xpose.msra.mxu0 0.0
    %3542 = vmatprep.subr.mxu0 0.0
    %3543 = vmatpush2.xpose.msra.mxu0 0.0
    %3544 = vmatprep.subr.mxu0 0.0
    %3545 = vmatpush2.xpose.msra.mxu0 0.0
    %3546 = vmatprep.subr.mxu0 0.0
    %3547 = vmatpush2.xpose.msra.mxu0 0.0
    %3548 = vmatprep.subr.mxu0 0.0
    %3549 = vmatpush2.xpose.msra.mxu0 0.0
    %3550 = vmatprep.mubr.f32.mxu0 0.0
    %v3551 = vand.u32 %v3252, 4294901760
    %3552 = vmatmul.mubr.f32.gmra.mxu0 %v3551
    %v3553 = vpop.f32.mrf.mxu0
    %v3554 = vadd.f32 %v3393, %v3553
    %v3555 = vpop.f32.mrf.mxu0
    %3556 = vmatprep.mubr.f32.mxu0 0.0
    %v3557 = vand.u32 %v3255, 4294901760
    %3558 = vmatmul.mubr.f32.gmra.mxu0 %v3557
    %v3559 = vpop.f32.mrf.mxu0
    %v3560 = vadd.f32 %v3403, %v3559
    %v3561 = vpop.f32.mrf.mxu0
    %3562 = vdwg.mxu0
    %3563 = vmatprep.subr.mxu0 0.0
    %v3564 = vand.u32 %v3303, 4294901760
    %v3565 = vsub.f32 %v3303, %v3564
    %3566 = vmatpush1.xpose.msra.mxu0 %v3565
    %3567 = vmatprep.subr.mxu0 0.0
    %v3568 = vand.u32 %v3300, 4294901760
    %v3569 = vsub.f32 %v3300, %v3568
    %3570 = vmatpush1.xpose.msra.mxu0 %v3569
    %3571 = vmatprep.subr.mxu0 0.0
    %v3572 = vand.u32 %v3297, 4294901760
    %v3573 = vsub.f32 %v3297, %v3572
    %3574 = vmatpush1.xpose.msra.mxu0 %v3573
    %3575 = vmatprep.subr.mxu0 0.0
    %v3576 = vand.u32 %v3294, 4294901760
    %v3577 = vsub.f32 %v3294, %v3576
    %3578 = vmatpush1.xpose.msra.mxu0 %v3577
    %3579 = vmatprep.subr.mxu0 0.0
    %v3580 = vand.u32 %v3291, 4294901760
    %v3581 = vsub.f32 %v3291, %v3580
    %3582 = vmatpush1.xpose.msra.mxu0 %v3581
    %3583 = vmatprep.subr.mxu0 0.0
    %v3584 = vand.u32 %v3288, 4294901760
    %v3585 = vsub.f32 %v3288, %v3584
    %3586 = vmatpush1.xpose.msra.mxu0 %v3585
    %3587 = vmatprep.subr.mxu0 0.0
    %v3588 = vand.u32 %v3285, 4294901760
    %v3589 = vsub.f32 %v3285, %v3588
    %3590 = vmatpush1.xpose.msra.mxu0 %v3589
    %3591 = vmatprep.subr.mxu0 0.0
    %v3592 = vand.u32 %v3282, 4294901760
    %v3593 = vsub.f32 %v3282, %v3592
    %3594 = vmatpush1.xpose.msra.mxu0 %v3593
    %3595 = vmatprep.subr.mxu0 0.0
    %v3596 = vand.u32 %v3279, 4294901760
    %v3597 = vsub.f32 %v3279, %v3596
    %3598 = vmatpush1.xpose.msra.mxu0 %v3597
    %3599 = vmatprep.subr.mxu0 0.0
    %v3600 = vand.u32 %v3276, 4294901760
    %v3601 = vsub.f32 %v3276, %v3600
    %3602 = vmatpush1.xpose.msra.mxu0 %v3601
    %3603 = vmatprep.subr.mxu0 0.0
    %v3604 = vand.u32 %v3273, 4294901760
    %v3605 = vsub.f32 %v3273, %v3604
    %3606 = vmatpush1.xpose.msra.mxu0 %v3605
    %3607 = vmatprep.subr.mxu0 0.0
    %v3608 = vand.u32 %v3270, 4294901760
    %v3609 = vsub.f32 %v3270, %v3608
    %3610 = vmatpush1.xpose.msra.mxu0 %v3609
    %3611 = vmatprep.subr.mxu0 0.0
    %v3612 = vand.u32 %v3267, 4294901760
    %v3613 = vsub.f32 %v3267, %v3612
    %3614 = vmatpush1.xpose.msra.mxu0 %v3613
    %3615 = vmatprep.subr.mxu0 0.0
    %v3616 = vand.u32 %v3264, 4294901760
    %v3617 = vsub.f32 %v3264, %v3616
    %3618 = vmatpush1.xpose.msra.mxu0 %v3617
    %3619 = vmatprep.subr.mxu0 0.0
    %v3620 = vand.u32 %v3261, 4294901760
    %v3621 = vsub.f32 %v3261, %v3620
    %3622 = vmatpush1.xpose.msra.mxu0 %v3621
    %3623 = vmatprep.subr.mxu0 0.0
    %v3624 = vand.u32 %v3258, 4294901760
    %v3625 = vsub.f32 %v3258, %v3624
    %3626 = vmatpush1.xpose.msra.mxu0 %v3625
    %3627 = vmatprep.subr.mxu0 0.0
    %3628 = vmatpush2.xpose.msra.mxu0 0.0
    %3629 = vmatprep.subr.mxu0 0.0
    %3630 = vmatpush2.xpose.msra.mxu0 0.0
    %3631 = vmatprep.subr.mxu0 0.0
    %3632 = vmatpush2.xpose.msra.mxu0 0.0
    %3633 = vmatprep.subr.mxu0 0.0
    %3634 = vmatpush2.xpose.msra.mxu0 0.0
    %3635 = vmatprep.subr.mxu0 0.0
    %3636 = vmatpush2.xpose.msra.mxu0 0.0
    %3637 = vmatprep.subr.mxu0 0.0
    %3638 = vmatpush2.xpose.msra.mxu0 0.0
    %3639 = vmatprep.subr.mxu0 0.0
    %3640 = vmatpush2.xpose.msra.mxu0 0.0
    %3641 = vmatprep.subr.mxu0 0.0
    %3642 = vmatpush2.xpose.msra.mxu0 0.0
    %3643 = vmatprep.subr.mxu0 0.0
    %3644 = vmatpush2.xpose.msra.mxu0 0.0
    %3645 = vmatprep.subr.mxu0 0.0
    %3646 = vmatpush2.xpose.msra.mxu0 0.0
    %3647 = vmatprep.subr.mxu0 0.0
    %3648 = vmatpush2.xpose.msra.mxu0 0.0
    %3649 = vmatprep.subr.mxu0 0.0
    %3650 = vmatpush2.xpose.msra.mxu0 0.0
    %3651 = vmatprep.subr.mxu0 0.0
    %3652 = vmatpush2.xpose.msra.mxu0 0.0
    %3653 = vmatprep.subr.mxu0 0.0
    %3654 = vmatpush2.xpose.msra.mxu0 0.0
    %3655 = vmatprep.subr.mxu0 0.0
    %3656 = vmatpush2.xpose.msra.mxu0 0.0
    %3657 = vmatprep.subr.mxu0 0.0
    %3658 = vmatpush2.xpose.msra.mxu0 0.0
    %3659 = vmatprep.mubr.f32.mxu0 0.0
    %v3660 = vand.u32 %v3252, 4294901760
    %v3661 = vsub.f32 %v3252, %v3660
    %3662 = vmatmul.mubr.f32.gmra.mxu0 %v3661
    %v3663 = vpop.f32.mrf.mxu0
    %v3664 = vadd.f32 %v3554, %v3663
    %v3665 = vpop.f32.mrf.mxu0
    %3666 = vmatprep.mubr.f32.mxu0 0.0
    %v3667 = vand.u32 %v3255, 4294901760
    %v3668 = vsub.f32 %v3255, %v3667
    %3669 = vmatmul.mubr.f32.gmra.mxu0 %v3668
    %v3670 = vpop.f32.mrf.mxu0
    %v3671 = vadd.f32 %v3560, %v3670
    %v3672 = vpop.f32.mrf.mxu0
    %3673 = vdwg.mxu0
    %3674 = vmatprep.subr.mxu0 0.0
    %v3675 = vand.u32 %v3303, 4294901760
    %3676 = vmatpush1.xpose.msra.mxu0 %v3675
    %3677 = vmatprep.subr.mxu0 0.0
    %v3678 = vand.u32 %v3300, 4294901760
    %3679 = vmatpush1.xpose.msra.mxu0 %v3678
    %3680 = vmatprep.subr.mxu0 0.0
    %v3681 = vand.u32 %v3297, 4294901760
    %3682 = vmatpush1.xpose.msra.mxu0 %v3681
    %3683 = vmatprep.subr.mxu0 0.0
    %v3684 = vand.u32 %v3294, 4294901760
    %3685 = vmatpush1.xpose.msra.mxu0 %v3684
    %3686 = vmatprep.subr.mxu0 0.0
    %v3687 = vand.u32 %v3291, 4294901760
    %3688 = vmatpush1.xpose.msra.mxu0 %v3687
    %3689 = vmatprep.subr.mxu0 0.0
    %v3690 = vand.u32 %v3288, 4294901760
    %3691 = vmatpush1.xpose.msra.mxu0 %v3690
    %3692 = vmatprep.subr.mxu0 0.0
    %v3693 = vand.u32 %v3285, 4294901760
    %3694 = vmatpush1.xpose.msra.mxu0 %v3693
    %3695 = vmatprep.subr.mxu0 0.0
    %v3696 = vand.u32 %v3282, 4294901760
    %3697 = vmatpush1.xpose.msra.mxu0 %v3696
    %3698 = vmatprep.subr.mxu0 0.0
    %v3699 = vand.u32 %v3279, 4294901760
    %3700 = vmatpush1.xpose.msra.mxu0 %v3699
    %3701 = vmatprep.subr.mxu0 0.0
    %v3702 = vand.u32 %v3276, 4294901760
    %3703 = vmatpush1.xpose.msra.mxu0 %v3702
    %3704 = vmatprep.subr.mxu0 0.0
    %v3705 = vand.u32 %v3273, 4294901760
    %3706 = vmatpush1.xpose.msra.mxu0 %v3705
    %3707 = vmatprep.subr.mxu0 0.0
    %v3708 = vand.u32 %v3270, 4294901760
    %3709 = vmatpush1.xpose.msra.mxu0 %v3708
    %3710 = vmatprep.subr.mxu0 0.0
    %v3711 = vand.u32 %v3267, 4294901760
    %3712 = vmatpush1.xpose.msra.mxu0 %v3711
    %3713 = vmatprep.subr.mxu0 0.0
    %v3714 = vand.u32 %v3264, 4294901760
    %3715 = vmatpush1.xpose.msra.mxu0 %v3714
    %3716 = vmatprep.subr.mxu0 0.0
    %v3717 = vand.u32 %v3261, 4294901760
    %3718 = vmatpush1.xpose.msra.mxu0 %v3717
    %3719 = vmatprep.subr.mxu0 0.0
    %v3720 = vand.u32 %v3258, 4294901760
    %3721 = vmatpush1.xpose.msra.mxu0 %v3720
    %3722 = vmatprep.subr.mxu0 0.0
    %3723 = vmatpush2.xpose.msra.mxu0 0.0
    %3724 = vmatprep.subr.mxu0 0.0
    %3725 = vmatpush2.xpose.msra.mxu0 0.0
    %3726 = vmatprep.subr.mxu0 0.0
    %3727 = vmatpush2.xpose.msra.mxu0 0.0
    %3728 = vmatprep.subr.mxu0 0.0
    %3729 = vmatpush2.xpose.msra.mxu0 0.0
    %3730 = vmatprep.subr.mxu0 0.0
    %3731 = vmatpush2.xpose.msra.mxu0 0.0
    %3732 = vmatprep.subr.mxu0 0.0
    %3733 = vmatpush2.xpose.msra.mxu0 0.0
    %3734 = vmatprep.subr.mxu0 0.0
    %3735 = vmatpush2.xpose.msra.mxu0 0.0
    %3736 = vmatprep.subr.mxu0 0.0
    %3737 = vmatpush2.xpose.msra.mxu0 0.0
    %3738 = vmatprep.subr.mxu0 0.0
    %3739 = vmatpush2.xpose.msra.mxu0 0.0
    %3740 = vmatprep.subr.mxu0 0.0
    %3741 = vmatpush2.xpose.msra.mxu0 0.0
    %3742 = vmatprep.subr.mxu0 0.0
    %3743 = vmatpush2.xpose.msra.mxu0 0.0
    %3744 = vmatprep.subr.mxu0 0.0
    %3745 = vmatpush2.xpose.msra.mxu0 0.0
    %3746 = vmatprep.subr.mxu0 0.0
    %3747 = vmatpush2.xpose.msra.mxu0 0.0
    %3748 = vmatprep.subr.mxu0 0.0
    %3749 = vmatpush2.xpose.msra.mxu0 0.0
    %3750 = vmatprep.subr.mxu0 0.0
    %3751 = vmatpush2.xpose.msra.mxu0 0.0
    %3752 = vmatprep.subr.mxu0 0.0
    %3753 = vmatpush2.xpose.msra.mxu0 0.0
    %3754 = vmatprep.mubr.f32.mxu0 0.0
    %v3755 = vand.u32 %v3252, 4294901760
    %v3756 = vsub.f32 %v3252, %v3755
    %v3757 = vand.u32 %v3756, 4294901760
    %3758 = vmatmul.mubr.f32.gmra.mxu0 %v3757
    %v3759 = vpop.f32.mrf.mxu0
    %v3760 = vadd.f32 %v3664, %v3759
    %v3761 = vpop.f32.mrf.mxu0
    %3762 = vmatprep.mubr.f32.mxu0 0.0
    %v3763 = vand.u32 %v3255, 4294901760
    %v3764 = vsub.f32 %v3255, %v3763
    %v3765 = vand.u32 %v3764, 4294901760
    %3766 = vmatmul.mubr.f32.gmra.mxu0 %v3765
    %v3767 = vpop.f32.mrf.mxu0
    %v3768 = vadd.f32 %v3671, %v3767
    %v3769 = vpop.f32.mrf.mxu0
    %3770 = vdwg.mxu0
    %3771 = vmatprep.subr.mxu0 0.0
    %v3772 = vand.u32 %v3303, 4294901760
    %v3773 = vsub.f32 %v3303, %v3772
    %v3774 = vand.u32 %v3773, 4294901760
    %3775 = vmatpush1.xpose.msra.mxu0 %v3774
    %3776 = vmatprep.subr.mxu0 0.0
    %v3777 = vand.u32 %v3300, 4294901760
    %v3778 = vsub.f32 %v3300, %v3777
    %v3779 = vand.u32 %v3778, 4294901760
    %3780 = vmatpush1.xpose.msra.mxu0 %v3779
    %3781 = vmatprep.subr.mxu0 0.0
    %v3782 = vand.u32 %v3297, 4294901760
    %v3783 = vsub.f32 %v3297, %v3782
    %v3784 = vand.u32 %v3783, 4294901760
    %3785 = vmatpush1.xpose.msra.mxu0 %v3784
    %3786 = vmatprep.subr.mxu0 0.0
    %v3787 = vand.u32 %v3294, 4294901760
    %v3788 = vsub.f32 %v3294, %v3787
    %v3789 = vand.u32 %v3788, 4294901760
    %3790 = vmatpush1.xpose.msra.mxu0 %v3789
    %3791 = vmatprep.subr.mxu0 0.0
    %v3792 = vand.u32 %v3291, 4294901760
    %v3793 = vsub.f32 %v3291, %v3792
    %v3794 = vand.u32 %v3793, 4294901760
    %3795 = vmatpush1.xpose.msra.mxu0 %v3794
    %3796 = vmatprep.subr.mxu0 0.0
    %v3797 = vand.u32 %v3288, 4294901760
    %v3798 = vsub.f32 %v3288, %v3797
    %v3799 = vand.u32 %v3798, 4294901760
    %3800 = vmatpush1.xpose.msra.mxu0 %v3799
    %3801 = vmatprep.subr.mxu0 0.0
    %v3802 = vand.u32 %v3285, 4294901760
    %v3803 = vsub.f32 %v3285, %v3802
    %v3804 = vand.u32 %v3803, 4294901760
    %3805 = vmatpush1.xpose.msra.mxu0 %v3804
    %3806 = vmatprep.subr.mxu0 0.0
    %v3807 = vand.u32 %v3282, 4294901760
    %v3808 = vsub.f32 %v3282, %v3807
    %v3809 = vand.u32 %v3808, 4294901760
    %3810 = vmatpush1.xpose.msra.mxu0 %v3809
    %3811 = vmatprep.subr.mxu0 0.0
    %v3812 = vand.u32 %v3279, 4294901760
    %v3813 = vsub.f32 %v3279, %v3812
    %v3814 = vand.u32 %v3813, 4294901760
    %3815 = vmatpush1.xpose.msra.mxu0 %v3814
    %3816 = vmatprep.subr.mxu0 0.0
    %v3817 = vand.u32 %v3276, 4294901760
    %v3818 = vsub.f32 %v3276, %v3817
    %v3819 = vand.u32 %v3818, 4294901760
    %3820 = vmatpush1.xpose.msra.mxu0 %v3819
    %3821 = vmatprep.subr.mxu0 0.0
    %v3822 = vand.u32 %v3273, 4294901760
    %v3823 = vsub.f32 %v3273, %v3822
    %v3824 = vand.u32 %v3823, 4294901760
    %3825 = vmatpush1.xpose.msra.mxu0 %v3824
    %3826 = vmatprep.subr.mxu0 0.0
    %v3827 = vand.u32 %v3270, 4294901760
    %v3828 = vsub.f32 %v3270, %v3827
    %v3829 = vand.u32 %v3828, 4294901760
    %3830 = vmatpush1.xpose.msra.mxu0 %v3829
    %3831 = vmatprep.subr.mxu0 0.0
    %v3832 = vand.u32 %v3267, 4294901760
    %v3833 = vsub.f32 %v3267, %v3832
    %v3834 = vand.u32 %v3833, 4294901760
    %3835 = vmatpush1.xpose.msra.mxu0 %v3834
    %3836 = vmatprep.subr.mxu0 0.0
    %v3837 = vand.u32 %v3264, 4294901760
    %v3838 = vsub.f32 %v3264, %v3837
    %v3839 = vand.u32 %v3838, 4294901760
    %3840 = vmatpush1.xpose.msra.mxu0 %v3839
    %3841 = vmatprep.subr.mxu0 0.0
    %v3842 = vand.u32 %v3261, 4294901760
    %v3843 = vsub.f32 %v3261, %v3842
    %v3844 = vand.u32 %v3843, 4294901760
    %3845 = vmatpush1.xpose.msra.mxu0 %v3844
    %3846 = vmatprep.subr.mxu0 0.0
    %v3847 = vand.u32 %v3258, 4294901760
    %v3848 = vsub.f32 %v3258, %v3847
    %v3849 = vand.u32 %v3848, 4294901760
    %3850 = vmatpush1.xpose.msra.mxu0 %v3849
    %3851 = vmatprep.subr.mxu0 0.0
    %3852 = vmatpush2.xpose.msra.mxu0 0.0
    %3853 = vmatprep.subr.mxu0 0.0
    %3854 = vmatpush2.xpose.msra.mxu0 0.0
    %3855 = vmatprep.subr.mxu0 0.0
    %3856 = vmatpush2.xpose.msra.mxu0 0.0
    %3857 = vmatprep.subr.mxu0 0.0
    %3858 = vmatpush2.xpose.msra.mxu0 0.0
    %3859 = vmatprep.subr.mxu0 0.0
    %3860 = vmatpush2.xpose.msra.mxu0 0.0
    %3861 = vmatprep.subr.mxu0 0.0
    %3862 = vmatpush2.xpose.msra.mxu0 0.0
    %3863 = vmatprep.subr.mxu0 0.0
    %3864 = vmatpush2.xpose.msra.mxu0 0.0
    %3865 = vmatprep.subr.mxu0 0.0
    %3866 = vmatpush2.xpose.msra.mxu0 0.0
    %3867 = vmatprep.subr.mxu0 0.0
    %3868 = vmatpush2.xpose.msra.mxu0 0.0
    %3869 = vmatprep.subr.mxu0 0.0
    %3870 = vmatpush2.xpose.msra.mxu0 0.0
    %3871 = vmatprep.subr.mxu0 0.0
    %3872 = vmatpush2.xpose.msra.mxu0 0.0
    %3873 = vmatprep.subr.mxu0 0.0
    %3874 = vmatpush2.xpose.msra.mxu0 0.0
    %3875 = vmatprep.subr.mxu0 0.0
    %3876 = vmatpush2.xpose.msra.mxu0 0.0
    %3877 = vmatprep.subr.mxu0 0.0
    %3878 = vmatpush2.xpose.msra.mxu0 0.0
    %3879 = vmatprep.subr.mxu0 0.0
    %3880 = vmatpush2.xpose.msra.mxu0 0.0
    %3881 = vmatprep.subr.mxu0 0.0
    %3882 = vmatpush2.xpose.msra.mxu0 0.0
    %3883 = vmatprep.mubr.f32.mxu0 0.0
    %v3884 = vand.u32 %v3252, 4294901760
    %3885 = vmatmul.mubr.f32.gmra.mxu0 %v3884
    %v3886 = vpop.f32.mrf.mxu0
    %v3887 = vadd.f32 %v3760, %v3886
    %v3888 = vpop.f32.mrf.mxu0
    %3889 = vmatprep.mubr.f32.mxu0 0.0
    %v3890 = vand.u32 %v3255, 4294901760
    %3891 = vmatmul.mubr.f32.gmra.mxu0 %v3890
    %v3892 = vpop.f32.mrf.mxu0
    %v3893 = vadd.f32 %v3768, %v3892
    %v3894 = vpop.f32.mrf.mxu0
    %3895 = vdwg.mxu0
    %3896 = vmatprep.subr.mxu0 0.0
    %v3897 = vand.u32 %v3303, 4294901760
    %3898 = vmatpush1.xpose.msra.mxu0 %v3897
    %3899 = vmatprep.subr.mxu0 0.0
    %v3900 = vand.u32 %v3300, 4294901760
    %3901 = vmatpush1.xpose.msra.mxu0 %v3900
    %3902 = vmatprep.subr.mxu0 0.0
    %v3903 = vand.u32 %v3297, 4294901760
    %3904 = vmatpush1.xpose.msra.mxu0 %v3903
    %3905 = vmatprep.subr.mxu0 0.0
    %v3906 = vand.u32 %v3294, 4294901760
    %3907 = vmatpush1.xpose.msra.mxu0 %v3906
    %3908 = vmatprep.subr.mxu0 0.0
    %v3909 = vand.u32 %v3291, 4294901760
    %3910 = vmatpush1.xpose.msra.mxu0 %v3909
    %3911 = vmatprep.subr.mxu0 0.0
    %v3912 = vand.u32 %v3288, 4294901760
    %3913 = vmatpush1.xpose.msra.mxu0 %v3912
    %3914 = vmatprep.subr.mxu0 0.0
    %v3915 = vand.u32 %v3285, 4294901760
    %3916 = vmatpush1.xpose.msra.mxu0 %v3915
    %3917 = vmatprep.subr.mxu0 0.0
    %v3918 = vand.u32 %v3282, 4294901760
    %3919 = vmatpush1.xpose.msra.mxu0 %v3918
    %3920 = vmatprep.subr.mxu0 0.0
    %v3921 = vand.u32 %v3279, 4294901760
    %3922 = vmatpush1.xpose.msra.mxu0 %v3921
    %3923 = vmatprep.subr.mxu0 0.0
    %v3924 = vand.u32 %v3276, 4294901760
    %3925 = vmatpush1.xpose.msra.mxu0 %v3924
    %3926 = vmatprep.subr.mxu0 0.0
    %v3927 = vand.u32 %v3273, 4294901760
    %3928 = vmatpush1.xpose.msra.mxu0 %v3927
    %3929 = vmatprep.subr.mxu0 0.0
    %v3930 = vand.u32 %v3270, 4294901760
    %3931 = vmatpush1.xpose.msra.mxu0 %v3930
    %3932 = vmatprep.subr.mxu0 0.0
    %v3933 = vand.u32 %v3267, 4294901760
    %3934 = vmatpush1.xpose.msra.mxu0 %v3933
    %3935 = vmatprep.subr.mxu0 0.0
    %v3936 = vand.u32 %v3264, 4294901760
    %3937 = vmatpush1.xpose.msra.mxu0 %v3936
    %3938 = vmatprep.subr.mxu0 0.0
    %v3939 = vand.u32 %v3261, 4294901760
    %3940 = vmatpush1.xpose.msra.mxu0 %v3939
    %3941 = vmatprep.subr.mxu0 0.0
    %v3942 = vand.u32 %v3258, 4294901760
    %3943 = vmatpush1.xpose.msra.mxu0 %v3942
    %3944 = vmatprep.subr.mxu0 0.0
    %3945 = vmatpush2.xpose.msra.mxu0 0.0
    %3946 = vmatprep.subr.mxu0 0.0
    %3947 = vmatpush2.xpose.msra.mxu0 0.0
    %3948 = vmatprep.subr.mxu0 0.0
    %3949 = vmatpush2.xpose.msra.mxu0 0.0
    %3950 = vmatprep.subr.mxu0 0.0
    %3951 = vmatpush2.xpose.msra.mxu0 0.0
    %3952 = vmatprep.subr.mxu0 0.0
    %3953 = vmatpush2.xpose.msra.mxu0 0.0
    %3954 = vmatprep.subr.mxu0 0.0
    %3955 = vmatpush2.xpose.msra.mxu0 0.0
    %3956 = vmatprep.subr.mxu0 0.0
    %3957 = vmatpush2.xpose.msra.mxu0 0.0
    %3958 = vmatprep.subr.mxu0 0.0
    %3959 = vmatpush2.xpose.msra.mxu0 0.0
    %3960 = vmatprep.subr.mxu0 0.0
    %3961 = vmatpush2.xpose.msra.mxu0 0.0
    %3962 = vmatprep.subr.mxu0 0.0
    %3963 = vmatpush2.xpose.msra.mxu0 0.0
    %3964 = vmatprep.subr.mxu0 0.0
    %3965 = vmatpush2.xpose.msra.mxu0 0.0
    %3966 = vmatprep.subr.mxu0 0.0
    %3967 = vmatpush2.xpose.msra.mxu0 0.0
    %3968 = vmatprep.subr.mxu0 0.0
    %3969 = vmatpush2.xpose.msra.mxu0 0.0
    %3970 = vmatprep.subr.mxu0 0.0
    %3971 = vmatpush2.xpose.msra.mxu0 0.0
    %3972 = vmatprep.subr.mxu0 0.0
    %3973 = vmatpush2.xpose.msra.mxu0 0.0
    %3974 = vmatprep.subr.mxu0 0.0
    %3975 = vmatpush2.xpose.msra.mxu0 0.0
    %3976 = vmatprep.mubr.f32.mxu0 0.0
    %v3977 = vand.u32 %v3252, 4294901760
    %3978 = vmatmul.mubr.f32.gmra.mxu0 %v3977
    %v3979 = vpop.f32.mrf.mxu0
    %v3980 = vadd.f32 %v3887, %v3979
    %v3981 = vpop.f32.mrf.mxu0
    %3982 = vmatprep.mubr.f32.mxu0 0.0
    %v3983 = vand.u32 %v3255, 4294901760
    %3984 = vmatmul.mubr.f32.gmra.mxu0 %v3983
    %v3985 = vpop.f32.mrf.mxu0
    %v3986 = vadd.f32 %v3893, %v3985
    %v3987 = vpop.f32.mrf.mxu0
    %3988 = vdwg.mxu0
    %v3990 = vsel %vm298, %v36, 0
    %v3993 = vsel %vm298, %v37, 0
    %v3996 = vsel %vm298, %v122, 0
    %v3999 = vsel %vm298, %v123, 0
    %v4002 = vsel %vm298, %v124, 0
    %v4005 = vsel %vm298, %v125, 0
    %v4008 = vsel %vm298, %v126, 0
    %v4011 = vsel %vm298, %v127, 0
    %v4014 = vsel %vm298, %v128, 0
    %v4017 = vsel %vm298, %v129, 0
    %v4020 = vsel %vm298, %v130, 0
    %v4023 = vsel %vm298, %v131, 0
    %v4026 = vsel %vm298, %v132, 0
    %v4029 = vsel %vm298, %v133, 0
    %v4032 = vsel %vm298, %v134, 0
    %v4035 = vsel %vm298, %v135, 0
    %v4038 = vsel %vm298, %v136, 0
    %v4041 = vsel %vm298, %v137, 0
    %4043 = vmatprep.subr.mxu0 0.0
    %v4044 = vand.u32 %v4041, 4294901760
    %4045 = vmatpush1.xpose.msra.mxu0 %v4044
    %4046 = vmatprep.subr.mxu0 0.0
    %v4047 = vand.u32 %v4038, 4294901760
    %4048 = vmatpush1.xpose.msra.mxu0 %v4047
    %4049 = vmatprep.subr.mxu0 0.0
    %v4050 = vand.u32 %v4035, 4294901760
    %4051 = vmatpush1.xpose.msra.mxu0 %v4050
    %4052 = vmatprep.subr.mxu0 0.0
    %v4053 = vand.u32 %v4032, 4294901760
    %4054 = vmatpush1.xpose.msra.mxu0 %v4053
    %4055 = vmatprep.subr.mxu0 0.0
    %v4056 = vand.u32 %v4029, 4294901760
    %4057 = vmatpush1.xpose.msra.mxu0 %v4056
    %4058 = vmatprep.subr.mxu0 0.0
    %v4059 = vand.u32 %v4026, 4294901760
    %4060 = vmatpush1.xpose.msra.mxu0 %v4059
    %4061 = vmatprep.subr.mxu0 0.0
    %v4062 = vand.u32 %v4023, 4294901760
    %4063 = vmatpush1.xpose.msra.mxu0 %v4062
    %4064 = vmatprep.subr.mxu0 0.0
    %v4065 = vand.u32 %v4020, 4294901760
    %4066 = vmatpush1.xpose.msra.mxu0 %v4065
    %4067 = vmatprep.subr.mxu0 0.0
    %v4068 = vand.u32 %v4017, 4294901760
    %4069 = vmatpush1.xpose.msra.mxu0 %v4068
    %4070 = vmatprep.subr.mxu0 0.0
    %v4071 = vand.u32 %v4014, 4294901760
    %4072 = vmatpush1.xpose.msra.mxu0 %v4071
    %4073 = vmatprep.subr.mxu0 0.0
    %v4074 = vand.u32 %v4011, 4294901760
    %4075 = vmatpush1.xpose.msra.mxu0 %v4074
    %4076 = vmatprep.subr.mxu0 0.0
    %v4077 = vand.u32 %v4008, 4294901760
    %4078 = vmatpush1.xpose.msra.mxu0 %v4077
    %4079 = vmatprep.subr.mxu0 0.0
    %v4080 = vand.u32 %v4005, 4294901760
    %4081 = vmatpush1.xpose.msra.mxu0 %v4080
    %4082 = vmatprep.subr.mxu0 0.0
    %v4083 = vand.u32 %v4002, 4294901760
    %4084 = vmatpush1.xpose.msra.mxu0 %v4083
    %4085 = vmatprep.subr.mxu0 0.0
    %v4086 = vand.u32 %v3999, 4294901760
    %4087 = vmatpush1.xpose.msra.mxu0 %v4086
    %4088 = vmatprep.subr.mxu0 0.0
    %v4089 = vand.u32 %v3996, 4294901760
    %4090 = vmatpush1.xpose.msra.mxu0 %v4089
    %4091 = vmatprep.subr.mxu0 0.0
    %4092 = vmatpush2.xpose.msra.mxu0 0.0
    %4093 = vmatprep.subr.mxu0 0.0
    %4094 = vmatpush2.xpose.msra.mxu0 0.0
    %4095 = vmatprep.subr.mxu0 0.0
    %4096 = vmatpush2.xpose.msra.mxu0 0.0
    %4097 = vmatprep.subr.mxu0 0.0
    %4098 = vmatpush2.xpose.msra.mxu0 0.0
    %4099 = vmatprep.subr.mxu0 0.0
    %4100 = vmatpush2.xpose.msra.mxu0 0.0
    %4101 = vmatprep.subr.mxu0 0.0
    %4102 = vmatpush2.xpose.msra.mxu0 0.0
    %4103 = vmatprep.subr.mxu0 0.0
    %4104 = vmatpush2.xpose.msra.mxu0 0.0
    %4105 = vmatprep.subr.mxu0 0.0
    %4106 = vmatpush2.xpose.msra.mxu0 0.0
    %4107 = vmatprep.subr.mxu0 0.0
    %4108 = vmatpush2.xpose.msra.mxu0 0.0
    %4109 = vmatprep.subr.mxu0 0.0
    %4110 = vmatpush2.xpose.msra.mxu0 0.0
    %4111 = vmatprep.subr.mxu0 0.0
    %4112 = vmatpush2.xpose.msra.mxu0 0.0
    %4113 = vmatprep.subr.mxu0 0.0
    %4114 = vmatpush2.xpose.msra.mxu0 0.0
    %4115 = vmatprep.subr.mxu0 0.0
    %4116 = vmatpush2.xpose.msra.mxu0 0.0
    %4117 = vmatprep.subr.mxu0 0.0
    %4118 = vmatpush2.xpose.msra.mxu0 0.0
    %4119 = vmatprep.subr.mxu0 0.0
    %4120 = vmatpush2.xpose.msra.mxu0 0.0
    %4121 = vmatprep.subr.mxu0 0.0
    %4122 = vmatpush2.xpose.msra.mxu0 0.0
    %4123 = vmatprep.mubr.f32.mxu0 0.0
    %v4124 = vand.u32 %v3990, 4294901760
    %v4125 = vsub.f32 %v3990, %v4124
    %v4126 = vand.u32 %v4125, 4294901760
    %v4127 = vsub.f32 %v4125, %v4126
    %v4128 = vand.u32 %v4127, 4294901760
    %4129 = vmatmul.mubr.f32.gmra.mxu0 %v4128
    %v4130 = vpop.f32.mrf.mxu0
    %v4131 = vadd.f32 0.0, %v4130
    %v4132 = vpop.f32.mrf.mxu0
    %4133 = vmatprep.mubr.f32.mxu0 0.0
    %v4134 = vand.u32 %v3993, 4294901760
    %v4135 = vsub.f32 %v3993, %v4134
    %v4136 = vand.u32 %v4135, 4294901760
    %v4137 = vsub.f32 %v4135, %v4136
    %v4138 = vand.u32 %v4137, 4294901760
    %4139 = vmatmul.mubr.f32.gmra.mxu0 %v4138
    %v4140 = vpop.f32.mrf.mxu0
    %v4141 = vadd.f32 0.0, %v4140
    %v4142 = vpop.f32.mrf.mxu0
    %4143 = vdwg.mxu0
    %4144 = vmatprep.subr.mxu0 0.0
    %v4145 = vand.u32 %v4041, 4294901760
    %v4146 = vsub.f32 %v4041, %v4145
    %v4147 = vand.u32 %v4146, 4294901760
    %v4148 = vsub.f32 %v4146, %v4147
    %v4149 = vand.u32 %v4148, 4294901760
    %4150 = vmatpush1.xpose.msra.mxu0 %v4149
    %4151 = vmatprep.subr.mxu0 0.0
    %v4152 = vand.u32 %v4038, 4294901760
    %v4153 = vsub.f32 %v4038, %v4152
    %v4154 = vand.u32 %v4153, 4294901760
    %v4155 = vsub.f32 %v4153, %v4154
    %v4156 = vand.u32 %v4155, 4294901760
    %4157 = vmatpush1.xpose.msra.mxu0 %v4156
    %4158 = vmatprep.subr.mxu0 0.0
    %v4159 = vand.u32 %v4035, 4294901760
    %v4160 = vsub.f32 %v4035, %v4159
    %v4161 = vand.u32 %v4160, 4294901760
    %v4162 = vsub.f32 %v4160, %v4161
    %v4163 = vand.u32 %v4162, 4294901760
    %4164 = vmatpush1.xpose.msra.mxu0 %v4163
    %4165 = vmatprep.subr.mxu0 0.0
    %v4166 = vand.u32 %v4032, 4294901760
    %v4167 = vsub.f32 %v4032, %v4166
    %v4168 = vand.u32 %v4167, 4294901760
    %v4169 = vsub.f32 %v4167, %v4168
    %v4170 = vand.u32 %v4169, 4294901760
    %4171 = vmatpush1.xpose.msra.mxu0 %v4170
    %4172 = vmatprep.subr.mxu0 0.0
    %v4173 = vand.u32 %v4029, 4294901760
    %v4174 = vsub.f32 %v4029, %v4173
    %v4175 = vand.u32 %v4174, 4294901760
    %v4176 = vsub.f32 %v4174, %v4175
    %v4177 = vand.u32 %v4176, 4294901760
    %4178 = vmatpush1.xpose.msra.mxu0 %v4177
    %4179 = vmatprep.subr.mxu0 0.0
    %v4180 = vand.u32 %v4026, 4294901760
    %v4181 = vsub.f32 %v4026, %v4180
    %v4182 = vand.u32 %v4181, 4294901760
    %v4183 = vsub.f32 %v4181, %v4182
    %v4184 = vand.u32 %v4183, 4294901760
    %4185 = vmatpush1.xpose.msra.mxu0 %v4184
    %4186 = vmatprep.subr.mxu0 0.0
    %v4187 = vand.u32 %v4023, 4294901760
    %v4188 = vsub.f32 %v4023, %v4187
    %v4189 = vand.u32 %v4188, 4294901760
    %v4190 = vsub.f32 %v4188, %v4189
    %v4191 = vand.u32 %v4190, 4294901760
    %4192 = vmatpush1.xpose.msra.mxu0 %v4191
    %4193 = vmatprep.subr.mxu0 0.0
    %v4194 = vand.u32 %v4020, 4294901760
    %v4195 = vsub.f32 %v4020, %v4194
    %v4196 = vand.u32 %v4195, 4294901760
    %v4197 = vsub.f32 %v4195, %v4196
    %v4198 = vand.u32 %v4197, 4294901760
    %4199 = vmatpush1.xpose.msra.mxu0 %v4198
    %4200 = vmatprep.subr.mxu0 0.0
    %v4201 = vand.u32 %v4017, 4294901760
    %v4202 = vsub.f32 %v4017, %v4201
    %v4203 = vand.u32 %v4202, 4294901760
    %v4204 = vsub.f32 %v4202, %v4203
    %v4205 = vand.u32 %v4204, 4294901760
    %4206 = vmatpush1.xpose.msra.mxu0 %v4205
    %4207 = vmatprep.subr.mxu0 0.0
    %v4208 = vand.u32 %v4014, 4294901760
    %v4209 = vsub.f32 %v4014, %v4208
    %v4210 = vand.u32 %v4209, 4294901760
    %v4211 = vsub.f32 %v4209, %v4210
    %v4212 = vand.u32 %v4211, 4294901760
    %4213 = vmatpush1.xpose.msra.mxu0 %v4212
    %4214 = vmatprep.subr.mxu0 0.0
    %v4215 = vand.u32 %v4011, 4294901760
    %v4216 = vsub.f32 %v4011, %v4215
    %v4217 = vand.u32 %v4216, 4294901760
    %v4218 = vsub.f32 %v4216, %v4217
    %v4219 = vand.u32 %v4218, 4294901760
    %4220 = vmatpush1.xpose.msra.mxu0 %v4219
    %4221 = vmatprep.subr.mxu0 0.0
    %v4222 = vand.u32 %v4008, 4294901760
    %v4223 = vsub.f32 %v4008, %v4222
    %v4224 = vand.u32 %v4223, 4294901760
    %v4225 = vsub.f32 %v4223, %v4224
    %v4226 = vand.u32 %v4225, 4294901760
    %4227 = vmatpush1.xpose.msra.mxu0 %v4226
    %4228 = vmatprep.subr.mxu0 0.0
    %v4229 = vand.u32 %v4005, 4294901760
    %v4230 = vsub.f32 %v4005, %v4229
    %v4231 = vand.u32 %v4230, 4294901760
    %v4232 = vsub.f32 %v4230, %v4231
    %v4233 = vand.u32 %v4232, 4294901760
    %4234 = vmatpush1.xpose.msra.mxu0 %v4233
    %4235 = vmatprep.subr.mxu0 0.0
    %v4236 = vand.u32 %v4002, 4294901760
    %v4237 = vsub.f32 %v4002, %v4236
    %v4238 = vand.u32 %v4237, 4294901760
    %v4239 = vsub.f32 %v4237, %v4238
    %v4240 = vand.u32 %v4239, 4294901760
    %4241 = vmatpush1.xpose.msra.mxu0 %v4240
    %4242 = vmatprep.subr.mxu0 0.0
    %v4243 = vand.u32 %v3999, 4294901760
    %v4244 = vsub.f32 %v3999, %v4243
    %v4245 = vand.u32 %v4244, 4294901760
    %v4246 = vsub.f32 %v4244, %v4245
    %v4247 = vand.u32 %v4246, 4294901760
    %4248 = vmatpush1.xpose.msra.mxu0 %v4247
    %4249 = vmatprep.subr.mxu0 0.0
    %v4250 = vand.u32 %v3996, 4294901760
    %v4251 = vsub.f32 %v3996, %v4250
    %v4252 = vand.u32 %v4251, 4294901760
    %v4253 = vsub.f32 %v4251, %v4252
    %v4254 = vand.u32 %v4253, 4294901760
    %4255 = vmatpush1.xpose.msra.mxu0 %v4254
    %4256 = vmatprep.subr.mxu0 0.0
    %4257 = vmatpush2.xpose.msra.mxu0 0.0
    %4258 = vmatprep.subr.mxu0 0.0
    %4259 = vmatpush2.xpose.msra.mxu0 0.0
    %4260 = vmatprep.subr.mxu0 0.0
    %4261 = vmatpush2.xpose.msra.mxu0 0.0
    %4262 = vmatprep.subr.mxu0 0.0
    %4263 = vmatpush2.xpose.msra.mxu0 0.0
    %4264 = vmatprep.subr.mxu0 0.0
    %4265 = vmatpush2.xpose.msra.mxu0 0.0
    %4266 = vmatprep.subr.mxu0 0.0
    %4267 = vmatpush2.xpose.msra.mxu0 0.0
    %4268 = vmatprep.subr.mxu0 0.0
    %4269 = vmatpush2.xpose.msra.mxu0 0.0
    %4270 = vmatprep.subr.mxu0 0.0
    %4271 = vmatpush2.xpose.msra.mxu0 0.0
    %4272 = vmatprep.subr.mxu0 0.0
    %4273 = vmatpush2.xpose.msra.mxu0 0.0
    %4274 = vmatprep.subr.mxu0 0.0
    %4275 = vmatpush2.xpose.msra.mxu0 0.0
    %4276 = vmatprep.subr.mxu0 0.0
    %4277 = vmatpush2.xpose.msra.mxu0 0.0
    %4278 = vmatprep.subr.mxu0 0.0
    %4279 = vmatpush2.xpose.msra.mxu0 0.0
    %4280 = vmatprep.subr.mxu0 0.0
    %4281 = vmatpush2.xpose.msra.mxu0 0.0
    %4282 = vmatprep.subr.mxu0 0.0
    %4283 = vmatpush2.xpose.msra.mxu0 0.0
    %4284 = vmatprep.subr.mxu0 0.0
    %4285 = vmatpush2.xpose.msra.mxu0 0.0
    %4286 = vmatprep.subr.mxu0 0.0
    %4287 = vmatpush2.xpose.msra.mxu0 0.0
    %4288 = vmatprep.mubr.f32.mxu0 0.0
    %v4289 = vand.u32 %v3990, 4294901760
    %4290 = vmatmul.mubr.f32.gmra.mxu0 %v4289
    %v4291 = vpop.f32.mrf.mxu0
    %v4292 = vadd.f32 %v4131, %v4291
    %v4293 = vpop.f32.mrf.mxu0
    %4294 = vmatprep.mubr.f32.mxu0 0.0
    %v4295 = vand.u32 %v3993, 4294901760
    %4296 = vmatmul.mubr.f32.gmra.mxu0 %v4295
    %v4297 = vpop.f32.mrf.mxu0
    %v4298 = vadd.f32 %v4141, %v4297
    %v4299 = vpop.f32.mrf.mxu0
    %4300 = vdwg.mxu0
    %4301 = vmatprep.subr.mxu0 0.0
    %v4302 = vand.u32 %v4041, 4294901760
    %v4303 = vsub.f32 %v4041, %v4302
    %4304 = vmatpush1.xpose.msra.mxu0 %v4303
    %4305 = vmatprep.subr.mxu0 0.0
    %v4306 = vand.u32 %v4038, 4294901760
    %v4307 = vsub.f32 %v4038, %v4306
    %4308 = vmatpush1.xpose.msra.mxu0 %v4307
    %4309 = vmatprep.subr.mxu0 0.0
    %v4310 = vand.u32 %v4035, 4294901760
    %v4311 = vsub.f32 %v4035, %v4310
    %4312 = vmatpush1.xpose.msra.mxu0 %v4311
    %4313 = vmatprep.subr.mxu0 0.0
    %v4314 = vand.u32 %v4032, 4294901760
    %v4315 = vsub.f32 %v4032, %v4314
    %4316 = vmatpush1.xpose.msra.mxu0 %v4315
    %4317 = vmatprep.subr.mxu0 0.0
    %v4318 = vand.u32 %v4029, 4294901760
    %v4319 = vsub.f32 %v4029, %v4318
    %4320 = vmatpush1.xpose.msra.mxu0 %v4319
    %4321 = vmatprep.subr.mxu0 0.0
    %v4322 = vand.u32 %v4026, 4294901760
    %v4323 = vsub.f32 %v4026, %v4322
    %4324 = vmatpush1.xpose.msra.mxu0 %v4323
    %4325 = vmatprep.subr.mxu0 0.0
    %v4326 = vand.u32 %v4023, 4294901760
    %v4327 = vsub.f32 %v4023, %v4326
    %4328 = vmatpush1.xpose.msra.mxu0 %v4327
    %4329 = vmatprep.subr.mxu0 0.0
    %v4330 = vand.u32 %v4020, 4294901760
    %v4331 = vsub.f32 %v4020, %v4330
    %4332 = vmatpush1.xpose.msra.mxu0 %v4331
    %4333 = vmatprep.subr.mxu0 0.0
    %v4334 = vand.u32 %v4017, 4294901760
    %v4335 = vsub.f32 %v4017, %v4334
    %4336 = vmatpush1.xpose.msra.mxu0 %v4335
    %4337 = vmatprep.subr.mxu0 0.0
    %v4338 = vand.u32 %v4014, 4294901760
    %v4339 = vsub.f32 %v4014, %v4338
    %4340 = vmatpush1.xpose.msra.mxu0 %v4339
    %4341 = vmatprep.subr.mxu0 0.0
    %v4342 = vand.u32 %v4011, 4294901760
    %v4343 = vsub.f32 %v4011, %v4342
    %4344 = vmatpush1.xpose.msra.mxu0 %v4343
    %4345 = vmatprep.subr.mxu0 0.0
    %v4346 = vand.u32 %v4008, 4294901760
    %v4347 = vsub.f32 %v4008, %v4346
    %4348 = vmatpush1.xpose.msra.mxu0 %v4347
    %4349 = vmatprep.subr.mxu0 0.0
    %v4350 = vand.u32 %v4005, 4294901760
    %v4351 = vsub.f32 %v4005, %v4350
    %4352 = vmatpush1.xpose.msra.mxu0 %v4351
    %4353 = vmatprep.subr.mxu0 0.0
    %v4354 = vand.u32 %v4002, 4294901760
    %v4355 = vsub.f32 %v4002, %v4354
    %4356 = vmatpush1.xpose.msra.mxu0 %v4355
    %4357 = vmatprep.subr.mxu0 0.0
    %v4358 = vand.u32 %v3999, 4294901760
    %v4359 = vsub.f32 %v3999, %v4358
    %4360 = vmatpush1.xpose.msra.mxu0 %v4359
    %4361 = vmatprep.subr.mxu0 0.0
    %v4362 = vand.u32 %v3996, 4294901760
    %v4363 = vsub.f32 %v3996, %v4362
    %4364 = vmatpush1.xpose.msra.mxu0 %v4363
    %4365 = vmatprep.subr.mxu0 0.0
    %4366 = vmatpush2.xpose.msra.mxu0 0.0
    %4367 = vmatprep.subr.mxu0 0.0
    %4368 = vmatpush2.xpose.msra.mxu0 0.0
    %4369 = vmatprep.subr.mxu0 0.0
    %4370 = vmatpush2.xpose.msra.mxu0 0.0
    %4371 = vmatprep.subr.mxu0 0.0
    %4372 = vmatpush2.xpose.msra.mxu0 0.0
    %4373 = vmatprep.subr.mxu0 0.0
    %4374 = vmatpush2.xpose.msra.mxu0 0.0
    %4375 = vmatprep.subr.mxu0 0.0
    %4376 = vmatpush2.xpose.msra.mxu0 0.0
    %4377 = vmatprep.subr.mxu0 0.0
    %4378 = vmatpush2.xpose.msra.mxu0 0.0
    %4379 = vmatprep.subr.mxu0 0.0
    %4380 = vmatpush2.xpose.msra.mxu0 0.0
    %4381 = vmatprep.subr.mxu0 0.0
    %4382 = vmatpush2.xpose.msra.mxu0 0.0
    %4383 = vmatprep.subr.mxu0 0.0
    %4384 = vmatpush2.xpose.msra.mxu0 0.0
    %4385 = vmatprep.subr.mxu0 0.0
    %4386 = vmatpush2.xpose.msra.mxu0 0.0
    %4387 = vmatprep.subr.mxu0 0.0
    %4388 = vmatpush2.xpose.msra.mxu0 0.0
    %4389 = vmatprep.subr.mxu0 0.0
    %4390 = vmatpush2.xpose.msra.mxu0 0.0
    %4391 = vmatprep.subr.mxu0 0.0
    %4392 = vmatpush2.xpose.msra.mxu0 0.0
    %4393 = vmatprep.subr.mxu0 0.0
    %4394 = vmatpush2.xpose.msra.mxu0 0.0
    %4395 = vmatprep.subr.mxu0 0.0
    %4396 = vmatpush2.xpose.msra.mxu0 0.0
    %4397 = vmatprep.mubr.f32.mxu0 0.0
    %v4398 = vand.u32 %v3990, 4294901760
    %v4399 = vsub.f32 %v3990, %v4398
    %4400 = vmatmul.mubr.f32.gmra.mxu0 %v4399
    %v4401 = vpop.f32.mrf.mxu0
    %v4402 = vadd.f32 %v4292, %v4401
    %v4403 = vpop.f32.mrf.mxu0
    %4404 = vmatprep.mubr.f32.mxu0 0.0
    %v4405 = vand.u32 %v3993, 4294901760
    %v4406 = vsub.f32 %v3993, %v4405
    %4407 = vmatmul.mubr.f32.gmra.mxu0 %v4406
    %v4408 = vpop.f32.mrf.mxu0
    %v4409 = vadd.f32 %v4298, %v4408
    %v4410 = vpop.f32.mrf.mxu0
    %4411 = vdwg.mxu0
    %4412 = vmatprep.subr.mxu0 0.0
    %v4413 = vand.u32 %v4041, 4294901760
    %4414 = vmatpush1.xpose.msra.mxu0 %v4413
    %4415 = vmatprep.subr.mxu0 0.0
    %v4416 = vand.u32 %v4038, 4294901760
    %4417 = vmatpush1.xpose.msra.mxu0 %v4416
    %4418 = vmatprep.subr.mxu0 0.0
    %v4419 = vand.u32 %v4035, 4294901760
    %4420 = vmatpush1.xpose.msra.mxu0 %v4419
    %4421 = vmatprep.subr.mxu0 0.0
    %v4422 = vand.u32 %v4032, 4294901760
    %4423 = vmatpush1.xpose.msra.mxu0 %v4422
    %4424 = vmatprep.subr.mxu0 0.0
    %v4425 = vand.u32 %v4029, 4294901760
    %4426 = vmatpush1.xpose.msra.mxu0 %v4425
    %4427 = vmatprep.subr.mxu0 0.0
    %v4428 = vand.u32 %v4026, 4294901760
    %4429 = vmatpush1.xpose.msra.mxu0 %v4428
    %4430 = vmatprep.subr.mxu0 0.0
    %v4431 = vand.u32 %v4023, 4294901760
    %4432 = vmatpush1.xpose.msra.mxu0 %v4431
    %4433 = vmatprep.subr.mxu0 0.0
    %v4434 = vand.u32 %v4020, 4294901760
    %4435 = vmatpush1.xpose.msra.mxu0 %v4434
    %4436 = vmatprep.subr.mxu0 0.0
    %v4437 = vand.u32 %v4017, 4294901760
    %4438 = vmatpush1.xpose.msra.mxu0 %v4437
    %4439 = vmatprep.subr.mxu0 0.0
    %v4440 = vand.u32 %v4014, 4294901760
    %4441 = vmatpush1.xpose.msra.mxu0 %v4440
    %4442 = vmatprep.subr.mxu0 0.0
    %v4443 = vand.u32 %v4011, 4294901760
    %4444 = vmatpush1.xpose.msra.mxu0 %v4443
    %4445 = vmatprep.subr.mxu0 0.0
    %v4446 = vand.u32 %v4008, 4294901760
    %4447 = vmatpush1.xpose.msra.mxu0 %v4446
    %4448 = vmatprep.subr.mxu0 0.0
    %v4449 = vand.u32 %v4005, 4294901760
    %4450 = vmatpush1.xpose.msra.mxu0 %v4449
    %4451 = vmatprep.subr.mxu0 0.0
    %v4452 = vand.u32 %v4002, 4294901760
    %4453 = vmatpush1.xpose.msra.mxu0 %v4452
    %4454 = vmatprep.subr.mxu0 0.0
    %v4455 = vand.u32 %v3999, 4294901760
    %4456 = vmatpush1.xpose.msra.mxu0 %v4455
    %4457 = vmatprep.subr.mxu0 0.0
    %v4458 = vand.u32 %v3996, 4294901760
    %4459 = vmatpush1.xpose.msra.mxu0 %v4458
    %4460 = vmatprep.subr.mxu0 0.0
    %4461 = vmatpush2.xpose.msra.mxu0 0.0
    %4462 = vmatprep.subr.mxu0 0.0
    %4463 = vmatpush2.xpose.msra.mxu0 0.0
    %4464 = vmatprep.subr.mxu0 0.0
    %4465 = vmatpush2.xpose.msra.mxu0 0.0
    %4466 = vmatprep.subr.mxu0 0.0
    %4467 = vmatpush2.xpose.msra.mxu0 0.0
    %4468 = vmatprep.subr.mxu0 0.0
    %4469 = vmatpush2.xpose.msra.mxu0 0.0
    %4470 = vmatprep.subr.mxu0 0.0
    %4471 = vmatpush2.xpose.msra.mxu0 0.0
    %4472 = vmatprep.subr.mxu0 0.0
    %4473 = vmatpush2.xpose.msra.mxu0 0.0
    %4474 = vmatprep.subr.mxu0 0.0
    %4475 = vmatpush2.xpose.msra.mxu0 0.0
    %4476 = vmatprep.subr.mxu0 0.0
    %4477 = vmatpush2.xpose.msra.mxu0 0.0
    %4478 = vmatprep.subr.mxu0 0.0
    %4479 = vmatpush2.xpose.msra.mxu0 0.0
    %4480 = vmatprep.subr.mxu0 0.0
    %4481 = vmatpush2.xpose.msra.mxu0 0.0
    %4482 = vmatprep.subr.mxu0 0.0
    %4483 = vmatpush2.xpose.msra.mxu0 0.0
    %4484 = vmatprep.subr.mxu0 0.0
    %4485 = vmatpush2.xpose.msra.mxu0 0.0
    %4486 = vmatprep.subr.mxu0 0.0
    %4487 = vmatpush2.xpose.msra.mxu0 0.0
    %4488 = vmatprep.subr.mxu0 0.0
    %4489 = vmatpush2.xpose.msra.mxu0 0.0
    %4490 = vmatprep.subr.mxu0 0.0
    %4491 = vmatpush2.xpose.msra.mxu0 0.0
    %4492 = vmatprep.mubr.f32.mxu0 0.0
    %v4493 = vand.u32 %v3990, 4294901760
    %v4494 = vsub.f32 %v3990, %v4493
    %v4495 = vand.u32 %v4494, 4294901760
    %4496 = vmatmul.mubr.f32.gmra.mxu0 %v4495
    %v4497 = vpop.f32.mrf.mxu0
    %v4498 = vadd.f32 %v4402, %v4497
    %v4499 = vpop.f32.mrf.mxu0
    %4500 = vmatprep.mubr.f32.mxu0 0.0
    %v4501 = vand.u32 %v3993, 4294901760
    %v4502 = vsub.f32 %v3993, %v4501
    %v4503 = vand.u32 %v4502, 4294901760
    %4504 = vmatmul.mubr.f32.gmra.mxu0 %v4503
    %v4505 = vpop.f32.mrf.mxu0
    %v4506 = vadd.f32 %v4409, %v4505
    %v4507 = vpop.f32.mrf.mxu0
    %4508 = vdwg.mxu0
    %4509 = vmatprep.subr.mxu0 0.0
    %v4510 = vand.u32 %v4041, 4294901760
    %v4511 = vsub.f32 %v4041, %v4510
    %v4512 = vand.u32 %v4511, 4294901760
    %4513 = vmatpush1.xpose.msra.mxu0 %v4512
    %4514 = vmatprep.subr.mxu0 0.0
    %v4515 = vand.u32 %v4038, 4294901760
    %v4516 = vsub.f32 %v4038, %v4515
    %v4517 = vand.u32 %v4516, 4294901760
    %4518 = vmatpush1.xpose.msra.mxu0 %v4517
    %4519 = vmatprep.subr.mxu0 0.0
    %v4520 = vand.u32 %v4035, 4294901760
    %v4521 = vsub.f32 %v4035, %v4520
    %v4522 = vand.u32 %v4521, 4294901760
    %4523 = vmatpush1.xpose.msra.mxu0 %v4522
    %4524 = vmatprep.subr.mxu0 0.0
    %v4525 = vand.u32 %v4032, 4294901760
    %v4526 = vsub.f32 %v4032, %v4525
    %v4527 = vand.u32 %v4526, 4294901760
    %4528 = vmatpush1.xpose.msra.mxu0 %v4527
    %4529 = vmatprep.subr.mxu0 0.0
    %v4530 = vand.u32 %v4029, 4294901760
    %v4531 = vsub.f32 %v4029, %v4530
    %v4532 = vand.u32 %v4531, 4294901760
    %4533 = vmatpush1.xpose.msra.mxu0 %v4532
    %4534 = vmatprep.subr.mxu0 0.0
    %v4535 = vand.u32 %v4026, 4294901760
    %v4536 = vsub.f32 %v4026, %v4535
    %v4537 = vand.u32 %v4536, 4294901760
    %4538 = vmatpush1.xpose.msra.mxu0 %v4537
    %4539 = vmatprep.subr.mxu0 0.0
    %v4540 = vand.u32 %v4023, 4294901760
    %v4541 = vsub.f32 %v4023, %v4540
    %v4542 = vand.u32 %v4541, 4294901760
    %4543 = vmatpush1.xpose.msra.mxu0 %v4542
    %4544 = vmatprep.subr.mxu0 0.0
    %v4545 = vand.u32 %v4020, 4294901760
    %v4546 = vsub.f32 %v4020, %v4545
    %v4547 = vand.u32 %v4546, 4294901760
    %4548 = vmatpush1.xpose.msra.mxu0 %v4547
    %4549 = vmatprep.subr.mxu0 0.0
    %v4550 = vand.u32 %v4017, 4294901760
    %v4551 = vsub.f32 %v4017, %v4550
    %v4552 = vand.u32 %v4551, 4294901760
    %4553 = vmatpush1.xpose.msra.mxu0 %v4552
    %4554 = vmatprep.subr.mxu0 0.0
    %v4555 = vand.u32 %v4014, 4294901760
    %v4556 = vsub.f32 %v4014, %v4555
    %v4557 = vand.u32 %v4556, 4294901760
    %4558 = vmatpush1.xpose.msra.mxu0 %v4557
    %4559 = vmatprep.subr.mxu0 0.0
    %v4560 = vand.u32 %v4011, 4294901760
    %v4561 = vsub.f32 %v4011, %v4560
    %v4562 = vand.u32 %v4561, 4294901760
    %4563 = vmatpush1.xpose.msra.mxu0 %v4562
    %4564 = vmatprep.subr.mxu0 0.0
    %v4565 = vand.u32 %v4008, 4294901760
    %v4566 = vsub.f32 %v4008, %v4565
    %v4567 = vand.u32 %v4566, 4294901760
    %4568 = vmatpush1.xpose.msra.mxu0 %v4567
    %4569 = vmatprep.subr.mxu0 0.0
    %v4570 = vand.u32 %v4005, 4294901760
    %v4571 = vsub.f32 %v4005, %v4570
    %v4572 = vand.u32 %v4571, 4294901760
    %4573 = vmatpush1.xpose.msra.mxu0 %v4572
    %4574 = vmatprep.subr.mxu0 0.0
    %v4575 = vand.u32 %v4002, 4294901760
    %v4576 = vsub.f32 %v4002, %v4575
    %v4577 = vand.u32 %v4576, 4294901760
    %4578 = vmatpush1.xpose.msra.mxu0 %v4577
    %4579 = vmatprep.subr.mxu0 0.0
    %v4580 = vand.u32 %v3999, 4294901760
    %v4581 = vsub.f32 %v3999, %v4580
    %v4582 = vand.u32 %v4581, 4294901760
    %4583 = vmatpush1.xpose.msra.mxu0 %v4582
    %4584 = vmatprep.subr.mxu0 0.0
    %v4585 = vand.u32 %v3996, 4294901760
    %v4586 = vsub.f32 %v3996, %v4585
    %v4587 = vand.u32 %v4586, 4294901760
    %4588 = vmatpush1.xpose.msra.mxu0 %v4587
    %4589 = vmatprep.subr.mxu0 0.0
    %4590 = vmatpush2.xpose.msra.mxu0 0.0
    %4591 = vmatprep.subr.mxu0 0.0
    %4592 = vmatpush2.xpose.msra.mxu0 0.0
    %4593 = vmatprep.subr.mxu0 0.0
    %4594 = vmatpush2.xpose.msra.mxu0 0.0
    %4595 = vmatprep.subr.mxu0 0.0
    %4596 = vmatpush2.xpose.msra.mxu0 0.0
    %4597 = vmatprep.subr.mxu0 0.0
    %4598 = vmatpush2.xpose.msra.mxu0 0.0
    %4599 = vmatprep.subr.mxu0 0.0
    %4600 = vmatpush2.xpose.msra.mxu0 0.0
    %4601 = vmatprep.subr.mxu0 0.0
    %4602 = vmatpush2.xpose.msra.mxu0 0.0
    %4603 = vmatprep.subr.mxu0 0.0
    %4604 = vmatpush2.xpose.msra.mxu0 0.0
    %4605 = vmatprep.subr.mxu0 0.0
    %4606 = vmatpush2.xpose.msra.mxu0 0.0
    %4607 = vmatprep.subr.mxu0 0.0
    %4608 = vmatpush2.xpose.msra.mxu0 0.0
    %4609 = vmatprep.subr.mxu0 0.0
    %4610 = vmatpush2.xpose.msra.mxu0 0.0
    %4611 = vmatprep.subr.mxu0 0.0
    %4612 = vmatpush2.xpose.msra.mxu0 0.0
    %4613 = vmatprep.subr.mxu0 0.0
    %4614 = vmatpush2.xpose.msra.mxu0 0.0
    %4615 = vmatprep.subr.mxu0 0.0
    %4616 = vmatpush2.xpose.msra.mxu0 0.0
    %4617 = vmatprep.subr.mxu0 0.0
    %4618 = vmatpush2.xpose.msra.mxu0 0.0
    %4619 = vmatprep.subr.mxu0 0.0
    %4620 = vmatpush2.xpose.msra.mxu0 0.0
    %4621 = vmatprep.mubr.f32.mxu0 0.0
    %v4622 = vand.u32 %v3990, 4294901760
    %4623 = vmatmul.mubr.f32.gmra.mxu0 %v4622
    %v4624 = vpop.f32.mrf.mxu0
    %v4625 = vadd.f32 %v4498, %v4624
    %v4626 = vpop.f32.mrf.mxu0
    %4627 = vmatprep.mubr.f32.mxu0 0.0
    %v4628 = vand.u32 %v3993, 4294901760
    %4629 = vmatmul.mubr.f32.gmra.mxu0 %v4628
    %v4630 = vpop.f32.mrf.mxu0
    %v4631 = vadd.f32 %v4506, %v4630
    %v4632 = vpop.f32.mrf.mxu0
    %4633 = vdwg.mxu0
    %4634 = vmatprep.subr.mxu0 0.0
    %v4635 = vand.u32 %v4041, 4294901760
    %4636 = vmatpush1.xpose.msra.mxu0 %v4635
    %4637 = vmatprep.subr.mxu0 0.0
    %v4638 = vand.u32 %v4038, 4294901760
    %4639 = vmatpush1.xpose.msra.mxu0 %v4638
    %4640 = vmatprep.subr.mxu0 0.0
    %v4641 = vand.u32 %v4035, 4294901760
    %4642 = vmatpush1.xpose.msra.mxu0 %v4641
    %4643 = vmatprep.subr.mxu0 0.0
    %v4644 = vand.u32 %v4032, 4294901760
    %4645 = vmatpush1.xpose.msra.mxu0 %v4644
    %4646 = vmatprep.subr.mxu0 0.0
    %v4647 = vand.u32 %v4029, 4294901760
    %4648 = vmatpush1.xpose.msra.mxu0 %v4647
    %4649 = vmatprep.subr.mxu0 0.0
    %v4650 = vand.u32 %v4026, 4294901760
    %4651 = vmatpush1.xpose.msra.mxu0 %v4650
    %4652 = vmatprep.subr.mxu0 0.0
    %v4653 = vand.u32 %v4023, 4294901760
    %4654 = vmatpush1.xpose.msra.mxu0 %v4653
    %4655 = vmatprep.subr.mxu0 0.0
    %v4656 = vand.u32 %v4020, 4294901760
    %4657 = vmatpush1.xpose.msra.mxu0 %v4656
    %4658 = vmatprep.subr.mxu0 0.0
    %v4659 = vand.u32 %v4017, 4294901760
    %4660 = vmatpush1.xpose.msra.mxu0 %v4659
    %4661 = vmatprep.subr.mxu0 0.0
    %v4662 = vand.u32 %v4014, 4294901760
    %4663 = vmatpush1.xpose.msra.mxu0 %v4662
    %4664 = vmatprep.subr.mxu0 0.0
    %v4665 = vand.u32 %v4011, 4294901760
    %4666 = vmatpush1.xpose.msra.mxu0 %v4665
    %4667 = vmatprep.subr.mxu0 0.0
    %v4668 = vand.u32 %v4008, 4294901760
    %4669 = vmatpush1.xpose.msra.mxu0 %v4668
    %4670 = vmatprep.subr.mxu0 0.0
    %v4671 = vand.u32 %v4005, 4294901760
    %4672 = vmatpush1.xpose.msra.mxu0 %v4671
    %4673 = vmatprep.subr.mxu0 0.0
    %v4674 = vand.u32 %v4002, 4294901760
    %4675 = vmatpush1.xpose.msra.mxu0 %v4674
    %4676 = vmatprep.subr.mxu0 0.0
    %v4677 = vand.u32 %v3999, 4294901760
    %4678 = vmatpush1.xpose.msra.mxu0 %v4677
    %4679 = vmatprep.subr.mxu0 0.0
    %v4680 = vand.u32 %v3996, 4294901760
    %4681 = vmatpush1.xpose.msra.mxu0 %v4680
    %4682 = vmatprep.subr.mxu0 0.0
    %4683 = vmatpush2.xpose.msra.mxu0 0.0
    %4684 = vmatprep.subr.mxu0 0.0
    %4685 = vmatpush2.xpose.msra.mxu0 0.0
    %4686 = vmatprep.subr.mxu0 0.0
    %4687 = vmatpush2.xpose.msra.mxu0 0.0
    %4688 = vmatprep.subr.mxu0 0.0
    %4689 = vmatpush2.xpose.msra.mxu0 0.0
    %4690 = vmatprep.subr.mxu0 0.0
    %4691 = vmatpush2.xpose.msra.mxu0 0.0
    %4692 = vmatprep.subr.mxu0 0.0
    %4693 = vmatpush2.xpose.msra.mxu0 0.0
    %4694 = vmatprep.subr.mxu0 0.0
    %4695 = vmatpush2.xpose.msra.mxu0 0.0
    %4696 = vmatprep.subr.mxu0 0.0
    %4697 = vmatpush2.xpose.msra.mxu0 0.0
    %4698 = vmatprep.subr.mxu0 0.0
    %4699 = vmatpush2.xpose.msra.mxu0 0.0
    %4700 = vmatprep.subr.mxu0 0.0
    %4701 = vmatpush2.xpose.msra.mxu0 0.0
    %4702 = vmatprep.subr.mxu0 0.0
    %4703 = vmatpush2.xpose.msra.mxu0 0.0
    %4704 = vmatprep.subr.mxu0 0.0
    %4705 = vmatpush2.xpose.msra.mxu0 0.0
    %4706 = vmatprep.subr.mxu0 0.0
    %4707 = vmatpush2.xpose.msra.mxu0 0.0
    %4708 = vmatprep.subr.mxu0 0.0
    %4709 = vmatpush2.xpose.msra.mxu0 0.0
    %4710 = vmatprep.subr.mxu0 0.0
    %4711 = vmatpush2.xpose.msra.mxu0 0.0
    %4712 = vmatprep.subr.mxu0 0.0
    %4713 = vmatpush2.xpose.msra.mxu0 0.0
    %4714 = vmatprep.mubr.f32.mxu0 0.0
    %v4715 = vand.u32 %v3990, 4294901760
    %4716 = vmatmul.mubr.f32.gmra.mxu0 %v4715
    %v4717 = vpop.f32.mrf.mxu0
    %v4718 = vadd.f32 %v4625, %v4717
    %v4719 = vpop.f32.mrf.mxu0
    %4720 = vmatprep.mubr.f32.mxu0 0.0
    %v4721 = vand.u32 %v3993, 4294901760
    %4722 = vmatmul.mubr.f32.gmra.mxu0 %v4721
    %v4723 = vpop.f32.mrf.mxu0
    %v4724 = vadd.f32 %v4631, %v4723
    %v4725 = vpop.f32.mrf.mxu0
    %4726 = vdwg.mxu0
    %v4728 = vsel %vm298, %v38, 0
    %v4731 = vsel %vm298, %v39, 0
    %v4734 = vsel %vm298, %v138, 0
    %v4737 = vsel %vm298, %v139, 0
    %v4740 = vsel %vm298, %v140, 0
    %v4743 = vsel %vm298, %v141, 0
    %v4746 = vsel %vm298, %v142, 0
    %v4749 = vsel %vm298, %v143, 0
    %v4752 = vsel %vm298, %v144, 0
    %v4755 = vsel %vm298, %v145, 0
    %v4758 = vsel %vm298, %v146, 0
    %v4761 = vsel %vm298, %v147, 0
    %v4764 = vsel %vm298, %v148, 0
    %v4767 = vsel %vm298, %v149, 0
    %v4770 = vsel %vm298, %v150, 0
    %v4773 = vsel %vm298, %v151, 0
    %v4776 = vsel %vm298, %v152, 0
    %v4779 = vsel %vm298, %v153, 0
    %4781 = vmatprep.subr.mxu0 0.0
    %v4782 = vand.u32 %v4779, 4294901760
    %4783 = vmatpush1.xpose.msra.mxu0 %v4782
    %4784 = vmatprep.subr.mxu0 0.0
    %v4785 = vand.u32 %v4776, 4294901760
    %4786 = vmatpush1.xpose.msra.mxu0 %v4785
    %4787 = vmatprep.subr.mxu0 0.0
    %v4788 = vand.u32 %v4773, 4294901760
    %4789 = vmatpush1.xpose.msra.mxu0 %v4788
    %4790 = vmatprep.subr.mxu0 0.0
    %v4791 = vand.u32 %v4770, 4294901760
    %4792 = vmatpush1.xpose.msra.mxu0 %v4791
    %4793 = vmatprep.subr.mxu0 0.0
    %v4794 = vand.u32 %v4767, 4294901760
    %4795 = vmatpush1.xpose.msra.mxu0 %v4794
    %4796 = vmatprep.subr.mxu0 0.0
    %v4797 = vand.u32 %v4764, 4294901760
    %4798 = vmatpush1.xpose.msra.mxu0 %v4797
    %4799 = vmatprep.subr.mxu0 0.0
    %v4800 = vand.u32 %v4761, 4294901760
    %4801 = vmatpush1.xpose.msra.mxu0 %v4800
    %4802 = vmatprep.subr.mxu0 0.0
    %v4803 = vand.u32 %v4758, 4294901760
    %4804 = vmatpush1.xpose.msra.mxu0 %v4803
    %4805 = vmatprep.subr.mxu0 0.0
    %v4806 = vand.u32 %v4755, 4294901760
    %4807 = vmatpush1.xpose.msra.mxu0 %v4806
    %4808 = vmatprep.subr.mxu0 0.0
    %v4809 = vand.u32 %v4752, 4294901760
    %4810 = vmatpush1.xpose.msra.mxu0 %v4809
    %4811 = vmatprep.subr.mxu0 0.0
    %v4812 = vand.u32 %v4749, 4294901760
    %4813 = vmatpush1.xpose.msra.mxu0 %v4812
    %4814 = vmatprep.subr.mxu0 0.0
    %v4815 = vand.u32 %v4746, 4294901760
    %4816 = vmatpush1.xpose.msra.mxu0 %v4815
    %4817 = vmatprep.subr.mxu0 0.0
    %v4818 = vand.u32 %v4743, 4294901760
    %4819 = vmatpush1.xpose.msra.mxu0 %v4818
    %4820 = vmatprep.subr.mxu0 0.0
    %v4821 = vand.u32 %v4740, 4294901760
    %4822 = vmatpush1.xpose.msra.mxu0 %v4821
    %4823 = vmatprep.subr.mxu0 0.0
    %v4824 = vand.u32 %v4737, 4294901760
    %4825 = vmatpush1.xpose.msra.mxu0 %v4824
    %4826 = vmatprep.subr.mxu0 0.0
    %v4827 = vand.u32 %v4734, 4294901760
    %4828 = vmatpush1.xpose.msra.mxu0 %v4827
    %4829 = vmatprep.subr.mxu0 0.0
    %4830 = vmatpush2.xpose.msra.mxu0 0.0
    %4831 = vmatprep.subr.mxu0 0.0
    %4832 = vmatpush2.xpose.msra.mxu0 0.0
    %4833 = vmatprep.subr.mxu0 0.0
    %4834 = vmatpush2.xpose.msra.mxu0 0.0
    %4835 = vmatprep.subr.mxu0 0.0
    %4836 = vmatpush2.xpose.msra.mxu0 0.0
    %4837 = vmatprep.subr.mxu0 0.0
    %4838 = vmatpush2.xpose.msra.mxu0 0.0
    %4839 = vmatprep.subr.mxu0 0.0
    %4840 = vmatpush2.xpose.msra.mxu0 0.0
    %4841 = vmatprep.subr.mxu0 0.0
    %4842 = vmatpush2.xpose.msra.mxu0 0.0
    %4843 = vmatprep.subr.mxu0 0.0
    %4844 = vmatpush2.xpose.msra.mxu0 0.0
    %4845 = vmatprep.subr.mxu0 0.0
    %4846 = vmatpush2.xpose.msra.mxu0 0.0
    %4847 = vmatprep.subr.mxu0 0.0
    %4848 = vmatpush2.xpose.msra.mxu0 0.0
    %4849 = vmatprep.subr.mxu0 0.0
    %4850 = vmatpush2.xpose.msra.mxu0 0.0
    %4851 = vmatprep.subr.mxu0 0.0
    %4852 = vmatpush2.xpose.msra.mxu0 0.0
    %4853 = vmatprep.subr.mxu0 0.0
    %4854 = vmatpush2.xpose.msra.mxu0 0.0
    %4855 = vmatprep.subr.mxu0 0.0
    %4856 = vmatpush2.xpose.msra.mxu0 0.0
    %4857 = vmatprep.subr.mxu0 0.0
    %4858 = vmatpush2.xpose.msra.mxu0 0.0
    %4859 = vmatprep.subr.mxu0 0.0
    %4860 = vmatpush2.xpose.msra.mxu0 0.0
    %4861 = vmatprep.mubr.f32.mxu0 0.0
    %v4862 = vand.u32 %v4728, 4294901760
    %v4863 = vsub.f32 %v4728, %v4862
    %v4864 = vand.u32 %v4863, 4294901760
    %v4865 = vsub.f32 %v4863, %v4864
    %v4866 = vand.u32 %v4865, 4294901760
    %4867 = vmatmul.mubr.f32.gmra.mxu0 %v4866
    %v4868 = vpop.f32.mrf.mxu0
    %v4869 = vadd.f32 0.0, %v4868
    %v4870 = vpop.f32.mrf.mxu0
    %4871 = vmatprep.mubr.f32.mxu0 0.0
    %v4872 = vand.u32 %v4731, 4294901760
    %v4873 = vsub.f32 %v4731, %v4872
    %v4874 = vand.u32 %v4873, 4294901760
    %v4875 = vsub.f32 %v4873, %v4874
    %v4876 = vand.u32 %v4875, 4294901760
    %4877 = vmatmul.mubr.f32.gmra.mxu0 %v4876
    %v4878 = vpop.f32.mrf.mxu0
    %v4879 = vadd.f32 0.0, %v4878
    %v4880 = vpop.f32.mrf.mxu0
    %4881 = vdwg.mxu0
    %4882 = vmatprep.subr.mxu0 0.0
    %v4883 = vand.u32 %v4779, 4294901760
    %v4884 = vsub.f32 %v4779, %v4883
    %v4885 = vand.u32 %v4884, 4294901760
    %v4886 = vsub.f32 %v4884, %v4885
    %v4887 = vand.u32 %v4886, 4294901760
    %4888 = vmatpush1.xpose.msra.mxu0 %v4887
    %4889 = vmatprep.subr.mxu0 0.0
    %v4890 = vand.u32 %v4776, 4294901760
    %v4891 = vsub.f32 %v4776, %v4890
    %v4892 = vand.u32 %v4891, 4294901760
    %v4893 = vsub.f32 %v4891, %v4892
    %v4894 = vand.u32 %v4893, 4294901760
    %4895 = vmatpush1.xpose.msra.mxu0 %v4894
    %4896 = vmatprep.subr.mxu0 0.0
    %v4897 = vand.u32 %v4773, 4294901760
    %v4898 = vsub.f32 %v4773, %v4897
    %v4899 = vand.u32 %v4898, 4294901760
    %v4900 = vsub.f32 %v4898, %v4899
    %v4901 = vand.u32 %v4900, 4294901760
    %4902 = vmatpush1.xpose.msra.mxu0 %v4901
    %4903 = vmatprep.subr.mxu0 0.0
    %v4904 = vand.u32 %v4770, 4294901760
    %v4905 = vsub.f32 %v4770, %v4904
    %v4906 = vand.u32 %v4905, 4294901760
    %v4907 = vsub.f32 %v4905, %v4906
    %v4908 = vand.u32 %v4907, 4294901760
    %4909 = vmatpush1.xpose.msra.mxu0 %v4908
    %4910 = vmatprep.subr.mxu0 0.0
    %v4911 = vand.u32 %v4767, 4294901760
    %v4912 = vsub.f32 %v4767, %v4911
    %v4913 = vand.u32 %v4912, 4294901760
    %v4914 = vsub.f32 %v4912, %v4913
    %v4915 = vand.u32 %v4914, 4294901760
    %4916 = vmatpush1.xpose.msra.mxu0 %v4915
    %4917 = vmatprep.subr.mxu0 0.0
    %v4918 = vand.u32 %v4764, 4294901760
    %v4919 = vsub.f32 %v4764, %v4918
    %v4920 = vand.u32 %v4919, 4294901760
    %v4921 = vsub.f32 %v4919, %v4920
    %v4922 = vand.u32 %v4921, 4294901760
    %4923 = vmatpush1.xpose.msra.mxu0 %v4922
    %4924 = vmatprep.subr.mxu0 0.0
    %v4925 = vand.u32 %v4761, 4294901760
    %v4926 = vsub.f32 %v4761, %v4925
    %v4927 = vand.u32 %v4926, 4294901760
    %v4928 = vsub.f32 %v4926, %v4927
    %v4929 = vand.u32 %v4928, 4294901760
    %4930 = vmatpush1.xpose.msra.mxu0 %v4929
    %4931 = vmatprep.subr.mxu0 0.0
    %v4932 = vand.u32 %v4758, 4294901760
    %v4933 = vsub.f32 %v4758, %v4932
    %v4934 = vand.u32 %v4933, 4294901760
    %v4935 = vsub.f32 %v4933, %v4934
    %v4936 = vand.u32 %v4935, 4294901760
    %4937 = vmatpush1.xpose.msra.mxu0 %v4936
    %4938 = vmatprep.subr.mxu0 0.0
    %v4939 = vand.u32 %v4755, 4294901760
    %v4940 = vsub.f32 %v4755, %v4939
    %v4941 = vand.u32 %v4940, 4294901760
    %v4942 = vsub.f32 %v4940, %v4941
    %v4943 = vand.u32 %v4942, 4294901760
    %4944 = vmatpush1.xpose.msra.mxu0 %v4943
    %4945 = vmatprep.subr.mxu0 0.0
    %v4946 = vand.u32 %v4752, 4294901760
    %v4947 = vsub.f32 %v4752, %v4946
    %v4948 = vand.u32 %v4947, 4294901760
    %v4949 = vsub.f32 %v4947, %v4948
    %v4950 = vand.u32 %v4949, 4294901760
    %4951 = vmatpush1.xpose.msra.mxu0 %v4950
    %4952 = vmatprep.subr.mxu0 0.0
    %v4953 = vand.u32 %v4749, 4294901760
    %v4954 = vsub.f32 %v4749, %v4953
    %v4955 = vand.u32 %v4954, 4294901760
    %v4956 = vsub.f32 %v4954, %v4955
    %v4957 = vand.u32 %v4956, 4294901760
    %4958 = vmatpush1.xpose.msra.mxu0 %v4957
    %4959 = vmatprep.subr.mxu0 0.0
    %v4960 = vand.u32 %v4746, 4294901760
    %v4961 = vsub.f32 %v4746, %v4960
    %v4962 = vand.u32 %v4961, 4294901760
    %v4963 = vsub.f32 %v4961, %v4962
    %v4964 = vand.u32 %v4963, 4294901760
    %4965 = vmatpush1.xpose.msra.mxu0 %v4964
    %4966 = vmatprep.subr.mxu0 0.0
    %v4967 = vand.u32 %v4743, 4294901760
    %v4968 = vsub.f32 %v4743, %v4967
    %v4969 = vand.u32 %v4968, 4294901760
    %v4970 = vsub.f32 %v4968, %v4969
    %v4971 = vand.u32 %v4970, 4294901760
    %4972 = vmatpush1.xpose.msra.mxu0 %v4971
    %4973 = vmatprep.subr.mxu0 0.0
    %v4974 = vand.u32 %v4740, 4294901760
    %v4975 = vsub.f32 %v4740, %v4974
    %v4976 = vand.u32 %v4975, 4294901760
    %v4977 = vsub.f32 %v4975, %v4976
    %v4978 = vand.u32 %v4977, 4294901760
    %4979 = vmatpush1.xpose.msra.mxu0 %v4978
    %4980 = vmatprep.subr.mxu0 0.0
    %v4981 = vand.u32 %v4737, 4294901760
    %v4982 = vsub.f32 %v4737, %v4981
    %v4983 = vand.u32 %v4982, 4294901760
    %v4984 = vsub.f32 %v4982, %v4983
    %v4985 = vand.u32 %v4984, 4294901760
    %4986 = vmatpush1.xpose.msra.mxu0 %v4985
    %4987 = vmatprep.subr.mxu0 0.0
    %v4988 = vand.u32 %v4734, 4294901760
    %v4989 = vsub.f32 %v4734, %v4988
    %v4990 = vand.u32 %v4989, 4294901760
    %v4991 = vsub.f32 %v4989, %v4990
    %v4992 = vand.u32 %v4991, 4294901760
    %4993 = vmatpush1.xpose.msra.mxu0 %v4992
    %4994 = vmatprep.subr.mxu0 0.0
    %4995 = vmatpush2.xpose.msra.mxu0 0.0
    %4996 = vmatprep.subr.mxu0 0.0
    %4997 = vmatpush2.xpose.msra.mxu0 0.0
    %4998 = vmatprep.subr.mxu0 0.0
    %4999 = vmatpush2.xpose.msra.mxu0 0.0
    %5000 = vmatprep.subr.mxu0 0.0
    %5001 = vmatpush2.xpose.msra.mxu0 0.0
    %5002 = vmatprep.subr.mxu0 0.0
    %5003 = vmatpush2.xpose.msra.mxu0 0.0
    %5004 = vmatprep.subr.mxu0 0.0
    %5005 = vmatpush2.xpose.msra.mxu0 0.0
    %5006 = vmatprep.subr.mxu0 0.0
    %5007 = vmatpush2.xpose.msra.mxu0 0.0
    %5008 = vmatprep.subr.mxu0 0.0
    %5009 = vmatpush2.xpose.msra.mxu0 0.0
    %5010 = vmatprep.subr.mxu0 0.0
    %5011 = vmatpush2.xpose.msra.mxu0 0.0
    %5012 = vmatprep.subr.mxu0 0.0
    %5013 = vmatpush2.xpose.msra.mxu0 0.0
    %5014 = vmatprep.subr.mxu0 0.0
    %5015 = vmatpush2.xpose.msra.mxu0 0.0
    %5016 = vmatprep.subr.mxu0 0.0
    %5017 = vmatpush2.xpose.msra.mxu0 0.0
    %5018 = vmatprep.subr.mxu0 0.0
    %5019 = vmatpush2.xpose.msra.mxu0 0.0
    %5020 = vmatprep.subr.mxu0 0.0
    %5021 = vmatpush2.xpose.msra.mxu0 0.0
    %5022 = vmatprep.subr.mxu0 0.0
    %5023 = vmatpush2.xpose.msra.mxu0 0.0
    %5024 = vmatprep.subr.mxu0 0.0
    %5025 = vmatpush2.xpose.msra.mxu0 0.0
    %5026 = vmatprep.mubr.f32.mxu0 0.0
    %v5027 = vand.u32 %v4728, 4294901760
    %5028 = vmatmul.mubr.f32.gmra.mxu0 %v5027
    %v5029 = vpop.f32.mrf.mxu0
    %v5030 = vadd.f32 %v4869, %v5029
    %v5031 = vpop.f32.mrf.mxu0
    %5032 = vmatprep.mubr.f32.mxu0 0.0
    %v5033 = vand.u32 %v4731, 4294901760
    %5034 = vmatmul.mubr.f32.gmra.mxu0 %v5033
    %v5035 = vpop.f32.mrf.mxu0
    %v5036 = vadd.f32 %v4879, %v5035
    %v5037 = vpop.f32.mrf.mxu0
    %5038 = vdwg.mxu0
    %5039 = vmatprep.subr.mxu0 0.0
    %v5040 = vand.u32 %v4779, 4294901760
    %v5041 = vsub.f32 %v4779, %v5040
    %5042 = vmatpush1.xpose.msra.mxu0 %v5041
    %5043 = vmatprep.subr.mxu0 0.0
    %v5044 = vand.u32 %v4776, 4294901760
    %v5045 = vsub.f32 %v4776, %v5044
    %5046 = vmatpush1.xpose.msra.mxu0 %v5045
    %5047 = vmatprep.subr.mxu0 0.0
    %v5048 = vand.u32 %v4773, 4294901760
    %v5049 = vsub.f32 %v4773, %v5048
    %5050 = vmatpush1.xpose.msra.mxu0 %v5049
    %5051 = vmatprep.subr.mxu0 0.0
    %v5052 = vand.u32 %v4770, 4294901760
    %v5053 = vsub.f32 %v4770, %v5052
    %5054 = vmatpush1.xpose.msra.mxu0 %v5053
    %5055 = vmatprep.subr.mxu0 0.0
    %v5056 = vand.u32 %v4767, 4294901760
    %v5057 = vsub.f32 %v4767, %v5056
    %5058 = vmatpush1.xpose.msra.mxu0 %v5057
    %5059 = vmatprep.subr.mxu0 0.0
    %v5060 = vand.u32 %v4764, 4294901760
    %v5061 = vsub.f32 %v4764, %v5060
    %5062 = vmatpush1.xpose.msra.mxu0 %v5061
    %5063 = vmatprep.subr.mxu0 0.0
    %v5064 = vand.u32 %v4761, 4294901760
    %v5065 = vsub.f32 %v4761, %v5064
    %5066 = vmatpush1.xpose.msra.mxu0 %v5065
    %5067 = vmatprep.subr.mxu0 0.0
    %v5068 = vand.u32 %v4758, 4294901760
    %v5069 = vsub.f32 %v4758, %v5068
    %5070 = vmatpush1.xpose.msra.mxu0 %v5069
    %5071 = vmatprep.subr.mxu0 0.0
    %v5072 = vand.u32 %v4755, 4294901760
    %v5073 = vsub.f32 %v4755, %v5072
    %5074 = vmatpush1.xpose.msra.mxu0 %v5073
    %5075 = vmatprep.subr.mxu0 0.0
    %v5076 = vand.u32 %v4752, 4294901760
    %v5077 = vsub.f32 %v4752, %v5076
    %5078 = vmatpush1.xpose.msra.mxu0 %v5077
    %5079 = vmatprep.subr.mxu0 0.0
    %v5080 = vand.u32 %v4749, 4294901760
    %v5081 = vsub.f32 %v4749, %v5080
    %5082 = vmatpush1.xpose.msra.mxu0 %v5081
    %5083 = vmatprep.subr.mxu0 0.0
    %v5084 = vand.u32 %v4746, 4294901760
    %v5085 = vsub.f32 %v4746, %v5084
    %5086 = vmatpush1.xpose.msra.mxu0 %v5085
    %5087 = vmatprep.subr.mxu0 0.0
    %v5088 = vand.u32 %v4743, 4294901760
    %v5089 = vsub.f32 %v4743, %v5088
    %5090 = vmatpush1.xpose.msra.mxu0 %v5089
    %5091 = vmatprep.subr.mxu0 0.0
    %v5092 = vand.u32 %v4740, 4294901760
    %v5093 = vsub.f32 %v4740, %v5092
    %5094 = vmatpush1.xpose.msra.mxu0 %v5093
    %5095 = vmatprep.subr.mxu0 0.0
    %v5096 = vand.u32 %v4737, 4294901760
    %v5097 = vsub.f32 %v4737, %v5096
    %5098 = vmatpush1.xpose.msra.mxu0 %v5097
    %5099 = vmatprep.subr.mxu0 0.0
    %v5100 = vand.u32 %v4734, 4294901760
    %v5101 = vsub.f32 %v4734, %v5100
    %5102 = vmatpush1.xpose.msra.mxu0 %v5101
    %5103 = vmatprep.subr.mxu0 0.0
    %5104 = vmatpush2.xpose.msra.mxu0 0.0
    %5105 = vmatprep.subr.mxu0 0.0
    %5106 = vmatpush2.xpose.msra.mxu0 0.0
    %5107 = vmatprep.subr.mxu0 0.0
    %5108 = vmatpush2.xpose.msra.mxu0 0.0
    %5109 = vmatprep.subr.mxu0 0.0
    %5110 = vmatpush2.xpose.msra.mxu0 0.0
    %5111 = vmatprep.subr.mxu0 0.0
    %5112 = vmatpush2.xpose.msra.mxu0 0.0
    %5113 = vmatprep.subr.mxu0 0.0
    %5114 = vmatpush2.xpose.msra.mxu0 0.0
    %5115 = vmatprep.subr.mxu0 0.0
    %5116 = vmatpush2.xpose.msra.mxu0 0.0
    %5117 = vmatprep.subr.mxu0 0.0
    %5118 = vmatpush2.xpose.msra.mxu0 0.0
    %5119 = vmatprep.subr.mxu0 0.0
    %5120 = vmatpush2.xpose.msra.mxu0 0.0
    %5121 = vmatprep.subr.mxu0 0.0
    %5122 = vmatpush2.xpose.msra.mxu0 0.0
    %5123 = vmatprep.subr.mxu0 0.0
    %5124 = vmatpush2.xpose.msra.mxu0 0.0
    %5125 = vmatprep.subr.mxu0 0.0
    %5126 = vmatpush2.xpose.msra.mxu0 0.0
    %5127 = vmatprep.subr.mxu0 0.0
    %5128 = vmatpush2.xpose.msra.mxu0 0.0
    %5129 = vmatprep.subr.mxu0 0.0
    %5130 = vmatpush2.xpose.msra.mxu0 0.0
    %5131 = vmatprep.subr.mxu0 0.0
    %5132 = vmatpush2.xpose.msra.mxu0 0.0
    %5133 = vmatprep.subr.mxu0 0.0
    %5134 = vmatpush2.xpose.msra.mxu0 0.0
    %5135 = vmatprep.mubr.f32.mxu0 0.0
    %v5136 = vand.u32 %v4728, 4294901760
    %v5137 = vsub.f32 %v4728, %v5136
    %5138 = vmatmul.mubr.f32.gmra.mxu0 %v5137
    %v5139 = vpop.f32.mrf.mxu0
    %v5140 = vadd.f32 %v5030, %v5139
    %v5141 = vpop.f32.mrf.mxu0
    %5142 = vmatprep.mubr.f32.mxu0 0.0
    %v5143 = vand.u32 %v4731, 4294901760
    %v5144 = vsub.f32 %v4731, %v5143
    %5145 = vmatmul.mubr.f32.gmra.mxu0 %v5144
    %v5146 = vpop.f32.mrf.mxu0
    %v5147 = vadd.f32 %v5036, %v5146
    %v5148 = vpop.f32.mrf.mxu0
    %5149 = vdwg.mxu0
    %5150 = vmatprep.subr.mxu0 0.0
    %v5151 = vand.u32 %v4779, 4294901760
    %5152 = vmatpush1.xpose.msra.mxu0 %v5151
    %5153 = vmatprep.subr.mxu0 0.0
    %v5154 = vand.u32 %v4776, 4294901760
    %5155 = vmatpush1.xpose.msra.mxu0 %v5154
    %5156 = vmatprep.subr.mxu0 0.0
    %v5157 = vand.u32 %v4773, 4294901760
    %5158 = vmatpush1.xpose.msra.mxu0 %v5157
    %5159 = vmatprep.subr.mxu0 0.0
    %v5160 = vand.u32 %v4770, 4294901760
    %5161 = vmatpush1.xpose.msra.mxu0 %v5160
    %5162 = vmatprep.subr.mxu0 0.0
    %v5163 = vand.u32 %v4767, 4294901760
    %5164 = vmatpush1.xpose.msra.mxu0 %v5163
    %5165 = vmatprep.subr.mxu0 0.0
    %v5166 = vand.u32 %v4764, 4294901760
    %5167 = vmatpush1.xpose.msra.mxu0 %v5166
    %5168 = vmatprep.subr.mxu0 0.0
    %v5169 = vand.u32 %v4761, 4294901760
    %5170 = vmatpush1.xpose.msra.mxu0 %v5169
    %5171 = vmatprep.subr.mxu0 0.0
    %v5172 = vand.u32 %v4758, 4294901760
    %5173 = vmatpush1.xpose.msra.mxu0 %v5172
    %5174 = vmatprep.subr.mxu0 0.0
    %v5175 = vand.u32 %v4755, 4294901760
    %5176 = vmatpush1.xpose.msra.mxu0 %v5175
    %5177 = vmatprep.subr.mxu0 0.0
    %v5178 = vand.u32 %v4752, 4294901760
    %5179 = vmatpush1.xpose.msra.mxu0 %v5178
    %5180 = vmatprep.subr.mxu0 0.0
    %v5181 = vand.u32 %v4749, 4294901760
    %5182 = vmatpush1.xpose.msra.mxu0 %v5181
    %5183 = vmatprep.subr.mxu0 0.0
    %v5184 = vand.u32 %v4746, 4294901760
    %5185 = vmatpush1.xpose.msra.mxu0 %v5184
    %5186 = vmatprep.subr.mxu0 0.0
    %v5187 = vand.u32 %v4743, 4294901760
    %5188 = vmatpush1.xpose.msra.mxu0 %v5187
    %5189 = vmatprep.subr.mxu0 0.0
    %v5190 = vand.u32 %v4740, 4294901760
    %5191 = vmatpush1.xpose.msra.mxu0 %v5190
    %5192 = vmatprep.subr.mxu0 0.0
    %v5193 = vand.u32 %v4737, 4294901760
    %5194 = vmatpush1.xpose.msra.mxu0 %v5193
    %5195 = vmatprep.subr.mxu0 0.0
    %v5196 = vand.u32 %v4734, 4294901760
    %5197 = vmatpush1.xpose.msra.mxu0 %v5196
    %5198 = vmatprep.subr.mxu0 0.0
    %5199 = vmatpush2.xpose.msra.mxu0 0.0
    %5200 = vmatprep.subr.mxu0 0.0
    %5201 = vmatpush2.xpose.msra.mxu0 0.0
    %5202 = vmatprep.subr.mxu0 0.0
    %5203 = vmatpush2.xpose.msra.mxu0 0.0
    %5204 = vmatprep.subr.mxu0 0.0
    %5205 = vmatpush2.xpose.msra.mxu0 0.0
    %5206 = vmatprep.subr.mxu0 0.0
    %5207 = vmatpush2.xpose.msra.mxu0 0.0
    %5208 = vmatprep.subr.mxu0 0.0
    %5209 = vmatpush2.xpose.msra.mxu0 0.0
    %5210 = vmatprep.subr.mxu0 0.0
    %5211 = vmatpush2.xpose.msra.mxu0 0.0
    %5212 = vmatprep.subr.mxu0 0.0
    %5213 = vmatpush2.xpose.msra.mxu0 0.0
    %5214 = vmatprep.subr.mxu0 0.0
    %5215 = vmatpush2.xpose.msra.mxu0 0.0
    %5216 = vmatprep.subr.mxu0 0.0
    %5217 = vmatpush2.xpose.msra.mxu0 0.0
    %5218 = vmatprep.subr.mxu0 0.0
    %5219 = vmatpush2.xpose.msra.mxu0 0.0
    %5220 = vmatprep.subr.mxu0 0.0
    %5221 = vmatpush2.xpose.msra.mxu0 0.0
    %5222 = vmatprep.subr.mxu0 0.0
    %5223 = vmatpush2.xpose.msra.mxu0 0.0
    %5224 = vmatprep.subr.mxu0 0.0
    %5225 = vmatpush2.xpose.msra.mxu0 0.0
    %5226 = vmatprep.subr.mxu0 0.0
    %5227 = vmatpush2.xpose.msra.mxu0 0.0
    %5228 = vmatprep.subr.mxu0 0.0
    %5229 = vmatpush2.xpose.msra.mxu0 0.0
    %5230 = vmatprep.mubr.f32.mxu0 0.0
    %v5231 = vand.u32 %v4728, 4294901760
    %v5232 = vsub.f32 %v4728, %v5231
    %v5233 = vand.u32 %v5232, 4294901760
    %5234 = vmatmul.mubr.f32.gmra.mxu0 %v5233
    %v5235 = vpop.f32.mrf.mxu0
    %v5236 = vadd.f32 %v5140, %v5235
    %v5237 = vpop.f32.mrf.mxu0
    %5238 = vmatprep.mubr.f32.mxu0 0.0
    %v5239 = vand.u32 %v4731, 4294901760
    %v5240 = vsub.f32 %v4731, %v5239
    %v5241 = vand.u32 %v5240, 4294901760
    %5242 = vmatmul.mubr.f32.gmra.mxu0 %v5241
    %v5243 = vpop.f32.mrf.mxu0
    %v5244 = vadd.f32 %v5147, %v5243
    %v5245 = vpop.f32.mrf.mxu0
    %5246 = vdwg.mxu0
    %5247 = vmatprep.subr.mxu0 0.0
    %v5248 = vand.u32 %v4779, 4294901760
    %v5249 = vsub.f32 %v4779, %v5248
    %v5250 = vand.u32 %v5249, 4294901760
    %5251 = vmatpush1.xpose.msra.mxu0 %v5250
    %5252 = vmatprep.subr.mxu0 0.0
    %v5253 = vand.u32 %v4776, 4294901760
    %v5254 = vsub.f32 %v4776, %v5253
    %v5255 = vand.u32 %v5254, 4294901760
    %5256 = vmatpush1.xpose.msra.mxu0 %v5255
    %5257 = vmatprep.subr.mxu0 0.0
    %v5258 = vand.u32 %v4773, 4294901760
    %v5259 = vsub.f32 %v4773, %v5258
    %v5260 = vand.u32 %v5259, 4294901760
    %5261 = vmatpush1.xpose.msra.mxu0 %v5260
    %5262 = vmatprep.subr.mxu0 0.0
    %v5263 = vand.u32 %v4770, 4294901760
    %v5264 = vsub.f32 %v4770, %v5263
    %v5265 = vand.u32 %v5264, 4294901760
    %5266 = vmatpush1.xpose.msra.mxu0 %v5265
    %5267 = vmatprep.subr.mxu0 0.0
    %v5268 = vand.u32 %v4767, 4294901760
    %v5269 = vsub.f32 %v4767, %v5268
    %v5270 = vand.u32 %v5269, 4294901760
    %5271 = vmatpush1.xpose.msra.mxu0 %v5270
    %5272 = vmatprep.subr.mxu0 0.0
    %v5273 = vand.u32 %v4764, 4294901760
    %v5274 = vsub.f32 %v4764, %v5273
    %v5275 = vand.u32 %v5274, 4294901760
    %5276 = vmatpush1.xpose.msra.mxu0 %v5275
    %5277 = vmatprep.subr.mxu0 0.0
    %v5278 = vand.u32 %v4761, 4294901760
    %v5279 = vsub.f32 %v4761, %v5278
    %v5280 = vand.u32 %v5279, 4294901760
    %5281 = vmatpush1.xpose.msra.mxu0 %v5280
    %5282 = vmatprep.subr.mxu0 0.0
    %v5283 = vand.u32 %v4758, 4294901760
    %v5284 = vsub.f32 %v4758, %v5283
    %v5285 = vand.u32 %v5284, 4294901760
    %5286 = vmatpush1.xpose.msra.mxu0 %v5285
    %5287 = vmatprep.subr.mxu0 0.0
    %v5288 = vand.u32 %v4755, 4294901760
    %v5289 = vsub.f32 %v4755, %v5288
    %v5290 = vand.u32 %v5289, 4294901760
    %5291 = vmatpush1.xpose.msra.mxu0 %v5290
    %5292 = vmatprep.subr.mxu0 0.0
    %v5293 = vand.u32 %v4752, 4294901760
    %v5294 = vsub.f32 %v4752, %v5293
    %v5295 = vand.u32 %v5294, 4294901760
    %5296 = vmatpush1.xpose.msra.mxu0 %v5295
    %5297 = vmatprep.subr.mxu0 0.0
    %v5298 = vand.u32 %v4749, 4294901760
    %v5299 = vsub.f32 %v4749, %v5298
    %v5300 = vand.u32 %v5299, 4294901760
    %5301 = vmatpush1.xpose.msra.mxu0 %v5300
    %5302 = vmatprep.subr.mxu0 0.0
    %v5303 = vand.u32 %v4746, 4294901760
    %v5304 = vsub.f32 %v4746, %v5303
    %v5305 = vand.u32 %v5304, 4294901760
    %5306 = vmatpush1.xpose.msra.mxu0 %v5305
    %5307 = vmatprep.subr.mxu0 0.0
    %v5308 = vand.u32 %v4743, 4294901760
    %v5309 = vsub.f32 %v4743, %v5308
    %v5310 = vand.u32 %v5309, 4294901760
    %5311 = vmatpush1.xpose.msra.mxu0 %v5310
    %5312 = vmatprep.subr.mxu0 0.0
    %v5313 = vand.u32 %v4740, 4294901760
    %v5314 = vsub.f32 %v4740, %v5313
    %v5315 = vand.u32 %v5314, 4294901760
    %5316 = vmatpush1.xpose.msra.mxu0 %v5315
    %5317 = vmatprep.subr.mxu0 0.0
    %v5318 = vand.u32 %v4737, 4294901760
    %v5319 = vsub.f32 %v4737, %v5318
    %v5320 = vand.u32 %v5319, 4294901760
    %5321 = vmatpush1.xpose.msra.mxu0 %v5320
    %5322 = vmatprep.subr.mxu0 0.0
    %v5323 = vand.u32 %v4734, 4294901760
    %v5324 = vsub.f32 %v4734, %v5323
    %v5325 = vand.u32 %v5324, 4294901760
    %5326 = vmatpush1.xpose.msra.mxu0 %v5325
    %5327 = vmatprep.subr.mxu0 0.0
    %5328 = vmatpush2.xpose.msra.mxu0 0.0
    %5329 = vmatprep.subr.mxu0 0.0
    %5330 = vmatpush2.xpose.msra.mxu0 0.0
    %5331 = vmatprep.subr.mxu0 0.0
    %5332 = vmatpush2.xpose.msra.mxu0 0.0
    %5333 = vmatprep.subr.mxu0 0.0
    %5334 = vmatpush2.xpose.msra.mxu0 0.0
    %5335 = vmatprep.subr.mxu0 0.0
    %5336 = vmatpush2.xpose.msra.mxu0 0.0
    %5337 = vmatprep.subr.mxu0 0.0
    %5338 = vmatpush2.xpose.msra.mxu0 0.0
    %5339 = vmatprep.subr.mxu0 0.0
    %5340 = vmatpush2.xpose.msra.mxu0 0.0
    %5341 = vmatprep.subr.mxu0 0.0
    %5342 = vmatpush2.xpose.msra.mxu0 0.0
    %5343 = vmatprep.subr.mxu0 0.0
    %5344 = vmatpush2.xpose.msra.mxu0 0.0
    %5345 = vmatprep.subr.mxu0 0.0
    %5346 = vmatpush2.xpose.msra.mxu0 0.0
    %5347 = vmatprep.subr.mxu0 0.0
    %5348 = vmatpush2.xpose.msra.mxu0 0.0
    %5349 = vmatprep.subr.mxu0 0.0
    %5350 = vmatpush2.xpose.msra.mxu0 0.0
    %5351 = vmatprep.subr.mxu0 0.0
    %5352 = vmatpush2.xpose.msra.mxu0 0.0
    %5353 = vmatprep.subr.mxu0 0.0
    %5354 = vmatpush2.xpose.msra.mxu0 0.0
    %5355 = vmatprep.subr.mxu0 0.0
    %5356 = vmatpush2.xpose.msra.mxu0 0.0
    %5357 = vmatprep.subr.mxu0 0.0
    %5358 = vmatpush2.xpose.msra.mxu0 0.0
    %5359 = vmatprep.mubr.f32.mxu0 0.0
    %v5360 = vand.u32 %v4728, 4294901760
    %5361 = vmatmul.mubr.f32.gmra.mxu0 %v5360
    %v5362 = vpop.f32.mrf.mxu0
    %v5363 = vadd.f32 %v5236, %v5362
    %v5364 = vpop.f32.mrf.mxu0
    %5365 = vmatprep.mubr.f32.mxu0 0.0
    %v5366 = vand.u32 %v4731, 4294901760
    %5367 = vmatmul.mubr.f32.gmra.mxu0 %v5366
    %v5368 = vpop.f32.mrf.mxu0
    %v5369 = vadd.f32 %v5244, %v5368
    %v5370 = vpop.f32.mrf.mxu0
    %5371 = vdwg.mxu0
    %5372 = vmatprep.subr.mxu0 0.0
    %v5373 = vand.u32 %v4779, 4294901760
    %5374 = vmatpush1.xpose.msra.mxu0 %v5373
    %5375 = vmatprep.subr.mxu0 0.0
    %v5376 = vand.u32 %v4776, 4294901760
    %5377 = vmatpush1.xpose.msra.mxu0 %v5376
    %5378 = vmatprep.subr.mxu0 0.0
    %v5379 = vand.u32 %v4773, 4294901760
    %5380 = vmatpush1.xpose.msra.mxu0 %v5379
    %5381 = vmatprep.subr.mxu0 0.0
    %v5382 = vand.u32 %v4770, 4294901760
    %5383 = vmatpush1.xpose.msra.mxu0 %v5382
    %5384 = vmatprep.subr.mxu0 0.0
    %v5385 = vand.u32 %v4767, 4294901760
    %5386 = vmatpush1.xpose.msra.mxu0 %v5385
    %5387 = vmatprep.subr.mxu0 0.0
    %v5388 = vand.u32 %v4764, 4294901760
    %5389 = vmatpush1.xpose.msra.mxu0 %v5388
    %5390 = vmatprep.subr.mxu0 0.0
    %v5391 = vand.u32 %v4761, 4294901760
    %5392 = vmatpush1.xpose.msra.mxu0 %v5391
    %5393 = vmatprep.subr.mxu0 0.0
    %v5394 = vand.u32 %v4758, 4294901760
    %5395 = vmatpush1.xpose.msra.mxu0 %v5394
    %5396 = vmatprep.subr.mxu0 0.0
    %v5397 = vand.u32 %v4755, 4294901760
    %5398 = vmatpush1.xpose.msra.mxu0 %v5397
    %5399 = vmatprep.subr.mxu0 0.0
    %v5400 = vand.u32 %v4752, 4294901760
    %5401 = vmatpush1.xpose.msra.mxu0 %v5400
    %5402 = vmatprep.subr.mxu0 0.0
    %v5403 = vand.u32 %v4749, 4294901760
    %5404 = vmatpush1.xpose.msra.mxu0 %v5403
    %5405 = vmatprep.subr.mxu0 0.0
    %v5406 = vand.u32 %v4746, 4294901760
    %5407 = vmatpush1.xpose.msra.mxu0 %v5406
    %5408 = vmatprep.subr.mxu0 0.0
    %v5409 = vand.u32 %v4743, 4294901760
    %5410 = vmatpush1.xpose.msra.mxu0 %v5409
    %5411 = vmatprep.subr.mxu0 0.0
    %v5412 = vand.u32 %v4740, 4294901760
    %5413 = vmatpush1.xpose.msra.mxu0 %v5412
    %5414 = vmatprep.subr.mxu0 0.0
    %v5415 = vand.u32 %v4737, 4294901760
    %5416 = vmatpush1.xpose.msra.mxu0 %v5415
    %5417 = vmatprep.subr.mxu0 0.0
    %v5418 = vand.u32 %v4734, 4294901760
    %5419 = vmatpush1.xpose.msra.mxu0 %v5418
    %5420 = vmatprep.subr.mxu0 0.0
    %5421 = vmatpush2.xpose.msra.mxu0 0.0
    %5422 = vmatprep.subr.mxu0 0.0
    %5423 = vmatpush2.xpose.msra.mxu0 0.0
    %5424 = vmatprep.subr.mxu0 0.0
    %5425 = vmatpush2.xpose.msra.mxu0 0.0
    %5426 = vmatprep.subr.mxu0 0.0
    %5427 = vmatpush2.xpose.msra.mxu0 0.0
    %5428 = vmatprep.subr.mxu0 0.0
    %5429 = vmatpush2.xpose.msra.mxu0 0.0
    %5430 = vmatprep.subr.mxu0 0.0
    %5431 = vmatpush2.xpose.msra.mxu0 0.0
    %5432 = vmatprep.subr.mxu0 0.0
    %5433 = vmatpush2.xpose.msra.mxu0 0.0
    %5434 = vmatprep.subr.mxu0 0.0
    %5435 = vmatpush2.xpose.msra.mxu0 0.0
    %5436 = vmatprep.subr.mxu0 0.0
    %5437 = vmatpush2.xpose.msra.mxu0 0.0
    %5438 = vmatprep.subr.mxu0 0.0
    %5439 = vmatpush2.xpose.msra.mxu0 0.0
    %5440 = vmatprep.subr.mxu0 0.0
    %5441 = vmatpush2.xpose.msra.mxu0 0.0
    %5442 = vmatprep.subr.mxu0 0.0
    %5443 = vmatpush2.xpose.msra.mxu0 0.0
    %5444 = vmatprep.subr.mxu0 0.0
    %5445 = vmatpush2.xpose.msra.mxu0 0.0
    %5446 = vmatprep.subr.mxu0 0.0
    %5447 = vmatpush2.xpose.msra.mxu0 0.0
    %5448 = vmatprep.subr.mxu0 0.0
    %5449 = vmatpush2.xpose.msra.mxu0 0.0
    %5450 = vmatprep.subr.mxu0 0.0
    %5451 = vmatpush2.xpose.msra.mxu0 0.0
    %5452 = vmatprep.mubr.f32.mxu0 0.0
    %v5453 = vand.u32 %v4728, 4294901760
    %5454 = vmatmul.mubr.f32.gmra.mxu0 %v5453
    %v5455 = vpop.f32.mrf.mxu0
    %v5456 = vadd.f32 %v5363, %v5455
    %v5457 = vpop.f32.mrf.mxu0
    %5458 = vmatprep.mubr.f32.mxu0 0.0
    %v5459 = vand.u32 %v4731, 4294901760
    %5460 = vmatmul.mubr.f32.gmra.mxu0 %v5459
    %v5461 = vpop.f32.mrf.mxu0
    %v5462 = vadd.f32 %v5369, %v5461
    %v5463 = vpop.f32.mrf.mxu0
    %5464 = vdwg.mxu0
    %v5466 = vsel %vm298, %v40, 0
    %v5469 = vsel %vm298, %v41, 0
    %v5472 = vsel %vm298, %v154, 0
    %v5475 = vsel %vm298, %v155, 0
    %v5478 = vsel %vm298, %v156, 0
    %v5481 = vsel %vm298, %v157, 0
    %v5484 = vsel %vm298, %v158, 0
    %v5487 = vsel %vm298, %v159, 0
    %v5490 = vsel %vm298, %v160, 0
    %v5493 = vsel %vm298, %v161, 0
    %v5496 = vsel %vm298, %v162, 0
    %v5499 = vsel %vm298, %v163, 0
    %v5502 = vsel %vm298, %v164, 0
    %v5505 = vsel %vm298, %v165, 0
    %v5508 = vsel %vm298, %v166, 0
    %v5511 = vsel %vm298, %v167, 0
    %v5514 = vsel %vm298, %v168, 0
    %v5517 = vsel %vm298, %v169, 0
    %5519 = vmatprep.subr.mxu0 0.0
    %v5520 = vand.u32 %v5517, 4294901760
    %5521 = vmatpush1.xpose.msra.mxu0 %v5520
    %5522 = vmatprep.subr.mxu0 0.0
    %v5523 = vand.u32 %v5514, 4294901760
    %5524 = vmatpush1.xpose.msra.mxu0 %v5523
    %5525 = vmatprep.subr.mxu0 0.0
    %v5526 = vand.u32 %v5511, 4294901760
    %5527 = vmatpush1.xpose.msra.mxu0 %v5526
    %5528 = vmatprep.subr.mxu0 0.0
    %v5529 = vand.u32 %v5508, 4294901760
    %5530 = vmatpush1.xpose.msra.mxu0 %v5529
    %5531 = vmatprep.subr.mxu0 0.0
    %v5532 = vand.u32 %v5505, 4294901760
    %5533 = vmatpush1.xpose.msra.mxu0 %v5532
    %5534 = vmatprep.subr.mxu0 0.0
    %v5535 = vand.u32 %v5502, 4294901760
    %5536 = vmatpush1.xpose.msra.mxu0 %v5535
    %5537 = vmatprep.subr.mxu0 0.0
    %v5538 = vand.u32 %v5499, 4294901760
    %5539 = vmatpush1.xpose.msra.mxu0 %v5538
    %5540 = vmatprep.subr.mxu0 0.0
    %v5541 = vand.u32 %v5496, 4294901760
    %5542 = vmatpush1.xpose.msra.mxu0 %v5541
    %5543 = vmatprep.subr.mxu0 0.0
    %v5544 = vand.u32 %v5493, 4294901760
    %5545 = vmatpush1.xpose.msra.mxu0 %v5544
    %5546 = vmatprep.subr.mxu0 0.0
    %v5547 = vand.u32 %v5490, 4294901760
    %5548 = vmatpush1.xpose.msra.mxu0 %v5547
    %5549 = vmatprep.subr.mxu0 0.0
    %v5550 = vand.u32 %v5487, 4294901760
    %5551 = vmatpush1.xpose.msra.mxu0 %v5550
    %5552 = vmatprep.subr.mxu0 0.0
    %v5553 = vand.u32 %v5484, 4294901760
    %5554 = vmatpush1.xpose.msra.mxu0 %v5553
    %5555 = vmatprep.subr.mxu0 0.0
    %v5556 = vand.u32 %v5481, 4294901760
    %5557 = vmatpush1.xpose.msra.mxu0 %v5556
    %5558 = vmatprep.subr.mxu0 0.0
    %v5559 = vand.u32 %v5478, 4294901760
    %5560 = vmatpush1.xpose.msra.mxu0 %v5559
    %5561 = vmatprep.subr.mxu0 0.0
    %v5562 = vand.u32 %v5475, 4294901760
    %5563 = vmatpush1.xpose.msra.mxu0 %v5562
    %5564 = vmatprep.subr.mxu0 0.0
    %v5565 = vand.u32 %v5472, 4294901760
    %5566 = vmatpush1.xpose.msra.mxu0 %v5565
    %5567 = vmatprep.subr.mxu0 0.0
    %5568 = vmatpush2.xpose.msra.mxu0 0.0
    %5569 = vmatprep.subr.mxu0 0.0
    %5570 = vmatpush2.xpose.msra.mxu0 0.0
    %5571 = vmatprep.subr.mxu0 0.0
    %5572 = vmatpush2.xpose.msra.mxu0 0.0
    %5573 = vmatprep.subr.mxu0 0.0
    %5574 = vmatpush2.xpose.msra.mxu0 0.0
    %5575 = vmatprep.subr.mxu0 0.0
    %5576 = vmatpush2.xpose.msra.mxu0 0.0
    %5577 = vmatprep.subr.mxu0 0.0
    %5578 = vmatpush2.xpose.msra.mxu0 0.0
    %5579 = vmatprep.subr.mxu0 0.0
    %5580 = vmatpush2.xpose.msra.mxu0 0.0
    %5581 = vmatprep.subr.mxu0 0.0
    %5582 = vmatpush2.xpose.msra.mxu0 0.0
    %5583 = vmatprep.subr.mxu0 0.0
    %5584 = vmatpush2.xpose.msra.mxu0 0.0
    %5585 = vmatprep.subr.mxu0 0.0
    %5586 = vmatpush2.xpose.msra.mxu0 0.0
    %5587 = vmatprep.subr.mxu0 0.0
    %5588 = vmatpush2.xpose.msra.mxu0 0.0
    %5589 = vmatprep.subr.mxu0 0.0
    %5590 = vmatpush2.xpose.msra.mxu0 0.0
    %5591 = vmatprep.subr.mxu0 0.0
    %5592 = vmatpush2.xpose.msra.mxu0 0.0
    %5593 = vmatprep.subr.mxu0 0.0
    %5594 = vmatpush2.xpose.msra.mxu0 0.0
    %5595 = vmatprep.subr.mxu0 0.0
    %5596 = vmatpush2.xpose.msra.mxu0 0.0
    %5597 = vmatprep.subr.mxu0 0.0
    %5598 = vmatpush2.xpose.msra.mxu0 0.0
    %5599 = vmatprep.mubr.f32.mxu0 0.0
    %v5600 = vand.u32 %v5466, 4294901760
    %v5601 = vsub.f32 %v5466, %v5600
    %v5602 = vand.u32 %v5601, 4294901760
    %v5603 = vsub.f32 %v5601, %v5602
    %v5604 = vand.u32 %v5603, 4294901760
    %5605 = vmatmul.mubr.f32.gmra.mxu0 %v5604
    %v5606 = vpop.f32.mrf.mxu0
    %v5607 = vadd.f32 0.0, %v5606
    %v5608 = vpop.f32.mrf.mxu0
    %5609 = vmatprep.mubr.f32.mxu0 0.0
    %v5610 = vand.u32 %v5469, 4294901760
    %v5611 = vsub.f32 %v5469, %v5610
    %v5612 = vand.u32 %v5611, 4294901760
    %v5613 = vsub.f32 %v5611, %v5612
    %v5614 = vand.u32 %v5613, 4294901760
    %5615 = vmatmul.mubr.f32.gmra.mxu0 %v5614
    %v5616 = vpop.f32.mrf.mxu0
    %v5617 = vadd.f32 0.0, %v5616
    %v5618 = vpop.f32.mrf.mxu0
    %5619 = vdwg.mxu0
    %5620 = vmatprep.subr.mxu0 0.0
    %v5621 = vand.u32 %v5517, 4294901760
    %v5622 = vsub.f32 %v5517, %v5621
    %v5623 = vand.u32 %v5622, 4294901760
    %v5624 = vsub.f32 %v5622, %v5623
    %v5625 = vand.u32 %v5624, 4294901760
    %5626 = vmatpush1.xpose.msra.mxu0 %v5625
    %5627 = vmatprep.subr.mxu0 0.0
    %v5628 = vand.u32 %v5514, 4294901760
    %v5629 = vsub.f32 %v5514, %v5628
    %v5630 = vand.u32 %v5629, 4294901760
    %v5631 = vsub.f32 %v5629, %v5630
    %v5632 = vand.u32 %v5631, 4294901760
    %5633 = vmatpush1.xpose.msra.mxu0 %v5632
    %5634 = vmatprep.subr.mxu0 0.0
    %v5635 = vand.u32 %v5511, 4294901760
    %v5636 = vsub.f32 %v5511, %v5635
    %v5637 = vand.u32 %v5636, 4294901760
    %v5638 = vsub.f32 %v5636, %v5637
    %v5639 = vand.u32 %v5638, 4294901760
    %5640 = vmatpush1.xpose.msra.mxu0 %v5639
    %5641 = vmatprep.subr.mxu0 0.0
    %v5642 = vand.u32 %v5508, 4294901760
    %v5643 = vsub.f32 %v5508, %v5642
    %v5644 = vand.u32 %v5643, 4294901760
    %v5645 = vsub.f32 %v5643, %v5644
    %v5646 = vand.u32 %v5645, 4294901760
    %5647 = vmatpush1.xpose.msra.mxu0 %v5646
    %5648 = vmatprep.subr.mxu0 0.0
    %v5649 = vand.u32 %v5505, 4294901760
    %v5650 = vsub.f32 %v5505, %v5649
    %v5651 = vand.u32 %v5650, 4294901760
    %v5652 = vsub.f32 %v5650, %v5651
    %v5653 = vand.u32 %v5652, 4294901760
    %5654 = vmatpush1.xpose.msra.mxu0 %v5653
    %5655 = vmatprep.subr.mxu0 0.0
    %v5656 = vand.u32 %v5502, 4294901760
    %v5657 = vsub.f32 %v5502, %v5656
    %v5658 = vand.u32 %v5657, 4294901760
    %v5659 = vsub.f32 %v5657, %v5658
    %v5660 = vand.u32 %v5659, 4294901760
    %5661 = vmatpush1.xpose.msra.mxu0 %v5660
    %5662 = vmatprep.subr.mxu0 0.0
    %v5663 = vand.u32 %v5499, 4294901760
    %v5664 = vsub.f32 %v5499, %v5663
    %v5665 = vand.u32 %v5664, 4294901760
    %v5666 = vsub.f32 %v5664, %v5665
    %v5667 = vand.u32 %v5666, 4294901760
    %5668 = vmatpush1.xpose.msra.mxu0 %v5667
    %5669 = vmatprep.subr.mxu0 0.0
    %v5670 = vand.u32 %v5496, 4294901760
    %v5671 = vsub.f32 %v5496, %v5670
    %v5672 = vand.u32 %v5671, 4294901760
    %v5673 = vsub.f32 %v5671, %v5672
    %v5674 = vand.u32 %v5673, 4294901760
    %5675 = vmatpush1.xpose.msra.mxu0 %v5674
    %5676 = vmatprep.subr.mxu0 0.0
    %v5677 = vand.u32 %v5493, 4294901760
    %v5678 = vsub.f32 %v5493, %v5677
    %v5679 = vand.u32 %v5678, 4294901760
    %v5680 = vsub.f32 %v5678, %v5679
    %v5681 = vand.u32 %v5680, 4294901760
    %5682 = vmatpush1.xpose.msra.mxu0 %v5681
    %5683 = vmatprep.subr.mxu0 0.0
    %v5684 = vand.u32 %v5490, 4294901760
    %v5685 = vsub.f32 %v5490, %v5684
    %v5686 = vand.u32 %v5685, 4294901760
    %v5687 = vsub.f32 %v5685, %v5686
    %v5688 = vand.u32 %v5687, 4294901760
    %5689 = vmatpush1.xpose.msra.mxu0 %v5688
    %5690 = vmatprep.subr.mxu0 0.0
    %v5691 = vand.u32 %v5487, 4294901760
    %v5692 = vsub.f32 %v5487, %v5691
    %v5693 = vand.u32 %v5692, 4294901760
    %v5694 = vsub.f32 %v5692, %v5693
    %v5695 = vand.u32 %v5694, 4294901760
    %5696 = vmatpush1.xpose.msra.mxu0 %v5695
    %5697 = vmatprep.subr.mxu0 0.0
    %v5698 = vand.u32 %v5484, 4294901760
    %v5699 = vsub.f32 %v5484, %v5698
    %v5700 = vand.u32 %v5699, 4294901760
    %v5701 = vsub.f32 %v5699, %v5700
    %v5702 = vand.u32 %v5701, 4294901760
    %5703 = vmatpush1.xpose.msra.mxu0 %v5702
    %5704 = vmatprep.subr.mxu0 0.0
    %v5705 = vand.u32 %v5481, 4294901760
    %v5706 = vsub.f32 %v5481, %v5705
    %v5707 = vand.u32 %v5706, 4294901760
    %v5708 = vsub.f32 %v5706, %v5707
    %v5709 = vand.u32 %v5708, 4294901760
    %5710 = vmatpush1.xpose.msra.mxu0 %v5709
    %5711 = vmatprep.subr.mxu0 0.0
    %v5712 = vand.u32 %v5478, 4294901760
    %v5713 = vsub.f32 %v5478, %v5712
    %v5714 = vand.u32 %v5713, 4294901760
    %v5715 = vsub.f32 %v5713, %v5714
    %v5716 = vand.u32 %v5715, 4294901760
    %5717 = vmatpush1.xpose.msra.mxu0 %v5716
    %5718 = vmatprep.subr.mxu0 0.0
    %v5719 = vand.u32 %v5475, 4294901760
    %v5720 = vsub.f32 %v5475, %v5719
    %v5721 = vand.u32 %v5720, 4294901760
    %v5722 = vsub.f32 %v5720, %v5721
    %v5723 = vand.u32 %v5722, 4294901760
    %5724 = vmatpush1.xpose.msra.mxu0 %v5723
    %5725 = vmatprep.subr.mxu0 0.0
    %v5726 = vand.u32 %v5472, 4294901760
    %v5727 = vsub.f32 %v5472, %v5726
    %v5728 = vand.u32 %v5727, 4294901760
    %v5729 = vsub.f32 %v5727, %v5728
    %v5730 = vand.u32 %v5729, 4294901760
    %5731 = vmatpush1.xpose.msra.mxu0 %v5730
    %5732 = vmatprep.subr.mxu0 0.0
    %5733 = vmatpush2.xpose.msra.mxu0 0.0
    %5734 = vmatprep.subr.mxu0 0.0
    %5735 = vmatpush2.xpose.msra.mxu0 0.0
    %5736 = vmatprep.subr.mxu0 0.0
    %5737 = vmatpush2.xpose.msra.mxu0 0.0
    %5738 = vmatprep.subr.mxu0 0.0
    %5739 = vmatpush2.xpose.msra.mxu0 0.0
    %5740 = vmatprep.subr.mxu0 0.0
    %5741 = vmatpush2.xpose.msra.mxu0 0.0
    %5742 = vmatprep.subr.mxu0 0.0
    %5743 = vmatpush2.xpose.msra.mxu0 0.0
    %5744 = vmatprep.subr.mxu0 0.0
    %5745 = vmatpush2.xpose.msra.mxu0 0.0
    %5746 = vmatprep.subr.mxu0 0.0
    %5747 = vmatpush2.xpose.msra.mxu0 0.0
    %5748 = vmatprep.subr.mxu0 0.0
    %5749 = vmatpush2.xpose.msra.mxu0 0.0
    %5750 = vmatprep.subr.mxu0 0.0
    %5751 = vmatpush2.xpose.msra.mxu0 0.0
    %5752 = vmatprep.subr.mxu0 0.0
    %5753 = vmatpush2.xpose.msra.mxu0 0.0
    %5754 = vmatprep.subr.mxu0 0.0
    %5755 = vmatpush2.xpose.msra.mxu0 0.0
    %5756 = vmatprep.subr.mxu0 0.0
    %5757 = vmatpush2.xpose.msra.mxu0 0.0
    %5758 = vmatprep.subr.mxu0 0.0
    %5759 = vmatpush2.xpose.msra.mxu0 0.0
    %5760 = vmatprep.subr.mxu0 0.0
    %5761 = vmatpush2.xpose.msra.mxu0 0.0
    %5762 = vmatprep.subr.mxu0 0.0
    %5763 = vmatpush2.xpose.msra.mxu0 0.0
    %5764 = vmatprep.mubr.f32.mxu0 0.0
    %v5765 = vand.u32 %v5466, 4294901760
    %5766 = vmatmul.mubr.f32.gmra.mxu0 %v5765
    %v5767 = vpop.f32.mrf.mxu0
    %v5768 = vadd.f32 %v5607, %v5767
    %v5769 = vpop.f32.mrf.mxu0
    %5770 = vmatprep.mubr.f32.mxu0 0.0
    %v5771 = vand.u32 %v5469, 4294901760
    %5772 = vmatmul.mubr.f32.gmra.mxu0 %v5771
    %v5773 = vpop.f32.mrf.mxu0
    %v5774 = vadd.f32 %v5617, %v5773
    %v5775 = vpop.f32.mrf.mxu0
    %5776 = vdwg.mxu0
    %5777 = vmatprep.subr.mxu0 0.0
    %v5778 = vand.u32 %v5517, 4294901760
    %v5779 = vsub.f32 %v5517, %v5778
    %5780 = vmatpush1.xpose.msra.mxu0 %v5779
    %5781 = vmatprep.subr.mxu0 0.0
    %v5782 = vand.u32 %v5514, 4294901760
    %v5783 = vsub.f32 %v5514, %v5782
    %5784 = vmatpush1.xpose.msra.mxu0 %v5783
    %5785 = vmatprep.subr.mxu0 0.0
    %v5786 = vand.u32 %v5511, 4294901760
    %v5787 = vsub.f32 %v5511, %v5786
    %5788 = vmatpush1.xpose.msra.mxu0 %v5787
    %5789 = vmatprep.subr.mxu0 0.0
    %v5790 = vand.u32 %v5508, 4294901760
    %v5791 = vsub.f32 %v5508, %v5790
    %5792 = vmatpush1.xpose.msra.mxu0 %v5791
    %5793 = vmatprep.subr.mxu0 0.0
    %v5794 = vand.u32 %v5505, 4294901760
    %v5795 = vsub.f32 %v5505, %v5794
    %5796 = vmatpush1.xpose.msra.mxu0 %v5795
    %5797 = vmatprep.subr.mxu0 0.0
    %v5798 = vand.u32 %v5502, 4294901760
    %v5799 = vsub.f32 %v5502, %v5798
    %5800 = vmatpush1.xpose.msra.mxu0 %v5799
    %5801 = vmatprep.subr.mxu0 0.0
    %v5802 = vand.u32 %v5499, 4294901760
    %v5803 = vsub.f32 %v5499, %v5802
    %5804 = vmatpush1.xpose.msra.mxu0 %v5803
    %5805 = vmatprep.subr.mxu0 0.0
    %v5806 = vand.u32 %v5496, 4294901760
    %v5807 = vsub.f32 %v5496, %v5806
    %5808 = vmatpush1.xpose.msra.mxu0 %v5807
    %5809 = vmatprep.subr.mxu0 0.0
    %v5810 = vand.u32 %v5493, 4294901760
    %v5811 = vsub.f32 %v5493, %v5810
    %5812 = vmatpush1.xpose.msra.mxu0 %v5811
    %5813 = vmatprep.subr.mxu0 0.0
    %v5814 = vand.u32 %v5490, 4294901760
    %v5815 = vsub.f32 %v5490, %v5814
    %5816 = vmatpush1.xpose.msra.mxu0 %v5815
    %5817 = vmatprep.subr.mxu0 0.0
    %v5818 = vand.u32 %v5487, 4294901760
    %v5819 = vsub.f32 %v5487, %v5818
    %5820 = vmatpush1.xpose.msra.mxu0 %v5819
    %5821 = vmatprep.subr.mxu0 0.0
    %v5822 = vand.u32 %v5484, 4294901760
    %v5823 = vsub.f32 %v5484, %v5822
    %5824 = vmatpush1.xpose.msra.mxu0 %v5823
    %5825 = vmatprep.subr.mxu0 0.0
    %v5826 = vand.u32 %v5481, 4294901760
    %v5827 = vsub.f32 %v5481, %v5826
    %5828 = vmatpush1.xpose.msra.mxu0 %v5827
    %5829 = vmatprep.subr.mxu0 0.0
    %v5830 = vand.u32 %v5478, 4294901760
    %v5831 = vsub.f32 %v5478, %v5830
    %5832 = vmatpush1.xpose.msra.mxu0 %v5831
    %5833 = vmatprep.subr.mxu0 0.0
    %v5834 = vand.u32 %v5475, 4294901760
    %v5835 = vsub.f32 %v5475, %v5834
    %5836 = vmatpush1.xpose.msra.mxu0 %v5835
    %5837 = vmatprep.subr.mxu0 0.0
    %v5838 = vand.u32 %v5472, 4294901760
    %v5839 = vsub.f32 %v5472, %v5838
    %5840 = vmatpush1.xpose.msra.mxu0 %v5839
    %5841 = vmatprep.subr.mxu0 0.0
    %5842 = vmatpush2.xpose.msra.mxu0 0.0
    %5843 = vmatprep.subr.mxu0 0.0
    %5844 = vmatpush2.xpose.msra.mxu0 0.0
    %5845 = vmatprep.subr.mxu0 0.0
    %5846 = vmatpush2.xpose.msra.mxu0 0.0
    %5847 = vmatprep.subr.mxu0 0.0
    %5848 = vmatpush2.xpose.msra.mxu0 0.0
    %5849 = vmatprep.subr.mxu0 0.0
    %5850 = vmatpush2.xpose.msra.mxu0 0.0
    %5851 = vmatprep.subr.mxu0 0.0
    %5852 = vmatpush2.xpose.msra.mxu0 0.0
    %5853 = vmatprep.subr.mxu0 0.0
    %5854 = vmatpush2.xpose.msra.mxu0 0.0
    %5855 = vmatprep.subr.mxu0 0.0
    %5856 = vmatpush2.xpose.msra.mxu0 0.0
    %5857 = vmatprep.subr.mxu0 0.0
    %5858 = vmatpush2.xpose.msra.mxu0 0.0
    %5859 = vmatprep.subr.mxu0 0.0
    %5860 = vmatpush2.xpose.msra.mxu0 0.0
    %5861 = vmatprep.subr.mxu0 0.0
    %5862 = vmatpush2.xpose.msra.mxu0 0.0
    %5863 = vmatprep.subr.mxu0 0.0
    %5864 = vmatpush2.xpose.msra.mxu0 0.0
    %5865 = vmatprep.subr.mxu0 0.0
    %5866 = vmatpush2.xpose.msra.mxu0 0.0
    %5867 = vmatprep.subr.mxu0 0.0
    %5868 = vmatpush2.xpose.msra.mxu0 0.0
    %5869 = vmatprep.subr.mxu0 0.0
    %5870 = vmatpush2.xpose.msra.mxu0 0.0
    %5871 = vmatprep.subr.mxu0 0.0
    %5872 = vmatpush2.xpose.msra.mxu0 0.0
    %5873 = vmatprep.mubr.f32.mxu0 0.0
    %v5874 = vand.u32 %v5466, 4294901760
    %v5875 = vsub.f32 %v5466, %v5874
    %5876 = vmatmul.mubr.f32.gmra.mxu0 %v5875
    %v5877 = vpop.f32.mrf.mxu0
    %v5878 = vadd.f32 %v5768, %v5877
    %v5879 = vpop.f32.mrf.mxu0
    %5880 = vmatprep.mubr.f32.mxu0 0.0
    %v5881 = vand.u32 %v5469, 4294901760
    %v5882 = vsub.f32 %v5469, %v5881
    %5883 = vmatmul.mubr.f32.gmra.mxu0 %v5882
    %v5884 = vpop.f32.mrf.mxu0
    %v5885 = vadd.f32 %v5774, %v5884
    %v5886 = vpop.f32.mrf.mxu0
    %5887 = vdwg.mxu0
    %5888 = vmatprep.subr.mxu0 0.0
    %v5889 = vand.u32 %v5517, 4294901760
    %5890 = vmatpush1.xpose.msra.mxu0 %v5889
    %5891 = vmatprep.subr.mxu0 0.0
    %v5892 = vand.u32 %v5514, 4294901760
    %5893 = vmatpush1.xpose.msra.mxu0 %v5892
    %5894 = vmatprep.subr.mxu0 0.0
    %v5895 = vand.u32 %v5511, 4294901760
    %5896 = vmatpush1.xpose.msra.mxu0 %v5895
    %5897 = vmatprep.subr.mxu0 0.0
    %v5898 = vand.u32 %v5508, 4294901760
    %5899 = vmatpush1.xpose.msra.mxu0 %v5898
    %5900 = vmatprep.subr.mxu0 0.0
    %v5901 = vand.u32 %v5505, 4294901760
    %5902 = vmatpush1.xpose.msra.mxu0 %v5901
    %5903 = vmatprep.subr.mxu0 0.0
    %v5904 = vand.u32 %v5502, 4294901760
    %5905 = vmatpush1.xpose.msra.mxu0 %v5904
    %5906 = vmatprep.subr.mxu0 0.0
    %v5907 = vand.u32 %v5499, 4294901760
    %5908 = vmatpush1.xpose.msra.mxu0 %v5907
    %5909 = vmatprep.subr.mxu0 0.0
    %v5910 = vand.u32 %v5496, 4294901760
    %5911 = vmatpush1.xpose.msra.mxu0 %v5910
    %5912 = vmatprep.subr.mxu0 0.0
    %v5913 = vand.u32 %v5493, 4294901760
    %5914 = vmatpush1.xpose.msra.mxu0 %v5913
    %5915 = vmatprep.subr.mxu0 0.0
    %v5916 = vand.u32 %v5490, 4294901760
    %5917 = vmatpush1.xpose.msra.mxu0 %v5916
    %5918 = vmatprep.subr.mxu0 0.0
    %v5919 = vand.u32 %v5487, 4294901760
    %5920 = vmatpush1.xpose.msra.mxu0 %v5919
    %5921 = vmatprep.subr.mxu0 0.0
    %v5922 = vand.u32 %v5484, 4294901760
    %5923 = vmatpush1.xpose.msra.mxu0 %v5922
    %5924 = vmatprep.subr.mxu0 0.0
    %v5925 = vand.u32 %v5481, 4294901760
    %5926 = vmatpush1.xpose.msra.mxu0 %v5925
    %5927 = vmatprep.subr.mxu0 0.0
    %v5928 = vand.u32 %v5478, 4294901760
    %5929 = vmatpush1.xpose.msra.mxu0 %v5928
    %5930 = vmatprep.subr.mxu0 0.0
    %v5931 = vand.u32 %v5475, 4294901760
    %5932 = vmatpush1.xpose.msra.mxu0 %v5931
    %5933 = vmatprep.subr.mxu0 0.0
    %v5934 = vand.u32 %v5472, 4294901760
    %5935 = vmatpush1.xpose.msra.mxu0 %v5934
    %5936 = vmatprep.subr.mxu0 0.0
    %5937 = vmatpush2.xpose.msra.mxu0 0.0
    %5938 = vmatprep.subr.mxu0 0.0
    %5939 = vmatpush2.xpose.msra.mxu0 0.0
    %5940 = vmatprep.subr.mxu0 0.0
    %5941 = vmatpush2.xpose.msra.mxu0 0.0
    %5942 = vmatprep.subr.mxu0 0.0
    %5943 = vmatpush2.xpose.msra.mxu0 0.0
    %5944 = vmatprep.subr.mxu0 0.0
    %5945 = vmatpush2.xpose.msra.mxu0 0.0
    %5946 = vmatprep.subr.mxu0 0.0
    %5947 = vmatpush2.xpose.msra.mxu0 0.0
    %5948 = vmatprep.subr.mxu0 0.0
    %5949 = vmatpush2.xpose.msra.mxu0 0.0
    %5950 = vmatprep.subr.mxu0 0.0
    %5951 = vmatpush2.xpose.msra.mxu0 0.0
    %5952 = vmatprep.subr.mxu0 0.0
    %5953 = vmatpush2.xpose.msra.mxu0 0.0
    %5954 = vmatprep.subr.mxu0 0.0
    %5955 = vmatpush2.xpose.msra.mxu0 0.0
    %5956 = vmatprep.subr.mxu0 0.0
    %5957 = vmatpush2.xpose.msra.mxu0 0.0
    %5958 = vmatprep.subr.mxu0 0.0
    %5959 = vmatpush2.xpose.msra.mxu0 0.0
    %5960 = vmatprep.subr.mxu0 0.0
    %5961 = vmatpush2.xpose.msra.mxu0 0.0
    %5962 = vmatprep.subr.mxu0 0.0
    %5963 = vmatpush2.xpose.msra.mxu0 0.0
    %5964 = vmatprep.subr.mxu0 0.0
    %5965 = vmatpush2.xpose.msra.mxu0 0.0
    %5966 = vmatprep.subr.mxu0 0.0
    %5967 = vmatpush2.xpose.msra.mxu0 0.0
    %5968 = vmatprep.mubr.f32.mxu0 0.0
    %v5969 = vand.u32 %v5466, 4294901760
    %v5970 = vsub.f32 %v5466, %v5969
    %v5971 = vand.u32 %v5970, 4294901760
    %5972 = vmatmul.mubr.f32.gmra.mxu0 %v5971
    %v5973 = vpop.f32.mrf.mxu0
    %v5974 = vadd.f32 %v5878, %v5973
    %v5975 = vpop.f32.mrf.mxu0
    %5976 = vmatprep.mubr.f32.mxu0 0.0
    %v5977 = vand.u32 %v5469, 4294901760
    %v5978 = vsub.f32 %v5469, %v5977
    %v5979 = vand.u32 %v5978, 4294901760
    %5980 = vmatmul.mubr.f32.gmra.mxu0 %v5979
    %v5981 = vpop.f32.mrf.mxu0
    %v5982 = vadd.f32 %v5885, %v5981
    %v5983 = vpop.f32.mrf.mxu0
    %5984 = vdwg.mxu0
    %5985 = vmatprep.subr.mxu0 0.0
    %v5986 = vand.u32 %v5517, 4294901760
    %v5987 = vsub.f32 %v5517, %v5986
    %v5988 = vand.u32 %v5987, 4294901760
    %5989 = vmatpush1.xpose.msra.mxu0 %v5988
    %5990 = vmatprep.subr.mxu0 0.0
    %v5991 = vand.u32 %v5514, 4294901760
    %v5992 = vsub.f32 %v5514, %v5991
    %v5993 = vand.u32 %v5992, 4294901760
    %5994 = vmatpush1.xpose.msra.mxu0 %v5993
    %5995 = vmatprep.subr.mxu0 0.0
    %v5996 = vand.u32 %v5511, 4294901760
    %v5997 = vsub.f32 %v5511, %v5996
    %v5998 = vand.u32 %v5997, 4294901760
    %5999 = vmatpush1.xpose.msra.mxu0 %v5998
    %6000 = vmatprep.subr.mxu0 0.0
    %v6001 = vand.u32 %v5508, 4294901760
    %v6002 = vsub.f32 %v5508, %v6001
    %v6003 = vand.u32 %v6002, 4294901760
    %6004 = vmatpush1.xpose.msra.mxu0 %v6003
    %6005 = vmatprep.subr.mxu0 0.0
    %v6006 = vand.u32 %v5505, 4294901760
    %v6007 = vsub.f32 %v5505, %v6006
    %v6008 = vand.u32 %v6007, 4294901760
    %6009 = vmatpush1.xpose.msra.mxu0 %v6008
    %6010 = vmatprep.subr.mxu0 0.0
    %v6011 = vand.u32 %v5502, 4294901760
    %v6012 = vsub.f32 %v5502, %v6011
    %v6013 = vand.u32 %v6012, 4294901760
    %6014 = vmatpush1.xpose.msra.mxu0 %v6013
    %6015 = vmatprep.subr.mxu0 0.0
    %v6016 = vand.u32 %v5499, 4294901760
    %v6017 = vsub.f32 %v5499, %v6016
    %v6018 = vand.u32 %v6017, 4294901760
    %6019 = vmatpush1.xpose.msra.mxu0 %v6018
    %6020 = vmatprep.subr.mxu0 0.0
    %v6021 = vand.u32 %v5496, 4294901760
    %v6022 = vsub.f32 %v5496, %v6021
    %v6023 = vand.u32 %v6022, 4294901760
    %6024 = vmatpush1.xpose.msra.mxu0 %v6023
    %6025 = vmatprep.subr.mxu0 0.0
    %v6026 = vand.u32 %v5493, 4294901760
    %v6027 = vsub.f32 %v5493, %v6026
    %v6028 = vand.u32 %v6027, 4294901760
    %6029 = vmatpush1.xpose.msra.mxu0 %v6028
    %6030 = vmatprep.subr.mxu0 0.0
    %v6031 = vand.u32 %v5490, 4294901760
    %v6032 = vsub.f32 %v5490, %v6031
    %v6033 = vand.u32 %v6032, 4294901760
    %6034 = vmatpush1.xpose.msra.mxu0 %v6033
    %6035 = vmatprep.subr.mxu0 0.0
    %v6036 = vand.u32 %v5487, 4294901760
    %v6037 = vsub.f32 %v5487, %v6036
    %v6038 = vand.u32 %v6037, 4294901760
    %6039 = vmatpush1.xpose.msra.mxu0 %v6038
    %6040 = vmatprep.subr.mxu0 0.0
    %v6041 = vand.u32 %v5484, 4294901760
    %v6042 = vsub.f32 %v5484, %v6041
    %v6043 = vand.u32 %v6042, 4294901760
    %6044 = vmatpush1.xpose.msra.mxu0 %v6043
    %6045 = vmatprep.subr.mxu0 0.0
    %v6046 = vand.u32 %v5481, 4294901760
    %v6047 = vsub.f32 %v5481, %v6046
    %v6048 = vand.u32 %v6047, 4294901760
    %6049 = vmatpush1.xpose.msra.mxu0 %v6048
    %6050 = vmatprep.subr.mxu0 0.0
    %v6051 = vand.u32 %v5478, 4294901760
    %v6052 = vsub.f32 %v5478, %v6051
    %v6053 = vand.u32 %v6052, 4294901760
    %6054 = vmatpush1.xpose.msra.mxu0 %v6053
    %6055 = vmatprep.subr.mxu0 0.0
    %v6056 = vand.u32 %v5475, 4294901760
    %v6057 = vsub.f32 %v5475, %v6056
    %v6058 = vand.u32 %v6057, 4294901760
    %6059 = vmatpush1.xpose.msra.mxu0 %v6058
    %6060 = vmatprep.subr.mxu0 0.0
    %v6061 = vand.u32 %v5472, 4294901760
    %v6062 = vsub.f32 %v5472, %v6061
    %v6063 = vand.u32 %v6062, 4294901760
    %6064 = vmatpush1.xpose.msra.mxu0 %v6063
    %6065 = vmatprep.subr.mxu0 0.0
    %6066 = vmatpush2.xpose.msra.mxu0 0.0
    %6067 = vmatprep.subr.mxu0 0.0
    %6068 = vmatpush2.xpose.msra.mxu0 0.0
    %6069 = vmatprep.subr.mxu0 0.0
    %6070 = vmatpush2.xpose.msra.mxu0 0.0
    %6071 = vmatprep.subr.mxu0 0.0
    %6072 = vmatpush2.xpose.msra.mxu0 0.0
    %6073 = vmatprep.subr.mxu0 0.0
    %6074 = vmatpush2.xpose.msra.mxu0 0.0
    %6075 = vmatprep.subr.mxu0 0.0
    %6076 = vmatpush2.xpose.msra.mxu0 0.0
    %6077 = vmatprep.subr.mxu0 0.0
    %6078 = vmatpush2.xpose.msra.mxu0 0.0
    %6079 = vmatprep.subr.mxu0 0.0
    %6080 = vmatpush2.xpose.msra.mxu0 0.0
    %6081 = vmatprep.subr.mxu0 0.0
    %6082 = vmatpush2.xpose.msra.mxu0 0.0
    %6083 = vmatprep.subr.mxu0 0.0
    %6084 = vmatpush2.xpose.msra.mxu0 0.0
    %6085 = vmatprep.subr.mxu0 0.0
    %6086 = vmatpush2.xpose.msra.mxu0 0.0
    %6087 = vmatprep.subr.mxu0 0.0
    %6088 = vmatpush2.xpose.msra.mxu0 0.0
    %6089 = vmatprep.subr.mxu0 0.0
    %6090 = vmatpush2.xpose.msra.mxu0 0.0
    %6091 = vmatprep.subr.mxu0 0.0
    %6092 = vmatpush2.xpose.msra.mxu0 0.0
    %6093 = vmatprep.subr.mxu0 0.0
    %6094 = vmatpush2.xpose.msra.mxu0 0.0
    %6095 = vmatprep.subr.mxu0 0.0
    %6096 = vmatpush2.xpose.msra.mxu0 0.0
    %6097 = vmatprep.mubr.f32.mxu0 0.0
    %v6098 = vand.u32 %v5466, 4294901760
    %6099 = vmatmul.mubr.f32.gmra.mxu0 %v6098
    %v6100 = vpop.f32.mrf.mxu0
    %v6101 = vadd.f32 %v5974, %v6100
    %v6102 = vpop.f32.mrf.mxu0
    %6103 = vmatprep.mubr.f32.mxu0 0.0
    %v6104 = vand.u32 %v5469, 4294901760
    %6105 = vmatmul.mubr.f32.gmra.mxu0 %v6104
    %v6106 = vpop.f32.mrf.mxu0
    %v6107 = vadd.f32 %v5982, %v6106
    %v6108 = vpop.f32.mrf.mxu0
    %6109 = vdwg.mxu0
    %6110 = vmatprep.subr.mxu0 0.0
    %v6111 = vand.u32 %v5517, 4294901760
    %6112 = vmatpush1.xpose.msra.mxu0 %v6111
    %6113 = vmatprep.subr.mxu0 0.0
    %v6114 = vand.u32 %v5514, 4294901760
    %6115 = vmatpush1.xpose.msra.mxu0 %v6114
    %6116 = vmatprep.subr.mxu0 0.0
    %v6117 = vand.u32 %v5511, 4294901760
    %6118 = vmatpush1.xpose.msra.mxu0 %v6117
    %6119 = vmatprep.subr.mxu0 0.0
    %v6120 = vand.u32 %v5508, 4294901760
    %6121 = vmatpush1.xpose.msra.mxu0 %v6120
    %6122 = vmatprep.subr.mxu0 0.0
    %v6123 = vand.u32 %v5505, 4294901760
    %6124 = vmatpush1.xpose.msra.mxu0 %v6123
    %6125 = vmatprep.subr.mxu0 0.0
    %v6126 = vand.u32 %v5502, 4294901760
    %6127 = vmatpush1.xpose.msra.mxu0 %v6126
    %6128 = vmatprep.subr.mxu0 0.0
    %v6129 = vand.u32 %v5499, 4294901760
    %6130 = vmatpush1.xpose.msra.mxu0 %v6129
    %6131 = vmatprep.subr.mxu0 0.0
    %v6132 = vand.u32 %v5496, 4294901760
    %6133 = vmatpush1.xpose.msra.mxu0 %v6132
    %6134 = vmatprep.subr.mxu0 0.0
    %v6135 = vand.u32 %v5493, 4294901760
    %6136 = vmatpush1.xpose.msra.mxu0 %v6135
    %6137 = vmatprep.subr.mxu0 0.0
    %v6138 = vand.u32 %v5490, 4294901760
    %6139 = vmatpush1.xpose.msra.mxu0 %v6138
    %6140 = vmatprep.subr.mxu0 0.0
    %v6141 = vand.u32 %v5487, 4294901760
    %6142 = vmatpush1.xpose.msra.mxu0 %v6141
    %6143 = vmatprep.subr.mxu0 0.0
    %v6144 = vand.u32 %v5484, 4294901760
    %6145 = vmatpush1.xpose.msra.mxu0 %v6144
    %6146 = vmatprep.subr.mxu0 0.0
    %v6147 = vand.u32 %v5481, 4294901760
    %6148 = vmatpush1.xpose.msra.mxu0 %v6147
    %6149 = vmatprep.subr.mxu0 0.0
    %v6150 = vand.u32 %v5478, 4294901760
    %6151 = vmatpush1.xpose.msra.mxu0 %v6150
    %6152 = vmatprep.subr.mxu0 0.0
    %v6153 = vand.u32 %v5475, 4294901760
    %6154 = vmatpush1.xpose.msra.mxu0 %v6153
    %6155 = vmatprep.subr.mxu0 0.0
    %v6156 = vand.u32 %v5472, 4294901760
    %6157 = vmatpush1.xpose.msra.mxu0 %v6156
    %6158 = vmatprep.subr.mxu0 0.0
    %6159 = vmatpush2.xpose.msra.mxu0 0.0
    %6160 = vmatprep.subr.mxu0 0.0
    %6161 = vmatpush2.xpose.msra.mxu0 0.0
    %6162 = vmatprep.subr.mxu0 0.0
    %6163 = vmatpush2.xpose.msra.mxu0 0.0
    %6164 = vmatprep.subr.mxu0 0.0
    %6165 = vmatpush2.xpose.msra.mxu0 0.0
    %6166 = vmatprep.subr.mxu0 0.0
    %6167 = vmatpush2.xpose.msra.mxu0 0.0
    %6168 = vmatprep.subr.mxu0 0.0
    %6169 = vmatpush2.xpose.msra.mxu0 0.0
    %6170 = vmatprep.subr.mxu0 0.0
    %6171 = vmatpush2.xpose.msra.mxu0 0.0
    %6172 = vmatprep.subr.mxu0 0.0
    %6173 = vmatpush2.xpose.msra.mxu0 0.0
    %6174 = vmatprep.subr.mxu0 0.0
    %6175 = vmatpush2.xpose.msra.mxu0 0.0
    %6176 = vmatprep.subr.mxu0 0.0
    %6177 = vmatpush2.xpose.msra.mxu0 0.0
    %6178 = vmatprep.subr.mxu0 0.0
    %6179 = vmatpush2.xpose.msra.mxu0 0.0
    %6180 = vmatprep.subr.mxu0 0.0
    %6181 = vmatpush2.xpose.msra.mxu0 0.0
    %6182 = vmatprep.subr.mxu0 0.0
    %6183 = vmatpush2.xpose.msra.mxu0 0.0
    %6184 = vmatprep.subr.mxu0 0.0
    %6185 = vmatpush2.xpose.msra.mxu0 0.0
    %6186 = vmatprep.subr.mxu0 0.0
    %6187 = vmatpush2.xpose.msra.mxu0 0.0
    %6188 = vmatprep.subr.mxu0 0.0
    %6189 = vmatpush2.xpose.msra.mxu0 0.0
    %6190 = vmatprep.mubr.f32.mxu0 0.0
    %v6191 = vand.u32 %v5466, 4294901760
    %6192 = vmatmul.mubr.f32.gmra.mxu0 %v6191
    %v6193 = vpop.f32.mrf.mxu0
    %v6194 = vadd.f32 %v6101, %v6193
    %v6195 = vpop.f32.mrf.mxu0
    %6196 = vmatprep.mubr.f32.mxu0 0.0
    %v6197 = vand.u32 %v5469, 4294901760
    %6198 = vmatmul.mubr.f32.gmra.mxu0 %v6197
    %v6199 = vpop.f32.mrf.mxu0
    %v6200 = vadd.f32 %v6107, %v6199
    %v6201 = vpop.f32.mrf.mxu0
    %6202 = vdwg.mxu0
    %v6203 = vmul.f32 %v1028, 0.17677669
    %v6204 = vmul.f32 %v1034, 0.17677669
    %v6205 = vmul.f32 %v1766, 0.17677669
    %v6206 = vmul.f32 %v1772, 0.17677669
    %v6207 = vmul.f32 %v2504, 0.17677669
    %v6208 = vmul.f32 %v2510, 0.17677669
    %v6209 = vmul.f32 %v3242, 0.17677669
    %v6210 = vmul.f32 %v3248, 0.17677669
    %v6211 = vmul.f32 %v3980, 0.17677669
    %v6212 = vmul.f32 %v3986, 0.17677669
    %v6213 = vmul.f32 %v4718, 0.17677669
    %v6214 = vmul.f32 %v4724, 0.17677669
    %v6215 = vmul.f32 %v5456, 0.17677669
    %v6216 = vmul.f32 %v5462, 0.17677669
    %v6217 = vmul.f32 %v6194, 0.17677669
    %v6218 = vmul.f32 %v6200, 0.17677669
    %v6219 = vld [vmem:[%s4] sm:$0xff]
    %v6220 = vld [vmem:[%s4 + $0x8] sm:$0xff]
    %v6221 = vld [vmem:[%s4 + $0x10] sm:$0xff]
    %v6222 = vld [vmem:[%s4 + $0x18] sm:$0xff]
    %v6223 = vld [vmem:[%s4 + $0x20] sm:$0xff]
    %v6224 = vld [vmem:[%s4 + $0x28] sm:$0xff]
    %v6225 = vld [vmem:[%s4 + $0x30] sm:$0xff]
    %v6226 = vld [vmem:[%s4 + $0x38] sm:$0xff]
    %v6227 = vld [vmem:[%s4 + $0x40] sm:$0xff]
    %v6228 = vld [vmem:[%s4 + $0x48] sm:$0xff]
    %v6229 = vld [vmem:[%s4 + $0x50] sm:$0xff]
    %v6230 = vld [vmem:[%s4 + $0x58] sm:$0xff]
    %v6231 = vld [vmem:[%s4 + $0x60] sm:$0xff]
    %v6232 = vld [vmem:[%s4 + $0x68] sm:$0xff]
    %v6233 = vld [vmem:[%s4 + $0x70] sm:$0xff]
    %v6234 = vld [vmem:[%s4 + $0x78] sm:$0xff]
    %v6235 = vadd.f32 %v6203, %v6219
    %v6236 = vadd.f32 %v6204, %v6220
    %v6237 = vadd.f32 %v6205, %v6221
    %v6238 = vadd.f32 %v6206, %v6222
    %v6239 = vadd.f32 %v6207, %v6223
    %v6240 = vadd.f32 %v6208, %v6224
    %v6241 = vadd.f32 %v6209, %v6225
    %v6242 = vadd.f32 %v6210, %v6226
    %v6243 = vadd.f32 %v6211, %v6227
    %v6244 = vadd.f32 %v6212, %v6228
    %v6245 = vadd.f32 %v6213, %v6229
    %v6246 = vadd.f32 %v6214, %v6230
    %v6247 = vadd.f32 %v6215, %v6231
    %v6248 = vadd.f32 %v6216, %v6232
    %v6249 = vadd.f32 %v6217, %v6233
    %v6250 = vadd.f32 %v6218, %v6234
    %v6251 = vld [vmem:[%s3] sm:$0x3]
    %v6252 = vld [vmem:[%s3 + $0x2] sm:$0x3]
    %v6253 = vld [vmem:[%s3 + $0x4] sm:$0x3]
    %v6254 = vld [vmem:[%s3 + $0x6] sm:$0x3]
    %v6255 = vld [vmem:[%s3 + $0x8] sm:$0x3]
    %v6256 = vld [vmem:[%s3 + $0xa] sm:$0x3]
    %v6257 = vld [vmem:[%s3 + $0xc] sm:$0x3]
    %v6258 = vld [vmem:[%s3 + $0xe] sm:$0x3]
    %v6259 = vld [vmem:[%s3 + $0x10] sm:$0x3]
    %v6260 = vld [vmem:[%s3 + $0x12] sm:$0x3]
    %v6261 = vld [vmem:[%s3 + $0x14] sm:$0x3]
    %v6262 = vld [vmem:[%s3 + $0x16] sm:$0x3]
    %v6263 = vld [vmem:[%s3 + $0x18] sm:$0x3]
    %v6264 = vld [vmem:[%s3 + $0x1a] sm:$0x3]
    %v6265 = vld [vmem:[%s3 + $0x1c] sm:$0x3]
    %v6266 = vld [vmem:[%s3 + $0x1e] sm:$0x3]
    %vm6267 = vnez %v6251
    %vm6268 = vnez %v6252
    %vm6269 = vnez %v6253
    %vm6270 = vnez %v6254
    %vm6271 = vnez %v6255
    %vm6272 = vnez %v6256
    %vm6273 = vnez %v6257
    %vm6274 = vnez %v6258
    %vm6275 = vnez %v6259
    %vm6276 = vnez %v6260
    %vm6277 = vnez %v6261
    %vm6278 = vnez %v6262
    %vm6279 = vnez %v6263
    %vm6280 = vnez %v6264
    %vm6281 = vnez %v6265
    %vm6282 = vnez %v6266
    %v6283 = vsel %vm6267, 16843009, 0
    %v6284 = vsel %vm6268, 16843009, 0
    %v6285 = vsel %vm6269, 16843009, 0
    %v6286 = vsel %vm6270, 16843009, 0
    %v6287 = vsel %vm6271, 16843009, 0
    %v6288 = vsel %vm6272, 16843009, 0
    %v6289 = vsel %vm6273, 16843009, 0
    %v6290 = vsel %vm6274, 16843009, 0
    %v6291 = vsel %vm6275, 16843009, 0
    %v6292 = vsel %vm6276, 16843009, 0
    %v6293 = vsel %vm6277, 16843009, 0
    %v6294 = vsel %vm6278, 16843009, 0
    %v6295 = vsel %vm6279, 16843009, 0
    %v6296 = vsel %vm6280, 16843009, 0
    %v6297 = vsel %vm6281, 16843009, 0
    %v6298 = vsel %vm6282, 16843009, 0
    %v6299 = vunpack.c.0.s8 %v6283
    %v6300 = vunpack.c.0.s8 %v6284
    %v6301 = vunpack.c.0.s8 %v6285
    %v6302 = vunpack.c.0.s8 %v6286
    %v6303 = vunpack.c.0.s8 %v6287
    %v6304 = vunpack.c.0.s8 %v6288
    %v6305 = vunpack.c.0.s8 %v6289
    %v6306 = vunpack.c.0.s8 %v6290
    %v6307 = vunpack.c.0.s8 %v6291
    %v6308 = vunpack.c.0.s8 %v6292
    %v6309 = vunpack.c.0.s8 %v6293
    %v6310 = vunpack.c.0.s8 %v6294
    %v6311 = vunpack.c.0.s8 %v6295
    %v6312 = vunpack.c.0.s8 %v6296
    %v6313 = vunpack.c.0.s8 %v6297
    %v6314 = vunpack.c.0.s8 %v6298
    %vm6315 = vcmp.ne.s32.totalorder %v6299, 0
    %vm6316 = vcmp.ne.s32.totalorder %v6300, 0
    %vm6317 = vcmp.ne.s32.totalorder %v6301, 0
    %vm6318 = vcmp.ne.s32.totalorder %v6302, 0
    %vm6319 = vcmp.ne.s32.totalorder %v6303, 0
    %vm6320 = vcmp.ne.s32.totalorder %v6304, 0
    %vm6321 = vcmp.ne.s32.totalorder %v6305, 0
    %vm6322 = vcmp.ne.s32.totalorder %v6306, 0
    %vm6323 = vcmp.ne.s32.totalorder %v6307, 0
    %vm6324 = vcmp.ne.s32.totalorder %v6308, 0
    %vm6325 = vcmp.ne.s32.totalorder %v6309, 0
    %vm6326 = vcmp.ne.s32.totalorder %v6310, 0
    %vm6327 = vcmp.ne.s32.totalorder %v6311, 0
    %vm6328 = vcmp.ne.s32.totalorder %v6312, 0
    %vm6329 = vcmp.ne.s32.totalorder %v6313, 0
    %vm6330 = vcmp.ne.s32.totalorder %v6314, 0
    %v6331 = vsel %vm6315, -1e+09, %v6235
    %v6332 = vsel %vm6316, -1e+09, %v6236
    %v6333 = vsel %vm6317, -1e+09, %v6237
    %v6334 = vsel %vm6318, -1e+09, %v6238
    %v6335 = vsel %vm6319, -1e+09, %v6239
    %v6336 = vsel %vm6320, -1e+09, %v6240
    %v6337 = vsel %vm6321, -1e+09, %v6241
    %v6338 = vsel %vm6322, -1e+09, %v6242
    %v6339 = vsel %vm6323, -1e+09, %v6243
    %v6340 = vsel %vm6324, -1e+09, %v6244
    %v6341 = vsel %vm6325, -1e+09, %v6245
    %v6342 = vsel %vm6326, -1e+09, %v6246
    %v6343 = vsel %vm6327, -1e+09, %v6247
    %v6344 = vsel %vm6328, -1e+09, %v6248
    %v6345 = vsel %vm6329, -1e+09, %v6249
    %v6346 = vsel %vm6330, -1e+09, %v6250
    %6347 = vst [vmem:[#allocation4] sm:$0xff] %v6331
    %6348 = vst [vmem:[#allocation4 + $0x8] sm:$0xff] %v6332
    %6349 = vst [vmem:[#allocation4 + $0x10] sm:$0xff] %v6333
    %6350 = vst [vmem:[#allocation4 + $0x18] sm:$0xff] %v6334
    %6351 = vst [vmem:[#allocation4 + $0x20] sm:$0xff] %v6335
    %6352 = vst [vmem:[#allocation4 + $0x28] sm:$0xff] %v6336
    %6353 = vst [vmem:[#allocation4 + $0x30] sm:$0xff] %v6337
    %6354 = vst [vmem:[#allocation4 + $0x38] sm:$0xff] %v6338
    %6355 = vst [vmem:[#allocation4 + $0x40] sm:$0xff] %v6339
    %6356 = vst [vmem:[#allocation4 + $0x48] sm:$0xff] %v6340
    %6357 = vst [vmem:[#allocation4 + $0x50] sm:$0xff] %v6341
    %6358 = vst [vmem:[#allocation4 + $0x58] sm:$0xff] %v6342
    %6359 = vst [vmem:[#allocation4 + $0x60] sm:$0xff] %v6343
    %6360 = vst [vmem:[#allocation4 + $0x68] sm:$0xff] %v6344
    %6361 = vst [vmem:[#allocation4 + $0x70] sm:$0xff] %v6345
    %6362 = vst [vmem:[#allocation4 + $0x78] sm:$0xff] %v6346
    %6363 = vmax.xlane.f32.xlu0 %v6331
    %v6364 = vpop.xlane.xlu0 %6363
    %6365 = vmax.xlane.f32.xlu0 %v6332
    %v6366 = vpop.xlane.xlu0 %6365
    %6367 = vmax.xlane.f32.xlu0 %v6333
    %v6368 = vpop.xlane.xlu0 %6367
    %6369 = vmax.xlane.f32.xlu0 %v6334
    %v6370 = vpop.xlane.xlu0 %6369
    %6371 = vmax.xlane.f32.xlu0 %v6335
    %v6372 = vpop.xlane.xlu0 %6371
    %6373 = vmax.xlane.f32.xlu0 %v6336
    %v6374 = vpop.xlane.xlu0 %6373
    %6375 = vmax.xlane.f32.xlu0 %v6337
    %v6376 = vpop.xlane.xlu0 %6375
    %6377 = vmax.xlane.f32.xlu0 %v6338
    %v6378 = vpop.xlane.xlu0 %6377
    %6379 = vmax.xlane.f32.xlu0 %v6339
    %v6380 = vpop.xlane.xlu0 %6379
    %6381 = vmax.xlane.f32.xlu0 %v6340
    %v6382 = vpop.xlane.xlu0 %6381
    %6383 = vmax.xlane.f32.xlu0 %v6341
    %v6384 = vpop.xlane.xlu0 %6383
    %6385 = vmax.xlane.f32.xlu0 %v6342
    %v6386 = vpop.xlane.xlu0 %6385
    %6387 = vmax.xlane.f32.xlu0 %v6343
    %v6388 = vpop.xlane.xlu0 %6387
    %6389 = vmax.xlane.f32.xlu0 %v6344
    %v6390 = vpop.xlane.xlu0 %6389
    %6391 = vmax.xlane.f32.xlu0 %v6345
    %v6392 = vpop.xlane.xlu0 %6391
    %6393 = vmax.xlane.f32.xlu0 %v6346
    %v6394 = vpop.xlane.xlu0 %6393
    %v6395 = vsub.f32 %v6331, %v6364
    %v6396 = vsub.f32 %v6332, %v6366
    %v6397 = vsub.f32 %v6333, %v6368
    %v6398 = vsub.f32 %v6334, %v6370
    %v6399 = vsub.f32 %v6335, %v6372
    %v6400 = vsub.f32 %v6336, %v6374
    %v6401 = vsub.f32 %v6337, %v6376
    %v6402 = vsub.f32 %v6338, %v6378
    %v6403 = vsub.f32 %v6339, %v6380
    %v6404 = vsub.f32 %v6340, %v6382
    %v6405 = vsub.f32 %v6341, %v6384
    %v6406 = vsub.f32 %v6342, %v6386
    %v6407 = vsub.f32 %v6343, %v6388
    %v6408 = vsub.f32 %v6344, %v6390
    %v6409 = vsub.f32 %v6345, %v6392
    %v6410 = vsub.f32 %v6346, %v6394
    %v6411 = vmul.f32 %v6395, 1.442695
    %v6412 = vpow.pop %v6411
    %v6413 = vmul.f32 %v6396, 1.442695
    %v6414 = vpow.pop %v6413
    %v6415 = vmul.f32 %v6397, 1.442695
    %v6416 = vpow.pop %v6415
    %v6417 = vmul.f32 %v6398, 1.442695
    %v6418 = vpow.pop %v6417
    %v6419 = vmul.f32 %v6399, 1.442695
    %v6420 = vpow.pop %v6419
    %v6421 = vmul.f32 %v6400, 1.442695
    %v6422 = vpow.pop %v6421
    %v6423 = vmul.f32 %v6401, 1.442695
    %v6424 = vpow.pop %v6423
    %v6425 = vmul.f32 %v6402, 1.442695
    %v6426 = vpow.pop %v6425
    %v6427 = vmul.f32 %v6403, 1.442695
    %v6428 = vpow.pop %v6427
    %v6429 = vmul.f32 %v6404, 1.442695
    %v6430 = vpow.pop %v6429
    %v6431 = vmul.f32 %v6405, 1.442695
    %v6432 = vpow.pop %v6431
    %v6433 = vmul.f32 %v6406, 1.442695
    %v6434 = vpow.pop %v6433
    %v6435 = vmul.f32 %v6407, 1.442695
    %v6436 = vpow.pop %v6435
    %v6437 = vmul.f32 %v6408, 1.442695
    %v6438 = vpow.pop %v6437
    %v6439 = vmul.f32 %v6409, 1.442695
    %v6440 = vpow.pop %v6439
    %v6441 = vmul.f32 %v6410, 1.442695
    %v6442 = vpow.pop %v6441
    %6443 = vadd.xlane.f32.xlu0 %v6412
    %v6444 = vpop.xlane.xlu0 %6443
    %6445 = vadd.xlane.f32.xlu0 %v6414
    %v6446 = vpop.xlane.xlu0 %6445
    %6447 = vadd.xlane.f32.xlu0 %v6416
    %v6448 = vpop.xlane.xlu0 %6447
    %6449 = vadd.xlane.f32.xlu0 %v6418
    %v6450 = vpop.xlane.xlu0 %6449
    %6451 = vadd.xlane.f32.xlu0 %v6420
    %v6452 = vpop.xlane.xlu0 %6451
    %6453 = vadd.xlane.f32.xlu0 %v6422
    %v6454 = vpop.xlane.xlu0 %6453
    %6455 = vadd.xlane.f32.xlu0 %v6424
    %v6456 = vpop.xlane.xlu0 %6455
    %6457 = vadd.xlane.f32.xlu0 %v6426
    %v6458 = vpop.xlane.xlu0 %6457
    %6459 = vadd.xlane.f32.xlu0 %v6428
    %v6460 = vpop.xlane.xlu0 %6459
    %6461 = vadd.xlane.f32.xlu0 %v6430
    %v6462 = vpop.xlane.xlu0 %6461
    %6463 = vadd.xlane.f32.xlu0 %v6432
    %v6464 = vpop.xlane.xlu0 %6463
    %6465 = vadd.xlane.f32.xlu0 %v6434
    %v6466 = vpop.xlane.xlu0 %6465
    %6467 = vadd.xlane.f32.xlu0 %v6436
    %v6468 = vpop.xlane.xlu0 %6467
    %6469 = vadd.xlane.f32.xlu0 %v6438
    %v6470 = vpop.xlane.xlu0 %6469
    %6471 = vadd.xlane.f32.xlu0 %v6440
    %v6472 = vpop.xlane.xlu0 %6471
    %6473 = vadd.xlane.f32.xlu0 %v6442
    %v6474 = vpop.xlane.xlu0 %6473
    %6475 = vmatprep.subr.mxu0 0.0
    %v6476 = vand.u32 %v185, 4294901760
    %6477 = vmatpush1.msra.mxu0 %v6476
    %6478 = vmatprep.subr.mxu0 0.0
    %v6479 = vand.u32 %v184, 4294901760
    %6480 = vmatpush1.msra.mxu0 %v6479
    %6481 = vmatprep.subr.mxu0 0.0
    %v6482 = vand.u32 %v183, 4294901760
    %6483 = vmatpush1.msra.mxu0 %v6482
    %6484 = vmatprep.subr.mxu0 0.0
    %v6485 = vand.u32 %v182, 4294901760
    %6486 = vmatpush1.msra.mxu0 %v6485
    %6487 = vmatprep.subr.mxu0 0.0
    %v6488 = vand.u32 %v181, 4294901760
    %6489 = vmatpush1.msra.mxu0 %v6488
    %6490 = vmatprep.subr.mxu0 0.0
    %v6491 = vand.u32 %v180, 4294901760
    %6492 = vmatpush1.msra.mxu0 %v6491
    %6493 = vmatprep.subr.mxu0 0.0
    %v6494 = vand.u32 %v179, 4294901760
    %6495 = vmatpush1.msra.mxu0 %v6494
    %6496 = vmatprep.subr.mxu0 0.0
    %v6497 = vand.u32 %v178, 4294901760
    %6498 = vmatpush1.msra.mxu0 %v6497
    %6499 = vmatprep.subr.mxu0 0.0
    %v6500 = vand.u32 %v177, 4294901760
    %6501 = vmatpush1.msra.mxu0 %v6500
    %6502 = vmatprep.subr.mxu0 0.0
    %v6503 = vand.u32 %v176, 4294901760
    %6504 = vmatpush1.msra.mxu0 %v6503
    %6505 = vmatprep.subr.mxu0 0.0
    %v6506 = vand.u32 %v175, 4294901760
    %6507 = vmatpush1.msra.mxu0 %v6506
    %6508 = vmatprep.subr.mxu0 0.0
    %v6509 = vand.u32 %v174, 4294901760
    %6510 = vmatpush1.msra.mxu0 %v6509
    %6511 = vmatprep.subr.mxu0 0.0
    %v6512 = vand.u32 %v173, 4294901760
    %6513 = vmatpush1.msra.mxu0 %v6512
    %6514 = vmatprep.subr.mxu0 0.0
    %v6515 = vand.u32 %v172, 4294901760
    %6516 = vmatpush1.msra.mxu0 %v6515
    %6517 = vmatprep.subr.mxu0 0.0
    %v6518 = vand.u32 %v171, 4294901760
    %6519 = vmatpush1.msra.mxu0 %v6518
    %6520 = vmatprep.subr.mxu0 0.0
    %v6521 = vand.u32 %v170, 4294901760
    %6522 = vmatpush1.msra.mxu0 %v6521
    %6523 = vmatprep.subr.mxu0 0.0
    %6524 = vmatpush2.msra.mxu0 0.0
    %6525 = vmatprep.subr.mxu0 0.0
    %6526 = vmatpush2.msra.mxu0 0.0
    %6527 = vmatprep.subr.mxu0 0.0
    %6528 = vmatpush2.msra.mxu0 0.0
    %6529 = vmatprep.subr.mxu0 0.0
    %6530 = vmatpush2.msra.mxu0 0.0
    %6531 = vmatprep.subr.mxu0 0.0
    %6532 = vmatpush2.msra.mxu0 0.0
    %6533 = vmatprep.subr.mxu0 0.0
    %6534 = vmatpush2.msra.mxu0 0.0
    %6535 = vmatprep.subr.mxu0 0.0
    %6536 = vmatpush2.msra.mxu0 0.0
    %6537 = vmatprep.subr.mxu0 0.0
    %6538 = vmatpush2.msra.mxu0 0.0
    %6539 = vmatprep.subr.mxu0 0.0
    %6540 = vmatpush2.msra.mxu0 0.0
    %6541 = vmatprep.subr.mxu0 0.0
    %6542 = vmatpush2.msra.mxu0 0.0
    %6543 = vmatprep.subr.mxu0 0.0
    %6544 = vmatpush2.msra.mxu0 0.0
    %6545 = vmatprep.subr.mxu0 0.0
    %6546 = vmatpush2.msra.mxu0 0.0
    %6547 = vmatprep.subr.mxu0 0.0
    %6548 = vmatpush2.msra.mxu0 0.0
    %6549 = vmatprep.subr.mxu0 0.0
    %6550 = vmatpush2.msra.mxu0 0.0
    %6551 = vmatprep.subr.mxu0 0.0
    %6552 = vmatpush2.msra.mxu0 0.0
    %6553 = vmatprep.subr.mxu0 0.0
    %6554 = vmatpush2.msra.mxu0 0.0
    %6555 = vmatprep.mubr.f32.mxu0 0.0
    %v6556 = vand.u32 %v6412, 4294901760
    %v6557 = vsub.f32 %v6412, %v6556
    %v6558 = vand.u32 %v6557, 4294901760
    %v6559 = vsub.f32 %v6557, %v6558
    %v6560 = vand.u32 %v6559, 4294901760
    %6561 = vmatmul.mubr.f32.gmra.mxu0 %v6560
    %v6562 = vpop.f32.mrf.mxu0
    %v6563 = vadd.f32 0.0, %v6562
    %v6564 = vpop.f32.mrf.mxu0
    %6565 = vmatprep.mubr.f32.mxu0 0.0
    %v6566 = vand.u32 %v6414, 4294901760
    %v6567 = vsub.f32 %v6414, %v6566
    %v6568 = vand.u32 %v6567, 4294901760
    %v6569 = vsub.f32 %v6567, %v6568
    %v6570 = vand.u32 %v6569, 4294901760
    %6571 = vmatmul.mubr.f32.gmra.mxu0 %v6570
    %v6572 = vpop.f32.mrf.mxu0
    %v6573 = vadd.f32 0.0, %v6572
    %v6574 = vpop.f32.mrf.mxu0
    %6575 = vdwg.mxu0
    %6576 = vmatprep.subr.mxu0 0.0
    %v6577 = vand.u32 %v185, 4294901760
    %v6578 = vsub.f32 %v185, %v6577
    %v6579 = vand.u32 %v6578, 4294901760
    %v6580 = vsub.f32 %v6578, %v6579
    %v6581 = vand.u32 %v6580, 4294901760
    %6582 = vmatpush1.msra.mxu0 %v6581
    %6583 = vmatprep.subr.mxu0 0.0
    %v6584 = vand.u32 %v184, 4294901760
    %v6585 = vsub.f32 %v184, %v6584
    %v6586 = vand.u32 %v6585, 4294901760
    %v6587 = vsub.f32 %v6585, %v6586
    %v6588 = vand.u32 %v6587, 4294901760
    %6589 = vmatpush1.msra.mxu0 %v6588
    %6590 = vmatprep.subr.mxu0 0.0
    %v6591 = vand.u32 %v183, 4294901760
    %v6592 = vsub.f32 %v183, %v6591
    %v6593 = vand.u32 %v6592, 4294901760
    %v6594 = vsub.f32 %v6592, %v6593
    %v6595 = vand.u32 %v6594, 4294901760
    %6596 = vmatpush1.msra.mxu0 %v6595
    %6597 = vmatprep.subr.mxu0 0.0
    %v6598 = vand.u32 %v182, 4294901760
    %v6599 = vsub.f32 %v182, %v6598
    %v6600 = vand.u32 %v6599, 4294901760
    %v6601 = vsub.f32 %v6599, %v6600
    %v6602 = vand.u32 %v6601, 4294901760
    %6603 = vmatpush1.msra.mxu0 %v6602
    %6604 = vmatprep.subr.mxu0 0.0
    %v6605 = vand.u32 %v181, 4294901760
    %v6606 = vsub.f32 %v181, %v6605
    %v6607 = vand.u32 %v6606, 4294901760
    %v6608 = vsub.f32 %v6606, %v6607
    %v6609 = vand.u32 %v6608, 4294901760
    %6610 = vmatpush1.msra.mxu0 %v6609
    %6611 = vmatprep.subr.mxu0 0.0
    %v6612 = vand.u32 %v180, 4294901760
    %v6613 = vsub.f32 %v180, %v6612
    %v6614 = vand.u32 %v6613, 4294901760
    %v6615 = vsub.f32 %v6613, %v6614
    %v6616 = vand.u32 %v6615, 4294901760
    %6617 = vmatpush1.msra.mxu0 %v6616
    %6618 = vmatprep.subr.mxu0 0.0
    %v6619 = vand.u32 %v179, 4294901760
    %v6620 = vsub.f32 %v179, %v6619
    %v6621 = vand.u32 %v6620, 4294901760
    %v6622 = vsub.f32 %v6620, %v6621
    %v6623 = vand.u32 %v6622, 4294901760
    %6624 = vmatpush1.msra.mxu0 %v6623
    %6625 = vmatprep.subr.mxu0 0.0
    %v6626 = vand.u32 %v178, 4294901760
    %v6627 = vsub.f32 %v178, %v6626
    %v6628 = vand.u32 %v6627, 4294901760
    %v6629 = vsub.f32 %v6627, %v6628
    %v6630 = vand.u32 %v6629, 4294901760
    %6631 = vmatpush1.msra.mxu0 %v6630
    %6632 = vmatprep.subr.mxu0 0.0
    %v6633 = vand.u32 %v177, 4294901760
    %v6634 = vsub.f32 %v177, %v6633
    %v6635 = vand.u32 %v6634, 4294901760
    %v6636 = vsub.f32 %v6634, %v6635
    %v6637 = vand.u32 %v6636, 4294901760
    %6638 = vmatpush1.msra.mxu0 %v6637
    %6639 = vmatprep.subr.mxu0 0.0
    %v6640 = vand.u32 %v176, 4294901760
    %v6641 = vsub.f32 %v176, %v6640
    %v6642 = vand.u32 %v6641, 4294901760
    %v6643 = vsub.f32 %v6641, %v6642
    %v6644 = vand.u32 %v6643, 4294901760
    %6645 = vmatpush1.msra.mxu0 %v6644
    %6646 = vmatprep.subr.mxu0 0.0
    %v6647 = vand.u32 %v175, 4294901760
    %v6648 = vsub.f32 %v175, %v6647
    %v6649 = vand.u32 %v6648, 4294901760
    %v6650 = vsub.f32 %v6648, %v6649
    %v6651 = vand.u32 %v6650, 4294901760
    %6652 = vmatpush1.msra.mxu0 %v6651
    %6653 = vmatprep.subr.mxu0 0.0
    %v6654 = vand.u32 %v174, 4294901760
    %v6655 = vsub.f32 %v174, %v6654
    %v6656 = vand.u32 %v6655, 4294901760
    %v6657 = vsub.f32 %v6655, %v6656
    %v6658 = vand.u32 %v6657, 4294901760
    %6659 = vmatpush1.msra.mxu0 %v6658
    %6660 = vmatprep.subr.mxu0 0.0
    %v6661 = vand.u32 %v173, 4294901760
    %v6662 = vsub.f32 %v173, %v6661
    %v6663 = vand.u32 %v6662, 4294901760
    %v6664 = vsub.f32 %v6662, %v6663
    %v6665 = vand.u32 %v6664, 4294901760
    %6666 = vmatpush1.msra.mxu0 %v6665
    %6667 = vmatprep.subr.mxu0 0.0
    %v6668 = vand.u32 %v172, 4294901760
    %v6669 = vsub.f32 %v172, %v6668
    %v6670 = vand.u32 %v6669, 4294901760
    %v6671 = vsub.f32 %v6669, %v6670
    %v6672 = vand.u32 %v6671, 4294901760
    %6673 = vmatpush1.msra.mxu0 %v6672
    %6674 = vmatprep.subr.mxu0 0.0
    %v6675 = vand.u32 %v171, 4294901760
    %v6676 = vsub.f32 %v171, %v6675
    %v6677 = vand.u32 %v6676, 4294901760
    %v6678 = vsub.f32 %v6676, %v6677
    %v6679 = vand.u32 %v6678, 4294901760
    %6680 = vmatpush1.msra.mxu0 %v6679
    %6681 = vmatprep.subr.mxu0 0.0
    %v6682 = vand.u32 %v170, 4294901760
    %v6683 = vsub.f32 %v170, %v6682
    %v6684 = vand.u32 %v6683, 4294901760
    %v6685 = vsub.f32 %v6683, %v6684
    %v6686 = vand.u32 %v6685, 4294901760
    %6687 = vmatpush1.msra.mxu0 %v6686
    %6688 = vmatprep.subr.mxu0 0.0
    %6689 = vmatpush2.msra.mxu0 0.0
    %6690 = vmatprep.subr.mxu0 0.0
    %6691 = vmatpush2.msra.mxu0 0.0
    %6692 = vmatprep.subr.mxu0 0.0
    %6693 = vmatpush2.msra.mxu0 0.0
    %6694 = vmatprep.subr.mxu0 0.0
    %6695 = vmatpush2.msra.mxu0 0.0
    %6696 = vmatprep.subr.mxu0 0.0
    %6697 = vmatpush2.msra.mxu0 0.0
    %6698 = vmatprep.subr.mxu0 0.0
    %6699 = vmatpush2.msra.mxu0 0.0
    %6700 = vmatprep.subr.mxu0 0.0
    %6701 = vmatpush2.msra.mxu0 0.0
    %6702 = vmatprep.subr.mxu0 0.0
    %6703 = vmatpush2.msra.mxu0 0.0
    %6704 = vmatprep.subr.mxu0 0.0
    %6705 = vmatpush2.msra.mxu0 0.0
    %6706 = vmatprep.subr.mxu0 0.0
    %6707 = vmatpush2.msra.mxu0 0.0
    %6708 = vmatprep.subr.mxu0 0.0
    %6709 = vmatpush2.msra.mxu0 0.0
    %6710 = vmatprep.subr.mxu0 0.0
    %6711 = vmatpush2.msra.mxu0 0.0
    %6712 = vmatprep.subr.mxu0 0.0
    %6713 = vmatpush2.msra.mxu0 0.0
    %6714 = vmatprep.subr.mxu0 0.0
    %6715 = vmatpush2.msra.mxu0 0.0
    %6716 = vmatprep.subr.mxu0 0.0
    %6717 = vmatpush2.msra.mxu0 0.0
    %6718 = vmatprep.subr.mxu0 0.0
    %6719 = vmatpush2.msra.mxu0 0.0
    %6720 = vmatprep.mubr.f32.mxu0 0.0
    %v6721 = vand.u32 %v6412, 4294901760
    %6722 = vmatmul.mubr.f32.gmra.mxu0 %v6721
    %v6723 = vpop.f32.mrf.mxu0
    %v6724 = vadd.f32 %v6563, %v6723
    %v6725 = vpop.f32.mrf.mxu0
    %6726 = vmatprep.mubr.f32.mxu0 0.0
    %v6727 = vand.u32 %v6414, 4294901760
    %6728 = vmatmul.mubr.f32.gmra.mxu0 %v6727
    %v6729 = vpop.f32.mrf.mxu0
    %v6730 = vadd.f32 %v6573, %v6729
    %v6731 = vpop.f32.mrf.mxu0
    %6732 = vdwg.mxu0
    %6733 = vmatprep.subr.mxu0 0.0
    %v6734 = vand.u32 %v185, 4294901760
    %v6735 = vsub.f32 %v185, %v6734
    %6736 = vmatpush1.msra.mxu0 %v6735
    %6737 = vmatprep.subr.mxu0 0.0
    %v6738 = vand.u32 %v184, 4294901760
    %v6739 = vsub.f32 %v184, %v6738
    %6740 = vmatpush1.msra.mxu0 %v6739
    %6741 = vmatprep.subr.mxu0 0.0
    %v6742 = vand.u32 %v183, 4294901760
    %v6743 = vsub.f32 %v183, %v6742
    %6744 = vmatpush1.msra.mxu0 %v6743
    %6745 = vmatprep.subr.mxu0 0.0
    %v6746 = vand.u32 %v182, 4294901760
    %v6747 = vsub.f32 %v182, %v6746
    %6748 = vmatpush1.msra.mxu0 %v6747
    %6749 = vmatprep.subr.mxu0 0.0
    %v6750 = vand.u32 %v181, 4294901760
    %v6751 = vsub.f32 %v181, %v6750
    %6752 = vmatpush1.msra.mxu0 %v6751
    %6753 = vmatprep.subr.mxu0 0.0
    %v6754 = vand.u32 %v180, 4294901760
    %v6755 = vsub.f32 %v180, %v6754
    %6756 = vmatpush1.msra.mxu0 %v6755
    %6757 = vmatprep.subr.mxu0 0.0
    %v6758 = vand.u32 %v179, 4294901760
    %v6759 = vsub.f32 %v179, %v6758
    %6760 = vmatpush1.msra.mxu0 %v6759
    %6761 = vmatprep.subr.mxu0 0.0
    %v6762 = vand.u32 %v178, 4294901760
    %v6763 = vsub.f32 %v178, %v6762
    %6764 = vmatpush1.msra.mxu0 %v6763
    %6765 = vmatprep.subr.mxu0 0.0
    %v6766 = vand.u32 %v177, 4294901760
    %v6767 = vsub.f32 %v177, %v6766
    %6768 = vmatpush1.msra.mxu0 %v6767
    %6769 = vmatprep.subr.mxu0 0.0
    %v6770 = vand.u32 %v176, 4294901760
    %v6771 = vsub.f32 %v176, %v6770
    %6772 = vmatpush1.msra.mxu0 %v6771
    %6773 = vmatprep.subr.mxu0 0.0
    %v6774 = vand.u32 %v175, 4294901760
    %v6775 = vsub.f32 %v175, %v6774
    %6776 = vmatpush1.msra.mxu0 %v6775
    %6777 = vmatprep.subr.mxu0 0.0
    %v6778 = vand.u32 %v174, 4294901760
    %v6779 = vsub.f32 %v174, %v6778
    %6780 = vmatpush1.msra.mxu0 %v6779
    %6781 = vmatprep.subr.mxu0 0.0
    %v6782 = vand.u32 %v173, 4294901760
    %v6783 = vsub.f32 %v173, %v6782
    %6784 = vmatpush1.msra.mxu0 %v6783
    %6785 = vmatprep.subr.mxu0 0.0
    %v6786 = vand.u32 %v172, 4294901760
    %v6787 = vsub.f32 %v172, %v6786
    %6788 = vmatpush1.msra.mxu0 %v6787
    %6789 = vmatprep.subr.mxu0 0.0
    %v6790 = vand.u32 %v171, 4294901760
    %v6791 = vsub.f32 %v171, %v6790
    %6792 = vmatpush1.msra.mxu0 %v6791
    %6793 = vmatprep.subr.mxu0 0.0
    %v6794 = vand.u32 %v170, 4294901760
    %v6795 = vsub.f32 %v170, %v6794
    %6796 = vmatpush1.msra.mxu0 %v6795
    %6797 = vmatprep.subr.mxu0 0.0
    %6798 = vmatpush2.msra.mxu0 0.0
    %6799 = vmatprep.subr.mxu0 0.0
    %6800 = vmatpush2.msra.mxu0 0.0
    %6801 = vmatprep.subr.mxu0 0.0
    %6802 = vmatpush2.msra.mxu0 0.0
    %6803 = vmatprep.subr.mxu0 0.0
    %6804 = vmatpush2.msra.mxu0 0.0
    %6805 = vmatprep.subr.mxu0 0.0
    %6806 = vmatpush2.msra.mxu0 0.0
    %6807 = vmatprep.subr.mxu0 0.0
    %6808 = vmatpush2.msra.mxu0 0.0
    %6809 = vmatprep.subr.mxu0 0.0
    %6810 = vmatpush2.msra.mxu0 0.0
    %6811 = vmatprep.subr.mxu0 0.0
    %6812 = vmatpush2.msra.mxu0 0.0
    %6813 = vmatprep.subr.mxu0 0.0
    %6814 = vmatpush2.msra.mxu0 0.0
    %6815 = vmatprep.subr.mxu0 0.0
    %6816 = vmatpush2.msra.mxu0 0.0
    %6817 = vmatprep.subr.mxu0 0.0
    %6818 = vmatpush2.msra.mxu0 0.0
    %6819 = vmatprep.subr.mxu0 0.0
    %6820 = vmatpush2.msra.mxu0 0.0
    %6821 = vmatprep.subr.mxu0 0.0
    %6822 = vmatpush2.msra.mxu0 0.0
    %6823 = vmatprep.subr.mxu0 0.0
    %6824 = vmatpush2.msra.mxu0 0.0
    %6825 = vmatprep.subr.mxu0 0.0
    %6826 = vmatpush2.msra.mxu0 0.0
    %6827 = vmatprep.subr.mxu0 0.0
    %6828 = vmatpush2.msra.mxu0 0.0
    %6829 = vmatprep.mubr.f32.mxu0 0.0
    %v6830 = vand.u32 %v6412, 4294901760
    %v6831 = vsub.f32 %v6412, %v6830
    %6832 = vmatmul.mubr.f32.gmra.mxu0 %v6831
    %v6833 = vpop.f32.mrf.mxu0
    %v6834 = vadd.f32 %v6724, %v6833
    %v6835 = vpop.f32.mrf.mxu0
    %6836 = vmatprep.mubr.f32.mxu0 0.0
    %v6837 = vand.u32 %v6414, 4294901760
    %v6838 = vsub.f32 %v6414, %v6837
    %6839 = vmatmul.mubr.f32.gmra.mxu0 %v6838
    %v6840 = vpop.f32.mrf.mxu0
    %v6841 = vadd.f32 %v6730, %v6840
    %v6842 = vpop.f32.mrf.mxu0
    %6843 = vdwg.mxu0
    %6844 = vmatprep.subr.mxu0 0.0
    %v6845 = vand.u32 %v185, 4294901760
    %6846 = vmatpush1.msra.mxu0 %v6845
    %6847 = vmatprep.subr.mxu0 0.0
    %v6848 = vand.u32 %v184, 4294901760
    %6849 = vmatpush1.msra.mxu0 %v6848
    %6850 = vmatprep.subr.mxu0 0.0
    %v6851 = vand.u32 %v183, 4294901760
    %6852 = vmatpush1.msra.mxu0 %v6851
    %6853 = vmatprep.subr.mxu0 0.0
    %v6854 = vand.u32 %v182, 4294901760
    %6855 = vmatpush1.msra.mxu0 %v6854
    %6856 = vmatprep.subr.mxu0 0.0
    %v6857 = vand.u32 %v181, 4294901760
    %6858 = vmatpush1.msra.mxu0 %v6857
    %6859 = vmatprep.subr.mxu0 0.0
    %v6860 = vand.u32 %v180, 4294901760
    %6861 = vmatpush1.msra.mxu0 %v6860
    %6862 = vmatprep.subr.mxu0 0.0
    %v6863 = vand.u32 %v179, 4294901760
    %6864 = vmatpush1.msra.mxu0 %v6863
    %6865 = vmatprep.subr.mxu0 0.0
    %v6866 = vand.u32 %v178, 4294901760
    %6867 = vmatpush1.msra.mxu0 %v6866
    %6868 = vmatprep.subr.mxu0 0.0
    %v6869 = vand.u32 %v177, 4294901760
    %6870 = vmatpush1.msra.mxu0 %v6869
    %6871 = vmatprep.subr.mxu0 0.0
    %v6872 = vand.u32 %v176, 4294901760
    %6873 = vmatpush1.msra.mxu0 %v6872
    %6874 = vmatprep.subr.mxu0 0.0
    %v6875 = vand.u32 %v175, 4294901760
    %6876 = vmatpush1.msra.mxu0 %v6875
    %6877 = vmatprep.subr.mxu0 0.0
    %v6878 = vand.u32 %v174, 4294901760
    %6879 = vmatpush1.msra.mxu0 %v6878
    %6880 = vmatprep.subr.mxu0 0.0
    %v6881 = vand.u32 %v173, 4294901760
    %6882 = vmatpush1.msra.mxu0 %v6881
    %6883 = vmatprep.subr.mxu0 0.0
    %v6884 = vand.u32 %v172, 4294901760
    %6885 = vmatpush1.msra.mxu0 %v6884
    %6886 = vmatprep.subr.mxu0 0.0
    %v6887 = vand.u32 %v171, 4294901760
    %6888 = vmatpush1.msra.mxu0 %v6887
    %6889 = vmatprep.subr.mxu0 0.0
    %v6890 = vand.u32 %v170, 4294901760
    %6891 = vmatpush1.msra.mxu0 %v6890
    %6892 = vmatprep.subr.mxu0 0.0
    %6893 = vmatpush2.msra.mxu0 0.0
    %6894 = vmatprep.subr.mxu0 0.0
    %6895 = vmatpush2.msra.mxu0 0.0
    %6896 = vmatprep.subr.mxu0 0.0
    %6897 = vmatpush2.msra.mxu0 0.0
    %6898 = vmatprep.subr.mxu0 0.0
    %6899 = vmatpush2.msra.mxu0 0.0
    %6900 = vmatprep.subr.mxu0 0.0
    %6901 = vmatpush2.msra.mxu0 0.0
    %6902 = vmatprep.subr.mxu0 0.0
    %6903 = vmatpush2.msra.mxu0 0.0
    %6904 = vmatprep.subr.mxu0 0.0
    %6905 = vmatpush2.msra.mxu0 0.0
    %6906 = vmatprep.subr.mxu0 0.0
    %6907 = vmatpush2.msra.mxu0 0.0
    %6908 = vmatprep.subr.mxu0 0.0
    %6909 = vmatpush2.msra.mxu0 0.0
    %6910 = vmatprep.subr.mxu0 0.0
    %6911 = vmatpush2.msra.mxu0 0.0
    %6912 = vmatprep.subr.mxu0 0.0
    %6913 = vmatpush2.msra.mxu0 0.0
    %6914 = vmatprep.subr.mxu0 0.0
    %6915 = vmatpush2.msra.mxu0 0.0
    %6916 = vmatprep.subr.mxu0 0.0
    %6917 = vmatpush2.msra.mxu0 0.0
    %6918 = vmatprep.subr.mxu0 0.0
    %6919 = vmatpush2.msra.mxu0 0.0
    %6920 = vmatprep.subr.mxu0 0.0
    %6921 = vmatpush2.msra.mxu0 0.0
    %6922 = vmatprep.subr.mxu0 0.0
    %6923 = vmatpush2.msra.mxu0 0.0
    %6924 = vmatprep.mubr.f32.mxu0 0.0
    %v6925 = vand.u32 %v6412, 4294901760
    %v6926 = vsub.f32 %v6412, %v6925
    %v6927 = vand.u32 %v6926, 4294901760
    %6928 = vmatmul.mubr.f32.gmra.mxu0 %v6927
    %v6929 = vpop.f32.mrf.mxu0
    %v6930 = vadd.f32 %v6834, %v6929
    %v6931 = vpop.f32.mrf.mxu0
    %6932 = vmatprep.mubr.f32.mxu0 0.0
    %v6933 = vand.u32 %v6414, 4294901760
    %v6934 = vsub.f32 %v6414, %v6933
    %v6935 = vand.u32 %v6934, 4294901760
    %6936 = vmatmul.mubr.f32.gmra.mxu0 %v6935
    %v6937 = vpop.f32.mrf.mxu0
    %v6938 = vadd.f32 %v6841, %v6937
    %v6939 = vpop.f32.mrf.mxu0
    %6940 = vdwg.mxu0
    %6941 = vmatprep.subr.mxu0 0.0
    %v6942 = vand.u32 %v185, 4294901760
    %v6943 = vsub.f32 %v185, %v6942
    %v6944 = vand.u32 %v6943, 4294901760
    %6945 = vmatpush1.msra.mxu0 %v6944
    %6946 = vmatprep.subr.mxu0 0.0
    %v6947 = vand.u32 %v184, 4294901760
    %v6948 = vsub.f32 %v184, %v6947
    %v6949 = vand.u32 %v6948, 4294901760
    %6950 = vmatpush1.msra.mxu0 %v6949
    %6951 = vmatprep.subr.mxu0 0.0
    %v6952 = vand.u32 %v183, 4294901760
    %v6953 = vsub.f32 %v183, %v6952
    %v6954 = vand.u32 %v6953, 4294901760
    %6955 = vmatpush1.msra.mxu0 %v6954
    %6956 = vmatprep.subr.mxu0 0.0
    %v6957 = vand.u32 %v182, 4294901760
    %v6958 = vsub.f32 %v182, %v6957
    %v6959 = vand.u32 %v6958, 4294901760
    %6960 = vmatpush1.msra.mxu0 %v6959
    %6961 = vmatprep.subr.mxu0 0.0
    %v6962 = vand.u32 %v181, 4294901760
    %v6963 = vsub.f32 %v181, %v6962
    %v6964 = vand.u32 %v6963, 4294901760
    %6965 = vmatpush1.msra.mxu0 %v6964
    %6966 = vmatprep.subr.mxu0 0.0
    %v6967 = vand.u32 %v180, 4294901760
    %v6968 = vsub.f32 %v180, %v6967
    %v6969 = vand.u32 %v6968, 4294901760
    %6970 = vmatpush1.msra.mxu0 %v6969
    %6971 = vmatprep.subr.mxu0 0.0
    %v6972 = vand.u32 %v179, 4294901760
    %v6973 = vsub.f32 %v179, %v6972
    %v6974 = vand.u32 %v6973, 4294901760
    %6975 = vmatpush1.msra.mxu0 %v6974
    %6976 = vmatprep.subr.mxu0 0.0
    %v6977 = vand.u32 %v178, 4294901760
    %v6978 = vsub.f32 %v178, %v6977
    %v6979 = vand.u32 %v6978, 4294901760
    %6980 = vmatpush1.msra.mxu0 %v6979
    %6981 = vmatprep.subr.mxu0 0.0
    %v6982 = vand.u32 %v177, 4294901760
    %v6983 = vsub.f32 %v177, %v6982
    %v6984 = vand.u32 %v6983, 4294901760
    %6985 = vmatpush1.msra.mxu0 %v6984
    %6986 = vmatprep.subr.mxu0 0.0
    %v6987 = vand.u32 %v176, 4294901760
    %v6988 = vsub.f32 %v176, %v6987
    %v6989 = vand.u32 %v6988, 4294901760
    %6990 = vmatpush1.msra.mxu0 %v6989
    %6991 = vmatprep.subr.mxu0 0.0
    %v6992 = vand.u32 %v175, 4294901760
    %v6993 = vsub.f32 %v175, %v6992
    %v6994 = vand.u32 %v6993, 4294901760
    %6995 = vmatpush1.msra.mxu0 %v6994
    %6996 = vmatprep.subr.mxu0 0.0
    %v6997 = vand.u32 %v174, 4294901760
    %v6998 = vsub.f32 %v174, %v6997
    %v6999 = vand.u32 %v6998, 4294901760
    %7000 = vmatpush1.msra.mxu0 %v6999
    %7001 = vmatprep.subr.mxu0 0.0
    %v7002 = vand.u32 %v173, 4294901760
    %v7003 = vsub.f32 %v173, %v7002
    %v7004 = vand.u32 %v7003, 4294901760
    %7005 = vmatpush1.msra.mxu0 %v7004
    %7006 = vmatprep.subr.mxu0 0.0
    %v7007 = vand.u32 %v172, 4294901760
    %v7008 = vsub.f32 %v172, %v7007
    %v7009 = vand.u32 %v7008, 4294901760
    %7010 = vmatpush1.msra.mxu0 %v7009
    %7011 = vmatprep.subr.mxu0 0.0
    %v7012 = vand.u32 %v171, 4294901760
    %v7013 = vsub.f32 %v171, %v7012
    %v7014 = vand.u32 %v7013, 4294901760
    %7015 = vmatpush1.msra.mxu0 %v7014
    %7016 = vmatprep.subr.mxu0 0.0
    %v7017 = vand.u32 %v170, 4294901760
    %v7018 = vsub.f32 %v170, %v7017
    %v7019 = vand.u32 %v7018, 4294901760
    %7020 = vmatpush1.msra.mxu0 %v7019
    %7021 = vmatprep.subr.mxu0 0.0
    %7022 = vmatpush2.msra.mxu0 0.0
    %7023 = vmatprep.subr.mxu0 0.0
    %7024 = vmatpush2.msra.mxu0 0.0
    %7025 = vmatprep.subr.mxu0 0.0
    %7026 = vmatpush2.msra.mxu0 0.0
    %7027 = vmatprep.subr.mxu0 0.0
    %7028 = vmatpush2.msra.mxu0 0.0
    %7029 = vmatprep.subr.mxu0 0.0
    %7030 = vmatpush2.msra.mxu0 0.0
    %7031 = vmatprep.subr.mxu0 0.0
    %7032 = vmatpush2.msra.mxu0 0.0
    %7033 = vmatprep.subr.mxu0 0.0
    %7034 = vmatpush2.msra.mxu0 0.0
    %7035 = vmatprep.subr.mxu0 0.0
    %7036 = vmatpush2.msra.mxu0 0.0
    %7037 = vmatprep.subr.mxu0 0.0
    %7038 = vmatpush2.msra.mxu0 0.0
    %7039 = vmatprep.subr.mxu0 0.0
    %7040 = vmatpush2.msra.mxu0 0.0
    %7041 = vmatprep.subr.mxu0 0.0
    %7042 = vmatpush2.msra.mxu0 0.0
    %7043 = vmatprep.subr.mxu0 0.0
    %7044 = vmatpush2.msra.mxu0 0.0
    %7045 = vmatprep.subr.mxu0 0.0
    %7046 = vmatpush2.msra.mxu0 0.0
    %7047 = vmatprep.subr.mxu0 0.0
    %7048 = vmatpush2.msra.mxu0 0.0
    %7049 = vmatprep.subr.mxu0 0.0
    %7050 = vmatpush2.msra.mxu0 0.0
    %7051 = vmatprep.subr.mxu0 0.0
    %7052 = vmatpush2.msra.mxu0 0.0
    %7053 = vmatprep.mubr.f32.mxu0 0.0
    %v7054 = vand.u32 %v6412, 4294901760
    %7055 = vmatmul.mubr.f32.gmra.mxu0 %v7054
    %v7056 = vpop.f32.mrf.mxu0
    %v7057 = vadd.f32 %v6930, %v7056
    %v7058 = vpop.f32.mrf.mxu0
    %7059 = vmatprep.mubr.f32.mxu0 0.0
    %v7060 = vand.u32 %v6414, 4294901760
    %7061 = vmatmul.mubr.f32.gmra.mxu0 %v7060
    %v7062 = vpop.f32.mrf.mxu0
    %v7063 = vadd.f32 %v6938, %v7062
    %v7064 = vpop.f32.mrf.mxu0
    %7065 = vdwg.mxu0
    %7066 = vmatprep.subr.mxu0 0.0
    %v7067 = vand.u32 %v185, 4294901760
    %7068 = vmatpush1.msra.mxu0 %v7067
    %7069 = vmatprep.subr.mxu0 0.0
    %v7070 = vand.u32 %v184, 4294901760
    %7071 = vmatpush1.msra.mxu0 %v7070
    %7072 = vmatprep.subr.mxu0 0.0
    %v7073 = vand.u32 %v183, 4294901760
    %7074 = vmatpush1.msra.mxu0 %v7073
    %7075 = vmatprep.subr.mxu0 0.0
    %v7076 = vand.u32 %v182, 4294901760
    %7077 = vmatpush1.msra.mxu0 %v7076
    %7078 = vmatprep.subr.mxu0 0.0
    %v7079 = vand.u32 %v181, 4294901760
    %7080 = vmatpush1.msra.mxu0 %v7079
    %7081 = vmatprep.subr.mxu0 0.0
    %v7082 = vand.u32 %v180, 4294901760
    %7083 = vmatpush1.msra.mxu0 %v7082
    %7084 = vmatprep.subr.mxu0 0.0
    %v7085 = vand.u32 %v179, 4294901760
    %7086 = vmatpush1.msra.mxu0 %v7085
    %7087 = vmatprep.subr.mxu0 0.0
    %v7088 = vand.u32 %v178, 4294901760
    %7089 = vmatpush1.msra.mxu0 %v7088
    %7090 = vmatprep.subr.mxu0 0.0
    %v7091 = vand.u32 %v177, 4294901760
    %7092 = vmatpush1.msra.mxu0 %v7091
    %7093 = vmatprep.subr.mxu0 0.0
    %v7094 = vand.u32 %v176, 4294901760
    %7095 = vmatpush1.msra.mxu0 %v7094
    %7096 = vmatprep.subr.mxu0 0.0
    %v7097 = vand.u32 %v175, 4294901760
    %7098 = vmatpush1.msra.mxu0 %v7097
    %7099 = vmatprep.subr.mxu0 0.0
    %v7100 = vand.u32 %v174, 4294901760
    %7101 = vmatpush1.msra.mxu0 %v7100
    %7102 = vmatprep.subr.mxu0 0.0
    %v7103 = vand.u32 %v173, 4294901760
    %7104 = vmatpush1.msra.mxu0 %v7103
    %7105 = vmatprep.subr.mxu0 0.0
    %v7106 = vand.u32 %v172, 4294901760
    %7107 = vmatpush1.msra.mxu0 %v7106
    %7108 = vmatprep.subr.mxu0 0.0
    %v7109 = vand.u32 %v171, 4294901760
    %7110 = vmatpush1.msra.mxu0 %v7109
    %7111 = vmatprep.subr.mxu0 0.0
    %v7112 = vand.u32 %v170, 4294901760
    %7113 = vmatpush1.msra.mxu0 %v7112
    %7114 = vmatprep.subr.mxu0 0.0
    %7115 = vmatpush2.msra.mxu0 0.0
    %7116 = vmatprep.subr.mxu0 0.0
    %7117 = vmatpush2.msra.mxu0 0.0
    %7118 = vmatprep.subr.mxu0 0.0
    %7119 = vmatpush2.msra.mxu0 0.0
    %7120 = vmatprep.subr.mxu0 0.0
    %7121 = vmatpush2.msra.mxu0 0.0
    %7122 = vmatprep.subr.mxu0 0.0
    %7123 = vmatpush2.msra.mxu0 0.0
    %7124 = vmatprep.subr.mxu0 0.0
    %7125 = vmatpush2.msra.mxu0 0.0
    %7126 = vmatprep.subr.mxu0 0.0
    %7127 = vmatpush2.msra.mxu0 0.0
    %7128 = vmatprep.subr.mxu0 0.0
    %7129 = vmatpush2.msra.mxu0 0.0
    %7130 = vmatprep.subr.mxu0 0.0
    %7131 = vmatpush2.msra.mxu0 0.0
    %7132 = vmatprep.subr.mxu0 0.0
    %7133 = vmatpush2.msra.mxu0 0.0
    %7134 = vmatprep.subr.mxu0 0.0
    %7135 = vmatpush2.msra.mxu0 0.0
    %7136 = vmatprep.subr.mxu0 0.0
    %7137 = vmatpush2.msra.mxu0 0.0
    %7138 = vmatprep.subr.mxu0 0.0
    %7139 = vmatpush2.msra.mxu0 0.0
    %7140 = vmatprep.subr.mxu0 0.0
    %7141 = vmatpush2.msra.mxu0 0.0
    %7142 = vmatprep.subr.mxu0 0.0
    %7143 = vmatpush2.msra.mxu0 0.0
    %7144 = vmatprep.subr.mxu0 0.0
    %7145 = vmatpush2.msra.mxu0 0.0
    %7146 = vmatprep.mubr.f32.mxu0 0.0
    %v7147 = vand.u32 %v6412, 4294901760
    %7148 = vmatmul.mubr.f32.gmra.mxu0 %v7147
    %v7149 = vpop.f32.mrf.mxu0
    %v7150 = vadd.f32 %v7057, %v7149
    %v7151 = vpop.f32.mrf.mxu0
    %7152 = vmatprep.mubr.f32.mxu0 0.0
    %v7153 = vand.u32 %v6414, 4294901760
    %7154 = vmatmul.mubr.f32.gmra.mxu0 %v7153
    %v7155 = vpop.f32.mrf.mxu0
    %v7156 = vadd.f32 %v7063, %v7155
    %v7157 = vpop.f32.mrf.mxu0
    %7158 = vdwg.mxu0
    %7159 = vmatprep.subr.mxu0 0.0
    %v7160 = vand.u32 %v201, 4294901760
    %7161 = vmatpush1.msra.mxu0 %v7160
    %7162 = vmatprep.subr.mxu0 0.0
    %v7163 = vand.u32 %v200, 4294901760
    %7164 = vmatpush1.msra.mxu0 %v7163
    %7165 = vmatprep.subr.mxu0 0.0
    %v7166 = vand.u32 %v199, 4294901760
    %7167 = vmatpush1.msra.mxu0 %v7166
    %7168 = vmatprep.subr.mxu0 0.0
    %v7169 = vand.u32 %v198, 4294901760
    %7170 = vmatpush1.msra.mxu0 %v7169
    %7171 = vmatprep.subr.mxu0 0.0
    %v7172 = vand.u32 %v197, 4294901760
    %7173 = vmatpush1.msra.mxu0 %v7172
    %7174 = vmatprep.subr.mxu0 0.0
    %v7175 = vand.u32 %v196, 4294901760
    %7176 = vmatpush1.msra.mxu0 %v7175
    %7177 = vmatprep.subr.mxu0 0.0
    %v7178 = vand.u32 %v195, 4294901760
    %7179 = vmatpush1.msra.mxu0 %v7178
    %7180 = vmatprep.subr.mxu0 0.0
    %v7181 = vand.u32 %v194, 4294901760
    %7182 = vmatpush1.msra.mxu0 %v7181
    %7183 = vmatprep.subr.mxu0 0.0
    %v7184 = vand.u32 %v193, 4294901760
    %7185 = vmatpush1.msra.mxu0 %v7184
    %7186 = vmatprep.subr.mxu0 0.0
    %v7187 = vand.u32 %v192, 4294901760
    %7188 = vmatpush1.msra.mxu0 %v7187
    %7189 = vmatprep.subr.mxu0 0.0
    %v7190 = vand.u32 %v191, 4294901760
    %7191 = vmatpush1.msra.mxu0 %v7190
    %7192 = vmatprep.subr.mxu0 0.0
    %v7193 = vand.u32 %v190, 4294901760
    %7194 = vmatpush1.msra.mxu0 %v7193
    %7195 = vmatprep.subr.mxu0 0.0
    %v7196 = vand.u32 %v189, 4294901760
    %7197 = vmatpush1.msra.mxu0 %v7196
    %7198 = vmatprep.subr.mxu0 0.0
    %v7199 = vand.u32 %v188, 4294901760
    %7200 = vmatpush1.msra.mxu0 %v7199
    %7201 = vmatprep.subr.mxu0 0.0
    %v7202 = vand.u32 %v187, 4294901760
    %7203 = vmatpush1.msra.mxu0 %v7202
    %7204 = vmatprep.subr.mxu0 0.0
    %v7205 = vand.u32 %v186, 4294901760
    %7206 = vmatpush1.msra.mxu0 %v7205
    %7207 = vmatprep.subr.mxu0 0.0
    %7208 = vmatpush2.msra.mxu0 0.0
    %7209 = vmatprep.subr.mxu0 0.0
    %7210 = vmatpush2.msra.mxu0 0.0
    %7211 = vmatprep.subr.mxu0 0.0
    %7212 = vmatpush2.msra.mxu0 0.0
    %7213 = vmatprep.subr.mxu0 0.0
    %7214 = vmatpush2.msra.mxu0 0.0
    %7215 = vmatprep.subr.mxu0 0.0
    %7216 = vmatpush2.msra.mxu0 0.0
    %7217 = vmatprep.subr.mxu0 0.0
    %7218 = vmatpush2.msra.mxu0 0.0
    %7219 = vmatprep.subr.mxu0 0.0
    %7220 = vmatpush2.msra.mxu0 0.0
    %7221 = vmatprep.subr.mxu0 0.0
    %7222 = vmatpush2.msra.mxu0 0.0
    %7223 = vmatprep.subr.mxu0 0.0
    %7224 = vmatpush2.msra.mxu0 0.0
    %7225 = vmatprep.subr.mxu0 0.0
    %7226 = vmatpush2.msra.mxu0 0.0
    %7227 = vmatprep.subr.mxu0 0.0
    %7228 = vmatpush2.msra.mxu0 0.0
    %7229 = vmatprep.subr.mxu0 0.0
    %7230 = vmatpush2.msra.mxu0 0.0
    %7231 = vmatprep.subr.mxu0 0.0
    %7232 = vmatpush2.msra.mxu0 0.0
    %7233 = vmatprep.subr.mxu0 0.0
    %7234 = vmatpush2.msra.mxu0 0.0
    %7235 = vmatprep.subr.mxu0 0.0
    %7236 = vmatpush2.msra.mxu0 0.0
    %7237 = vmatprep.subr.mxu0 0.0
    %7238 = vmatpush2.msra.mxu0 0.0
    %7239 = vmatprep.mubr.f32.mxu0 0.0
    %v7240 = vand.u32 %v6416, 4294901760
    %v7241 = vsub.f32 %v6416, %v7240
    %v7242 = vand.u32 %v7241, 4294901760
    %v7243 = vsub.f32 %v7241, %v7242
    %v7244 = vand.u32 %v7243, 4294901760
    %7245 = vmatmul.mubr.f32.gmra.mxu0 %v7244
    %v7246 = vpop.f32.mrf.mxu0
    %v7247 = vadd.f32 0.0, %v7246
    %v7248 = vpop.f32.mrf.mxu0
    %7249 = vmatprep.mubr.f32.mxu0 0.0
    %v7250 = vand.u32 %v6418, 4294901760
    %v7251 = vsub.f32 %v6418, %v7250
    %v7252 = vand.u32 %v7251, 4294901760
    %v7253 = vsub.f32 %v7251, %v7252
    %v7254 = vand.u32 %v7253, 4294901760
    %7255 = vmatmul.mubr.f32.gmra.mxu0 %v7254
    %v7256 = vpop.f32.mrf.mxu0
    %v7257 = vadd.f32 0.0, %v7256
    %v7258 = vpop.f32.mrf.mxu0
    %7259 = vdwg.mxu0
    %7260 = vmatprep.subr.mxu0 0.0
    %v7261 = vand.u32 %v201, 4294901760
    %v7262 = vsub.f32 %v201, %v7261
    %v7263 = vand.u32 %v7262, 4294901760
    %v7264 = vsub.f32 %v7262, %v7263
    %v7265 = vand.u32 %v7264, 4294901760
    %7266 = vmatpush1.msra.mxu0 %v7265
    %7267 = vmatprep.subr.mxu0 0.0
    %v7268 = vand.u32 %v200, 4294901760
    %v7269 = vsub.f32 %v200, %v7268
    %v7270 = vand.u32 %v7269, 4294901760
    %v7271 = vsub.f32 %v7269, %v7270
    %v7272 = vand.u32 %v7271, 4294901760
    %7273 = vmatpush1.msra.mxu0 %v7272
    %7274 = vmatprep.subr.mxu0 0.0
    %v7275 = vand.u32 %v199, 4294901760
    %v7276 = vsub.f32 %v199, %v7275
    %v7277 = vand.u32 %v7276, 4294901760
    %v7278 = vsub.f32 %v7276, %v7277
    %v7279 = vand.u32 %v7278, 4294901760
    %7280 = vmatpush1.msra.mxu0 %v7279
    %7281 = vmatprep.subr.mxu0 0.0
    %v7282 = vand.u32 %v198, 4294901760
    %v7283 = vsub.f32 %v198, %v7282
    %v7284 = vand.u32 %v7283, 4294901760
    %v7285 = vsub.f32 %v7283, %v7284
    %v7286 = vand.u32 %v7285, 4294901760
    %7287 = vmatpush1.msra.mxu0 %v7286
    %7288 = vmatprep.subr.mxu0 0.0
    %v7289 = vand.u32 %v197, 4294901760
    %v7290 = vsub.f32 %v197, %v7289
    %v7291 = vand.u32 %v7290, 4294901760
    %v7292 = vsub.f32 %v7290, %v7291
    %v7293 = vand.u32 %v7292, 4294901760
    %7294 = vmatpush1.msra.mxu0 %v7293
    %7295 = vmatprep.subr.mxu0 0.0
    %v7296 = vand.u32 %v196, 4294901760
    %v7297 = vsub.f32 %v196, %v7296
    %v7298 = vand.u32 %v7297, 4294901760
    %v7299 = vsub.f32 %v7297, %v7298
    %v7300 = vand.u32 %v7299, 4294901760
    %7301 = vmatpush1.msra.mxu0 %v7300
    %7302 = vmatprep.subr.mxu0 0.0
    %v7303 = vand.u32 %v195, 4294901760
    %v7304 = vsub.f32 %v195, %v7303
    %v7305 = vand.u32 %v7304, 4294901760
    %v7306 = vsub.f32 %v7304, %v7305
    %v7307 = vand.u32 %v7306, 4294901760
    %7308 = vmatpush1.msra.mxu0 %v7307
    %7309 = vmatprep.subr.mxu0 0.0
    %v7310 = vand.u32 %v194, 4294901760
    %v7311 = vsub.f32 %v194, %v7310
    %v7312 = vand.u32 %v7311, 4294901760
    %v7313 = vsub.f32 %v7311, %v7312
    %v7314 = vand.u32 %v7313, 4294901760
    %7315 = vmatpush1.msra.mxu0 %v7314
    %7316 = vmatprep.subr.mxu0 0.0
    %v7317 = vand.u32 %v193, 4294901760
    %v7318 = vsub.f32 %v193, %v7317
    %v7319 = vand.u32 %v7318, 4294901760
    %v7320 = vsub.f32 %v7318, %v7319
    %v7321 = vand.u32 %v7320, 4294901760
    %7322 = vmatpush1.msra.mxu0 %v7321
    %7323 = vmatprep.subr.mxu0 0.0
    %v7324 = vand.u32 %v192, 4294901760
    %v7325 = vsub.f32 %v192, %v7324
    %v7326 = vand.u32 %v7325, 4294901760
    %v7327 = vsub.f32 %v7325, %v7326
    %v7328 = vand.u32 %v7327, 4294901760
    %7329 = vmatpush1.msra.mxu0 %v7328
    %7330 = vmatprep.subr.mxu0 0.0
    %v7331 = vand.u32 %v191, 4294901760
    %v7332 = vsub.f32 %v191, %v7331
    %v7333 = vand.u32 %v7332, 4294901760
    %v7334 = vsub.f32 %v7332, %v7333
    %v7335 = vand.u32 %v7334, 4294901760
    %7336 = vmatpush1.msra.mxu0 %v7335
    %7337 = vmatprep.subr.mxu0 0.0
    %v7338 = vand.u32 %v190, 4294901760
    %v7339 = vsub.f32 %v190, %v7338
    %v7340 = vand.u32 %v7339, 4294901760
    %v7341 = vsub.f32 %v7339, %v7340
    %v7342 = vand.u32 %v7341, 4294901760
    %7343 = vmatpush1.msra.mxu0 %v7342
    %7344 = vmatprep.subr.mxu0 0.0
    %v7345 = vand.u32 %v189, 4294901760
    %v7346 = vsub.f32 %v189, %v7345
    %v7347 = vand.u32 %v7346, 4294901760
    %v7348 = vsub.f32 %v7346, %v7347
    %v7349 = vand.u32 %v7348, 4294901760
    %7350 = vmatpush1.msra.mxu0 %v7349
    %7351 = vmatprep.subr.mxu0 0.0
    %v7352 = vand.u32 %v188, 4294901760
    %v7353 = vsub.f32 %v188, %v7352
    %v7354 = vand.u32 %v7353, 4294901760
    %v7355 = vsub.f32 %v7353, %v7354
    %v7356 = vand.u32 %v7355, 4294901760
    %7357 = vmatpush1.msra.mxu0 %v7356
    %7358 = vmatprep.subr.mxu0 0.0
    %v7359 = vand.u32 %v187, 4294901760
    %v7360 = vsub.f32 %v187, %v7359
    %v7361 = vand.u32 %v7360, 4294901760
    %v7362 = vsub.f32 %v7360, %v7361
    %v7363 = vand.u32 %v7362, 4294901760
    %7364 = vmatpush1.msra.mxu0 %v7363
    %7365 = vmatprep.subr.mxu0 0.0
    %v7366 = vand.u32 %v186, 4294901760
    %v7367 = vsub.f32 %v186, %v7366
    %v7368 = vand.u32 %v7367, 4294901760
    %v7369 = vsub.f32 %v7367, %v7368
    %v7370 = vand.u32 %v7369, 4294901760
    %7371 = vmatpush1.msra.mxu0 %v7370
    %7372 = vmatprep.subr.mxu0 0.0
    %7373 = vmatpush2.msra.mxu0 0.0
    %7374 = vmatprep.subr.mxu0 0.0
    %7375 = vmatpush2.msra.mxu0 0.0
    %7376 = vmatprep.subr.mxu0 0.0
    %7377 = vmatpush2.msra.mxu0 0.0
    %7378 = vmatprep.subr.mxu0 0.0
    %7379 = vmatpush2.msra.mxu0 0.0
    %7380 = vmatprep.subr.mxu0 0.0
    %7381 = vmatpush2.msra.mxu0 0.0
    %7382 = vmatprep.subr.mxu0 0.0
    %7383 = vmatpush2.msra.mxu0 0.0
    %7384 = vmatprep.subr.mxu0 0.0
    %7385 = vmatpush2.msra.mxu0 0.0
    %7386 = vmatprep.subr.mxu0 0.0
    %7387 = vmatpush2.msra.mxu0 0.0
    %7388 = vmatprep.subr.mxu0 0.0
    %7389 = vmatpush2.msra.mxu0 0.0
    %7390 = vmatprep.subr.mxu0 0.0
    %7391 = vmatpush2.msra.mxu0 0.0
    %7392 = vmatprep.subr.mxu0 0.0
    %7393 = vmatpush2.msra.mxu0 0.0
    %7394 = vmatprep.subr.mxu0 0.0
    %7395 = vmatpush2.msra.mxu0 0.0
    %7396 = vmatprep.subr.mxu0 0.0
    %7397 = vmatpush2.msra.mxu0 0.0
    %7398 = vmatprep.subr.mxu0 0.0
    %7399 = vmatpush2.msra.mxu0 0.0
    %7400 = vmatprep.subr.mxu0 0.0
    %7401 = vmatpush2.msra.mxu0 0.0
    %7402 = vmatprep.subr.mxu0 0.0
    %7403 = vmatpush2.msra.mxu0 0.0
    %7404 = vmatprep.mubr.f32.mxu0 0.0
    %v7405 = vand.u32 %v6416, 4294901760
    %7406 = vmatmul.mubr.f32.gmra.mxu0 %v7405
    %v7407 = vpop.f32.mrf.mxu0
    %v7408 = vadd.f32 %v7247, %v7407
    %v7409 = vpop.f32.mrf.mxu0
    %7410 = vmatprep.mubr.f32.mxu0 0.0
    %v7411 = vand.u32 %v6418, 4294901760
    %7412 = vmatmul.mubr.f32.gmra.mxu0 %v7411
    %v7413 = vpop.f32.mrf.mxu0
    %v7414 = vadd.f32 %v7257, %v7413
    %v7415 = vpop.f32.mrf.mxu0
    %7416 = vdwg.mxu0
    %7417 = vmatprep.subr.mxu0 0.0
    %v7418 = vand.u32 %v201, 4294901760
    %v7419 = vsub.f32 %v201, %v7418
    %7420 = vmatpush1.msra.mxu0 %v7419
    %7421 = vmatprep.subr.mxu0 0.0
    %v7422 = vand.u32 %v200, 4294901760
    %v7423 = vsub.f32 %v200, %v7422
    %7424 = vmatpush1.msra.mxu0 %v7423
    %7425 = vmatprep.subr.mxu0 0.0
    %v7426 = vand.u32 %v199, 4294901760
    %v7427 = vsub.f32 %v199, %v7426
    %7428 = vmatpush1.msra.mxu0 %v7427
    %7429 = vmatprep.subr.mxu0 0.0
    %v7430 = vand.u32 %v198, 4294901760
    %v7431 = vsub.f32 %v198, %v7430
    %7432 = vmatpush1.msra.mxu0 %v7431
    %7433 = vmatprep.subr.mxu0 0.0
    %v7434 = vand.u32 %v197, 4294901760
    %v7435 = vsub.f32 %v197, %v7434
    %7436 = vmatpush1.msra.mxu0 %v7435
    %7437 = vmatprep.subr.mxu0 0.0
    %v7438 = vand.u32 %v196, 4294901760
    %v7439 = vsub.f32 %v196, %v7438
    %7440 = vmatpush1.msra.mxu0 %v7439
    %7441 = vmatprep.subr.mxu0 0.0
    %v7442 = vand.u32 %v195, 4294901760
    %v7443 = vsub.f32 %v195, %v7442
    %7444 = vmatpush1.msra.mxu0 %v7443
    %7445 = vmatprep.subr.mxu0 0.0
    %v7446 = vand.u32 %v194, 4294901760
    %v7447 = vsub.f32 %v194, %v7446
    %7448 = vmatpush1.msra.mxu0 %v7447
    %7449 = vmatprep.subr.mxu0 0.0
    %v7450 = vand.u32 %v193, 4294901760
    %v7451 = vsub.f32 %v193, %v7450
    %7452 = vmatpush1.msra.mxu0 %v7451
    %7453 = vmatprep.subr.mxu0 0.0
    %v7454 = vand.u32 %v192, 4294901760
    %v7455 = vsub.f32 %v192, %v7454
    %7456 = vmatpush1.msra.mxu0 %v7455
    %7457 = vmatprep.subr.mxu0 0.0
    %v7458 = vand.u32 %v191, 4294901760
    %v7459 = vsub.f32 %v191, %v7458
    %7460 = vmatpush1.msra.mxu0 %v7459
    %7461 = vmatprep.subr.mxu0 0.0
    %v7462 = vand.u32 %v190, 4294901760
    %v7463 = vsub.f32 %v190, %v7462
    %7464 = vmatpush1.msra.mxu0 %v7463
    %7465 = vmatprep.subr.mxu0 0.0
    %v7466 = vand.u32 %v189, 4294901760
    %v7467 = vsub.f32 %v189, %v7466
    %7468 = vmatpush1.msra.mxu0 %v7467
    %7469 = vmatprep.subr.mxu0 0.0
    %v7470 = vand.u32 %v188, 4294901760
    %v7471 = vsub.f32 %v188, %v7470
    %7472 = vmatpush1.msra.mxu0 %v7471
    %7473 = vmatprep.subr.mxu0 0.0
    %v7474 = vand.u32 %v187, 4294901760
    %v7475 = vsub.f32 %v187, %v7474
    %7476 = vmatpush1.msra.mxu0 %v7475
    %7477 = vmatprep.subr.mxu0 0.0
    %v7478 = vand.u32 %v186, 4294901760
    %v7479 = vsub.f32 %v186, %v7478
    %7480 = vmatpush1.msra.mxu0 %v7479
    %7481 = vmatprep.subr.mxu0 0.0
    %7482 = vmatpush2.msra.mxu0 0.0
    %7483 = vmatprep.subr.mxu0 0.0
    %7484 = vmatpush2.msra.mxu0 0.0
    %7485 = vmatprep.subr.mxu0 0.0
    %7486 = vmatpush2.msra.mxu0 0.0
    %7487 = vmatprep.subr.mxu0 0.0
    %7488 = vmatpush2.msra.mxu0 0.0
    %7489 = vmatprep.subr.mxu0 0.0
    %7490 = vmatpush2.msra.mxu0 0.0
    %7491 = vmatprep.subr.mxu0 0.0
    %7492 = vmatpush2.msra.mxu0 0.0
    %7493 = vmatprep.subr.mxu0 0.0
    %7494 = vmatpush2.msra.mxu0 0.0
    %7495 = vmatprep.subr.mxu0 0.0
    %7496 = vmatpush2.msra.mxu0 0.0
    %7497 = vmatprep.subr.mxu0 0.0
    %7498 = vmatpush2.msra.mxu0 0.0
    %7499 = vmatprep.subr.mxu0 0.0
    %7500 = vmatpush2.msra.mxu0 0.0
    %7501 = vmatprep.subr.mxu0 0.0
    %7502 = vmatpush2.msra.mxu0 0.0
    %7503 = vmatprep.subr.mxu0 0.0
    %7504 = vmatpush2.msra.mxu0 0.0
    %7505 = vmatprep.subr.mxu0 0.0
    %7506 = vmatpush2.msra.mxu0 0.0
    %7507 = vmatprep.subr.mxu0 0.0
    %7508 = vmatpush2.msra.mxu0 0.0
    %7509 = vmatprep.subr.mxu0 0.0
    %7510 = vmatpush2.msra.mxu0 0.0
    %7511 = vmatprep.subr.mxu0 0.0
    %7512 = vmatpush2.msra.mxu0 0.0
    %7513 = vmatprep.mubr.f32.mxu0 0.0
    %v7514 = vand.u32 %v6416, 4294901760
    %v7515 = vsub.f32 %v6416, %v7514
    %7516 = vmatmul.mubr.f32.gmra.mxu0 %v7515
    %v7517 = vpop.f32.mrf.mxu0
    %v7518 = vadd.f32 %v7408, %v7517
    %v7519 = vpop.f32.mrf.mxu0
    %7520 = vmatprep.mubr.f32.mxu0 0.0
    %v7521 = vand.u32 %v6418, 4294901760
    %v7522 = vsub.f32 %v6418, %v7521
    %7523 = vmatmul.mubr.f32.gmra.mxu0 %v7522
    %v7524 = vpop.f32.mrf.mxu0
    %v7525 = vadd.f32 %v7414, %v7524
    %v7526 = vpop.f32.mrf.mxu0
    %7527 = vdwg.mxu0
    %7528 = vmatprep.subr.mxu0 0.0
    %v7529 = vand.u32 %v201, 4294901760
    %7530 = vmatpush1.msra.mxu0 %v7529
    %7531 = vmatprep.subr.mxu0 0.0
    %v7532 = vand.u32 %v200, 4294901760
    %7533 = vmatpush1.msra.mxu0 %v7532
    %7534 = vmatprep.subr.mxu0 0.0
    %v7535 = vand.u32 %v199, 4294901760
    %7536 = vmatpush1.msra.mxu0 %v7535
    %7537 = vmatprep.subr.mxu0 0.0
    %v7538 = vand.u32 %v198, 4294901760
    %7539 = vmatpush1.msra.mxu0 %v7538
    %7540 = vmatprep.subr.mxu0 0.0
    %v7541 = vand.u32 %v197, 4294901760
    %7542 = vmatpush1.msra.mxu0 %v7541
    %7543 = vmatprep.subr.mxu0 0.0
    %v7544 = vand.u32 %v196, 4294901760
    %7545 = vmatpush1.msra.mxu0 %v7544
    %7546 = vmatprep.subr.mxu0 0.0
    %v7547 = vand.u32 %v195, 4294901760
    %7548 = vmatpush1.msra.mxu0 %v7547
    %7549 = vmatprep.subr.mxu0 0.0
    %v7550 = vand.u32 %v194, 4294901760
    %7551 = vmatpush1.msra.mxu0 %v7550
    %7552 = vmatprep.subr.mxu0 0.0
    %v7553 = vand.u32 %v193, 4294901760
    %7554 = vmatpush1.msra.mxu0 %v7553
    %7555 = vmatprep.subr.mxu0 0.0
    %v7556 = vand.u32 %v192, 4294901760
    %7557 = vmatpush1.msra.mxu0 %v7556
    %7558 = vmatprep.subr.mxu0 0.0
    %v7559 = vand.u32 %v191, 4294901760
    %7560 = vmatpush1.msra.mxu0 %v7559
    %7561 = vmatprep.subr.mxu0 0.0
    %v7562 = vand.u32 %v190, 4294901760
    %7563 = vmatpush1.msra.mxu0 %v7562
    %7564 = vmatprep.subr.mxu0 0.0
    %v7565 = vand.u32 %v189, 4294901760
    %7566 = vmatpush1.msra.mxu0 %v7565
    %7567 = vmatprep.subr.mxu0 0.0
    %v7568 = vand.u32 %v188, 4294901760
    %7569 = vmatpush1.msra.mxu0 %v7568
    %7570 = vmatprep.subr.mxu0 0.0
    %v7571 = vand.u32 %v187, 4294901760
    %7572 = vmatpush1.msra.mxu0 %v7571
    %7573 = vmatprep.subr.mxu0 0.0
    %v7574 = vand.u32 %v186, 4294901760
    %7575 = vmatpush1.msra.mxu0 %v7574
    %7576 = vmatprep.subr.mxu0 0.0
    %7577 = vmatpush2.msra.mxu0 0.0
    %7578 = vmatprep.subr.mxu0 0.0
    %7579 = vmatpush2.msra.mxu0 0.0
    %7580 = vmatprep.subr.mxu0 0.0
    %7581 = vmatpush2.msra.mxu0 0.0
    %7582 = vmatprep.subr.mxu0 0.0
    %7583 = vmatpush2.msra.mxu0 0.0
    %7584 = vmatprep.subr.mxu0 0.0
    %7585 = vmatpush2.msra.mxu0 0.0
    %7586 = vmatprep.subr.mxu0 0.0
    %7587 = vmatpush2.msra.mxu0 0.0
    %7588 = vmatprep.subr.mxu0 0.0
    %7589 = vmatpush2.msra.mxu0 0.0
    %7590 = vmatprep.subr.mxu0 0.0
    %7591 = vmatpush2.msra.mxu0 0.0
    %7592 = vmatprep.subr.mxu0 0.0
    %7593 = vmatpush2.msra.mxu0 0.0
    %7594 = vmatprep.subr.mxu0 0.0
    %7595 = vmatpush2.msra.mxu0 0.0
    %7596 = vmatprep.subr.mxu0 0.0
    %7597 = vmatpush2.msra.mxu0 0.0
    %7598 = vmatprep.subr.mxu0 0.0
    %7599 = vmatpush2.msra.mxu0 0.0
    %7600 = vmatprep.subr.mxu0 0.0
    %7601 = vmatpush2.msra.mxu0 0.0
    %7602 = vmatprep.subr.mxu0 0.0
    %7603 = vmatpush2.msra.mxu0 0.0
    %7604 = vmatprep.subr.mxu0 0.0
    %7605 = vmatpush2.msra.mxu0 0.0
    %7606 = vmatprep.subr.mxu0 0.0
    %7607 = vmatpush2.msra.mxu0 0.0
    %7608 = vmatprep.mubr.f32.mxu0 0.0
    %v7609 = vand.u32 %v6416, 4294901760
    %v7610 = vsub.f32 %v6416, %v7609
    %v7611 = vand.u32 %v7610, 4294901760
    %7612 = vmatmul.mubr.f32.gmra.mxu0 %v7611
    %v7613 = vpop.f32.mrf.mxu0
    %v7614 = vadd.f32 %v7518, %v7613
    %v7615 = vpop.f32.mrf.mxu0
    %7616 = vmatprep.mubr.f32.mxu0 0.0
    %v7617 = vand.u32 %v6418, 4294901760
    %v7618 = vsub.f32 %v6418, %v7617
    %v7619 = vand.u32 %v7618, 4294901760
    %7620 = vmatmul.mubr.f32.gmra.mxu0 %v7619
    %v7621 = vpop.f32.mrf.mxu0
    %v7622 = vadd.f32 %v7525, %v7621
    %v7623 = vpop.f32.mrf.mxu0
    %7624 = vdwg.mxu0
    %7625 = vmatprep.subr.mxu0 0.0
    %v7626 = vand.u32 %v201, 4294901760
    %v7627 = vsub.f32 %v201, %v7626
    %v7628 = vand.u32 %v7627, 4294901760
    %7629 = vmatpush1.msra.mxu0 %v7628
    %7630 = vmatprep.subr.mxu0 0.0
    %v7631 = vand.u32 %v200, 4294901760
    %v7632 = vsub.f32 %v200, %v7631
    %v7633 = vand.u32 %v7632, 4294901760
    %7634 = vmatpush1.msra.mxu0 %v7633
    %7635 = vmatprep.subr.mxu0 0.0
    %v7636 = vand.u32 %v199, 4294901760
    %v7637 = vsub.f32 %v199, %v7636
    %v7638 = vand.u32 %v7637, 4294901760
    %7639 = vmatpush1.msra.mxu0 %v7638
    %7640 = vmatprep.subr.mxu0 0.0
    %v7641 = vand.u32 %v198, 4294901760
    %v7642 = vsub.f32 %v198, %v7641
    %v7643 = vand.u32 %v7642, 4294901760
    %7644 = vmatpush1.msra.mxu0 %v7643
    %7645 = vmatprep.subr.mxu0 0.0
    %v7646 = vand.u32 %v197, 4294901760
    %v7647 = vsub.f32 %v197, %v7646
    %v7648 = vand.u32 %v7647, 4294901760
    %7649 = vmatpush1.msra.mxu0 %v7648
    %7650 = vmatprep.subr.mxu0 0.0
    %v7651 = vand.u32 %v196, 4294901760
    %v7652 = vsub.f32 %v196, %v7651
    %v7653 = vand.u32 %v7652, 4294901760
    %7654 = vmatpush1.msra.mxu0 %v7653
    %7655 = vmatprep.subr.mxu0 0.0
    %v7656 = vand.u32 %v195, 4294901760
    %v7657 = vsub.f32 %v195, %v7656
    %v7658 = vand.u32 %v7657, 4294901760
    %7659 = vmatpush1.msra.mxu0 %v7658
    %7660 = vmatprep.subr.mxu0 0.0
    %v7661 = vand.u32 %v194, 4294901760
    %v7662 = vsub.f32 %v194, %v7661
    %v7663 = vand.u32 %v7662, 4294901760
    %7664 = vmatpush1.msra.mxu0 %v7663
    %7665 = vmatprep.subr.mxu0 0.0
    %v7666 = vand.u32 %v193, 4294901760
    %v7667 = vsub.f32 %v193, %v7666
    %v7668 = vand.u32 %v7667, 4294901760
    %7669 = vmatpush1.msra.mxu0 %v7668
    %7670 = vmatprep.subr.mxu0 0.0
    %v7671 = vand.u32 %v192, 4294901760
    %v7672 = vsub.f32 %v192, %v7671
    %v7673 = vand.u32 %v7672, 4294901760
    %7674 = vmatpush1.msra.mxu0 %v7673
    %7675 = vmatprep.subr.mxu0 0.0
    %v7676 = vand.u32 %v191, 4294901760
    %v7677 = vsub.f32 %v191, %v7676
    %v7678 = vand.u32 %v7677, 4294901760
    %7679 = vmatpush1.msra.mxu0 %v7678
    %7680 = vmatprep.subr.mxu0 0.0
    %v7681 = vand.u32 %v190, 4294901760
    %v7682 = vsub.f32 %v190, %v7681
    %v7683 = vand.u32 %v7682, 4294901760
    %7684 = vmatpush1.msra.mxu0 %v7683
    %7685 = vmatprep.subr.mxu0 0.0
    %v7686 = vand.u32 %v189, 4294901760
    %v7687 = vsub.f32 %v189, %v7686
    %v7688 = vand.u32 %v7687, 4294901760
    %7689 = vmatpush1.msra.mxu0 %v7688
    %7690 = vmatprep.subr.mxu0 0.0
    %v7691 = vand.u32 %v188, 4294901760
    %v7692 = vsub.f32 %v188, %v7691
    %v7693 = vand.u32 %v7692, 4294901760
    %7694 = vmatpush1.msra.mxu0 %v7693
    %7695 = vmatprep.subr.mxu0 0.0
    %v7696 = vand.u32 %v187, 4294901760
    %v7697 = vsub.f32 %v187, %v7696
    %v7698 = vand.u32 %v7697, 4294901760
    %7699 = vmatpush1.msra.mxu0 %v7698
    %7700 = vmatprep.subr.mxu0 0.0
    %v7701 = vand.u32 %v186, 4294901760
    %v7702 = vsub.f32 %v186, %v7701
    %v7703 = vand.u32 %v7702, 4294901760
    %7704 = vmatpush1.msra.mxu0 %v7703
    %7705 = vmatprep.subr.mxu0 0.0
    %7706 = vmatpush2.msra.mxu0 0.0
    %7707 = vmatprep.subr.mxu0 0.0
    %7708 = vmatpush2.msra.mxu0 0.0
    %7709 = vmatprep.subr.mxu0 0.0
    %7710 = vmatpush2.msra.mxu0 0.0
    %7711 = vmatprep.subr.mxu0 0.0
    %7712 = vmatpush2.msra.mxu0 0.0
    %7713 = vmatprep.subr.mxu0 0.0
    %7714 = vmatpush2.msra.mxu0 0.0
    %7715 = vmatprep.subr.mxu0 0.0
    %7716 = vmatpush2.msra.mxu0 0.0
    %7717 = vmatprep.subr.mxu0 0.0
    %7718 = vmatpush2.msra.mxu0 0.0
    %7719 = vmatprep.subr.mxu0 0.0
    %7720 = vmatpush2.msra.mxu0 0.0
    %7721 = vmatprep.subr.mxu0 0.0
    %7722 = vmatpush2.msra.mxu0 0.0
    %7723 = vmatprep.subr.mxu0 0.0
    %7724 = vmatpush2.msra.mxu0 0.0
    %7725 = vmatprep.subr.mxu0 0.0
    %7726 = vmatpush2.msra.mxu0 0.0
    %7727 = vmatprep.subr.mxu0 0.0
    %7728 = vmatpush2.msra.mxu0 0.0
    %7729 = vmatprep.subr.mxu0 0.0
    %7730 = vmatpush2.msra.mxu0 0.0
    %7731 = vmatprep.subr.mxu0 0.0
    %7732 = vmatpush2.msra.mxu0 0.0
    %7733 = vmatprep.subr.mxu0 0.0
    %7734 = vmatpush2.msra.mxu0 0.0
    %7735 = vmatprep.subr.mxu0 0.0
    %7736 = vmatpush2.msra.mxu0 0.0
    %7737 = vmatprep.mubr.f32.mxu0 0.0
    %v7738 = vand.u32 %v6416, 4294901760
    %7739 = vmatmul.mubr.f32.gmra.mxu0 %v7738
    %v7740 = vpop.f32.mrf.mxu0
    %v7741 = vadd.f32 %v7614, %v7740
    %v7742 = vpop.f32.mrf.mxu0
    %7743 = vmatprep.mubr.f32.mxu0 0.0
    %v7744 = vand.u32 %v6418, 4294901760
    %7745 = vmatmul.mubr.f32.gmra.mxu0 %v7744
    %v7746 = vpop.f32.mrf.mxu0
    %v7747 = vadd.f32 %v7622, %v7746
    %v7748 = vpop.f32.mrf.mxu0
    %7749 = vdwg.mxu0
    %7750 = vmatprep.subr.mxu0 0.0
    %v7751 = vand.u32 %v201, 4294901760
    %7752 = vmatpush1.msra.mxu0 %v7751
    %7753 = vmatprep.subr.mxu0 0.0
    %v7754 = vand.u32 %v200, 4294901760
    %7755 = vmatpush1.msra.mxu0 %v7754
    %7756 = vmatprep.subr.mxu0 0.0
    %v7757 = vand.u32 %v199, 4294901760
    %7758 = vmatpush1.msra.mxu0 %v7757
    %7759 = vmatprep.subr.mxu0 0.0
    %v7760 = vand.u32 %v198, 4294901760
    %7761 = vmatpush1.msra.mxu0 %v7760
    %7762 = vmatprep.subr.mxu0 0.0
    %v7763 = vand.u32 %v197, 4294901760
    %7764 = vmatpush1.msra.mxu0 %v7763
    %7765 = vmatprep.subr.mxu0 0.0
    %v7766 = vand.u32 %v196, 4294901760
    %7767 = vmatpush1.msra.mxu0 %v7766
    %7768 = vmatprep.subr.mxu0 0.0
    %v7769 = vand.u32 %v195, 4294901760
    %7770 = vmatpush1.msra.mxu0 %v7769
    %7771 = vmatprep.subr.mxu0 0.0
    %v7772 = vand.u32 %v194, 4294901760
    %7773 = vmatpush1.msra.mxu0 %v7772
    %7774 = vmatprep.subr.mxu0 0.0
    %v7775 = vand.u32 %v193, 4294901760
    %7776 = vmatpush1.msra.mxu0 %v7775
    %7777 = vmatprep.subr.mxu0 0.0
    %v7778 = vand.u32 %v192, 4294901760
    %7779 = vmatpush1.msra.mxu0 %v7778
    %7780 = vmatprep.subr.mxu0 0.0
    %v7781 = vand.u32 %v191, 4294901760
    %7782 = vmatpush1.msra.mxu0 %v7781
    %7783 = vmatprep.subr.mxu0 0.0
    %v7784 = vand.u32 %v190, 4294901760
    %7785 = vmatpush1.msra.mxu0 %v7784
    %7786 = vmatprep.subr.mxu0 0.0
    %v7787 = vand.u32 %v189, 4294901760
    %7788 = vmatpush1.msra.mxu0 %v7787
    %7789 = vmatprep.subr.mxu0 0.0
    %v7790 = vand.u32 %v188, 4294901760
    %7791 = vmatpush1.msra.mxu0 %v7790
    %7792 = vmatprep.subr.mxu0 0.0
    %v7793 = vand.u32 %v187, 4294901760
    %7794 = vmatpush1.msra.mxu0 %v7793
    %7795 = vmatprep.subr.mxu0 0.0
    %v7796 = vand.u32 %v186, 4294901760
    %7797 = vmatpush1.msra.mxu0 %v7796
    %7798 = vmatprep.subr.mxu0 0.0
    %7799 = vmatpush2.msra.mxu0 0.0
    %7800 = vmatprep.subr.mxu0 0.0
    %7801 = vmatpush2.msra.mxu0 0.0
    %7802 = vmatprep.subr.mxu0 0.0
    %7803 = vmatpush2.msra.mxu0 0.0
    %7804 = vmatprep.subr.mxu0 0.0
    %7805 = vmatpush2.msra.mxu0 0.0
    %7806 = vmatprep.subr.mxu0 0.0
    %7807 = vmatpush2.msra.mxu0 0.0
    %7808 = vmatprep.subr.mxu0 0.0
    %7809 = vmatpush2.msra.mxu0 0.0
    %7810 = vmatprep.subr.mxu0 0.0
    %7811 = vmatpush2.msra.mxu0 0.0
    %7812 = vmatprep.subr.mxu0 0.0
    %7813 = vmatpush2.msra.mxu0 0.0
    %7814 = vmatprep.subr.mxu0 0.0
    %7815 = vmatpush2.msra.mxu0 0.0
    %7816 = vmatprep.subr.mxu0 0.0
    %7817 = vmatpush2.msra.mxu0 0.0
    %7818 = vmatprep.subr.mxu0 0.0
    %7819 = vmatpush2.msra.mxu0 0.0
    %7820 = vmatprep.subr.mxu0 0.0
    %7821 = vmatpush2.msra.mxu0 0.0
    %7822 = vmatprep.subr.mxu0 0.0
    %7823 = vmatpush2.msra.mxu0 0.0
    %7824 = vmatprep.subr.mxu0 0.0
    %7825 = vmatpush2.msra.mxu0 0.0
    %7826 = vmatprep.subr.mxu0 0.0
    %7827 = vmatpush2.msra.mxu0 0.0
    %7828 = vmatprep.subr.mxu0 0.0
    %7829 = vmatpush2.msra.mxu0 0.0
    %7830 = vmatprep.mubr.f32.mxu0 0.0
    %v7831 = vand.u32 %v6416, 4294901760
    %7832 = vmatmul.mubr.f32.gmra.mxu0 %v7831
    %v7833 = vpop.f32.mrf.mxu0
    %v7834 = vadd.f32 %v7741, %v7833
    %v7835 = vpop.f32.mrf.mxu0
    %7836 = vmatprep.mubr.f32.mxu0 0.0
    %v7837 = vand.u32 %v6418, 4294901760
    %7838 = vmatmul.mubr.f32.gmra.mxu0 %v7837
    %v7839 = vpop.f32.mrf.mxu0
    %v7840 = vadd.f32 %v7747, %v7839
    %v7841 = vpop.f32.mrf.mxu0
    %7842 = vdwg.mxu0
    %7843 = vmatprep.subr.mxu0 0.0
    %v7844 = vand.u32 %v217, 4294901760
    %7845 = vmatpush1.msra.mxu0 %v7844
    %7846 = vmatprep.subr.mxu0 0.0
    %v7847 = vand.u32 %v216, 4294901760
    %7848 = vmatpush1.msra.mxu0 %v7847
    %7849 = vmatprep.subr.mxu0 0.0
    %v7850 = vand.u32 %v215, 4294901760
    %7851 = vmatpush1.msra.mxu0 %v7850
    %7852 = vmatprep.subr.mxu0 0.0
    %v7853 = vand.u32 %v214, 4294901760
    %7854 = vmatpush1.msra.mxu0 %v7853
    %7855 = vmatprep.subr.mxu0 0.0
    %v7856 = vand.u32 %v213, 4294901760
    %7857 = vmatpush1.msra.mxu0 %v7856
    %7858 = vmatprep.subr.mxu0 0.0
    %v7859 = vand.u32 %v212, 4294901760
    %7860 = vmatpush1.msra.mxu0 %v7859
    %7861 = vmatprep.subr.mxu0 0.0
    %v7862 = vand.u32 %v211, 4294901760
    %7863 = vmatpush1.msra.mxu0 %v7862
    %7864 = vmatprep.subr.mxu0 0.0
    %v7865 = vand.u32 %v210, 4294901760
    %7866 = vmatpush1.msra.mxu0 %v7865
    %7867 = vmatprep.subr.mxu0 0.0
    %v7868 = vand.u32 %v209, 4294901760
    %7869 = vmatpush1.msra.mxu0 %v7868
    %7870 = vmatprep.subr.mxu0 0.0
    %v7871 = vand.u32 %v208, 4294901760
    %7872 = vmatpush1.msra.mxu0 %v7871
    %7873 = vmatprep.subr.mxu0 0.0
    %v7874 = vand.u32 %v207, 4294901760
    %7875 = vmatpush1.msra.mxu0 %v7874
    %7876 = vmatprep.subr.mxu0 0.0
    %v7877 = vand.u32 %v206, 4294901760
    %7878 = vmatpush1.msra.mxu0 %v7877
    %7879 = vmatprep.subr.mxu0 0.0
    %v7880 = vand.u32 %v205, 4294901760
    %7881 = vmatpush1.msra.mxu0 %v7880
    %7882 = vmatprep.subr.mxu0 0.0
    %v7883 = vand.u32 %v204, 4294901760
    %7884 = vmatpush1.msra.mxu0 %v7883
    %7885 = vmatprep.subr.mxu0 0.0
    %v7886 = vand.u32 %v203, 4294901760
    %7887 = vmatpush1.msra.mxu0 %v7886
    %7888 = vmatprep.subr.mxu0 0.0
    %v7889 = vand.u32 %v202, 4294901760
    %7890 = vmatpush1.msra.mxu0 %v7889
    %7891 = vmatprep.subr.mxu0 0.0
    %7892 = vmatpush2.msra.mxu0 0.0
    %7893 = vmatprep.subr.mxu0 0.0
    %7894 = vmatpush2.msra.mxu0 0.0
    %7895 = vmatprep.subr.mxu0 0.0
    %7896 = vmatpush2.msra.mxu0 0.0
    %7897 = vmatprep.subr.mxu0 0.0
    %7898 = vmatpush2.msra.mxu0 0.0
    %7899 = vmatprep.subr.mxu0 0.0
    %7900 = vmatpush2.msra.mxu0 0.0
    %7901 = vmatprep.subr.mxu0 0.0
    %7902 = vmatpush2.msra.mxu0 0.0
    %7903 = vmatprep.subr.mxu0 0.0
    %7904 = vmatpush2.msra.mxu0 0.0
    %7905 = vmatprep.subr.mxu0 0.0
    %7906 = vmatpush2.msra.mxu0 0.0
    %7907 = vmatprep.subr.mxu0 0.0
    %7908 = vmatpush2.msra.mxu0 0.0
    %7909 = vmatprep.subr.mxu0 0.0
    %7910 = vmatpush2.msra.mxu0 0.0
    %7911 = vmatprep.subr.mxu0 0.0
    %7912 = vmatpush2.msra.mxu0 0.0
    %7913 = vmatprep.subr.mxu0 0.0
    %7914 = vmatpush2.msra.mxu0 0.0
    %7915 = vmatprep.subr.mxu0 0.0
    %7916 = vmatpush2.msra.mxu0 0.0
    %7917 = vmatprep.subr.mxu0 0.0
    %7918 = vmatpush2.msra.mxu0 0.0
    %7919 = vmatprep.subr.mxu0 0.0
    %7920 = vmatpush2.msra.mxu0 0.0
    %7921 = vmatprep.subr.mxu0 0.0
    %7922 = vmatpush2.msra.mxu0 0.0
    %7923 = vmatprep.mubr.f32.mxu0 0.0
    %v7924 = vand.u32 %v6420, 4294901760
    %v7925 = vsub.f32 %v6420, %v7924
    %v7926 = vand.u32 %v7925, 4294901760
    %v7927 = vsub.f32 %v7925, %v7926
    %v7928 = vand.u32 %v7927, 4294901760
    %7929 = vmatmul.mubr.f32.gmra.mxu0 %v7928
    %v7930 = vpop.f32.mrf.mxu0
    %v7931 = vadd.f32 0.0, %v7930
    %v7932 = vpop.f32.mrf.mxu0
    %7933 = vmatprep.mubr.f32.mxu0 0.0
    %v7934 = vand.u32 %v6422, 4294901760
    %v7935 = vsub.f32 %v6422, %v7934
    %v7936 = vand.u32 %v7935, 4294901760
    %v7937 = vsub.f32 %v7935, %v7936
    %v7938 = vand.u32 %v7937, 4294901760
    %7939 = vmatmul.mubr.f32.gmra.mxu0 %v7938
    %v7940 = vpop.f32.mrf.mxu0
    %v7941 = vadd.f32 0.0, %v7940
    %v7942 = vpop.f32.mrf.mxu0
    %7943 = vdwg.mxu0
    %7944 = vmatprep.subr.mxu0 0.0
    %v7945 = vand.u32 %v217, 4294901760
    %v7946 = vsub.f32 %v217, %v7945
    %v7947 = vand.u32 %v7946, 4294901760
    %v7948 = vsub.f32 %v7946, %v7947
    %v7949 = vand.u32 %v7948, 4294901760
    %7950 = vmatpush1.msra.mxu0 %v7949
    %7951 = vmatprep.subr.mxu0 0.0
    %v7952 = vand.u32 %v216, 4294901760
    %v7953 = vsub.f32 %v216, %v7952
    %v7954 = vand.u32 %v7953, 4294901760
    %v7955 = vsub.f32 %v7953, %v7954
    %v7956 = vand.u32 %v7955, 4294901760
    %7957 = vmatpush1.msra.mxu0 %v7956
    %7958 = vmatprep.subr.mxu0 0.0
    %v7959 = vand.u32 %v215, 4294901760
    %v7960 = vsub.f32 %v215, %v7959
    %v7961 = vand.u32 %v7960, 4294901760
    %v7962 = vsub.f32 %v7960, %v7961
    %v7963 = vand.u32 %v7962, 4294901760
    %7964 = vmatpush1.msra.mxu0 %v7963
    %7965 = vmatprep.subr.mxu0 0.0
    %v7966 = vand.u32 %v214, 4294901760
    %v7967 = vsub.f32 %v214, %v7966
    %v7968 = vand.u32 %v7967, 4294901760
    %v7969 = vsub.f32 %v7967, %v7968
    %v7970 = vand.u32 %v7969, 4294901760
    %7971 = vmatpush1.msra.mxu0 %v7970
    %7972 = vmatprep.subr.mxu0 0.0
    %v7973 = vand.u32 %v213, 4294901760
    %v7974 = vsub.f32 %v213, %v7973
    %v7975 = vand.u32 %v7974, 4294901760
    %v7976 = vsub.f32 %v7974, %v7975
    %v7977 = vand.u32 %v7976, 4294901760
    %7978 = vmatpush1.msra.mxu0 %v7977
    %7979 = vmatprep.subr.mxu0 0.0
    %v7980 = vand.u32 %v212, 4294901760
    %v7981 = vsub.f32 %v212, %v7980
    %v7982 = vand.u32 %v7981, 4294901760
    %v7983 = vsub.f32 %v7981, %v7982
    %v7984 = vand.u32 %v7983, 4294901760
    %7985 = vmatpush1.msra.mxu0 %v7984
    %7986 = vmatprep.subr.mxu0 0.0
    %v7987 = vand.u32 %v211, 4294901760
    %v7988 = vsub.f32 %v211, %v7987
    %v7989 = vand.u32 %v7988, 4294901760
    %v7990 = vsub.f32 %v7988, %v7989
    %v7991 = vand.u32 %v7990, 4294901760
    %7992 = vmatpush1.msra.mxu0 %v7991
    %7993 = vmatprep.subr.mxu0 0.0
    %v7994 = vand.u32 %v210, 4294901760
    %v7995 = vsub.f32 %v210, %v7994
    %v7996 = vand.u32 %v7995, 4294901760
    %v7997 = vsub.f32 %v7995, %v7996
    %v7998 = vand.u32 %v7997, 4294901760
    %7999 = vmatpush1.msra.mxu0 %v7998
    %8000 = vmatprep.subr.mxu0 0.0
    %v8001 = vand.u32 %v209, 4294901760
    %v8002 = vsub.f32 %v209, %v8001
    %v8003 = vand.u32 %v8002, 4294901760
    %v8004 = vsub.f32 %v8002, %v8003
    %v8005 = vand.u32 %v8004, 4294901760
    %8006 = vmatpush1.msra.mxu0 %v8005
    %8007 = vmatprep.subr.mxu0 0.0
    %v8008 = vand.u32 %v208, 4294901760
    %v8009 = vsub.f32 %v208, %v8008
    %v8010 = vand.u32 %v8009, 4294901760
    %v8011 = vsub.f32 %v8009, %v8010
    %v8012 = vand.u32 %v8011, 4294901760
    %8013 = vmatpush1.msra.mxu0 %v8012
    %8014 = vmatprep.subr.mxu0 0.0
    %v8015 = vand.u32 %v207, 4294901760
    %v8016 = vsub.f32 %v207, %v8015
    %v8017 = vand.u32 %v8016, 4294901760
    %v8018 = vsub.f32 %v8016, %v8017
    %v8019 = vand.u32 %v8018, 4294901760
    %8020 = vmatpush1.msra.mxu0 %v8019
    %8021 = vmatprep.subr.mxu0 0.0
    %v8022 = vand.u32 %v206, 4294901760
    %v8023 = vsub.f32 %v206, %v8022
    %v8024 = vand.u32 %v8023, 4294901760
    %v8025 = vsub.f32 %v8023, %v8024
    %v8026 = vand.u32 %v8025, 4294901760
    %8027 = vmatpush1.msra.mxu0 %v8026
    %8028 = vmatprep.subr.mxu0 0.0
    %v8029 = vand.u32 %v205, 4294901760
    %v8030 = vsub.f32 %v205, %v8029
    %v8031 = vand.u32 %v8030, 4294901760
    %v8032 = vsub.f32 %v8030, %v8031
    %v8033 = vand.u32 %v8032, 4294901760
    %8034 = vmatpush1.msra.mxu0 %v8033
    %8035 = vmatprep.subr.mxu0 0.0
    %v8036 = vand.u32 %v204, 4294901760
    %v8037 = vsub.f32 %v204, %v8036
    %v8038 = vand.u32 %v8037, 4294901760
    %v8039 = vsub.f32 %v8037, %v8038
    %v8040 = vand.u32 %v8039, 4294901760
    %8041 = vmatpush1.msra.mxu0 %v8040
    %8042 = vmatprep.subr.mxu0 0.0
    %v8043 = vand.u32 %v203, 4294901760
    %v8044 = vsub.f32 %v203, %v8043
    %v8045 = vand.u32 %v8044, 4294901760
    %v8046 = vsub.f32 %v8044, %v8045
    %v8047 = vand.u32 %v8046, 4294901760
    %8048 = vmatpush1.msra.mxu0 %v8047
    %8049 = vmatprep.subr.mxu0 0.0
    %v8050 = vand.u32 %v202, 4294901760
    %v8051 = vsub.f32 %v202, %v8050
    %v8052 = vand.u32 %v8051, 4294901760
    %v8053 = vsub.f32 %v8051, %v8052
    %v8054 = vand.u32 %v8053, 4294901760
    %8055 = vmatpush1.msra.mxu0 %v8054
    %8056 = vmatprep.subr.mxu0 0.0
    %8057 = vmatpush2.msra.mxu0 0.0
    %8058 = vmatprep.subr.mxu0 0.0
    %8059 = vmatpush2.msra.mxu0 0.0
    %8060 = vmatprep.subr.mxu0 0.0
    %8061 = vmatpush2.msra.mxu0 0.0
    %8062 = vmatprep.subr.mxu0 0.0
    %8063 = vmatpush2.msra.mxu0 0.0
    %8064 = vmatprep.subr.mxu0 0.0
    %8065 = vmatpush2.msra.mxu0 0.0
    %8066 = vmatprep.subr.mxu0 0.0
    %8067 = vmatpush2.msra.mxu0 0.0
    %8068 = vmatprep.subr.mxu0 0.0
    %8069 = vmatpush2.msra.mxu0 0.0
    %8070 = vmatprep.subr.mxu0 0.0
    %8071 = vmatpush2.msra.mxu0 0.0
    %8072 = vmatprep.subr.mxu0 0.0
    %8073 = vmatpush2.msra.mxu0 0.0
    %8074 = vmatprep.subr.mxu0 0.0
    %8075 = vmatpush2.msra.mxu0 0.0
    %8076 = vmatprep.subr.mxu0 0.0
    %8077 = vmatpush2.msra.mxu0 0.0
    %8078 = vmatprep.subr.mxu0 0.0
    %8079 = vmatpush2.msra.mxu0 0.0
    %8080 = vmatprep.subr.mxu0 0.0
    %8081 = vmatpush2.msra.mxu0 0.0
    %8082 = vmatprep.subr.mxu0 0.0
    %8083 = vmatpush2.msra.mxu0 0.0
    %8084 = vmatprep.subr.mxu0 0.0
    %8085 = vmatpush2.msra.mxu0 0.0
    %8086 = vmatprep.subr.mxu0 0.0
    %8087 = vmatpush2.msra.mxu0 0.0
    %8088 = vmatprep.mubr.f32.mxu0 0.0
    %v8089 = vand.u32 %v6420, 4294901760
    %8090 = vmatmul.mubr.f32.gmra.mxu0 %v8089
    %v8091 = vpop.f32.mrf.mxu0
    %v8092 = vadd.f32 %v7931, %v8091
    %v8093 = vpop.f32.mrf.mxu0
    %8094 = vmatprep.mubr.f32.mxu0 0.0
    %v8095 = vand.u32 %v6422, 4294901760
    %8096 = vmatmul.mubr.f32.gmra.mxu0 %v8095
    %v8097 = vpop.f32.mrf.mxu0
    %v8098 = vadd.f32 %v7941, %v8097
    %v8099 = vpop.f32.mrf.mxu0
    %8100 = vdwg.mxu0
    %8101 = vmatprep.subr.mxu0 0.0
    %v8102 = vand.u32 %v217, 4294901760
    %v8103 = vsub.f32 %v217, %v8102
    %8104 = vmatpush1.msra.mxu0 %v8103
    %8105 = vmatprep.subr.mxu0 0.0
    %v8106 = vand.u32 %v216, 4294901760
    %v8107 = vsub.f32 %v216, %v8106
    %8108 = vmatpush1.msra.mxu0 %v8107
    %8109 = vmatprep.subr.mxu0 0.0
    %v8110 = vand.u32 %v215, 4294901760
    %v8111 = vsub.f32 %v215, %v8110
    %8112 = vmatpush1.msra.mxu0 %v8111
    %8113 = vmatprep.subr.mxu0 0.0
    %v8114 = vand.u32 %v214, 4294901760
    %v8115 = vsub.f32 %v214, %v8114
    %8116 = vmatpush1.msra.mxu0 %v8115
    %8117 = vmatprep.subr.mxu0 0.0
    %v8118 = vand.u32 %v213, 4294901760
    %v8119 = vsub.f32 %v213, %v8118
    %8120 = vmatpush1.msra.mxu0 %v8119
    %8121 = vmatprep.subr.mxu0 0.0
    %v8122 = vand.u32 %v212, 4294901760
    %v8123 = vsub.f32 %v212, %v8122
    %8124 = vmatpush1.msra.mxu0 %v8123
    %8125 = vmatprep.subr.mxu0 0.0
    %v8126 = vand.u32 %v211, 4294901760
    %v8127 = vsub.f32 %v211, %v8126
    %8128 = vmatpush1.msra.mxu0 %v8127
    %8129 = vmatprep.subr.mxu0 0.0
    %v8130 = vand.u32 %v210, 4294901760
    %v8131 = vsub.f32 %v210, %v8130
    %8132 = vmatpush1.msra.mxu0 %v8131
    %8133 = vmatprep.subr.mxu0 0.0
    %v8134 = vand.u32 %v209, 4294901760
    %v8135 = vsub.f32 %v209, %v8134
    %8136 = vmatpush1.msra.mxu0 %v8135
    %8137 = vmatprep.subr.mxu0 0.0
    %v8138 = vand.u32 %v208, 4294901760
    %v8139 = vsub.f32 %v208, %v8138
    %8140 = vmatpush1.msra.mxu0 %v8139
    %8141 = vmatprep.subr.mxu0 0.0
    %v8142 = vand.u32 %v207, 4294901760
    %v8143 = vsub.f32 %v207, %v8142
    %8144 = vmatpush1.msra.mxu0 %v8143
    %8145 = vmatprep.subr.mxu0 0.0
    %v8146 = vand.u32 %v206, 4294901760
    %v8147 = vsub.f32 %v206, %v8146
    %8148 = vmatpush1.msra.mxu0 %v8147
    %8149 = vmatprep.subr.mxu0 0.0
    %v8150 = vand.u32 %v205, 4294901760
    %v8151 = vsub.f32 %v205, %v8150
    %8152 = vmatpush1.msra.mxu0 %v8151
    %8153 = vmatprep.subr.mxu0 0.0
    %v8154 = vand.u32 %v204, 4294901760
    %v8155 = vsub.f32 %v204, %v8154
    %8156 = vmatpush1.msra.mxu0 %v8155
    %8157 = vmatprep.subr.mxu0 0.0
    %v8158 = vand.u32 %v203, 4294901760
    %v8159 = vsub.f32 %v203, %v8158
    %8160 = vmatpush1.msra.mxu0 %v8159
    %8161 = vmatprep.subr.mxu0 0.0
    %v8162 = vand.u32 %v202, 4294901760
    %v8163 = vsub.f32 %v202, %v8162
    %8164 = vmatpush1.msra.mxu0 %v8163
    %8165 = vmatprep.subr.mxu0 0.0
    %8166 = vmatpush2.msra.mxu0 0.0
    %8167 = vmatprep.subr.mxu0 0.0
    %8168 = vmatpush2.msra.mxu0 0.0
    %8169 = vmatprep.subr.mxu0 0.0
    %8170 = vmatpush2.msra.mxu0 0.0
    %8171 = vmatprep.subr.mxu0 0.0
    %8172 = vmatpush2.msra.mxu0 0.0
    %8173 = vmatprep.subr.mxu0 0.0
    %8174 = vmatpush2.msra.mxu0 0.0
    %8175 = vmatprep.subr.mxu0 0.0
    %8176 = vmatpush2.msra.mxu0 0.0
    %8177 = vmatprep.subr.mxu0 0.0
    %8178 = vmatpush2.msra.mxu0 0.0
    %8179 = vmatprep.subr.mxu0 0.0
    %8180 = vmatpush2.msra.mxu0 0.0
    %8181 = vmatprep.subr.mxu0 0.0
    %8182 = vmatpush2.msra.mxu0 0.0
    %8183 = vmatprep.subr.mxu0 0.0
    %8184 = vmatpush2.msra.mxu0 0.0
    %8185 = vmatprep.subr.mxu0 0.0
    %8186 = vmatpush2.msra.mxu0 0.0
    %8187 = vmatprep.subr.mxu0 0.0
    %8188 = vmatpush2.msra.mxu0 0.0
    %8189 = vmatprep.subr.mxu0 0.0
    %8190 = vmatpush2.msra.mxu0 0.0
    %8191 = vmatprep.subr.mxu0 0.0
    %8192 = vmatpush2.msra.mxu0 0.0
    %8193 = vmatprep.subr.mxu0 0.0
    %8194 = vmatpush2.msra.mxu0 0.0
    %8195 = vmatprep.subr.mxu0 0.0
    %8196 = vmatpush2.msra.mxu0 0.0
    %8197 = vmatprep.mubr.f32.mxu0 0.0
    %v8198 = vand.u32 %v6420, 4294901760
    %v8199 = vsub.f32 %v6420, %v8198
    %8200 = vmatmul.mubr.f32.gmra.mxu0 %v8199
    %v8201 = vpop.f32.mrf.mxu0
    %v8202 = vadd.f32 %v8092, %v8201
    %v8203 = vpop.f32.mrf.mxu0
    %8204 = vmatprep.mubr.f32.mxu0 0.0
    %v8205 = vand.u32 %v6422, 4294901760
    %v8206 = vsub.f32 %v6422, %v8205
    %8207 = vmatmul.mubr.f32.gmra.mxu0 %v8206
    %v8208 = vpop.f32.mrf.mxu0
    %v8209 = vadd.f32 %v8098, %v8208
    %v8210 = vpop.f32.mrf.mxu0
    %8211 = vdwg.mxu0
    %8212 = vmatprep.subr.mxu0 0.0
    %v8213 = vand.u32 %v217, 4294901760
    %8214 = vmatpush1.msra.mxu0 %v8213
    %8215 = vmatprep.subr.mxu0 0.0
    %v8216 = vand.u32 %v216, 4294901760
    %8217 = vmatpush1.msra.mxu0 %v8216
    %8218 = vmatprep.subr.mxu0 0.0
    %v8219 = vand.u32 %v215, 4294901760
    %8220 = vmatpush1.msra.mxu0 %v8219
    %8221 = vmatprep.subr.mxu0 0.0
    %v8222 = vand.u32 %v214, 4294901760
    %8223 = vmatpush1.msra.mxu0 %v8222
    %8224 = vmatprep.subr.mxu0 0.0
    %v8225 = vand.u32 %v213, 4294901760
    %8226 = vmatpush1.msra.mxu0 %v8225
    %8227 = vmatprep.subr.mxu0 0.0
    %v8228 = vand.u32 %v212, 4294901760
    %8229 = vmatpush1.msra.mxu0 %v8228
    %8230 = vmatprep.subr.mxu0 0.0
    %v8231 = vand.u32 %v211, 4294901760
    %8232 = vmatpush1.msra.mxu0 %v8231
    %8233 = vmatprep.subr.mxu0 0.0
    %v8234 = vand.u32 %v210, 4294901760
    %8235 = vmatpush1.msra.mxu0 %v8234
    %8236 = vmatprep.subr.mxu0 0.0
    %v8237 = vand.u32 %v209, 4294901760
    %8238 = vmatpush1.msra.mxu0 %v8237
    %8239 = vmatprep.subr.mxu0 0.0
    %v8240 = vand.u32 %v208, 4294901760
    %8241 = vmatpush1.msra.mxu0 %v8240
    %8242 = vmatprep.subr.mxu0 0.0
    %v8243 = vand.u32 %v207, 4294901760
    %8244 = vmatpush1.msra.mxu0 %v8243
    %8245 = vmatprep.subr.mxu0 0.0
    %v8246 = vand.u32 %v206, 4294901760
    %8247 = vmatpush1.msra.mxu0 %v8246
    %8248 = vmatprep.subr.mxu0 0.0
    %v8249 = vand.u32 %v205, 4294901760
    %8250 = vmatpush1.msra.mxu0 %v8249
    %8251 = vmatprep.subr.mxu0 0.0
    %v8252 = vand.u32 %v204, 4294901760
    %8253 = vmatpush1.msra.mxu0 %v8252
    %8254 = vmatprep.subr.mxu0 0.0
    %v8255 = vand.u32 %v203, 4294901760
    %8256 = vmatpush1.msra.mxu0 %v8255
    %8257 = vmatprep.subr.mxu0 0.0
    %v8258 = vand.u32 %v202, 4294901760
    %8259 = vmatpush1.msra.mxu0 %v8258
    %8260 = vmatprep.subr.mxu0 0.0
    %8261 = vmatpush2.msra.mxu0 0.0
    %8262 = vmatprep.subr.mxu0 0.0
    %8263 = vmatpush2.msra.mxu0 0.0
    %8264 = vmatprep.subr.mxu0 0.0
    %8265 = vmatpush2.msra.mxu0 0.0
    %8266 = vmatprep.subr.mxu0 0.0
    %8267 = vmatpush2.msra.mxu0 0.0
    %8268 = vmatprep.subr.mxu0 0.0
    %8269 = vmatpush2.msra.mxu0 0.0
    %8270 = vmatprep.subr.mxu0 0.0
    %8271 = vmatpush2.msra.mxu0 0.0
    %8272 = vmatprep.subr.mxu0 0.0
    %8273 = vmatpush2.msra.mxu0 0.0
    %8274 = vmatprep.subr.mxu0 0.0
    %8275 = vmatpush2.msra.mxu0 0.0
    %8276 = vmatprep.subr.mxu0 0.0
    %8277 = vmatpush2.msra.mxu0 0.0
    %8278 = vmatprep.subr.mxu0 0.0
    %8279 = vmatpush2.msra.mxu0 0.0
    %8280 = vmatprep.subr.mxu0 0.0
    %8281 = vmatpush2.msra.mxu0 0.0
    %8282 = vmatprep.subr.mxu0 0.0
    %8283 = vmatpush2.msra.mxu0 0.0
    %8284 = vmatprep.subr.mxu0 0.0
    %8285 = vmatpush2.msra.mxu0 0.0
    %8286 = vmatprep.subr.mxu0 0.0
    %8287 = vmatpush2.msra.mxu0 0.0
    %8288 = vmatprep.subr.mxu0 0.0
    %8289 = vmatpush2.msra.mxu0 0.0
    %8290 = vmatprep.subr.mxu0 0.0
    %8291 = vmatpush2.msra.mxu0 0.0
    %8292 = vmatprep.mubr.f32.mxu0 0.0
    %v8293 = vand.u32 %v6420, 4294901760
    %v8294 = vsub.f32 %v6420, %v8293
    %v8295 = vand.u32 %v8294, 4294901760
    %8296 = vmatmul.mubr.f32.gmra.mxu0 %v8295
    %v8297 = vpop.f32.mrf.mxu0
    %v8298 = vadd.f32 %v8202, %v8297
    %v8299 = vpop.f32.mrf.mxu0
    %8300 = vmatprep.mubr.f32.mxu0 0.0
    %v8301 = vand.u32 %v6422, 4294901760
    %v8302 = vsub.f32 %v6422, %v8301
    %v8303 = vand.u32 %v8302, 4294901760
    %8304 = vmatmul.mubr.f32.gmra.mxu0 %v8303
    %v8305 = vpop.f32.mrf.mxu0
    %v8306 = vadd.f32 %v8209, %v8305
    %v8307 = vpop.f32.mrf.mxu0
    %8308 = vdwg.mxu0
    %8309 = vmatprep.subr.mxu0 0.0
    %v8310 = vand.u32 %v217, 4294901760
    %v8311 = vsub.f32 %v217, %v8310
    %v8312 = vand.u32 %v8311, 4294901760
    %8313 = vmatpush1.msra.mxu0 %v8312
    %8314 = vmatprep.subr.mxu0 0.0
    %v8315 = vand.u32 %v216, 4294901760
    %v8316 = vsub.f32 %v216, %v8315
    %v8317 = vand.u32 %v8316, 4294901760
    %8318 = vmatpush1.msra.mxu0 %v8317
    %8319 = vmatprep.subr.mxu0 0.0
    %v8320 = vand.u32 %v215, 4294901760
    %v8321 = vsub.f32 %v215, %v8320
    %v8322 = vand.u32 %v8321, 4294901760
    %8323 = vmatpush1.msra.mxu0 %v8322
    %8324 = vmatprep.subr.mxu0 0.0
    %v8325 = vand.u32 %v214, 4294901760
    %v8326 = vsub.f32 %v214, %v8325
    %v8327 = vand.u32 %v8326, 4294901760
    %8328 = vmatpush1.msra.mxu0 %v8327
    %8329 = vmatprep.subr.mxu0 0.0
    %v8330 = vand.u32 %v213, 4294901760
    %v8331 = vsub.f32 %v213, %v8330
    %v8332 = vand.u32 %v8331, 4294901760
    %8333 = vmatpush1.msra.mxu0 %v8332
    %8334 = vmatprep.subr.mxu0 0.0
    %v8335 = vand.u32 %v212, 4294901760
    %v8336 = vsub.f32 %v212, %v8335
    %v8337 = vand.u32 %v8336, 4294901760
    %8338 = vmatpush1.msra.mxu0 %v8337
    %8339 = vmatprep.subr.mxu0 0.0
    %v8340 = vand.u32 %v211, 4294901760
    %v8341 = vsub.f32 %v211, %v8340
    %v8342 = vand.u32 %v8341, 4294901760
    %8343 = vmatpush1.msra.mxu0 %v8342
    %8344 = vmatprep.subr.mxu0 0.0
    %v8345 = vand.u32 %v210, 4294901760
    %v8346 = vsub.f32 %v210, %v8345
    %v8347 = vand.u32 %v8346, 4294901760
    %8348 = vmatpush1.msra.mxu0 %v8347
    %8349 = vmatprep.subr.mxu0 0.0
    %v8350 = vand.u32 %v209, 4294901760
    %v8351 = vsub.f32 %v209, %v8350
    %v8352 = vand.u32 %v8351, 4294901760
    %8353 = vmatpush1.msra.mxu0 %v8352
    %8354 = vmatprep.subr.mxu0 0.0
    %v8355 = vand.u32 %v208, 4294901760
    %v8356 = vsub.f32 %v208, %v8355
    %v8357 = vand.u32 %v8356, 4294901760
    %8358 = vmatpush1.msra.mxu0 %v8357
    %8359 = vmatprep.subr.mxu0 0.0
    %v8360 = vand.u32 %v207, 4294901760
    %v8361 = vsub.f32 %v207, %v8360
    %v8362 = vand.u32 %v8361, 4294901760
    %8363 = vmatpush1.msra.mxu0 %v8362
    %8364 = vmatprep.subr.mxu0 0.0
    %v8365 = vand.u32 %v206, 4294901760
    %v8366 = vsub.f32 %v206, %v8365
    %v8367 = vand.u32 %v8366, 4294901760
    %8368 = vmatpush1.msra.mxu0 %v8367
    %8369 = vmatprep.subr.mxu0 0.0
    %v8370 = vand.u32 %v205, 4294901760
    %v8371 = vsub.f32 %v205, %v8370
    %v8372 = vand.u32 %v8371, 4294901760
    %8373 = vmatpush1.msra.mxu0 %v8372
    %8374 = vmatprep.subr.mxu0 0.0
    %v8375 = vand.u32 %v204, 4294901760
    %v8376 = vsub.f32 %v204, %v8375
    %v8377 = vand.u32 %v8376, 4294901760
    %8378 = vmatpush1.msra.mxu0 %v8377
    %8379 = vmatprep.subr.mxu0 0.0
    %v8380 = vand.u32 %v203, 4294901760
    %v8381 = vsub.f32 %v203, %v8380
    %v8382 = vand.u32 %v8381, 4294901760
    %8383 = vmatpush1.msra.mxu0 %v8382
    %8384 = vmatprep.subr.mxu0 0.0
    %v8385 = vand.u32 %v202, 4294901760
    %v8386 = vsub.f32 %v202, %v8385
    %v8387 = vand.u32 %v8386, 4294901760
    %8388 = vmatpush1.msra.mxu0 %v8387
    %8389 = vmatprep.subr.mxu0 0.0
    %8390 = vmatpush2.msra.mxu0 0.0
    %8391 = vmatprep.subr.mxu0 0.0
    %8392 = vmatpush2.msra.mxu0 0.0
    %8393 = vmatprep.subr.mxu0 0.0
    %8394 = vmatpush2.msra.mxu0 0.0
    %8395 = vmatprep.subr.mxu0 0.0
    %8396 = vmatpush2.msra.mxu0 0.0
    %8397 = vmatprep.subr.mxu0 0.0
    %8398 = vmatpush2.msra.mxu0 0.0
    %8399 = vmatprep.subr.mxu0 0.0
    %8400 = vmatpush2.msra.mxu0 0.0
    %8401 = vmatprep.subr.mxu0 0.0
    %8402 = vmatpush2.msra.mxu0 0.0
    %8403 = vmatprep.subr.mxu0 0.0
    %8404 = vmatpush2.msra.mxu0 0.0
    %8405 = vmatprep.subr.mxu0 0.0
    %8406 = vmatpush2.msra.mxu0 0.0
    %8407 = vmatprep.subr.mxu0 0.0
    %8408 = vmatpush2.msra.mxu0 0.0
    %8409 = vmatprep.subr.mxu0 0.0
    %8410 = vmatpush2.msra.mxu0 0.0
    %8411 = vmatprep.subr.mxu0 0.0
    %8412 = vmatpush2.msra.mxu0 0.0
    %8413 = vmatprep.subr.mxu0 0.0
    %8414 = vmatpush2.msra.mxu0 0.0
    %8415 = vmatprep.subr.mxu0 0.0
    %8416 = vmatpush2.msra.mxu0 0.0
    %8417 = vmatprep.subr.mxu0 0.0
    %8418 = vmatpush2.msra.mxu0 0.0
    %8419 = vmatprep.subr.mxu0 0.0
    %8420 = vmatpush2.msra.mxu0 0.0
    %8421 = vmatprep.mubr.f32.mxu0 0.0
    %v8422 = vand.u32 %v6420, 4294901760
    %8423 = vmatmul.mubr.f32.gmra.mxu0 %v8422
    %v8424 = vpop.f32.mrf.mxu0
    %v8425 = vadd.f32 %v8298, %v8424
    %v8426 = vpop.f32.mrf.mxu0
    %8427 = vmatprep.mubr.f32.mxu0 0.0
    %v8428 = vand.u32 %v6422, 4294901760
    %8429 = vmatmul.mubr.f32.gmra.mxu0 %v8428
    %v8430 = vpop.f32.mrf.mxu0
    %v8431 = vadd.f32 %v8306, %v8430
    %v8432 = vpop.f32.mrf.mxu0
    %8433 = vdwg.mxu0
    %8434 = vmatprep.subr.mxu0 0.0
    %v8435 = vand.u32 %v217, 4294901760
    %8436 = vmatpush1.msra.mxu0 %v8435
    %8437 = vmatprep.subr.mxu0 0.0
    %v8438 = vand.u32 %v216, 4294901760
    %8439 = vmatpush1.msra.mxu0 %v8438
    %8440 = vmatprep.subr.mxu0 0.0
    %v8441 = vand.u32 %v215, 4294901760
    %8442 = vmatpush1.msra.mxu0 %v8441
    %8443 = vmatprep.subr.mxu0 0.0
    %v8444 = vand.u32 %v214, 4294901760
    %8445 = vmatpush1.msra.mxu0 %v8444
    %8446 = vmatprep.subr.mxu0 0.0
    %v8447 = vand.u32 %v213, 4294901760
    %8448 = vmatpush1.msra.mxu0 %v8447
    %8449 = vmatprep.subr.mxu0 0.0
    %v8450 = vand.u32 %v212, 4294901760
    %8451 = vmatpush1.msra.mxu0 %v8450
    %8452 = vmatprep.subr.mxu0 0.0
    %v8453 = vand.u32 %v211, 4294901760
    %8454 = vmatpush1.msra.mxu0 %v8453
    %8455 = vmatprep.subr.mxu0 0.0
    %v8456 = vand.u32 %v210, 4294901760
    %8457 = vmatpush1.msra.mxu0 %v8456
    %8458 = vmatprep.subr.mxu0 0.0
    %v8459 = vand.u32 %v209, 4294901760
    %8460 = vmatpush1.msra.mxu0 %v8459
    %8461 = vmatprep.subr.mxu0 0.0
    %v8462 = vand.u32 %v208, 4294901760
    %8463 = vmatpush1.msra.mxu0 %v8462
    %8464 = vmatprep.subr.mxu0 0.0
    %v8465 = vand.u32 %v207, 4294901760
    %8466 = vmatpush1.msra.mxu0 %v8465
    %8467 = vmatprep.subr.mxu0 0.0
    %v8468 = vand.u32 %v206, 4294901760
    %8469 = vmatpush1.msra.mxu0 %v8468
    %8470 = vmatprep.subr.mxu0 0.0
    %v8471 = vand.u32 %v205, 4294901760
    %8472 = vmatpush1.msra.mxu0 %v8471
    %8473 = vmatprep.subr.mxu0 0.0
    %v8474 = vand.u32 %v204, 4294901760
    %8475 = vmatpush1.msra.mxu0 %v8474
    %8476 = vmatprep.subr.mxu0 0.0
    %v8477 = vand.u32 %v203, 4294901760
    %8478 = vmatpush1.msra.mxu0 %v8477
    %8479 = vmatprep.subr.mxu0 0.0
    %v8480 = vand.u32 %v202, 4294901760
    %8481 = vmatpush1.msra.mxu0 %v8480
    %8482 = vmatprep.subr.mxu0 0.0
    %8483 = vmatpush2.msra.mxu0 0.0
    %8484 = vmatprep.subr.mxu0 0.0
    %8485 = vmatpush2.msra.mxu0 0.0
    %8486 = vmatprep.subr.mxu0 0.0
    %8487 = vmatpush2.msra.mxu0 0.0
    %8488 = vmatprep.subr.mxu0 0.0
    %8489 = vmatpush2.msra.mxu0 0.0
    %8490 = vmatprep.subr.mxu0 0.0
    %8491 = vmatpush2.msra.mxu0 0.0
    %8492 = vmatprep.subr.mxu0 0.0
    %8493 = vmatpush2.msra.mxu0 0.0
    %8494 = vmatprep.subr.mxu0 0.0
    %8495 = vmatpush2.msra.mxu0 0.0
    %8496 = vmatprep.subr.mxu0 0.0
    %8497 = vmatpush2.msra.mxu0 0.0
    %8498 = vmatprep.subr.mxu0 0.0
    %8499 = vmatpush2.msra.mxu0 0.0
    %8500 = vmatprep.subr.mxu0 0.0
    %8501 = vmatpush2.msra.mxu0 0.0
    %8502 = vmatprep.subr.mxu0 0.0
    %8503 = vmatpush2.msra.mxu0 0.0
    %8504 = vmatprep.subr.mxu0 0.0
    %8505 = vmatpush2.msra.mxu0 0.0
    %8506 = vmatprep.subr.mxu0 0.0
    %8507 = vmatpush2.msra.mxu0 0.0
    %8508 = vmatprep.subr.mxu0 0.0
    %8509 = vmatpush2.msra.mxu0 0.0
    %8510 = vmatprep.subr.mxu0 0.0
    %8511 = vmatpush2.msra.mxu0 0.0
    %8512 = vmatprep.subr.mxu0 0.0
    %8513 = vmatpush2.msra.mxu0 0.0
    %8514 = vmatprep.mubr.f32.mxu0 0.0
    %v8515 = vand.u32 %v6420, 4294901760
    %8516 = vmatmul.mubr.f32.gmra.mxu0 %v8515
    %v8517 = vpop.f32.mrf.mxu0
    %v8518 = vadd.f32 %v8425, %v8517
    %v8519 = vpop.f32.mrf.mxu0
    %8520 = vmatprep.mubr.f32.mxu0 0.0
    %v8521 = vand.u32 %v6422, 4294901760
    %8522 = vmatmul.mubr.f32.gmra.mxu0 %v8521
    %v8523 = vpop.f32.mrf.mxu0
    %v8524 = vadd.f32 %v8431, %v8523
    %v8525 = vpop.f32.mrf.mxu0
    %8526 = vdwg.mxu0
    %8527 = vmatprep.subr.mxu0 0.0
    %v8528 = vand.u32 %v233, 4294901760
    %8529 = vmatpush1.msra.mxu0 %v8528
    %8530 = vmatprep.subr.mxu0 0.0
    %v8531 = vand.u32 %v232, 4294901760
    %8532 = vmatpush1.msra.mxu0 %v8531
    %8533 = vmatprep.subr.mxu0 0.0
    %v8534 = vand.u32 %v231, 4294901760
    %8535 = vmatpush1.msra.mxu0 %v8534
    %8536 = vmatprep.subr.mxu0 0.0
    %v8537 = vand.u32 %v230, 4294901760
    %8538 = vmatpush1.msra.mxu0 %v8537
    %8539 = vmatprep.subr.mxu0 0.0
    %v8540 = vand.u32 %v229, 4294901760
    %8541 = vmatpush1.msra.mxu0 %v8540
    %8542 = vmatprep.subr.mxu0 0.0
    %v8543 = vand.u32 %v228, 4294901760
    %8544 = vmatpush1.msra.mxu0 %v8543
    %8545 = vmatprep.subr.mxu0 0.0
    %v8546 = vand.u32 %v227, 4294901760
    %8547 = vmatpush1.msra.mxu0 %v8546
    %8548 = vmatprep.subr.mxu0 0.0
    %v8549 = vand.u32 %v226, 4294901760
    %8550 = vmatpush1.msra.mxu0 %v8549
    %8551 = vmatprep.subr.mxu0 0.0
    %v8552 = vand.u32 %v225, 4294901760
    %8553 = vmatpush1.msra.mxu0 %v8552
    %8554 = vmatprep.subr.mxu0 0.0
    %v8555 = vand.u32 %v224, 4294901760
    %8556 = vmatpush1.msra.mxu0 %v8555
    %8557 = vmatprep.subr.mxu0 0.0
    %v8558 = vand.u32 %v223, 4294901760
    %8559 = vmatpush1.msra.mxu0 %v8558
    %8560 = vmatprep.subr.mxu0 0.0
    %v8561 = vand.u32 %v222, 4294901760
    %8562 = vmatpush1.msra.mxu0 %v8561
    %8563 = vmatprep.subr.mxu0 0.0
    %v8564 = vand.u32 %v221, 4294901760
    %8565 = vmatpush1.msra.mxu0 %v8564
    %8566 = vmatprep.subr.mxu0 0.0
    %v8567 = vand.u32 %v220, 4294901760
    %8568 = vmatpush1.msra.mxu0 %v8567
    %8569 = vmatprep.subr.mxu0 0.0
    %v8570 = vand.u32 %v219, 4294901760
    %8571 = vmatpush1.msra.mxu0 %v8570
    %8572 = vmatprep.subr.mxu0 0.0
    %v8573 = vand.u32 %v218, 4294901760
    %8574 = vmatpush1.msra.mxu0 %v8573
    %8575 = vmatprep.subr.mxu0 0.0
    %8576 = vmatpush2.msra.mxu0 0.0
    %8577 = vmatprep.subr.mxu0 0.0
    %8578 = vmatpush2.msra.mxu0 0.0
    %8579 = vmatprep.subr.mxu0 0.0
    %8580 = vmatpush2.msra.mxu0 0.0
    %8581 = vmatprep.subr.mxu0 0.0
    %8582 = vmatpush2.msra.mxu0 0.0
    %8583 = vmatprep.subr.mxu0 0.0
    %8584 = vmatpush2.msra.mxu0 0.0
    %8585 = vmatprep.subr.mxu0 0.0
    %8586 = vmatpush2.msra.mxu0 0.0
    %8587 = vmatprep.subr.mxu0 0.0
    %8588 = vmatpush2.msra.mxu0 0.0
    %8589 = vmatprep.subr.mxu0 0.0
    %8590 = vmatpush2.msra.mxu0 0.0
    %8591 = vmatprep.subr.mxu0 0.0
    %8592 = vmatpush2.msra.mxu0 0.0
    %8593 = vmatprep.subr.mxu0 0.0
    %8594 = vmatpush2.msra.mxu0 0.0
    %8595 = vmatprep.subr.mxu0 0.0
    %8596 = vmatpush2.msra.mxu0 0.0
    %8597 = vmatprep.subr.mxu0 0.0
    %8598 = vmatpush2.msra.mxu0 0.0
    %8599 = vmatprep.subr.mxu0 0.0
    %8600 = vmatpush2.msra.mxu0 0.0
    %8601 = vmatprep.subr.mxu0 0.0
    %8602 = vmatpush2.msra.mxu0 0.0
    %8603 = vmatprep.subr.mxu0 0.0
    %8604 = vmatpush2.msra.mxu0 0.0
    %8605 = vmatprep.subr.mxu0 0.0
    %8606 = vmatpush2.msra.mxu0 0.0
    %8607 = vmatprep.mubr.f32.mxu0 0.0
    %v8608 = vand.u32 %v6424, 4294901760
    %v8609 = vsub.f32 %v6424, %v8608
    %v8610 = vand.u32 %v8609, 4294901760
    %v8611 = vsub.f32 %v8609, %v8610
    %v8612 = vand.u32 %v8611, 4294901760
    %8613 = vmatmul.mubr.f32.gmra.mxu0 %v8612
    %v8614 = vpop.f32.mrf.mxu0
    %v8615 = vadd.f32 0.0, %v8614
    %v8616 = vpop.f32.mrf.mxu0
    %8617 = vmatprep.mubr.f32.mxu0 0.0
    %v8618 = vand.u32 %v6426, 4294901760
    %v8619 = vsub.f32 %v6426, %v8618
    %v8620 = vand.u32 %v8619, 4294901760
    %v8621 = vsub.f32 %v8619, %v8620
    %v8622 = vand.u32 %v8621, 4294901760
    %8623 = vmatmul.mubr.f32.gmra.mxu0 %v8622
    %v8624 = vpop.f32.mrf.mxu0
    %v8625 = vadd.f32 0.0, %v8624
    %v8626 = vpop.f32.mrf.mxu0
    %8627 = vdwg.mxu0
    %8628 = vmatprep.subr.mxu0 0.0
    %v8629 = vand.u32 %v233, 4294901760
    %v8630 = vsub.f32 %v233, %v8629
    %v8631 = vand.u32 %v8630, 4294901760
    %v8632 = vsub.f32 %v8630, %v8631
    %v8633 = vand.u32 %v8632, 4294901760
    %8634 = vmatpush1.msra.mxu0 %v8633
    %8635 = vmatprep.subr.mxu0 0.0
    %v8636 = vand.u32 %v232, 4294901760
    %v8637 = vsub.f32 %v232, %v8636
    %v8638 = vand.u32 %v8637, 4294901760
    %v8639 = vsub.f32 %v8637, %v8638
    %v8640 = vand.u32 %v8639, 4294901760
    %8641 = vmatpush1.msra.mxu0 %v8640
    %8642 = vmatprep.subr.mxu0 0.0
    %v8643 = vand.u32 %v231, 4294901760
    %v8644 = vsub.f32 %v231, %v8643
    %v8645 = vand.u32 %v8644, 4294901760
    %v8646 = vsub.f32 %v8644, %v8645
    %v8647 = vand.u32 %v8646, 4294901760
    %8648 = vmatpush1.msra.mxu0 %v8647
    %8649 = vmatprep.subr.mxu0 0.0
    %v8650 = vand.u32 %v230, 4294901760
    %v8651 = vsub.f32 %v230, %v8650
    %v8652 = vand.u32 %v8651, 4294901760
    %v8653 = vsub.f32 %v8651, %v8652
    %v8654 = vand.u32 %v8653, 4294901760
    %8655 = vmatpush1.msra.mxu0 %v8654
    %8656 = vmatprep.subr.mxu0 0.0
    %v8657 = vand.u32 %v229, 4294901760
    %v8658 = vsub.f32 %v229, %v8657
    %v8659 = vand.u32 %v8658, 4294901760
    %v8660 = vsub.f32 %v8658, %v8659
    %v8661 = vand.u32 %v8660, 4294901760
    %8662 = vmatpush1.msra.mxu0 %v8661
    %8663 = vmatprep.subr.mxu0 0.0
    %v8664 = vand.u32 %v228, 4294901760
    %v8665 = vsub.f32 %v228, %v8664
    %v8666 = vand.u32 %v8665, 4294901760
    %v8667 = vsub.f32 %v8665, %v8666
    %v8668 = vand.u32 %v8667, 4294901760
    %8669 = vmatpush1.msra.mxu0 %v8668
    %8670 = vmatprep.subr.mxu0 0.0
    %v8671 = vand.u32 %v227, 4294901760
    %v8672 = vsub.f32 %v227, %v8671
    %v8673 = vand.u32 %v8672, 4294901760
    %v8674 = vsub.f32 %v8672, %v8673
    %v8675 = vand.u32 %v8674, 4294901760
    %8676 = vmatpush1.msra.mxu0 %v8675
    %8677 = vmatprep.subr.mxu0 0.0
    %v8678 = vand.u32 %v226, 4294901760
    %v8679 = vsub.f32 %v226, %v8678
    %v8680 = vand.u32 %v8679, 4294901760
    %v8681 = vsub.f32 %v8679, %v8680
    %v8682 = vand.u32 %v8681, 4294901760
    %8683 = vmatpush1.msra.mxu0 %v8682
    %8684 = vmatprep.subr.mxu0 0.0
    %v8685 = vand.u32 %v225, 4294901760
    %v8686 = vsub.f32 %v225, %v8685
    %v8687 = vand.u32 %v8686, 4294901760
    %v8688 = vsub.f32 %v8686, %v8687
    %v8689 = vand.u32 %v8688, 4294901760
    %8690 = vmatpush1.msra.mxu0 %v8689
    %8691 = vmatprep.subr.mxu0 0.0
    %v8692 = vand.u32 %v224, 4294901760
    %v8693 = vsub.f32 %v224, %v8692
    %v8694 = vand.u32 %v8693, 4294901760
    %v8695 = vsub.f32 %v8693, %v8694
    %v8696 = vand.u32 %v8695, 4294901760
    %8697 = vmatpush1.msra.mxu0 %v8696
    %8698 = vmatprep.subr.mxu0 0.0
    %v8699 = vand.u32 %v223, 4294901760
    %v8700 = vsub.f32 %v223, %v8699
    %v8701 = vand.u32 %v8700, 4294901760
    %v8702 = vsub.f32 %v8700, %v8701
    %v8703 = vand.u32 %v8702, 4294901760
    %8704 = vmatpush1.msra.mxu0 %v8703
    %8705 = vmatprep.subr.mxu0 0.0
    %v8706 = vand.u32 %v222, 4294901760
    %v8707 = vsub.f32 %v222, %v8706
    %v8708 = vand.u32 %v8707, 4294901760
    %v8709 = vsub.f32 %v8707, %v8708
    %v8710 = vand.u32 %v8709, 4294901760
    %8711 = vmatpush1.msra.mxu0 %v8710
    %8712 = vmatprep.subr.mxu0 0.0
    %v8713 = vand.u32 %v221, 4294901760
    %v8714 = vsub.f32 %v221, %v8713
    %v8715 = vand.u32 %v8714, 4294901760
    %v8716 = vsub.f32 %v8714, %v8715
    %v8717 = vand.u32 %v8716, 4294901760
    %8718 = vmatpush1.msra.mxu0 %v8717
    %8719 = vmatprep.subr.mxu0 0.0
    %v8720 = vand.u32 %v220, 4294901760
    %v8721 = vsub.f32 %v220, %v8720
    %v8722 = vand.u32 %v8721, 4294901760
    %v8723 = vsub.f32 %v8721, %v8722
    %v8724 = vand.u32 %v8723, 4294901760
    %8725 = vmatpush1.msra.mxu0 %v8724
    %8726 = vmatprep.subr.mxu0 0.0
    %v8727 = vand.u32 %v219, 4294901760
    %v8728 = vsub.f32 %v219, %v8727
    %v8729 = vand.u32 %v8728, 4294901760
    %v8730 = vsub.f32 %v8728, %v8729
    %v8731 = vand.u32 %v8730, 4294901760
    %8732 = vmatpush1.msra.mxu0 %v8731
    %8733 = vmatprep.subr.mxu0 0.0
    %v8734 = vand.u32 %v218, 4294901760
    %v8735 = vsub.f32 %v218, %v8734
    %v8736 = vand.u32 %v8735, 4294901760
    %v8737 = vsub.f32 %v8735, %v8736
    %v8738 = vand.u32 %v8737, 4294901760
    %8739 = vmatpush1.msra.mxu0 %v8738
    %8740 = vmatprep.subr.mxu0 0.0
    %8741 = vmatpush2.msra.mxu0 0.0
    %8742 = vmatprep.subr.mxu0 0.0
    %8743 = vmatpush2.msra.mxu0 0.0
    %8744 = vmatprep.subr.mxu0 0.0
    %8745 = vmatpush2.msra.mxu0 0.0
    %8746 = vmatprep.subr.mxu0 0.0
    %8747 = vmatpush2.msra.mxu0 0.0
    %8748 = vmatprep.subr.mxu0 0.0
    %8749 = vmatpush2.msra.mxu0 0.0
    %8750 = vmatprep.subr.mxu0 0.0
    %8751 = vmatpush2.msra.mxu0 0.0
    %8752 = vmatprep.subr.mxu0 0.0
    %8753 = vmatpush2.msra.mxu0 0.0
    %8754 = vmatprep.subr.mxu0 0.0
    %8755 = vmatpush2.msra.mxu0 0.0
    %8756 = vmatprep.subr.mxu0 0.0
    %8757 = vmatpush2.msra.mxu0 0.0
    %8758 = vmatprep.subr.mxu0 0.0
    %8759 = vmatpush2.msra.mxu0 0.0
    %8760 = vmatprep.subr.mxu0 0.0
    %8761 = vmatpush2.msra.mxu0 0.0
    %8762 = vmatprep.subr.mxu0 0.0
    %8763 = vmatpush2.msra.mxu0 0.0
    %8764 = vmatprep.subr.mxu0 0.0
    %8765 = vmatpush2.msra.mxu0 0.0
    %8766 = vmatprep.subr.mxu0 0.0
    %8767 = vmatpush2.msra.mxu0 0.0
    %8768 = vmatprep.subr.mxu0 0.0
    %8769 = vmatpush2.msra.mxu0 0.0
    %8770 = vmatprep.subr.mxu0 0.0
    %8771 = vmatpush2.msra.mxu0 0.0
    %8772 = vmatprep.mubr.f32.mxu0 0.0
    %v8773 = vand.u32 %v6424, 4294901760
    %8774 = vmatmul.mubr.f32.gmra.mxu0 %v8773
    %v8775 = vpop.f32.mrf.mxu0
    %v8776 = vadd.f32 %v8615, %v8775
    %v8777 = vpop.f32.mrf.mxu0
    %8778 = vmatprep.mubr.f32.mxu0 0.0
    %v8779 = vand.u32 %v6426, 4294901760
    %8780 = vmatmul.mubr.f32.gmra.mxu0 %v8779
    %v8781 = vpop.f32.mrf.mxu0
    %v8782 = vadd.f32 %v8625, %v8781
    %v8783 = vpop.f32.mrf.mxu0
    %8784 = vdwg.mxu0
    %8785 = vmatprep.subr.mxu0 0.0
    %v8786 = vand.u32 %v233, 4294901760
    %v8787 = vsub.f32 %v233, %v8786
    %8788 = vmatpush1.msra.mxu0 %v8787
    %8789 = vmatprep.subr.mxu0 0.0
    %v8790 = vand.u32 %v232, 4294901760
    %v8791 = vsub.f32 %v232, %v8790
    %8792 = vmatpush1.msra.mxu0 %v8791
    %8793 = vmatprep.subr.mxu0 0.0
    %v8794 = vand.u32 %v231, 4294901760
    %v8795 = vsub.f32 %v231, %v8794
    %8796 = vmatpush1.msra.mxu0 %v8795
    %8797 = vmatprep.subr.mxu0 0.0
    %v8798 = vand.u32 %v230, 4294901760
    %v8799 = vsub.f32 %v230, %v8798
    %8800 = vmatpush1.msra.mxu0 %v8799
    %8801 = vmatprep.subr.mxu0 0.0
    %v8802 = vand.u32 %v229, 4294901760
    %v8803 = vsub.f32 %v229, %v8802
    %8804 = vmatpush1.msra.mxu0 %v8803
    %8805 = vmatprep.subr.mxu0 0.0
    %v8806 = vand.u32 %v228, 4294901760
    %v8807 = vsub.f32 %v228, %v8806
    %8808 = vmatpush1.msra.mxu0 %v8807
    %8809 = vmatprep.subr.mxu0 0.0
    %v8810 = vand.u32 %v227, 4294901760
    %v8811 = vsub.f32 %v227, %v8810
    %8812 = vmatpush1.msra.mxu0 %v8811
    %8813 = vmatprep.subr.mxu0 0.0
    %v8814 = vand.u32 %v226, 4294901760
    %v8815 = vsub.f32 %v226, %v8814
    %8816 = vmatpush1.msra.mxu0 %v8815
    %8817 = vmatprep.subr.mxu0 0.0
    %v8818 = vand.u32 %v225, 4294901760
    %v8819 = vsub.f32 %v225, %v8818
    %8820 = vmatpush1.msra.mxu0 %v8819
    %8821 = vmatprep.subr.mxu0 0.0
    %v8822 = vand.u32 %v224, 4294901760
    %v8823 = vsub.f32 %v224, %v8822
    %8824 = vmatpush1.msra.mxu0 %v8823
    %8825 = vmatprep.subr.mxu0 0.0
    %v8826 = vand.u32 %v223, 4294901760
    %v8827 = vsub.f32 %v223, %v8826
    %8828 = vmatpush1.msra.mxu0 %v8827
    %8829 = vmatprep.subr.mxu0 0.0
    %v8830 = vand.u32 %v222, 4294901760
    %v8831 = vsub.f32 %v222, %v8830
    %8832 = vmatpush1.msra.mxu0 %v8831
    %8833 = vmatprep.subr.mxu0 0.0
    %v8834 = vand.u32 %v221, 4294901760
    %v8835 = vsub.f32 %v221, %v8834
    %8836 = vmatpush1.msra.mxu0 %v8835
    %8837 = vmatprep.subr.mxu0 0.0
    %v8838 = vand.u32 %v220, 4294901760
    %v8839 = vsub.f32 %v220, %v8838
    %8840 = vmatpush1.msra.mxu0 %v8839
    %8841 = vmatprep.subr.mxu0 0.0
    %v8842 = vand.u32 %v219, 4294901760
    %v8843 = vsub.f32 %v219, %v8842
    %8844 = vmatpush1.msra.mxu0 %v8843
    %8845 = vmatprep.subr.mxu0 0.0
    %v8846 = vand.u32 %v218, 4294901760
    %v8847 = vsub.f32 %v218, %v8846
    %8848 = vmatpush1.msra.mxu0 %v8847
    %8849 = vmatprep.subr.mxu0 0.0
    %8850 = vmatpush2.msra.mxu0 0.0
    %8851 = vmatprep.subr.mxu0 0.0
    %8852 = vmatpush2.msra.mxu0 0.0
    %8853 = vmatprep.subr.mxu0 0.0
    %8854 = vmatpush2.msra.mxu0 0.0
    %8855 = vmatprep.subr.mxu0 0.0
    %8856 = vmatpush2.msra.mxu0 0.0
    %8857 = vmatprep.subr.mxu0 0.0
    %8858 = vmatpush2.msra.mxu0 0.0
    %8859 = vmatprep.subr.mxu0 0.0
    %8860 = vmatpush2.msra.mxu0 0.0
    %8861 = vmatprep.subr.mxu0 0.0
    %8862 = vmatpush2.msra.mxu0 0.0
    %8863 = vmatprep.subr.mxu0 0.0
    %8864 = vmatpush2.msra.mxu0 0.0
    %8865 = vmatprep.subr.mxu0 0.0
    %8866 = vmatpush2.msra.mxu0 0.0
    %8867 = vmatprep.subr.mxu0 0.0
    %8868 = vmatpush2.msra.mxu0 0.0
    %8869 = vmatprep.subr.mxu0 0.0
    %8870 = vmatpush2.msra.mxu0 0.0
    %8871 = vmatprep.subr.mxu0 0.0
    %8872 = vmatpush2.msra.mxu0 0.0
    %8873 = vmatprep.subr.mxu0 0.0
    %8874 = vmatpush2.msra.mxu0 0.0
    %8875 = vmatprep.subr.mxu0 0.0
    %8876 = vmatpush2.msra.mxu0 0.0
    %8877 = vmatprep.subr.mxu0 0.0
    %8878 = vmatpush2.msra.mxu0 0.0
    %8879 = vmatprep.subr.mxu0 0.0
    %8880 = vmatpush2.msra.mxu0 0.0
    %8881 = vmatprep.mubr.f32.mxu0 0.0
    %v8882 = vand.u32 %v6424, 4294901760
    %v8883 = vsub.f32 %v6424, %v8882
    %8884 = vmatmul.mubr.f32.gmra.mxu0 %v8883
    %v8885 = vpop.f32.mrf.mxu0
    %v8886 = vadd.f32 %v8776, %v8885
    %v8887 = vpop.f32.mrf.mxu0
    %8888 = vmatprep.mubr.f32.mxu0 0.0
    %v8889 = vand.u32 %v6426, 4294901760
    %v8890 = vsub.f32 %v6426, %v8889
    %8891 = vmatmul.mubr.f32.gmra.mxu0 %v8890
    %v8892 = vpop.f32.mrf.mxu0
    %v8893 = vadd.f32 %v8782, %v8892
    %v8894 = vpop.f32.mrf.mxu0
    %8895 = vdwg.mxu0
    %8896 = vmatprep.subr.mxu0 0.0
    %v8897 = vand.u32 %v233, 4294901760
    %8898 = vmatpush1.msra.mxu0 %v8897
    %8899 = vmatprep.subr.mxu0 0.0
    %v8900 = vand.u32 %v232, 4294901760
    %8901 = vmatpush1.msra.mxu0 %v8900
    %8902 = vmatprep.subr.mxu0 0.0
    %v8903 = vand.u32 %v231, 4294901760
    %8904 = vmatpush1.msra.mxu0 %v8903
    %8905 = vmatprep.subr.mxu0 0.0
    %v8906 = vand.u32 %v230, 4294901760
    %8907 = vmatpush1.msra.mxu0 %v8906
    %8908 = vmatprep.subr.mxu0 0.0
    %v8909 = vand.u32 %v229, 4294901760
    %8910 = vmatpush1.msra.mxu0 %v8909
    %8911 = vmatprep.subr.mxu0 0.0
    %v8912 = vand.u32 %v228, 4294901760
    %8913 = vmatpush1.msra.mxu0 %v8912
    %8914 = vmatprep.subr.mxu0 0.0
    %v8915 = vand.u32 %v227, 4294901760
    %8916 = vmatpush1.msra.mxu0 %v8915
    %8917 = vmatprep.subr.mxu0 0.0
    %v8918 = vand.u32 %v226, 4294901760
    %8919 = vmatpush1.msra.mxu0 %v8918
    %8920 = vmatprep.subr.mxu0 0.0
    %v8921 = vand.u32 %v225, 4294901760
    %8922 = vmatpush1.msra.mxu0 %v8921
    %8923 = vmatprep.subr.mxu0 0.0
    %v8924 = vand.u32 %v224, 4294901760
    %8925 = vmatpush1.msra.mxu0 %v8924
    %8926 = vmatprep.subr.mxu0 0.0
    %v8927 = vand.u32 %v223, 4294901760
    %8928 = vmatpush1.msra.mxu0 %v8927
    %8929 = vmatprep.subr.mxu0 0.0
    %v8930 = vand.u32 %v222, 4294901760
    %8931 = vmatpush1.msra.mxu0 %v8930
    %8932 = vmatprep.subr.mxu0 0.0
    %v8933 = vand.u32 %v221, 4294901760
    %8934 = vmatpush1.msra.mxu0 %v8933
    %8935 = vmatprep.subr.mxu0 0.0
    %v8936 = vand.u32 %v220, 4294901760
    %8937 = vmatpush1.msra.mxu0 %v8936
    %8938 = vmatprep.subr.mxu0 0.0
    %v8939 = vand.u32 %v219, 4294901760
    %8940 = vmatpush1.msra.mxu0 %v8939
    %8941 = vmatprep.subr.mxu0 0.0
    %v8942 = vand.u32 %v218, 4294901760
    %8943 = vmatpush1.msra.mxu0 %v8942
    %8944 = vmatprep.subr.mxu0 0.0
    %8945 = vmatpush2.msra.mxu0 0.0
    %8946 = vmatprep.subr.mxu0 0.0
    %8947 = vmatpush2.msra.mxu0 0.0
    %8948 = vmatprep.subr.mxu0 0.0
    %8949 = vmatpush2.msra.mxu0 0.0
    %8950 = vmatprep.subr.mxu0 0.0
    %8951 = vmatpush2.msra.mxu0 0.0
    %8952 = vmatprep.subr.mxu0 0.0
    %8953 = vmatpush2.msra.mxu0 0.0
    %8954 = vmatprep.subr.mxu0 0.0
    %8955 = vmatpush2.msra.mxu0 0.0
    %8956 = vmatprep.subr.mxu0 0.0
    %8957 = vmatpush2.msra.mxu0 0.0
    %8958 = vmatprep.subr.mxu0 0.0
    %8959 = vmatpush2.msra.mxu0 0.0
    %8960 = vmatprep.subr.mxu0 0.0
    %8961 = vmatpush2.msra.mxu0 0.0
    %8962 = vmatprep.subr.mxu0 0.0
    %8963 = vmatpush2.msra.mxu0 0.0
    %8964 = vmatprep.subr.mxu0 0.0
    %8965 = vmatpush2.msra.mxu0 0.0
    %8966 = vmatprep.subr.mxu0 0.0
    %8967 = vmatpush2.msra.mxu0 0.0
    %8968 = vmatprep.subr.mxu0 0.0
    %8969 = vmatpush2.msra.mxu0 0.0
    %8970 = vmatprep.subr.mxu0 0.0
    %8971 = vmatpush2.msra.mxu0 0.0
    %8972 = vmatprep.subr.mxu0 0.0
    %8973 = vmatpush2.msra.mxu0 0.0
    %8974 = vmatprep.subr.mxu0 0.0
    %8975 = vmatpush2.msra.mxu0 0.0
    %8976 = vmatprep.mubr.f32.mxu0 0.0
    %v8977 = vand.u32 %v6424, 4294901760
    %v8978 = vsub.f32 %v6424, %v8977
    %v8979 = vand.u32 %v8978, 4294901760
    %8980 = vmatmul.mubr.f32.gmra.mxu0 %v8979
    %v8981 = vpop.f32.mrf.mxu0
    %v8982 = vadd.f32 %v8886, %v8981
    %v8983 = vpop.f32.mrf.mxu0
    %8984 = vmatprep.mubr.f32.mxu0 0.0
    %v8985 = vand.u32 %v6426, 4294901760
    %v8986 = vsub.f32 %v6426, %v8985
    %v8987 = vand.u32 %v8986, 4294901760
    %8988 = vmatmul.mubr.f32.gmra.mxu0 %v8987
    %v8989 = vpop.f32.mrf.mxu0
    %v8990 = vadd.f32 %v8893, %v8989
    %v8991 = vpop.f32.mrf.mxu0
    %8992 = vdwg.mxu0
    %8993 = vmatprep.subr.mxu0 0.0
    %v8994 = vand.u32 %v233, 4294901760
    %v8995 = vsub.f32 %v233, %v8994
    %v8996 = vand.u32 %v8995, 4294901760
    %8997 = vmatpush1.msra.mxu0 %v8996
    %8998 = vmatprep.subr.mxu0 0.0
    %v8999 = vand.u32 %v232, 4294901760
    %v9000 = vsub.f32 %v232, %v8999
    %v9001 = vand.u32 %v9000, 4294901760
    %9002 = vmatpush1.msra.mxu0 %v9001
    %9003 = vmatprep.subr.mxu0 0.0
    %v9004 = vand.u32 %v231, 4294901760
    %v9005 = vsub.f32 %v231, %v9004
    %v9006 = vand.u32 %v9005, 4294901760
    %9007 = vmatpush1.msra.mxu0 %v9006
    %9008 = vmatprep.subr.mxu0 0.0
    %v9009 = vand.u32 %v230, 4294901760
    %v9010 = vsub.f32 %v230, %v9009
    %v9011 = vand.u32 %v9010, 4294901760
    %9012 = vmatpush1.msra.mxu0 %v9011
    %9013 = vmatprep.subr.mxu0 0.0
    %v9014 = vand.u32 %v229, 4294901760
    %v9015 = vsub.f32 %v229, %v9014
    %v9016 = vand.u32 %v9015, 4294901760
    %9017 = vmatpush1.msra.mxu0 %v9016
    %9018 = vmatprep.subr.mxu0 0.0
    %v9019 = vand.u32 %v228, 4294901760
    %v9020 = vsub.f32 %v228, %v9019
    %v9021 = vand.u32 %v9020, 4294901760
    %9022 = vmatpush1.msra.mxu0 %v9021
    %9023 = vmatprep.subr.mxu0 0.0
    %v9024 = vand.u32 %v227, 4294901760
    %v9025 = vsub.f32 %v227, %v9024
    %v9026 = vand.u32 %v9025, 4294901760
    %9027 = vmatpush1.msra.mxu0 %v9026
    %9028 = vmatprep.subr.mxu0 0.0
    %v9029 = vand.u32 %v226, 4294901760
    %v9030 = vsub.f32 %v226, %v9029
    %v9031 = vand.u32 %v9030, 4294901760
    %9032 = vmatpush1.msra.mxu0 %v9031
    %9033 = vmatprep.subr.mxu0 0.0
    %v9034 = vand.u32 %v225, 4294901760
    %v9035 = vsub.f32 %v225, %v9034
    %v9036 = vand.u32 %v9035, 4294901760
    %9037 = vmatpush1.msra.mxu0 %v9036
    %9038 = vmatprep.subr.mxu0 0.0
    %v9039 = vand.u32 %v224, 4294901760
    %v9040 = vsub.f32 %v224, %v9039
    %v9041 = vand.u32 %v9040, 4294901760
    %9042 = vmatpush1.msra.mxu0 %v9041
    %9043 = vmatprep.subr.mxu0 0.0
    %v9044 = vand.u32 %v223, 4294901760
    %v9045 = vsub.f32 %v223, %v9044
    %v9046 = vand.u32 %v9045, 4294901760
    %9047 = vmatpush1.msra.mxu0 %v9046
    %9048 = vmatprep.subr.mxu0 0.0
    %v9049 = vand.u32 %v222, 4294901760
    %v9050 = vsub.f32 %v222, %v9049
    %v9051 = vand.u32 %v9050, 4294901760
    %9052 = vmatpush1.msra.mxu0 %v9051
    %9053 = vmatprep.subr.mxu0 0.0
    %v9054 = vand.u32 %v221, 4294901760
    %v9055 = vsub.f32 %v221, %v9054
    %v9056 = vand.u32 %v9055, 4294901760
    %9057 = vmatpush1.msra.mxu0 %v9056
    %9058 = vmatprep.subr.mxu0 0.0
    %v9059 = vand.u32 %v220, 4294901760
    %v9060 = vsub.f32 %v220, %v9059
    %v9061 = vand.u32 %v9060, 4294901760
    %9062 = vmatpush1.msra.mxu0 %v9061
    %9063 = vmatprep.subr.mxu0 0.0
    %v9064 = vand.u32 %v219, 4294901760
    %v9065 = vsub.f32 %v219, %v9064
    %v9066 = vand.u32 %v9065, 4294901760
    %9067 = vmatpush1.msra.mxu0 %v9066
    %9068 = vmatprep.subr.mxu0 0.0
    %v9069 = vand.u32 %v218, 4294901760
    %v9070 = vsub.f32 %v218, %v9069
    %v9071 = vand.u32 %v9070, 4294901760
    %9072 = vmatpush1.msra.mxu0 %v9071
    %9073 = vmatprep.subr.mxu0 0.0
    %9074 = vmatpush2.msra.mxu0 0.0
    %9075 = vmatprep.subr.mxu0 0.0
    %9076 = vmatpush2.msra.mxu0 0.0
    %9077 = vmatprep.subr.mxu0 0.0
    %9078 = vmatpush2.msra.mxu0 0.0
    %9079 = vmatprep.subr.mxu0 0.0
    %9080 = vmatpush2.msra.mxu0 0.0
    %9081 = vmatprep.subr.mxu0 0.0
    %9082 = vmatpush2.msra.mxu0 0.0
    %9083 = vmatprep.subr.mxu0 0.0
    %9084 = vmatpush2.msra.mxu0 0.0
    %9085 = vmatprep.subr.mxu0 0.0
    %9086 = vmatpush2.msra.mxu0 0.0
    %9087 = vmatprep.subr.mxu0 0.0
    %9088 = vmatpush2.msra.mxu0 0.0
    %9089 = vmatprep.subr.mxu0 0.0
    %9090 = vmatpush2.msra.mxu0 0.0
    %9091 = vmatprep.subr.mxu0 0.0
    %9092 = vmatpush2.msra.mxu0 0.0
    %9093 = vmatprep.subr.mxu0 0.0
    %9094 = vmatpush2.msra.mxu0 0.0
    %9095 = vmatprep.subr.mxu0 0.0
    %9096 = vmatpush2.msra.mxu0 0.0
    %9097 = vmatprep.subr.mxu0 0.0
    %9098 = vmatpush2.msra.mxu0 0.0
    %9099 = vmatprep.subr.mxu0 0.0
    %9100 = vmatpush2.msra.mxu0 0.0
    %9101 = vmatprep.subr.mxu0 0.0
    %9102 = vmatpush2.msra.mxu0 0.0
    %9103 = vmatprep.subr.mxu0 0.0
    %9104 = vmatpush2.msra.mxu0 0.0
    %9105 = vmatprep.mubr.f32.mxu0 0.0
    %v9106 = vand.u32 %v6424, 4294901760
    %9107 = vmatmul.mubr.f32.gmra.mxu0 %v9106
    %v9108 = vpop.f32.mrf.mxu0
    %v9109 = vadd.f32 %v8982, %v9108
    %v9110 = vpop.f32.mrf.mxu0
    %9111 = vmatprep.mubr.f32.mxu0 0.0
    %v9112 = vand.u32 %v6426, 4294901760
    %9113 = vmatmul.mubr.f32.gmra.mxu0 %v9112
    %v9114 = vpop.f32.mrf.mxu0
    %v9115 = vadd.f32 %v8990, %v9114
    %v9116 = vpop.f32.mrf.mxu0
    %9117 = vdwg.mxu0
    %9118 = vmatprep.subr.mxu0 0.0
    %v9119 = vand.u32 %v233, 4294901760
    %9120 = vmatpush1.msra.mxu0 %v9119
    %9121 = vmatprep.subr.mxu0 0.0
    %v9122 = vand.u32 %v232, 4294901760
    %9123 = vmatpush1.msra.mxu0 %v9122
    %9124 = vmatprep.subr.mxu0 0.0
    %v9125 = vand.u32 %v231, 4294901760
    %9126 = vmatpush1.msra.mxu0 %v9125
    %9127 = vmatprep.subr.mxu0 0.0
    %v9128 = vand.u32 %v230, 4294901760
    %9129 = vmatpush1.msra.mxu0 %v9128
    %9130 = vmatprep.subr.mxu0 0.0
    %v9131 = vand.u32 %v229, 4294901760
    %9132 = vmatpush1.msra.mxu0 %v9131
    %9133 = vmatprep.subr.mxu0 0.0
    %v9134 = vand.u32 %v228, 4294901760
    %9135 = vmatpush1.msra.mxu0 %v9134
    %9136 = vmatprep.subr.mxu0 0.0
    %v9137 = vand.u32 %v227, 4294901760
    %9138 = vmatpush1.msra.mxu0 %v9137
    %9139 = vmatprep.subr.mxu0 0.0
    %v9140 = vand.u32 %v226, 4294901760
    %9141 = vmatpush1.msra.mxu0 %v9140
    %9142 = vmatprep.subr.mxu0 0.0
    %v9143 = vand.u32 %v225, 4294901760
    %9144 = vmatpush1.msra.mxu0 %v9143
    %9145 = vmatprep.subr.mxu0 0.0
    %v9146 = vand.u32 %v224, 4294901760
    %9147 = vmatpush1.msra.mxu0 %v9146
    %9148 = vmatprep.subr.mxu0 0.0
    %v9149 = vand.u32 %v223, 4294901760
    %9150 = vmatpush1.msra.mxu0 %v9149
    %9151 = vmatprep.subr.mxu0 0.0
    %v9152 = vand.u32 %v222, 4294901760
    %9153 = vmatpush1.msra.mxu0 %v9152
    %9154 = vmatprep.subr.mxu0 0.0
    %v9155 = vand.u32 %v221, 4294901760
    %9156 = vmatpush1.msra.mxu0 %v9155
    %9157 = vmatprep.subr.mxu0 0.0
    %v9158 = vand.u32 %v220, 4294901760
    %9159 = vmatpush1.msra.mxu0 %v9158
    %9160 = vmatprep.subr.mxu0 0.0
    %v9161 = vand.u32 %v219, 4294901760
    %9162 = vmatpush1.msra.mxu0 %v9161
    %9163 = vmatprep.subr.mxu0 0.0
    %v9164 = vand.u32 %v218, 4294901760
    %9165 = vmatpush1.msra.mxu0 %v9164
    %9166 = vmatprep.subr.mxu0 0.0
    %9167 = vmatpush2.msra.mxu0 0.0
    %9168 = vmatprep.subr.mxu0 0.0
    %9169 = vmatpush2.msra.mxu0 0.0
    %9170 = vmatprep.subr.mxu0 0.0
    %9171 = vmatpush2.msra.mxu0 0.0
    %9172 = vmatprep.subr.mxu0 0.0
    %9173 = vmatpush2.msra.mxu0 0.0
    %9174 = vmatprep.subr.mxu0 0.0
    %9175 = vmatpush2.msra.mxu0 0.0
    %9176 = vmatprep.subr.mxu0 0.0
    %9177 = vmatpush2.msra.mxu0 0.0
    %9178 = vmatprep.subr.mxu0 0.0
    %9179 = vmatpush2.msra.mxu0 0.0
    %9180 = vmatprep.subr.mxu0 0.0
    %9181 = vmatpush2.msra.mxu0 0.0
    %9182 = vmatprep.subr.mxu0 0.0
    %9183 = vmatpush2.msra.mxu0 0.0
    %9184 = vmatprep.subr.mxu0 0.0
    %9185 = vmatpush2.msra.mxu0 0.0
    %9186 = vmatprep.subr.mxu0 0.0
    %9187 = vmatpush2.msra.mxu0 0.0
    %9188 = vmatprep.subr.mxu0 0.0
    %9189 = vmatpush2.msra.mxu0 0.0
    %9190 = vmatprep.subr.mxu0 0.0
    %9191 = vmatpush2.msra.mxu0 0.0
    %9192 = vmatprep.subr.mxu0 0.0
    %9193 = vmatpush2.msra.mxu0 0.0
    %9194 = vmatprep.subr.mxu0 0.0
    %9195 = vmatpush2.msra.mxu0 0.0
    %9196 = vmatprep.subr.mxu0 0.0
    %9197 = vmatpush2.msra.mxu0 0.0
    %9198 = vmatprep.mubr.f32.mxu0 0.0
    %v9199 = vand.u32 %v6424, 4294901760
    %9200 = vmatmul.mubr.f32.gmra.mxu0 %v9199
    %v9201 = vpop.f32.mrf.mxu0
    %v9202 = vadd.f32 %v9109, %v9201
    %v9203 = vpop.f32.mrf.mxu0
    %9204 = vmatprep.mubr.f32.mxu0 0.0
    %v9205 = vand.u32 %v6426, 4294901760
    %9206 = vmatmul.mubr.f32.gmra.mxu0 %v9205
    %v9207 = vpop.f32.mrf.mxu0
    %v9208 = vadd.f32 %v9115, %v9207
    %v9209 = vpop.f32.mrf.mxu0
    %9210 = vdwg.mxu0
    %9211 = vmatprep.subr.mxu0 0.0
    %v9212 = vand.u32 %v249, 4294901760
    %9213 = vmatpush1.msra.mxu0 %v9212
    %9214 = vmatprep.subr.mxu0 0.0
    %v9215 = vand.u32 %v248, 4294901760
    %9216 = vmatpush1.msra.mxu0 %v9215
    %9217 = vmatprep.subr.mxu0 0.0
    %v9218 = vand.u32 %v247, 4294901760
    %9219 = vmatpush1.msra.mxu0 %v9218
    %9220 = vmatprep.subr.mxu0 0.0
    %v9221 = vand.u32 %v246, 4294901760
    %9222 = vmatpush1.msra.mxu0 %v9221
    %9223 = vmatprep.subr.mxu0 0.0
    %v9224 = vand.u32 %v245, 4294901760
    %9225 = vmatpush1.msra.mxu0 %v9224
    %9226 = vmatprep.subr.mxu0 0.0
    %v9227 = vand.u32 %v244, 4294901760
    %9228 = vmatpush1.msra.mxu0 %v9227
    %9229 = vmatprep.subr.mxu0 0.0
    %v9230 = vand.u32 %v243, 4294901760
    %9231 = vmatpush1.msra.mxu0 %v9230
    %9232 = vmatprep.subr.mxu0 0.0
    %v9233 = vand.u32 %v242, 4294901760
    %9234 = vmatpush1.msra.mxu0 %v9233
    %9235 = vmatprep.subr.mxu0 0.0
    %v9236 = vand.u32 %v241, 4294901760
    %9237 = vmatpush1.msra.mxu0 %v9236
    %9238 = vmatprep.subr.mxu0 0.0
    %v9239 = vand.u32 %v240, 4294901760
    %9240 = vmatpush1.msra.mxu0 %v9239
    %9241 = vmatprep.subr.mxu0 0.0
    %v9242 = vand.u32 %v239, 4294901760
    %9243 = vmatpush1.msra.mxu0 %v9242
    %9244 = vmatprep.subr.mxu0 0.0
    %v9245 = vand.u32 %v238, 4294901760
    %9246 = vmatpush1.msra.mxu0 %v9245
    %9247 = vmatprep.subr.mxu0 0.0
    %v9248 = vand.u32 %v237, 4294901760
    %9249 = vmatpush1.msra.mxu0 %v9248
    %9250 = vmatprep.subr.mxu0 0.0
    %v9251 = vand.u32 %v236, 4294901760
    %9252 = vmatpush1.msra.mxu0 %v9251
    %9253 = vmatprep.subr.mxu0 0.0
    %v9254 = vand.u32 %v235, 4294901760
    %9255 = vmatpush1.msra.mxu0 %v9254
    %9256 = vmatprep.subr.mxu0 0.0
    %v9257 = vand.u32 %v234, 4294901760
    %9258 = vmatpush1.msra.mxu0 %v9257
    %9259 = vmatprep.subr.mxu0 0.0
    %9260 = vmatpush2.msra.mxu0 0.0
    %9261 = vmatprep.subr.mxu0 0.0
    %9262 = vmatpush2.msra.mxu0 0.0
    %9263 = vmatprep.subr.mxu0 0.0
    %9264 = vmatpush2.msra.mxu0 0.0
    %9265 = vmatprep.subr.mxu0 0.0
    %9266 = vmatpush2.msra.mxu0 0.0
    %9267 = vmatprep.subr.mxu0 0.0
    %9268 = vmatpush2.msra.mxu0 0.0
    %9269 = vmatprep.subr.mxu0 0.0
    %9270 = vmatpush2.msra.mxu0 0.0
    %9271 = vmatprep.subr.mxu0 0.0
    %9272 = vmatpush2.msra.mxu0 0.0
    %9273 = vmatprep.subr.mxu0 0.0
    %9274 = vmatpush2.msra.mxu0 0.0
    %9275 = vmatprep.subr.mxu0 0.0
    %9276 = vmatpush2.msra.mxu0 0.0
    %9277 = vmatprep.subr.mxu0 0.0
    %9278 = vmatpush2.msra.mxu0 0.0
    %9279 = vmatprep.subr.mxu0 0.0
    %9280 = vmatpush2.msra.mxu0 0.0
    %9281 = vmatprep.subr.mxu0 0.0
    %9282 = vmatpush2.msra.mxu0 0.0
    %9283 = vmatprep.subr.mxu0 0.0
    %9284 = vmatpush2.msra.mxu0 0.0
    %9285 = vmatprep.subr.mxu0 0.0
    %9286 = vmatpush2.msra.mxu0 0.0
    %9287 = vmatprep.subr.mxu0 0.0
    %9288 = vmatpush2.msra.mxu0 0.0
    %9289 = vmatprep.subr.mxu0 0.0
    %9290 = vmatpush2.msra.mxu0 0.0
    %9291 = vmatprep.mubr.f32.mxu0 0.0
    %v9292 = vand.u32 %v6428, 4294901760
    %v9293 = vsub.f32 %v6428, %v9292
    %v9294 = vand.u32 %v9293, 4294901760
    %v9295 = vsub.f32 %v9293, %v9294
    %v9296 = vand.u32 %v9295, 4294901760
    %9297 = vmatmul.mubr.f32.gmra.mxu0 %v9296
    %v9298 = vpop.f32.mrf.mxu0
    %v9299 = vadd.f32 0.0, %v9298
    %v9300 = vpop.f32.mrf.mxu0
    %9301 = vmatprep.mubr.f32.mxu0 0.0
    %v9302 = vand.u32 %v6430, 4294901760
    %v9303 = vsub.f32 %v6430, %v9302
    %v9304 = vand.u32 %v9303, 4294901760
    %v9305 = vsub.f32 %v9303, %v9304
    %v9306 = vand.u32 %v9305, 4294901760
    %9307 = vmatmul.mubr.f32.gmra.mxu0 %v9306
    %v9308 = vpop.f32.mrf.mxu0
    %v9309 = vadd.f32 0.0, %v9308
    %v9310 = vpop.f32.mrf.mxu0
    %9311 = vdwg.mxu0
    %9312 = vmatprep.subr.mxu0 0.0
    %v9313 = vand.u32 %v249, 4294901760
    %v9314 = vsub.f32 %v249, %v9313
    %v9315 = vand.u32 %v9314, 4294901760
    %v9316 = vsub.f32 %v9314, %v9315
    %v9317 = vand.u32 %v9316, 4294901760
    %9318 = vmatpush1.msra.mxu0 %v9317
    %9319 = vmatprep.subr.mxu0 0.0
    %v9320 = vand.u32 %v248, 4294901760
    %v9321 = vsub.f32 %v248, %v9320
    %v9322 = vand.u32 %v9321, 4294901760
    %v9323 = vsub.f32 %v9321, %v9322
    %v9324 = vand.u32 %v9323, 4294901760
    %9325 = vmatpush1.msra.mxu0 %v9324
    %9326 = vmatprep.subr.mxu0 0.0
    %v9327 = vand.u32 %v247, 4294901760
    %v9328 = vsub.f32 %v247, %v9327
    %v9329 = vand.u32 %v9328, 4294901760
    %v9330 = vsub.f32 %v9328, %v9329
    %v9331 = vand.u32 %v9330, 4294901760
    %9332 = vmatpush1.msra.mxu0 %v9331
    %9333 = vmatprep.subr.mxu0 0.0
    %v9334 = vand.u32 %v246, 4294901760
    %v9335 = vsub.f32 %v246, %v9334
    %v9336 = vand.u32 %v9335, 4294901760
    %v9337 = vsub.f32 %v9335, %v9336
    %v9338 = vand.u32 %v9337, 4294901760
    %9339 = vmatpush1.msra.mxu0 %v9338
    %9340 = vmatprep.subr.mxu0 0.0
    %v9341 = vand.u32 %v245, 4294901760
    %v9342 = vsub.f32 %v245, %v9341
    %v9343 = vand.u32 %v9342, 4294901760
    %v9344 = vsub.f32 %v9342, %v9343
    %v9345 = vand.u32 %v9344, 4294901760
    %9346 = vmatpush1.msra.mxu0 %v9345
    %9347 = vmatprep.subr.mxu0 0.0
    %v9348 = vand.u32 %v244, 4294901760
    %v9349 = vsub.f32 %v244, %v9348
    %v9350 = vand.u32 %v9349, 4294901760
    %v9351 = vsub.f32 %v9349, %v9350
    %v9352 = vand.u32 %v9351, 4294901760
    %9353 = vmatpush1.msra.mxu0 %v9352
    %9354 = vmatprep.subr.mxu0 0.0
    %v9355 = vand.u32 %v243, 4294901760
    %v9356 = vsub.f32 %v243, %v9355
    %v9357 = vand.u32 %v9356, 4294901760
    %v9358 = vsub.f32 %v9356, %v9357
    %v9359 = vand.u32 %v9358, 4294901760
    %9360 = vmatpush1.msra.mxu0 %v9359
    %9361 = vmatprep.subr.mxu0 0.0
    %v9362 = vand.u32 %v242, 4294901760
    %v9363 = vsub.f32 %v242, %v9362
    %v9364 = vand.u32 %v9363, 4294901760
    %v9365 = vsub.f32 %v9363, %v9364
    %v9366 = vand.u32 %v9365, 4294901760
    %9367 = vmatpush1.msra.mxu0 %v9366
    %9368 = vmatprep.subr.mxu0 0.0
    %v9369 = vand.u32 %v241, 4294901760
    %v9370 = vsub.f32 %v241, %v9369
    %v9371 = vand.u32 %v9370, 4294901760
    %v9372 = vsub.f32 %v9370, %v9371
    %v9373 = vand.u32 %v9372, 4294901760
    %9374 = vmatpush1.msra.mxu0 %v9373
    %9375 = vmatprep.subr.mxu0 0.0
    %v9376 = vand.u32 %v240, 4294901760
    %v9377 = vsub.f32 %v240, %v9376
    %v9378 = vand.u32 %v9377, 4294901760
    %v9379 = vsub.f32 %v9377, %v9378
    %v9380 = vand.u32 %v9379, 4294901760
    %9381 = vmatpush1.msra.mxu0 %v9380
    %9382 = vmatprep.subr.mxu0 0.0
    %v9383 = vand.u32 %v239, 4294901760
    %v9384 = vsub.f32 %v239, %v9383
    %v9385 = vand.u32 %v9384, 4294901760
    %v9386 = vsub.f32 %v9384, %v9385
    %v9387 = vand.u32 %v9386, 4294901760
    %9388 = vmatpush1.msra.mxu0 %v9387
    %9389 = vmatprep.subr.mxu0 0.0
    %v9390 = vand.u32 %v238, 4294901760
    %v9391 = vsub.f32 %v238, %v9390
    %v9392 = vand.u32 %v9391, 4294901760
    %v9393 = vsub.f32 %v9391, %v9392
    %v9394 = vand.u32 %v9393, 4294901760
    %9395 = vmatpush1.msra.mxu0 %v9394
    %9396 = vmatprep.subr.mxu0 0.0
    %v9397 = vand.u32 %v237, 4294901760
    %v9398 = vsub.f32 %v237, %v9397
    %v9399 = vand.u32 %v9398, 4294901760
    %v9400 = vsub.f32 %v9398, %v9399
    %v9401 = vand.u32 %v9400, 4294901760
    %9402 = vmatpush1.msra.mxu0 %v9401
    %9403 = vmatprep.subr.mxu0 0.0
    %v9404 = vand.u32 %v236, 4294901760
    %v9405 = vsub.f32 %v236, %v9404
    %v9406 = vand.u32 %v9405, 4294901760
    %v9407 = vsub.f32 %v9405, %v9406
    %v9408 = vand.u32 %v9407, 4294901760
    %9409 = vmatpush1.msra.mxu0 %v9408
    %9410 = vmatprep.subr.mxu0 0.0
    %v9411 = vand.u32 %v235, 4294901760
    %v9412 = vsub.f32 %v235, %v9411
    %v9413 = vand.u32 %v9412, 4294901760
    %v9414 = vsub.f32 %v9412, %v9413
    %v9415 = vand.u32 %v9414, 4294901760
    %9416 = vmatpush1.msra.mxu0 %v9415
    %9417 = vmatprep.subr.mxu0 0.0
    %v9418 = vand.u32 %v234, 4294901760
    %v9419 = vsub.f32 %v234, %v9418
    %v9420 = vand.u32 %v9419, 4294901760
    %v9421 = vsub.f32 %v9419, %v9420
    %v9422 = vand.u32 %v9421, 4294901760
    %9423 = vmatpush1.msra.mxu0 %v9422
    %9424 = vmatprep.subr.mxu0 0.0
    %9425 = vmatpush2.msra.mxu0 0.0
    %9426 = vmatprep.subr.mxu0 0.0
    %9427 = vmatpush2.msra.mxu0 0.0
    %9428 = vmatprep.subr.mxu0 0.0
    %9429 = vmatpush2.msra.mxu0 0.0
    %9430 = vmatprep.subr.mxu0 0.0
    %9431 = vmatpush2.msra.mxu0 0.0
    %9432 = vmatprep.subr.mxu0 0.0
    %9433 = vmatpush2.msra.mxu0 0.0
    %9434 = vmatprep.subr.mxu0 0.0
    %9435 = vmatpush2.msra.mxu0 0.0
    %9436 = vmatprep.subr.mxu0 0.0
    %9437 = vmatpush2.msra.mxu0 0.0
    %9438 = vmatprep.subr.mxu0 0.0
    %9439 = vmatpush2.msra.mxu0 0.0
    %9440 = vmatprep.subr.mxu0 0.0
    %9441 = vmatpush2.msra.mxu0 0.0
    %9442 = vmatprep.subr.mxu0 0.0
    %9443 = vmatpush2.msra.mxu0 0.0
    %9444 = vmatprep.subr.mxu0 0.0
    %9445 = vmatpush2.msra.mxu0 0.0
    %9446 = vmatprep.subr.mxu0 0.0
    %9447 = vmatpush2.msra.mxu0 0.0
    %9448 = vmatprep.subr.mxu0 0.0
    %9449 = vmatpush2.msra.mxu0 0.0
    %9450 = vmatprep.subr.mxu0 0.0
    %9451 = vmatpush2.msra.mxu0 0.0
    %9452 = vmatprep.subr.mxu0 0.0
    %9453 = vmatpush2.msra.mxu0 0.0
    %9454 = vmatprep.subr.mxu0 0.0
    %9455 = vmatpush2.msra.mxu0 0.0
    %9456 = vmatprep.mubr.f32.mxu0 0.0
    %v9457 = vand.u32 %v6428, 4294901760
    %9458 = vmatmul.mubr.f32.gmra.mxu0 %v9457
    %v9459 = vpop.f32.mrf.mxu0
    %v9460 = vadd.f32 %v9299, %v9459
    %v9461 = vpop.f32.mrf.mxu0
    %9462 = vmatprep.mubr.f32.mxu0 0.0
    %v9463 = vand.u32 %v6430, 4294901760
    %9464 = vmatmul.mubr.f32.gmra.mxu0 %v9463
    %v9465 = vpop.f32.mrf.mxu0
    %v9466 = vadd.f32 %v9309, %v9465
    %v9467 = vpop.f32.mrf.mxu0
    %9468 = vdwg.mxu0
    %9469 = vmatprep.subr.mxu0 0.0
    %v9470 = vand.u32 %v249, 4294901760
    %v9471 = vsub.f32 %v249, %v9470
    %9472 = vmatpush1.msra.mxu0 %v9471
    %9473 = vmatprep.subr.mxu0 0.0
    %v9474 = vand.u32 %v248, 4294901760
    %v9475 = vsub.f32 %v248, %v9474
    %9476 = vmatpush1.msra.mxu0 %v9475
    %9477 = vmatprep.subr.mxu0 0.0
    %v9478 = vand.u32 %v247, 4294901760
    %v9479 = vsub.f32 %v247, %v9478
    %9480 = vmatpush1.msra.mxu0 %v9479
    %9481 = vmatprep.subr.mxu0 0.0
    %v9482 = vand.u32 %v246, 4294901760
    %v9483 = vsub.f32 %v246, %v9482
    %9484 = vmatpush1.msra.mxu0 %v9483
    %9485 = vmatprep.subr.mxu0 0.0
    %v9486 = vand.u32 %v245, 4294901760
    %v9487 = vsub.f32 %v245, %v9486
    %9488 = vmatpush1.msra.mxu0 %v9487
    %9489 = vmatprep.subr.mxu0 0.0
    %v9490 = vand.u32 %v244, 4294901760
    %v9491 = vsub.f32 %v244, %v9490
    %9492 = vmatpush1.msra.mxu0 %v9491
    %9493 = vmatprep.subr.mxu0 0.0
    %v9494 = vand.u32 %v243, 4294901760
    %v9495 = vsub.f32 %v243, %v9494
    %9496 = vmatpush1.msra.mxu0 %v9495
    %9497 = vmatprep.subr.mxu0 0.0
    %v9498 = vand.u32 %v242, 4294901760
    %v9499 = vsub.f32 %v242, %v9498
    %9500 = vmatpush1.msra.mxu0 %v9499
    %9501 = vmatprep.subr.mxu0 0.0
    %v9502 = vand.u32 %v241, 4294901760
    %v9503 = vsub.f32 %v241, %v9502
    %9504 = vmatpush1.msra.mxu0 %v9503
    %9505 = vmatprep.subr.mxu0 0.0
    %v9506 = vand.u32 %v240, 4294901760
    %v9507 = vsub.f32 %v240, %v9506
    %9508 = vmatpush1.msra.mxu0 %v9507
    %9509 = vmatprep.subr.mxu0 0.0
    %v9510 = vand.u32 %v239, 4294901760
    %v9511 = vsub.f32 %v239, %v9510
    %9512 = vmatpush1.msra.mxu0 %v9511
    %9513 = vmatprep.subr.mxu0 0.0
    %v9514 = vand.u32 %v238, 4294901760
    %v9515 = vsub.f32 %v238, %v9514
    %9516 = vmatpush1.msra.mxu0 %v9515
    %9517 = vmatprep.subr.mxu0 0.0
    %v9518 = vand.u32 %v237, 4294901760
    %v9519 = vsub.f32 %v237, %v9518
    %9520 = vmatpush1.msra.mxu0 %v9519
    %9521 = vmatprep.subr.mxu0 0.0
    %v9522 = vand.u32 %v236, 4294901760
    %v9523 = vsub.f32 %v236, %v9522
    %9524 = vmatpush1.msra.mxu0 %v9523
    %9525 = vmatprep.subr.mxu0 0.0
    %v9526 = vand.u32 %v235, 4294901760
    %v9527 = vsub.f32 %v235, %v9526
    %9528 = vmatpush1.msra.mxu0 %v9527
    %9529 = vmatprep.subr.mxu0 0.0
    %v9530 = vand.u32 %v234, 4294901760
    %v9531 = vsub.f32 %v234, %v9530
    %9532 = vmatpush1.msra.mxu0 %v9531
    %9533 = vmatprep.subr.mxu0 0.0
    %9534 = vmatpush2.msra.mxu0 0.0
    %9535 = vmatprep.subr.mxu0 0.0
    %9536 = vmatpush2.msra.mxu0 0.0
    %9537 = vmatprep.subr.mxu0 0.0
    %9538 = vmatpush2.msra.mxu0 0.0
    %9539 = vmatprep.subr.mxu0 0.0
    %9540 = vmatpush2.msra.mxu0 0.0
    %9541 = vmatprep.subr.mxu0 0.0
    %9542 = vmatpush2.msra.mxu0 0.0
    %9543 = vmatprep.subr.mxu0 0.0
    %9544 = vmatpush2.msra.mxu0 0.0
    %9545 = vmatprep.subr.mxu0 0.0
    %9546 = vmatpush2.msra.mxu0 0.0
    %9547 = vmatprep.subr.mxu0 0.0
    %9548 = vmatpush2.msra.mxu0 0.0
    %9549 = vmatprep.subr.mxu0 0.0
    %9550 = vmatpush2.msra.mxu0 0.0
    %9551 = vmatprep.subr.mxu0 0.0
    %9552 = vmatpush2.msra.mxu0 0.0
    %9553 = vmatprep.subr.mxu0 0.0
    %9554 = vmatpush2.msra.mxu0 0.0
    %9555 = vmatprep.subr.mxu0 0.0
    %9556 = vmatpush2.msra.mxu0 0.0
    %9557 = vmatprep.subr.mxu0 0.0
    %9558 = vmatpush2.msra.mxu0 0.0
    %9559 = vmatprep.subr.mxu0 0.0
    %9560 = vmatpush2.msra.mxu0 0.0
    %9561 = vmatprep.subr.mxu0 0.0
    %9562 = vmatpush2.msra.mxu0 0.0
    %9563 = vmatprep.subr.mxu0 0.0
    %9564 = vmatpush2.msra.mxu0 0.0
    %9565 = vmatprep.mubr.f32.mxu0 0.0
    %v9566 = vand.u32 %v6428, 4294901760
    %v9567 = vsub.f32 %v6428, %v9566
    %9568 = vmatmul.mubr.f32.gmra.mxu0 %v9567
    %v9569 = vpop.f32.mrf.mxu0
    %v9570 = vadd.f32 %v9460, %v9569
    %v9571 = vpop.f32.mrf.mxu0
    %9572 = vmatprep.mubr.f32.mxu0 0.0
    %v9573 = vand.u32 %v6430, 4294901760
    %v9574 = vsub.f32 %v6430, %v9573
    %9575 = vmatmul.mubr.f32.gmra.mxu0 %v9574
    %v9576 = vpop.f32.mrf.mxu0
    %v9577 = vadd.f32 %v9466, %v9576
    %v9578 = vpop.f32.mrf.mxu0
    %9579 = vdwg.mxu0
    %9580 = vmatprep.subr.mxu0 0.0
    %v9581 = vand.u32 %v249, 4294901760
    %9582 = vmatpush1.msra.mxu0 %v9581
    %9583 = vmatprep.subr.mxu0 0.0
    %v9584 = vand.u32 %v248, 4294901760
    %9585 = vmatpush1.msra.mxu0 %v9584
    %9586 = vmatprep.subr.mxu0 0.0
    %v9587 = vand.u32 %v247, 4294901760
    %9588 = vmatpush1.msra.mxu0 %v9587
    %9589 = vmatprep.subr.mxu0 0.0
    %v9590 = vand.u32 %v246, 4294901760
    %9591 = vmatpush1.msra.mxu0 %v9590
    %9592 = vmatprep.subr.mxu0 0.0
    %v9593 = vand.u32 %v245, 4294901760
    %9594 = vmatpush1.msra.mxu0 %v9593
    %9595 = vmatprep.subr.mxu0 0.0
    %v9596 = vand.u32 %v244, 4294901760
    %9597 = vmatpush1.msra.mxu0 %v9596
    %9598 = vmatprep.subr.mxu0 0.0
    %v9599 = vand.u32 %v243, 4294901760
    %9600 = vmatpush1.msra.mxu0 %v9599
    %9601 = vmatprep.subr.mxu0 0.0
    %v9602 = vand.u32 %v242, 4294901760
    %9603 = vmatpush1.msra.mxu0 %v9602
    %9604 = vmatprep.subr.mxu0 0.0
    %v9605 = vand.u32 %v241, 4294901760
    %9606 = vmatpush1.msra.mxu0 %v9605
    %9607 = vmatprep.subr.mxu0 0.0
    %v9608 = vand.u32 %v240, 4294901760
    %9609 = vmatpush1.msra.mxu0 %v9608
    %9610 = vmatprep.subr.mxu0 0.0
    %v9611 = vand.u32 %v239, 4294901760
    %9612 = vmatpush1.msra.mxu0 %v9611
    %9613 = vmatprep.subr.mxu0 0.0
    %v9614 = vand.u32 %v238, 4294901760
    %9615 = vmatpush1.msra.mxu0 %v9614
    %9616 = vmatprep.subr.mxu0 0.0
    %v9617 = vand.u32 %v237, 4294901760
    %9618 = vmatpush1.msra.mxu0 %v9617
    %9619 = vmatprep.subr.mxu0 0.0
    %v9620 = vand.u32 %v236, 4294901760
    %9621 = vmatpush1.msra.mxu0 %v9620
    %9622 = vmatprep.subr.mxu0 0.0
    %v9623 = vand.u32 %v235, 4294901760
    %9624 = vmatpush1.msra.mxu0 %v9623
    %9625 = vmatprep.subr.mxu0 0.0
    %v9626 = vand.u32 %v234, 4294901760
    %9627 = vmatpush1.msra.mxu0 %v9626
    %9628 = vmatprep.subr.mxu0 0.0
    %9629 = vmatpush2.msra.mxu0 0.0
    %9630 = vmatprep.subr.mxu0 0.0
    %9631 = vmatpush2.msra.mxu0 0.0
    %9632 = vmatprep.subr.mxu0 0.0
    %9633 = vmatpush2.msra.mxu0 0.0
    %9634 = vmatprep.subr.mxu0 0.0
    %9635 = vmatpush2.msra.mxu0 0.0
    %9636 = vmatprep.subr.mxu0 0.0
    %9637 = vmatpush2.msra.mxu0 0.0
    %9638 = vmatprep.subr.mxu0 0.0
    %9639 = vmatpush2.msra.mxu0 0.0
    %9640 = vmatprep.subr.mxu0 0.0
    %9641 = vmatpush2.msra.mxu0 0.0
    %9642 = vmatprep.subr.mxu0 0.0
    %9643 = vmatpush2.msra.mxu0 0.0
    %9644 = vmatprep.subr.mxu0 0.0
    %9645 = vmatpush2.msra.mxu0 0.0
    %9646 = vmatprep.subr.mxu0 0.0
    %9647 = vmatpush2.msra.mxu0 0.0
    %9648 = vmatprep.subr.mxu0 0.0
    %9649 = vmatpush2.msra.mxu0 0.0
    %9650 = vmatprep.subr.mxu0 0.0
    %9651 = vmatpush2.msra.mxu0 0.0
    %9652 = vmatprep.subr.mxu0 0.0
    %9653 = vmatpush2.msra.mxu0 0.0
    %9654 = vmatprep.subr.mxu0 0.0
    %9655 = vmatpush2.msra.mxu0 0.0
    %9656 = vmatprep.subr.mxu0 0.0
    %9657 = vmatpush2.msra.mxu0 0.0
    %9658 = vmatprep.subr.mxu0 0.0
    %9659 = vmatpush2.msra.mxu0 0.0
    %9660 = vmatprep.mubr.f32.mxu0 0.0
    %v9661 = vand.u32 %v6428, 4294901760
    %v9662 = vsub.f32 %v6428, %v9661
    %v9663 = vand.u32 %v9662, 4294901760
    %9664 = vmatmul.mubr.f32.gmra.mxu0 %v9663
    %v9665 = vpop.f32.mrf.mxu0
    %v9666 = vadd.f32 %v9570, %v9665
    %v9667 = vpop.f32.mrf.mxu0
    %9668 = vmatprep.mubr.f32.mxu0 0.0
    %v9669 = vand.u32 %v6430, 4294901760
    %v9670 = vsub.f32 %v6430, %v9669
    %v9671 = vand.u32 %v9670, 4294901760
    %9672 = vmatmul.mubr.f32.gmra.mxu0 %v9671
    %v9673 = vpop.f32.mrf.mxu0
    %v9674 = vadd.f32 %v9577, %v9673
    %v9675 = vpop.f32.mrf.mxu0
    %9676 = vdwg.mxu0
    %9677 = vmatprep.subr.mxu0 0.0
    %v9678 = vand.u32 %v249, 4294901760
    %v9679 = vsub.f32 %v249, %v9678
    %v9680 = vand.u32 %v9679, 4294901760
    %9681 = vmatpush1.msra.mxu0 %v9680
    %9682 = vmatprep.subr.mxu0 0.0
    %v9683 = vand.u32 %v248, 4294901760
    %v9684 = vsub.f32 %v248, %v9683
    %v9685 = vand.u32 %v9684, 4294901760
    %9686 = vmatpush1.msra.mxu0 %v9685
    %9687 = vmatprep.subr.mxu0 0.0
    %v9688 = vand.u32 %v247, 4294901760
    %v9689 = vsub.f32 %v247, %v9688
    %v9690 = vand.u32 %v9689, 4294901760
    %9691 = vmatpush1.msra.mxu0 %v9690
    %9692 = vmatprep.subr.mxu0 0.0
    %v9693 = vand.u32 %v246, 4294901760
    %v9694 = vsub.f32 %v246, %v9693
    %v9695 = vand.u32 %v9694, 4294901760
    %9696 = vmatpush1.msra.mxu0 %v9695
    %9697 = vmatprep.subr.mxu0 0.0
    %v9698 = vand.u32 %v245, 4294901760
    %v9699 = vsub.f32 %v245, %v9698
    %v9700 = vand.u32 %v9699, 4294901760
    %9701 = vmatpush1.msra.mxu0 %v9700
    %9702 = vmatprep.subr.mxu0 0.0
    %v9703 = vand.u32 %v244, 4294901760
    %v9704 = vsub.f32 %v244, %v9703
    %v9705 = vand.u32 %v9704, 4294901760
    %9706 = vmatpush1.msra.mxu0 %v9705
    %9707 = vmatprep.subr.mxu0 0.0
    %v9708 = vand.u32 %v243, 4294901760
    %v9709 = vsub.f32 %v243, %v9708
    %v9710 = vand.u32 %v9709, 4294901760
    %9711 = vmatpush1.msra.mxu0 %v9710
    %9712 = vmatprep.subr.mxu0 0.0
    %v9713 = vand.u32 %v242, 4294901760
    %v9714 = vsub.f32 %v242, %v9713
    %v9715 = vand.u32 %v9714, 4294901760
    %9716 = vmatpush1.msra.mxu0 %v9715
    %9717 = vmatprep.subr.mxu0 0.0
    %v9718 = vand.u32 %v241, 4294901760
    %v9719 = vsub.f32 %v241, %v9718
    %v9720 = vand.u32 %v9719, 4294901760
    %9721 = vmatpush1.msra.mxu0 %v9720
    %9722 = vmatprep.subr.mxu0 0.0
    %v9723 = vand.u32 %v240, 4294901760
    %v9724 = vsub.f32 %v240, %v9723
    %v9725 = vand.u32 %v9724, 4294901760
    %9726 = vmatpush1.msra.mxu0 %v9725
    %9727 = vmatprep.subr.mxu0 0.0
    %v9728 = vand.u32 %v239, 4294901760
    %v9729 = vsub.f32 %v239, %v9728
    %v9730 = vand.u32 %v9729, 4294901760
    %9731 = vmatpush1.msra.mxu0 %v9730
    %9732 = vmatprep.subr.mxu0 0.0
    %v9733 = vand.u32 %v238, 4294901760
    %v9734 = vsub.f32 %v238, %v9733
    %v9735 = vand.u32 %v9734, 4294901760
    %9736 = vmatpush1.msra.mxu0 %v9735
    %9737 = vmatprep.subr.mxu0 0.0
    %v9738 = vand.u32 %v237, 4294901760
    %v9739 = vsub.f32 %v237, %v9738
    %v9740 = vand.u32 %v9739, 4294901760
    %9741 = vmatpush1.msra.mxu0 %v9740
    %9742 = vmatprep.subr.mxu0 0.0
    %v9743 = vand.u32 %v236, 4294901760
    %v9744 = vsub.f32 %v236, %v9743
    %v9745 = vand.u32 %v9744, 4294901760
    %9746 = vmatpush1.msra.mxu0 %v9745
    %9747 = vmatprep.subr.mxu0 0.0
    %v9748 = vand.u32 %v235, 4294901760
    %v9749 = vsub.f32 %v235, %v9748
    %v9750 = vand.u32 %v9749, 4294901760
    %9751 = vmatpush1.msra.mxu0 %v9750
    %9752 = vmatprep.subr.mxu0 0.0
    %v9753 = vand.u32 %v234, 4294901760
    %v9754 = vsub.f32 %v234, %v9753
    %v9755 = vand.u32 %v9754, 4294901760
    %9756 = vmatpush1.msra.mxu0 %v9755
    %9757 = vmatprep.subr.mxu0 0.0
    %9758 = vmatpush2.msra.mxu0 0.0
    %9759 = vmatprep.subr.mxu0 0.0
    %9760 = vmatpush2.msra.mxu0 0.0
    %9761 = vmatprep.subr.mxu0 0.0
    %9762 = vmatpush2.msra.mxu0 0.0
    %9763 = vmatprep.subr.mxu0 0.0
    %9764 = vmatpush2.msra.mxu0 0.0
    %9765 = vmatprep.subr.mxu0 0.0
    %9766 = vmatpush2.msra.mxu0 0.0
    %9767 = vmatprep.subr.mxu0 0.0
    %9768 = vmatpush2.msra.mxu0 0.0
    %9769 = vmatprep.subr.mxu0 0.0
    %9770 = vmatpush2.msra.mxu0 0.0
    %9771 = vmatprep.subr.mxu0 0.0
    %9772 = vmatpush2.msra.mxu0 0.0
    %9773 = vmatprep.subr.mxu0 0.0
    %9774 = vmatpush2.msra.mxu0 0.0
    %9775 = vmatprep.subr.mxu0 0.0
    %9776 = vmatpush2.msra.mxu0 0.0
    %9777 = vmatprep.subr.mxu0 0.0
    %9778 = vmatpush2.msra.mxu0 0.0
    %9779 = vmatprep.subr.mxu0 0.0
    %9780 = vmatpush2.msra.mxu0 0.0
    %9781 = vmatprep.subr.mxu0 0.0
    %9782 = vmatpush2.msra.mxu0 0.0
    %9783 = vmatprep.subr.mxu0 0.0
    %9784 = vmatpush2.msra.mxu0 0.0
    %9785 = vmatprep.subr.mxu0 0.0
    %9786 = vmatpush2.msra.mxu0 0.0
    %9787 = vmatprep.subr.mxu0 0.0
    %9788 = vmatpush2.msra.mxu0 0.0
    %9789 = vmatprep.mubr.f32.mxu0 0.0
    %v9790 = vand.u32 %v6428, 4294901760
    %9791 = vmatmul.mubr.f32.gmra.mxu0 %v9790
    %v9792 = vpop.f32.mrf.mxu0
    %v9793 = vadd.f32 %v9666, %v9792
    %v9794 = vpop.f32.mrf.mxu0
    %9795 = vmatprep.mubr.f32.mxu0 0.0
    %v9796 = vand.u32 %v6430, 4294901760
    %9797 = vmatmul.mubr.f32.gmra.mxu0 %v9796
    %v9798 = vpop.f32.mrf.mxu0
    %v9799 = vadd.f32 %v9674, %v9798
    %v9800 = vpop.f32.mrf.mxu0
    %9801 = vdwg.mxu0
    %9802 = vmatprep.subr.mxu0 0.0
    %v9803 = vand.u32 %v249, 4294901760
    %9804 = vmatpush1.msra.mxu0 %v9803
    %9805 = vmatprep.subr.mxu0 0.0
    %v9806 = vand.u32 %v248, 4294901760
    %9807 = vmatpush1.msra.mxu0 %v9806
    %9808 = vmatprep.subr.mxu0 0.0
    %v9809 = vand.u32 %v247, 4294901760
    %9810 = vmatpush1.msra.mxu0 %v9809
    %9811 = vmatprep.subr.mxu0 0.0
    %v9812 = vand.u32 %v246, 4294901760
    %9813 = vmatpush1.msra.mxu0 %v9812
    %9814 = vmatprep.subr.mxu0 0.0
    %v9815 = vand.u32 %v245, 4294901760
    %9816 = vmatpush1.msra.mxu0 %v9815
    %9817 = vmatprep.subr.mxu0 0.0
    %v9818 = vand.u32 %v244, 4294901760
    %9819 = vmatpush1.msra.mxu0 %v9818
    %9820 = vmatprep.subr.mxu0 0.0
    %v9821 = vand.u32 %v243, 4294901760
    %9822 = vmatpush1.msra.mxu0 %v9821
    %9823 = vmatprep.subr.mxu0 0.0
    %v9824 = vand.u32 %v242, 4294901760
    %9825 = vmatpush1.msra.mxu0 %v9824
    %9826 = vmatprep.subr.mxu0 0.0
    %v9827 = vand.u32 %v241, 4294901760
    %9828 = vmatpush1.msra.mxu0 %v9827
    %9829 = vmatprep.subr.mxu0 0.0
    %v9830 = vand.u32 %v240, 4294901760
    %9831 = vmatpush1.msra.mxu0 %v9830
    %9832 = vmatprep.subr.mxu0 0.0
    %v9833 = vand.u32 %v239, 4294901760
    %9834 = vmatpush1.msra.mxu0 %v9833
    %9835 = vmatprep.subr.mxu0 0.0
    %v9836 = vand.u32 %v238, 4294901760
    %9837 = vmatpush1.msra.mxu0 %v9836
    %9838 = vmatprep.subr.mxu0 0.0
    %v9839 = vand.u32 %v237, 4294901760
    %9840 = vmatpush1.msra.mxu0 %v9839
    %9841 = vmatprep.subr.mxu0 0.0
    %v9842 = vand.u32 %v236, 4294901760
    %9843 = vmatpush1.msra.mxu0 %v9842
    %9844 = vmatprep.subr.mxu0 0.0
    %v9845 = vand.u32 %v235, 4294901760
    %9846 = vmatpush1.msra.mxu0 %v9845
    %9847 = vmatprep.subr.mxu0 0.0
    %v9848 = vand.u32 %v234, 4294901760
    %9849 = vmatpush1.msra.mxu0 %v9848
    %9850 = vmatprep.subr.mxu0 0.0
    %9851 = vmatpush2.msra.mxu0 0.0
    %9852 = vmatprep.subr.mxu0 0.0
    %9853 = vmatpush2.msra.mxu0 0.0
    %9854 = vmatprep.subr.mxu0 0.0
    %9855 = vmatpush2.msra.mxu0 0.0
    %9856 = vmatprep.subr.mxu0 0.0
    %9857 = vmatpush2.msra.mxu0 0.0
    %9858 = vmatprep.subr.mxu0 0.0
    %9859 = vmatpush2.msra.mxu0 0.0
    %9860 = vmatprep.subr.mxu0 0.0
    %9861 = vmatpush2.msra.mxu0 0.0
    %9862 = vmatprep.subr.mxu0 0.0
    %9863 = vmatpush2.msra.mxu0 0.0
    %9864 = vmatprep.subr.mxu0 0.0
    %9865 = vmatpush2.msra.mxu0 0.0
    %9866 = vmatprep.subr.mxu0 0.0
    %9867 = vmatpush2.msra.mxu0 0.0
    %9868 = vmatprep.subr.mxu0 0.0
    %9869 = vmatpush2.msra.mxu0 0.0
    %9870 = vmatprep.subr.mxu0 0.0
    %9871 = vmatpush2.msra.mxu0 0.0
    %9872 = vmatprep.subr.mxu0 0.0
    %9873 = vmatpush2.msra.mxu0 0.0
    %9874 = vmatprep.subr.mxu0 0.0
    %9875 = vmatpush2.msra.mxu0 0.0
    %9876 = vmatprep.subr.mxu0 0.0
    %9877 = vmatpush2.msra.mxu0 0.0
    %9878 = vmatprep.subr.mxu0 0.0
    %9879 = vmatpush2.msra.mxu0 0.0
    %9880 = vmatprep.subr.mxu0 0.0
    %9881 = vmatpush2.msra.mxu0 0.0
    %9882 = vmatprep.mubr.f32.mxu0 0.0
    %v9883 = vand.u32 %v6428, 4294901760
    %9884 = vmatmul.mubr.f32.gmra.mxu0 %v9883
    %v9885 = vpop.f32.mrf.mxu0
    %v9886 = vadd.f32 %v9793, %v9885
    %v9887 = vpop.f32.mrf.mxu0
    %9888 = vmatprep.mubr.f32.mxu0 0.0
    %v9889 = vand.u32 %v6430, 4294901760
    %9890 = vmatmul.mubr.f32.gmra.mxu0 %v9889
    %v9891 = vpop.f32.mrf.mxu0
    %v9892 = vadd.f32 %v9799, %v9891
    %v9893 = vpop.f32.mrf.mxu0
    %9894 = vdwg.mxu0
    %9895 = vmatprep.subr.mxu0 0.0
    %v9896 = vand.u32 %v265, 4294901760
    %9897 = vmatpush1.msra.mxu0 %v9896
    %9898 = vmatprep.subr.mxu0 0.0
    %v9899 = vand.u32 %v264, 4294901760
    %9900 = vmatpush1.msra.mxu0 %v9899
    %9901 = vmatprep.subr.mxu0 0.0
    %v9902 = vand.u32 %v263, 4294901760
    %9903 = vmatpush1.msra.mxu0 %v9902
    %9904 = vmatprep.subr.mxu0 0.0
    %v9905 = vand.u32 %v262, 4294901760
    %9906 = vmatpush1.msra.mxu0 %v9905
    %9907 = vmatprep.subr.mxu0 0.0
    %v9908 = vand.u32 %v261, 4294901760
    %9909 = vmatpush1.msra.mxu0 %v9908
    %9910 = vmatprep.subr.mxu0 0.0
    %v9911 = vand.u32 %v260, 4294901760
    %9912 = vmatpush1.msra.mxu0 %v9911
    %9913 = vmatprep.subr.mxu0 0.0
    %v9914 = vand.u32 %v259, 4294901760
    %9915 = vmatpush1.msra.mxu0 %v9914
    %9916 = vmatprep.subr.mxu0 0.0
    %v9917 = vand.u32 %v258, 4294901760
    %9918 = vmatpush1.msra.mxu0 %v9917
    %9919 = vmatprep.subr.mxu0 0.0
    %v9920 = vand.u32 %v257, 4294901760
    %9921 = vmatpush1.msra.mxu0 %v9920
    %9922 = vmatprep.subr.mxu0 0.0
    %v9923 = vand.u32 %v256, 4294901760
    %9924 = vmatpush1.msra.mxu0 %v9923
    %9925 = vmatprep.subr.mxu0 0.0
    %v9926 = vand.u32 %v255, 4294901760
    %9927 = vmatpush1.msra.mxu0 %v9926
    %9928 = vmatprep.subr.mxu0 0.0
    %v9929 = vand.u32 %v254, 4294901760
    %9930 = vmatpush1.msra.mxu0 %v9929
    %9931 = vmatprep.subr.mxu0 0.0
    %v9932 = vand.u32 %v253, 4294901760
    %9933 = vmatpush1.msra.mxu0 %v9932
    %9934 = vmatprep.subr.mxu0 0.0
    %v9935 = vand.u32 %v252, 4294901760
    %9936 = vmatpush1.msra.mxu0 %v9935
    %9937 = vmatprep.subr.mxu0 0.0
    %v9938 = vand.u32 %v251, 4294901760
    %9939 = vmatpush1.msra.mxu0 %v9938
    %9940 = vmatprep.subr.mxu0 0.0
    %v9941 = vand.u32 %v250, 4294901760
    %9942 = vmatpush1.msra.mxu0 %v9941
    %9943 = vmatprep.subr.mxu0 0.0
    %9944 = vmatpush2.msra.mxu0 0.0
    %9945 = vmatprep.subr.mxu0 0.0
    %9946 = vmatpush2.msra.mxu0 0.0
    %9947 = vmatprep.subr.mxu0 0.0
    %9948 = vmatpush2.msra.mxu0 0.0
    %9949 = vmatprep.subr.mxu0 0.0
    %9950 = vmatpush2.msra.mxu0 0.0
    %9951 = vmatprep.subr.mxu0 0.0
    %9952 = vmatpush2.msra.mxu0 0.0
    %9953 = vmatprep.subr.mxu0 0.0
    %9954 = vmatpush2.msra.mxu0 0.0
    %9955 = vmatprep.subr.mxu0 0.0
    %9956 = vmatpush2.msra.mxu0 0.0
    %9957 = vmatprep.subr.mxu0 0.0
    %9958 = vmatpush2.msra.mxu0 0.0
    %9959 = vmatprep.subr.mxu0 0.0
    %9960 = vmatpush2.msra.mxu0 0.0
    %9961 = vmatprep.subr.mxu0 0.0
    %9962 = vmatpush2.msra.mxu0 0.0
    %9963 = vmatprep.subr.mxu0 0.0
    %9964 = vmatpush2.msra.mxu0 0.0
    %9965 = vmatprep.subr.mxu0 0.0
    %9966 = vmatpush2.msra.mxu0 0.0
    %9967 = vmatprep.subr.mxu0 0.0
    %9968 = vmatpush2.msra.mxu0 0.0
    %9969 = vmatprep.subr.mxu0 0.0
    %9970 = vmatpush2.msra.mxu0 0.0
    %9971 = vmatprep.subr.mxu0 0.0
    %9972 = vmatpush2.msra.mxu0 0.0
    %9973 = vmatprep.subr.mxu0 0.0
    %9974 = vmatpush2.msra.mxu0 0.0
    %9975 = vmatprep.mubr.f32.mxu0 0.0
    %v9976 = vand.u32 %v6432, 4294901760
    %v9977 = vsub.f32 %v6432, %v9976
    %v9978 = vand.u32 %v9977, 4294901760
    %v9979 = vsub.f32 %v9977, %v9978
    %v9980 = vand.u32 %v9979, 4294901760
    %9981 = vmatmul.mubr.f32.gmra.mxu0 %v9980
    %v9982 = vpop.f32.mrf.mxu0
    %v9983 = vadd.f32 0.0, %v9982
    %v9984 = vpop.f32.mrf.mxu0
    %9985 = vmatprep.mubr.f32.mxu0 0.0
    %v9986 = vand.u32 %v6434, 4294901760
    %v9987 = vsub.f32 %v6434, %v9986
    %v9988 = vand.u32 %v9987, 4294901760
    %v9989 = vsub.f32 %v9987, %v9988
    %v9990 = vand.u32 %v9989, 4294901760
    %9991 = vmatmul.mubr.f32.gmra.mxu0 %v9990
    %v9992 = vpop.f32.mrf.mxu0
    %v9993 = vadd.f32 0.0, %v9992
    %v9994 = vpop.f32.mrf.mxu0
    %9995 = vdwg.mxu0
    %9996 = vmatprep.subr.mxu0 0.0
    %v9997 = vand.u32 %v265, 4294901760
    %v9998 = vsub.f32 %v265, %v9997
    %v9999 = vand.u32 %v9998, 4294901760
    %v10000 = vsub.f32 %v9998, %v9999
    %v10001 = vand.u32 %v10000, 4294901760
    %10002 = vmatpush1.msra.mxu0 %v10001
    %10003 = vmatprep.subr.mxu0 0.0
    %v10004 = vand.u32 %v264, 4294901760
    %v10005 = vsub.f32 %v264, %v10004
    %v10006 = vand.u32 %v10005, 4294901760
    %v10007 = vsub.f32 %v10005, %v10006
    %v10008 = vand.u32 %v10007, 4294901760
    %10009 = vmatpush1.msra.mxu0 %v10008
    %10010 = vmatprep.subr.mxu0 0.0
    %v10011 = vand.u32 %v263, 4294901760
    %v10012 = vsub.f32 %v263, %v10011
    %v10013 = vand.u32 %v10012, 4294901760
    %v10014 = vsub.f32 %v10012, %v10013
    %v10015 = vand.u32 %v10014, 4294901760
    %10016 = vmatpush1.msra.mxu0 %v10015
    %10017 = vmatprep.subr.mxu0 0.0
    %v10018 = vand.u32 %v262, 4294901760
    %v10019 = vsub.f32 %v262, %v10018
    %v10020 = vand.u32 %v10019, 4294901760
    %v10021 = vsub.f32 %v10019, %v10020
    %v10022 = vand.u32 %v10021, 4294901760
    %10023 = vmatpush1.msra.mxu0 %v10022
    %10024 = vmatprep.subr.mxu0 0.0
    %v10025 = vand.u32 %v261, 4294901760
    %v10026 = vsub.f32 %v261, %v10025
    %v10027 = vand.u32 %v10026, 4294901760
    %v10028 = vsub.f32 %v10026, %v10027
    %v10029 = vand.u32 %v10028, 4294901760
    %10030 = vmatpush1.msra.mxu0 %v10029
    %10031 = vmatprep.subr.mxu0 0.0
    %v10032 = vand.u32 %v260, 4294901760
    %v10033 = vsub.f32 %v260, %v10032
    %v10034 = vand.u32 %v10033, 4294901760
    %v10035 = vsub.f32 %v10033, %v10034
    %v10036 = vand.u32 %v10035, 4294901760
    %10037 = vmatpush1.msra.mxu0 %v10036
    %10038 = vmatprep.subr.mxu0 0.0
    %v10039 = vand.u32 %v259, 4294901760
    %v10040 = vsub.f32 %v259, %v10039
    %v10041 = vand.u32 %v10040, 4294901760
    %v10042 = vsub.f32 %v10040, %v10041
    %v10043 = vand.u32 %v10042, 4294901760
    %10044 = vmatpush1.msra.mxu0 %v10043
    %10045 = vmatprep.subr.mxu0 0.0
    %v10046 = vand.u32 %v258, 4294901760
    %v10047 = vsub.f32 %v258, %v10046
    %v10048 = vand.u32 %v10047, 4294901760
    %v10049 = vsub.f32 %v10047, %v10048
    %v10050 = vand.u32 %v10049, 4294901760
    %10051 = vmatpush1.msra.mxu0 %v10050
    %10052 = vmatprep.subr.mxu0 0.0
    %v10053 = vand.u32 %v257, 4294901760
    %v10054 = vsub.f32 %v257, %v10053
    %v10055 = vand.u32 %v10054, 4294901760
    %v10056 = vsub.f32 %v10054, %v10055
    %v10057 = vand.u32 %v10056, 4294901760
    %10058 = vmatpush1.msra.mxu0 %v10057
    %10059 = vmatprep.subr.mxu0 0.0
    %v10060 = vand.u32 %v256, 4294901760
    %v10061 = vsub.f32 %v256, %v10060
    %v10062 = vand.u32 %v10061, 4294901760
    %v10063 = vsub.f32 %v10061, %v10062
    %v10064 = vand.u32 %v10063, 4294901760
    %10065 = vmatpush1.msra.mxu0 %v10064
    %10066 = vmatprep.subr.mxu0 0.0
    %v10067 = vand.u32 %v255, 4294901760
    %v10068 = vsub.f32 %v255, %v10067
    %v10069 = vand.u32 %v10068, 4294901760
    %v10070 = vsub.f32 %v10068, %v10069
    %v10071 = vand.u32 %v10070, 4294901760
    %10072 = vmatpush1.msra.mxu0 %v10071
    %10073 = vmatprep.subr.mxu0 0.0
    %v10074 = vand.u32 %v254, 4294901760
    %v10075 = vsub.f32 %v254, %v10074
    %v10076 = vand.u32 %v10075, 4294901760
    %v10077 = vsub.f32 %v10075, %v10076
    %v10078 = vand.u32 %v10077, 4294901760
    %10079 = vmatpush1.msra.mxu0 %v10078
    %10080 = vmatprep.subr.mxu0 0.0
    %v10081 = vand.u32 %v253, 4294901760
    %v10082 = vsub.f32 %v253, %v10081
    %v10083 = vand.u32 %v10082, 4294901760
    %v10084 = vsub.f32 %v10082, %v10083
    %v10085 = vand.u32 %v10084, 4294901760
    %10086 = vmatpush1.msra.mxu0 %v10085
    %10087 = vmatprep.subr.mxu0 0.0
    %v10088 = vand.u32 %v252, 4294901760
    %v10089 = vsub.f32 %v252, %v10088
    %v10090 = vand.u32 %v10089, 4294901760
    %v10091 = vsub.f32 %v10089, %v10090
    %v10092 = vand.u32 %v10091, 4294901760
    %10093 = vmatpush1.msra.mxu0 %v10092
    %10094 = vmatprep.subr.mxu0 0.0
    %v10095 = vand.u32 %v251, 4294901760
    %v10096 = vsub.f32 %v251, %v10095
    %v10097 = vand.u32 %v10096, 4294901760
    %v10098 = vsub.f32 %v10096, %v10097
    %v10099 = vand.u32 %v10098, 4294901760
    %10100 = vmatpush1.msra.mxu0 %v10099
    %10101 = vmatprep.subr.mxu0 0.0
    %v10102 = vand.u32 %v250, 4294901760
    %v10103 = vsub.f32 %v250, %v10102
    %v10104 = vand.u32 %v10103, 4294901760
    %v10105 = vsub.f32 %v10103, %v10104
    %v10106 = vand.u32 %v10105, 4294901760
    %10107 = vmatpush1.msra.mxu0 %v10106
    %10108 = vmatprep.subr.mxu0 0.0
    %10109 = vmatpush2.msra.mxu0 0.0
    %10110 = vmatprep.subr.mxu0 0.0
    %10111 = vmatpush2.msra.mxu0 0.0
    %10112 = vmatprep.subr.mxu0 0.0
    %10113 = vmatpush2.msra.mxu0 0.0
    %10114 = vmatprep.subr.mxu0 0.0
    %10115 = vmatpush2.msra.mxu0 0.0
    %10116 = vmatprep.subr.mxu0 0.0
    %10117 = vmatpush2.msra.mxu0 0.0
    %10118 = vmatprep.subr.mxu0 0.0
    %10119 = vmatpush2.msra.mxu0 0.0
    %10120 = vmatprep.subr.mxu0 0.0
    %10121 = vmatpush2.msra.mxu0 0.0
    %10122 = vmatprep.subr.mxu0 0.0
    %10123 = vmatpush2.msra.mxu0 0.0
    %10124 = vmatprep.subr.mxu0 0.0
    %10125 = vmatpush2.msra.mxu0 0.0
    %10126 = vmatprep.subr.mxu0 0.0
    %10127 = vmatpush2.msra.mxu0 0.0
    %10128 = vmatprep.subr.mxu0 0.0
    %10129 = vmatpush2.msra.mxu0 0.0
    %10130 = vmatprep.subr.mxu0 0.0
    %10131 = vmatpush2.msra.mxu0 0.0
    %10132 = vmatprep.subr.mxu0 0.0
    %10133 = vmatpush2.msra.mxu0 0.0
    %10134 = vmatprep.subr.mxu0 0.0
    %10135 = vmatpush2.msra.mxu0 0.0
    %10136 = vmatprep.subr.mxu0 0.0
    %10137 = vmatpush2.msra.mxu0 0.0
    %10138 = vmatprep.subr.mxu0 0.0
    %10139 = vmatpush2.msra.mxu0 0.0
    %10140 = vmatprep.mubr.f32.mxu0 0.0
    %v10141 = vand.u32 %v6432, 4294901760
    %10142 = vmatmul.mubr.f32.gmra.mxu0 %v10141
    %v10143 = vpop.f32.mrf.mxu0
    %v10144 = vadd.f32 %v9983, %v10143
    %v10145 = vpop.f32.mrf.mxu0
    %10146 = vmatprep.mubr.f32.mxu0 0.0
    %v10147 = vand.u32 %v6434, 4294901760
    %10148 = vmatmul.mubr.f32.gmra.mxu0 %v10147
    %v10149 = vpop.f32.mrf.mxu0
    %v10150 = vadd.f32 %v9993, %v10149
    %v10151 = vpop.f32.mrf.mxu0
    %10152 = vdwg.mxu0
    %10153 = vmatprep.subr.mxu0 0.0
    %v10154 = vand.u32 %v265, 4294901760
    %v10155 = vsub.f32 %v265, %v10154
    %10156 = vmatpush1.msra.mxu0 %v10155
    %10157 = vmatprep.subr.mxu0 0.0
    %v10158 = vand.u32 %v264, 4294901760
    %v10159 = vsub.f32 %v264, %v10158
    %10160 = vmatpush1.msra.mxu0 %v10159
    %10161 = vmatprep.subr.mxu0 0.0
    %v10162 = vand.u32 %v263, 4294901760
    %v10163 = vsub.f32 %v263, %v10162
    %10164 = vmatpush1.msra.mxu0 %v10163
    %10165 = vmatprep.subr.mxu0 0.0
    %v10166 = vand.u32 %v262, 4294901760
    %v10167 = vsub.f32 %v262, %v10166
    %10168 = vmatpush1.msra.mxu0 %v10167
    %10169 = vmatprep.subr.mxu0 0.0
    %v10170 = vand.u32 %v261, 4294901760
    %v10171 = vsub.f32 %v261, %v10170
    %10172 = vmatpush1.msra.mxu0 %v10171
    %10173 = vmatprep.subr.mxu0 0.0
    %v10174 = vand.u32 %v260, 4294901760
    %v10175 = vsub.f32 %v260, %v10174
    %10176 = vmatpush1.msra.mxu0 %v10175
    %10177 = vmatprep.subr.mxu0 0.0
    %v10178 = vand.u32 %v259, 4294901760
    %v10179 = vsub.f32 %v259, %v10178
    %10180 = vmatpush1.msra.mxu0 %v10179
    %10181 = vmatprep.subr.mxu0 0.0
    %v10182 = vand.u32 %v258, 4294901760
    %v10183 = vsub.f32 %v258, %v10182
    %10184 = vmatpush1.msra.mxu0 %v10183
    %10185 = vmatprep.subr.mxu0 0.0
    %v10186 = vand.u32 %v257, 4294901760
    %v10187 = vsub.f32 %v257, %v10186
    %10188 = vmatpush1.msra.mxu0 %v10187
    %10189 = vmatprep.subr.mxu0 0.0
    %v10190 = vand.u32 %v256, 4294901760
    %v10191 = vsub.f32 %v256, %v10190
    %10192 = vmatpush1.msra.mxu0 %v10191
    %10193 = vmatprep.subr.mxu0 0.0
    %v10194 = vand.u32 %v255, 4294901760
    %v10195 = vsub.f32 %v255, %v10194
    %10196 = vmatpush1.msra.mxu0 %v10195
    %10197 = vmatprep.subr.mxu0 0.0
    %v10198 = vand.u32 %v254, 4294901760
    %v10199 = vsub.f32 %v254, %v10198
    %10200 = vmatpush1.msra.mxu0 %v10199
    %10201 = vmatprep.subr.mxu0 0.0
    %v10202 = vand.u32 %v253, 4294901760
    %v10203 = vsub.f32 %v253, %v10202
    %10204 = vmatpush1.msra.mxu0 %v10203
    %10205 = vmatprep.subr.mxu0 0.0
    %v10206 = vand.u32 %v252, 4294901760
    %v10207 = vsub.f32 %v252, %v10206
    %10208 = vmatpush1.msra.mxu0 %v10207
    %10209 = vmatprep.subr.mxu0 0.0
    %v10210 = vand.u32 %v251, 4294901760
    %v10211 = vsub.f32 %v251, %v10210
    %10212 = vmatpush1.msra.mxu0 %v10211
    %10213 = vmatprep.subr.mxu0 0.0
    %v10214 = vand.u32 %v250, 4294901760
    %v10215 = vsub.f32 %v250, %v10214
    %10216 = vmatpush1.msra.mxu0 %v10215
    %10217 = vmatprep.subr.mxu0 0.0
    %10218 = vmatpush2.msra.mxu0 0.0
    %10219 = vmatprep.subr.mxu0 0.0
    %10220 = vmatpush2.msra.mxu0 0.0
    %10221 = vmatprep.subr.mxu0 0.0
    %10222 = vmatpush2.msra.mxu0 0.0
    %10223 = vmatprep.subr.mxu0 0.0
    %10224 = vmatpush2.msra.mxu0 0.0
    %10225 = vmatprep.subr.mxu0 0.0
    %10226 = vmatpush2.msra.mxu0 0.0
    %10227 = vmatprep.subr.mxu0 0.0
    %10228 = vmatpush2.msra.mxu0 0.0
    %10229 = vmatprep.subr.mxu0 0.0
    %10230 = vmatpush2.msra.mxu0 0.0
    %10231 = vmatprep.subr.mxu0 0.0
    %10232 = vmatpush2.msra.mxu0 0.0
    %10233 = vmatprep.subr.mxu0 0.0
    %10234 = vmatpush2.msra.mxu0 0.0
    %10235 = vmatprep.subr.mxu0 0.0
    %10236 = vmatpush2.msra.mxu0 0.0
    %10237 = vmatprep.subr.mxu0 0.0
    %10238 = vmatpush2.msra.mxu0 0.0
    %10239 = vmatprep.subr.mxu0 0.0
    %10240 = vmatpush2.msra.mxu0 0.0
    %10241 = vmatprep.subr.mxu0 0.0
    %10242 = vmatpush2.msra.mxu0 0.0
    %10243 = vmatprep.subr.mxu0 0.0
    %10244 = vmatpush2.msra.mxu0 0.0
    %10245 = vmatprep.subr.mxu0 0.0
    %10246 = vmatpush2.msra.mxu0 0.0
    %10247 = vmatprep.subr.mxu0 0.0
    %10248 = vmatpush2.msra.mxu0 0.0
    %10249 = vmatprep.mubr.f32.mxu0 0.0
    %v10250 = vand.u32 %v6432, 4294901760
    %v10251 = vsub.f32 %v6432, %v10250
    %10252 = vmatmul.mubr.f32.gmra.mxu0 %v10251
    %v10253 = vpop.f32.mrf.mxu0
    %v10254 = vadd.f32 %v10144, %v10253
    %v10255 = vpop.f32.mrf.mxu0
    %10256 = vmatprep.mubr.f32.mxu0 0.0
    %v10257 = vand.u32 %v6434, 4294901760
    %v10258 = vsub.f32 %v6434, %v10257
    %10259 = vmatmul.mubr.f32.gmra.mxu0 %v10258
    %v10260 = vpop.f32.mrf.mxu0
    %v10261 = vadd.f32 %v10150, %v10260
    %v10262 = vpop.f32.mrf.mxu0
    %10263 = vdwg.mxu0
    %10264 = vmatprep.subr.mxu0 0.0
    %v10265 = vand.u32 %v265, 4294901760
    %10266 = vmatpush1.msra.mxu0 %v10265
    %10267 = vmatprep.subr.mxu0 0.0
    %v10268 = vand.u32 %v264, 4294901760
    %10269 = vmatpush1.msra.mxu0 %v10268
    %10270 = vmatprep.subr.mxu0 0.0
    %v10271 = vand.u32 %v263, 4294901760
    %10272 = vmatpush1.msra.mxu0 %v10271
    %10273 = vmatprep.subr.mxu0 0.0
    %v10274 = vand.u32 %v262, 4294901760
    %10275 = vmatpush1.msra.mxu0 %v10274
    %10276 = vmatprep.subr.mxu0 0.0
    %v10277 = vand.u32 %v261, 4294901760
    %10278 = vmatpush1.msra.mxu0 %v10277
    %10279 = vmatprep.subr.mxu0 0.0
    %v10280 = vand.u32 %v260, 4294901760
    %10281 = vmatpush1.msra.mxu0 %v10280
    %10282 = vmatprep.subr.mxu0 0.0
    %v10283 = vand.u32 %v259, 4294901760
    %10284 = vmatpush1.msra.mxu0 %v10283
    %10285 = vmatprep.subr.mxu0 0.0
    %v10286 = vand.u32 %v258, 4294901760
    %10287 = vmatpush1.msra.mxu0 %v10286
    %10288 = vmatprep.subr.mxu0 0.0
    %v10289 = vand.u32 %v257, 4294901760
    %10290 = vmatpush1.msra.mxu0 %v10289
    %10291 = vmatprep.subr.mxu0 0.0
    %v10292 = vand.u32 %v256, 4294901760
    %10293 = vmatpush1.msra.mxu0 %v10292
    %10294 = vmatprep.subr.mxu0 0.0
    %v10295 = vand.u32 %v255, 4294901760
    %10296 = vmatpush1.msra.mxu0 %v10295
    %10297 = vmatprep.subr.mxu0 0.0
    %v10298 = vand.u32 %v254, 4294901760
    %10299 = vmatpush1.msra.mxu0 %v10298
    %10300 = vmatprep.subr.mxu0 0.0
    %v10301 = vand.u32 %v253, 4294901760
    %10302 = vmatpush1.msra.mxu0 %v10301
    %10303 = vmatprep.subr.mxu0 0.0
    %v10304 = vand.u32 %v252, 4294901760
    %10305 = vmatpush1.msra.mxu0 %v10304
    %10306 = vmatprep.subr.mxu0 0.0
    %v10307 = vand.u32 %v251, 4294901760
    %10308 = vmatpush1.msra.mxu0 %v10307
    %10309 = vmatprep.subr.mxu0 0.0
    %v10310 = vand.u32 %v250, 4294901760
    %10311 = vmatpush1.msra.mxu0 %v10310
    %10312 = vmatprep.subr.mxu0 0.0
    %10313 = vmatpush2.msra.mxu0 0.0
    %10314 = vmatprep.subr.mxu0 0.0
    %10315 = vmatpush2.msra.mxu0 0.0
    %10316 = vmatprep.subr.mxu0 0.0
    %10317 = vmatpush2.msra.mxu0 0.0
    %10318 = vmatprep.subr.mxu0 0.0
    %10319 = vmatpush2.msra.mxu0 0.0
    %10320 = vmatprep.subr.mxu0 0.0
    %10321 = vmatpush2.msra.mxu0 0.0
    %10322 = vmatprep.subr.mxu0 0.0
    %10323 = vmatpush2.msra.mxu0 0.0
    %10324 = vmatprep.subr.mxu0 0.0
    %10325 = vmatpush2.msra.mxu0 0.0
    %10326 = vmatprep.subr.mxu0 0.0
    %10327 = vmatpush2.msra.mxu0 0.0
    %10328 = vmatprep.subr.mxu0 0.0
    %10329 = vmatpush2.msra.mxu0 0.0
    %10330 = vmatprep.subr.mxu0 0.0
    %10331 = vmatpush2.msra.mxu0 0.0
    %10332 = vmatprep.subr.mxu0 0.0
    %10333 = vmatpush2.msra.mxu0 0.0
    %10334 = vmatprep.subr.mxu0 0.0
    %10335 = vmatpush2.msra.mxu0 0.0
    %10336 = vmatprep.subr.mxu0 0.0
    %10337 = vmatpush2.msra.mxu0 0.0
    %10338 = vmatprep.subr.mxu0 0.0
    %10339 = vmatpush2.msra.mxu0 0.0
    %10340 = vmatprep.subr.mxu0 0.0
    %10341 = vmatpush2.msra.mxu0 0.0
    %10342 = vmatprep.subr.mxu0 0.0
    %10343 = vmatpush2.msra.mxu0 0.0
    %10344 = vmatprep.mubr.f32.mxu0 0.0
    %v10345 = vand.u32 %v6432, 4294901760
    %v10346 = vsub.f32 %v6432, %v10345
    %v10347 = vand.u32 %v10346, 4294901760
    %10348 = vmatmul.mubr.f32.gmra.mxu0 %v10347
    %v10349 = vpop.f32.mrf.mxu0
    %v10350 = vadd.f32 %v10254, %v10349
    %v10351 = vpop.f32.mrf.mxu0
    %10352 = vmatprep.mubr.f32.mxu0 0.0
    %v10353 = vand.u32 %v6434, 4294901760
    %v10354 = vsub.f32 %v6434, %v10353
    %v10355 = vand.u32 %v10354, 4294901760
    %10356 = vmatmul.mubr.f32.gmra.mxu0 %v10355
    %v10357 = vpop.f32.mrf.mxu0
    %v10358 = vadd.f32 %v10261, %v10357
    %v10359 = vpop.f32.mrf.mxu0
    %10360 = vdwg.mxu0
    %10361 = vmatprep.subr.mxu0 0.0
    %v10362 = vand.u32 %v265, 4294901760
    %v10363 = vsub.f32 %v265, %v10362
    %v10364 = vand.u32 %v10363, 4294901760
    %10365 = vmatpush1.msra.mxu0 %v10364
    %10366 = vmatprep.subr.mxu0 0.0
    %v10367 = vand.u32 %v264, 4294901760
    %v10368 = vsub.f32 %v264, %v10367
    %v10369 = vand.u32 %v10368, 4294901760
    %10370 = vmatpush1.msra.mxu0 %v10369
    %10371 = vmatprep.subr.mxu0 0.0
    %v10372 = vand.u32 %v263, 4294901760
    %v10373 = vsub.f32 %v263, %v10372
    %v10374 = vand.u32 %v10373, 4294901760
    %10375 = vmatpush1.msra.mxu0 %v10374
    %10376 = vmatprep.subr.mxu0 0.0
    %v10377 = vand.u32 %v262, 4294901760
    %v10378 = vsub.f32 %v262, %v10377
    %v10379 = vand.u32 %v10378, 4294901760
    %10380 = vmatpush1.msra.mxu0 %v10379
    %10381 = vmatprep.subr.mxu0 0.0
    %v10382 = vand.u32 %v261, 4294901760
    %v10383 = vsub.f32 %v261, %v10382
    %v10384 = vand.u32 %v10383, 4294901760
    %10385 = vmatpush1.msra.mxu0 %v10384
    %10386 = vmatprep.subr.mxu0 0.0
    %v10387 = vand.u32 %v260, 4294901760
    %v10388 = vsub.f32 %v260, %v10387
    %v10389 = vand.u32 %v10388, 4294901760
    %10390 = vmatpush1.msra.mxu0 %v10389
    %10391 = vmatprep.subr.mxu0 0.0
    %v10392 = vand.u32 %v259, 4294901760
    %v10393 = vsub.f32 %v259, %v10392
    %v10394 = vand.u32 %v10393, 4294901760
    %10395 = vmatpush1.msra.mxu0 %v10394
    %10396 = vmatprep.subr.mxu0 0.0
    %v10397 = vand.u32 %v258, 4294901760
    %v10398 = vsub.f32 %v258, %v10397
    %v10399 = vand.u32 %v10398, 4294901760
    %10400 = vmatpush1.msra.mxu0 %v10399
    %10401 = vmatprep.subr.mxu0 0.0
    %v10402 = vand.u32 %v257, 4294901760
    %v10403 = vsub.f32 %v257, %v10402
    %v10404 = vand.u32 %v10403, 4294901760
    %10405 = vmatpush1.msra.mxu0 %v10404
    %10406 = vmatprep.subr.mxu0 0.0
    %v10407 = vand.u32 %v256, 4294901760
    %v10408 = vsub.f32 %v256, %v10407
    %v10409 = vand.u32 %v10408, 4294901760
    %10410 = vmatpush1.msra.mxu0 %v10409
    %10411 = vmatprep.subr.mxu0 0.0
    %v10412 = vand.u32 %v255, 4294901760
    %v10413 = vsub.f32 %v255, %v10412
    %v10414 = vand.u32 %v10413, 4294901760
    %10415 = vmatpush1.msra.mxu0 %v10414
    %10416 = vmatprep.subr.mxu0 0.0
    %v10417 = vand.u32 %v254, 4294901760
    %v10418 = vsub.f32 %v254, %v10417
    %v10419 = vand.u32 %v10418, 4294901760
    %10420 = vmatpush1.msra.mxu0 %v10419
    %10421 = vmatprep.subr.mxu0 0.0
    %v10422 = vand.u32 %v253, 4294901760
    %v10423 = vsub.f32 %v253, %v10422
    %v10424 = vand.u32 %v10423, 4294901760
    %10425 = vmatpush1.msra.mxu0 %v10424
    %10426 = vmatprep.subr.mxu0 0.0
    %v10427 = vand.u32 %v252, 4294901760
    %v10428 = vsub.f32 %v252, %v10427
    %v10429 = vand.u32 %v10428, 4294901760
    %10430 = vmatpush1.msra.mxu0 %v10429
    %10431 = vmatprep.subr.mxu0 0.0
    %v10432 = vand.u32 %v251, 4294901760
    %v10433 = vsub.f32 %v251, %v10432
    %v10434 = vand.u32 %v10433, 4294901760
    %10435 = vmatpush1.msra.mxu0 %v10434
    %10436 = vmatprep.subr.mxu0 0.0
    %v10437 = vand.u32 %v250, 4294901760
    %v10438 = vsub.f32 %v250, %v10437
    %v10439 = vand.u32 %v10438, 4294901760
    %10440 = vmatpush1.msra.mxu0 %v10439
    %10441 = vmatprep.subr.mxu0 0.0
    %10442 = vmatpush2.msra.mxu0 0.0
    %10443 = vmatprep.subr.mxu0 0.0
    %10444 = vmatpush2.msra.mxu0 0.0
    %10445 = vmatprep.subr.mxu0 0.0
    %10446 = vmatpush2.msra.mxu0 0.0
    %10447 = vmatprep.subr.mxu0 0.0
    %10448 = vmatpush2.msra.mxu0 0.0
    %10449 = vmatprep.subr.mxu0 0.0
    %10450 = vmatpush2.msra.mxu0 0.0
    %10451 = vmatprep.subr.mxu0 0.0
    %10452 = vmatpush2.msra.mxu0 0.0
    %10453 = vmatprep.subr.mxu0 0.0
    %10454 = vmatpush2.msra.mxu0 0.0
    %10455 = vmatprep.subr.mxu0 0.0
    %10456 = vmatpush2.msra.mxu0 0.0
    %10457 = vmatprep.subr.mxu0 0.0
    %10458 = vmatpush2.msra.mxu0 0.0
    %10459 = vmatprep.subr.mxu0 0.0
    %10460 = vmatpush2.msra.mxu0 0.0
    %10461 = vmatprep.subr.mxu0 0.0
    %10462 = vmatpush2.msra.mxu0 0.0
    %10463 = vmatprep.subr.mxu0 0.0
    %10464 = vmatpush2.msra.mxu0 0.0
    %10465 = vmatprep.subr.mxu0 0.0
    %10466 = vmatpush2.msra.mxu0 0.0
    %10467 = vmatprep.subr.mxu0 0.0
    %10468 = vmatpush2.msra.mxu0 0.0
    %10469 = vmatprep.subr.mxu0 0.0
    %10470 = vmatpush2.msra.mxu0 0.0
    %10471 = vmatprep.subr.mxu0 0.0
    %10472 = vmatpush2.msra.mxu0 0.0
    %10473 = vmatprep.mubr.f32.mxu0 0.0
    %v10474 = vand.u32 %v6432, 4294901760
    %10475 = vmatmul.mubr.f32.gmra.mxu0 %v10474
    %v10476 = vpop.f32.mrf.mxu0
    %v10477 = vadd.f32 %v10350, %v10476
    %v10478 = vpop.f32.mrf.mxu0
    %10479 = vmatprep.mubr.f32.mxu0 0.0
    %v10480 = vand.u32 %v6434, 4294901760
    %10481 = vmatmul.mubr.f32.gmra.mxu0 %v10480
    %v10482 = vpop.f32.mrf.mxu0
    %v10483 = vadd.f32 %v10358, %v10482
    %v10484 = vpop.f32.mrf.mxu0
    %10485 = vdwg.mxu0
    %10486 = vmatprep.subr.mxu0 0.0
    %v10487 = vand.u32 %v265, 4294901760
    %10488 = vmatpush1.msra.mxu0 %v10487
    %10489 = vmatprep.subr.mxu0 0.0
    %v10490 = vand.u32 %v264, 4294901760
    %10491 = vmatpush1.msra.mxu0 %v10490
    %10492 = vmatprep.subr.mxu0 0.0
    %v10493 = vand.u32 %v263, 4294901760
    %10494 = vmatpush1.msra.mxu0 %v10493
    %10495 = vmatprep.subr.mxu0 0.0
    %v10496 = vand.u32 %v262, 4294901760
    %10497 = vmatpush1.msra.mxu0 %v10496
    %10498 = vmatprep.subr.mxu0 0.0
    %v10499 = vand.u32 %v261, 4294901760
    %10500 = vmatpush1.msra.mxu0 %v10499
    %10501 = vmatprep.subr.mxu0 0.0
    %v10502 = vand.u32 %v260, 4294901760
    %10503 = vmatpush1.msra.mxu0 %v10502
    %10504 = vmatprep.subr.mxu0 0.0
    %v10505 = vand.u32 %v259, 4294901760
    %10506 = vmatpush1.msra.mxu0 %v10505
    %10507 = vmatprep.subr.mxu0 0.0
    %v10508 = vand.u32 %v258, 4294901760
    %10509 = vmatpush1.msra.mxu0 %v10508
    %10510 = vmatprep.subr.mxu0 0.0
    %v10511 = vand.u32 %v257, 4294901760
    %10512 = vmatpush1.msra.mxu0 %v10511
    %10513 = vmatprep.subr.mxu0 0.0
    %v10514 = vand.u32 %v256, 4294901760
    %10515 = vmatpush1.msra.mxu0 %v10514
    %10516 = vmatprep.subr.mxu0 0.0
    %v10517 = vand.u32 %v255, 4294901760
    %10518 = vmatpush1.msra.mxu0 %v10517
    %10519 = vmatprep.subr.mxu0 0.0
    %v10520 = vand.u32 %v254, 4294901760
    %10521 = vmatpush1.msra.mxu0 %v10520
    %10522 = vmatprep.subr.mxu0 0.0
    %v10523 = vand.u32 %v253, 4294901760
    %10524 = vmatpush1.msra.mxu0 %v10523
    %10525 = vmatprep.subr.mxu0 0.0
    %v10526 = vand.u32 %v252, 4294901760
    %10527 = vmatpush1.msra.mxu0 %v10526
    %10528 = vmatprep.subr.mxu0 0.0
    %v10529 = vand.u32 %v251, 4294901760
    %10530 = vmatpush1.msra.mxu0 %v10529
    %10531 = vmatprep.subr.mxu0 0.0
    %v10532 = vand.u32 %v250, 4294901760
    %10533 = vmatpush1.msra.mxu0 %v10532
    %10534 = vmatprep.subr.mxu0 0.0
    %10535 = vmatpush2.msra.mxu0 0.0
    %10536 = vmatprep.subr.mxu0 0.0
    %10537 = vmatpush2.msra.mxu0 0.0
    %10538 = vmatprep.subr.mxu0 0.0
    %10539 = vmatpush2.msra.mxu0 0.0
    %10540 = vmatprep.subr.mxu0 0.0
    %10541 = vmatpush2.msra.mxu0 0.0
    %10542 = vmatprep.subr.mxu0 0.0
    %10543 = vmatpush2.msra.mxu0 0.0
    %10544 = vmatprep.subr.mxu0 0.0
    %10545 = vmatpush2.msra.mxu0 0.0
    %10546 = vmatprep.subr.mxu0 0.0
    %10547 = vmatpush2.msra.mxu0 0.0
    %10548 = vmatprep.subr.mxu0 0.0
    %10549 = vmatpush2.msra.mxu0 0.0
    %10550 = vmatprep.subr.mxu0 0.0
    %10551 = vmatpush2.msra.mxu0 0.0
    %10552 = vmatprep.subr.mxu0 0.0
    %10553 = vmatpush2.msra.mxu0 0.0
    %10554 = vmatprep.subr.mxu0 0.0
    %10555 = vmatpush2.msra.mxu0 0.0
    %10556 = vmatprep.subr.mxu0 0.0
    %10557 = vmatpush2.msra.mxu0 0.0
    %10558 = vmatprep.subr.mxu0 0.0
    %10559 = vmatpush2.msra.mxu0 0.0
    %10560 = vmatprep.subr.mxu0 0.0
    %10561 = vmatpush2.msra.mxu0 0.0
    %10562 = vmatprep.subr.mxu0 0.0
    %10563 = vmatpush2.msra.mxu0 0.0
    %10564 = vmatprep.subr.mxu0 0.0
    %10565 = vmatpush2.msra.mxu0 0.0
    %10566 = vmatprep.mubr.f32.mxu0 0.0
    %v10567 = vand.u32 %v6432, 4294901760
    %10568 = vmatmul.mubr.f32.gmra.mxu0 %v10567
    %v10569 = vpop.f32.mrf.mxu0
    %v10570 = vadd.f32 %v10477, %v10569
    %v10571 = vpop.f32.mrf.mxu0
    %10572 = vmatprep.mubr.f32.mxu0 0.0
    %v10573 = vand.u32 %v6434, 4294901760
    %10574 = vmatmul.mubr.f32.gmra.mxu0 %v10573
    %v10575 = vpop.f32.mrf.mxu0
    %v10576 = vadd.f32 %v10483, %v10575
    %v10577 = vpop.f32.mrf.mxu0
    %10578 = vdwg.mxu0
    %10579 = vmatprep.subr.mxu0 0.0
    %v10580 = vand.u32 %v281, 4294901760
    %10581 = vmatpush1.msra.mxu0 %v10580
    %10582 = vmatprep.subr.mxu0 0.0
    %v10583 = vand.u32 %v280, 4294901760
    %10584 = vmatpush1.msra.mxu0 %v10583
    %10585 = vmatprep.subr.mxu0 0.0
    %v10586 = vand.u32 %v279, 4294901760
    %10587 = vmatpush1.msra.mxu0 %v10586
    %10588 = vmatprep.subr.mxu0 0.0
    %v10589 = vand.u32 %v278, 4294901760
    %10590 = vmatpush1.msra.mxu0 %v10589
    %10591 = vmatprep.subr.mxu0 0.0
    %v10592 = vand.u32 %v277, 4294901760
    %10593 = vmatpush1.msra.mxu0 %v10592
    %10594 = vmatprep.subr.mxu0 0.0
    %v10595 = vand.u32 %v276, 4294901760
    %10596 = vmatpush1.msra.mxu0 %v10595
    %10597 = vmatprep.subr.mxu0 0.0
    %v10598 = vand.u32 %v275, 4294901760
    %10599 = vmatpush1.msra.mxu0 %v10598
    %10600 = vmatprep.subr.mxu0 0.0
    %v10601 = vand.u32 %v274, 4294901760
    %10602 = vmatpush1.msra.mxu0 %v10601
    %10603 = vmatprep.subr.mxu0 0.0
    %v10604 = vand.u32 %v273, 4294901760
    %10605 = vmatpush1.msra.mxu0 %v10604
    %10606 = vmatprep.subr.mxu0 0.0
    %v10607 = vand.u32 %v272, 4294901760
    %10608 = vmatpush1.msra.mxu0 %v10607
    %10609 = vmatprep.subr.mxu0 0.0
    %v10610 = vand.u32 %v271, 4294901760
    %10611 = vmatpush1.msra.mxu0 %v10610
    %10612 = vmatprep.subr.mxu0 0.0
    %v10613 = vand.u32 %v270, 4294901760
    %10614 = vmatpush1.msra.mxu0 %v10613
    %10615 = vmatprep.subr.mxu0 0.0
    %v10616 = vand.u32 %v269, 4294901760
    %10617 = vmatpush1.msra.mxu0 %v10616
    %10618 = vmatprep.subr.mxu0 0.0
    %v10619 = vand.u32 %v268, 4294901760
    %10620 = vmatpush1.msra.mxu0 %v10619
    %10621 = vmatprep.subr.mxu0 0.0
    %v10622 = vand.u32 %v267, 4294901760
    %10623 = vmatpush1.msra.mxu0 %v10622
    %10624 = vmatprep.subr.mxu0 0.0
    %v10625 = vand.u32 %v266, 4294901760
    %10626 = vmatpush1.msra.mxu0 %v10625
    %10627 = vmatprep.subr.mxu0 0.0
    %10628 = vmatpush2.msra.mxu0 0.0
    %10629 = vmatprep.subr.mxu0 0.0
    %10630 = vmatpush2.msra.mxu0 0.0
    %10631 = vmatprep.subr.mxu0 0.0
    %10632 = vmatpush2.msra.mxu0 0.0
    %10633 = vmatprep.subr.mxu0 0.0
    %10634 = vmatpush2.msra.mxu0 0.0
    %10635 = vmatprep.subr.mxu0 0.0
    %10636 = vmatpush2.msra.mxu0 0.0
    %10637 = vmatprep.subr.mxu0 0.0
    %10638 = vmatpush2.msra.mxu0 0.0
    %10639 = vmatprep.subr.mxu0 0.0
    %10640 = vmatpush2.msra.mxu0 0.0
    %10641 = vmatprep.subr.mxu0 0.0
    %10642 = vmatpush2.msra.mxu0 0.0
    %10643 = vmatprep.subr.mxu0 0.0
    %10644 = vmatpush2.msra.mxu0 0.0
    %10645 = vmatprep.subr.mxu0 0.0
    %10646 = vmatpush2.msra.mxu0 0.0
    %10647 = vmatprep.subr.mxu0 0.0
    %10648 = vmatpush2.msra.mxu0 0.0
    %10649 = vmatprep.subr.mxu0 0.0
    %10650 = vmatpush2.msra.mxu0 0.0
    %10651 = vmatprep.subr.mxu0 0.0
    %10652 = vmatpush2.msra.mxu0 0.0
    %10653 = vmatprep.subr.mxu0 0.0
    %10654 = vmatpush2.msra.mxu0 0.0
    %10655 = vmatprep.subr.mxu0 0.0
    %10656 = vmatpush2.msra.mxu0 0.0
    %10657 = vmatprep.subr.mxu0 0.0
    %10658 = vmatpush2.msra.mxu0 0.0
    %10659 = vmatprep.mubr.f32.mxu0 0.0
    %v10660 = vand.u32 %v6436, 4294901760
    %v10661 = vsub.f32 %v6436, %v10660
    %v10662 = vand.u32 %v10661, 4294901760
    %v10663 = vsub.f32 %v10661, %v10662
    %v10664 = vand.u32 %v10663, 4294901760
    %10665 = vmatmul.mubr.f32.gmra.mxu0 %v10664
    %v10666 = vpop.f32.mrf.mxu0
    %v10667 = vadd.f32 0.0, %v10666
    %v10668 = vpop.f32.mrf.mxu0
    %10669 = vmatprep.mubr.f32.mxu0 0.0
    %v10670 = vand.u32 %v6438, 4294901760
    %v10671 = vsub.f32 %v6438, %v10670
    %v10672 = vand.u32 %v10671, 4294901760
    %v10673 = vsub.f32 %v10671, %v10672
    %v10674 = vand.u32 %v10673, 4294901760
    %10675 = vmatmul.mubr.f32.gmra.mxu0 %v10674
    %v10676 = vpop.f32.mrf.mxu0
    %v10677 = vadd.f32 0.0, %v10676
    %v10678 = vpop.f32.mrf.mxu0
    %10679 = vdwg.mxu0
    %10680 = vmatprep.subr.mxu0 0.0
    %v10681 = vand.u32 %v281, 4294901760
    %v10682 = vsub.f32 %v281, %v10681
    %v10683 = vand.u32 %v10682, 4294901760
    %v10684 = vsub.f32 %v10682, %v10683
    %v10685 = vand.u32 %v10684, 4294901760
    %10686 = vmatpush1.msra.mxu0 %v10685
    %10687 = vmatprep.subr.mxu0 0.0
    %v10688 = vand.u32 %v280, 4294901760
    %v10689 = vsub.f32 %v280, %v10688
    %v10690 = vand.u32 %v10689, 4294901760
    %v10691 = vsub.f32 %v10689, %v10690
    %v10692 = vand.u32 %v10691, 4294901760
    %10693 = vmatpush1.msra.mxu0 %v10692
    %10694 = vmatprep.subr.mxu0 0.0
    %v10695 = vand.u32 %v279, 4294901760
    %v10696 = vsub.f32 %v279, %v10695
    %v10697 = vand.u32 %v10696, 4294901760
    %v10698 = vsub.f32 %v10696, %v10697
    %v10699 = vand.u32 %v10698, 4294901760
    %10700 = vmatpush1.msra.mxu0 %v10699
    %10701 = vmatprep.subr.mxu0 0.0
    %v10702 = vand.u32 %v278, 4294901760
    %v10703 = vsub.f32 %v278, %v10702
    %v10704 = vand.u32 %v10703, 4294901760
    %v10705 = vsub.f32 %v10703, %v10704
    %v10706 = vand.u32 %v10705, 4294901760
    %10707 = vmatpush1.msra.mxu0 %v10706
    %10708 = vmatprep.subr.mxu0 0.0
    %v10709 = vand.u32 %v277, 4294901760
    %v10710 = vsub.f32 %v277, %v10709
    %v10711 = vand.u32 %v10710, 4294901760
    %v10712 = vsub.f32 %v10710, %v10711
    %v10713 = vand.u32 %v10712, 4294901760
    %10714 = vmatpush1.msra.mxu0 %v10713
    %10715 = vmatprep.subr.mxu0 0.0
    %v10716 = vand.u32 %v276, 4294901760
    %v10717 = vsub.f32 %v276, %v10716
    %v10718 = vand.u32 %v10717, 4294901760
    %v10719 = vsub.f32 %v10717, %v10718
    %v10720 = vand.u32 %v10719, 4294901760
    %10721 = vmatpush1.msra.mxu0 %v10720
    %10722 = vmatprep.subr.mxu0 0.0
    %v10723 = vand.u32 %v275, 4294901760
    %v10724 = vsub.f32 %v275, %v10723
    %v10725 = vand.u32 %v10724, 4294901760
    %v10726 = vsub.f32 %v10724, %v10725
    %v10727 = vand.u32 %v10726, 4294901760
    %10728 = vmatpush1.msra.mxu0 %v10727
    %10729 = vmatprep.subr.mxu0 0.0
    %v10730 = vand.u32 %v274, 4294901760
    %v10731 = vsub.f32 %v274, %v10730
    %v10732 = vand.u32 %v10731, 4294901760
    %v10733 = vsub.f32 %v10731, %v10732
    %v10734 = vand.u32 %v10733, 4294901760
    %10735 = vmatpush1.msra.mxu0 %v10734
    %10736 = vmatprep.subr.mxu0 0.0
    %v10737 = vand.u32 %v273, 4294901760
    %v10738 = vsub.f32 %v273, %v10737
    %v10739 = vand.u32 %v10738, 4294901760
    %v10740 = vsub.f32 %v10738, %v10739
    %v10741 = vand.u32 %v10740, 4294901760
    %10742 = vmatpush1.msra.mxu0 %v10741
    %10743 = vmatprep.subr.mxu0 0.0
    %v10744 = vand.u32 %v272, 4294901760
    %v10745 = vsub.f32 %v272, %v10744
    %v10746 = vand.u32 %v10745, 4294901760
    %v10747 = vsub.f32 %v10745, %v10746
    %v10748 = vand.u32 %v10747, 4294901760
    %10749 = vmatpush1.msra.mxu0 %v10748
    %10750 = vmatprep.subr.mxu0 0.0
    %v10751 = vand.u32 %v271, 4294901760
    %v10752 = vsub.f32 %v271, %v10751
    %v10753 = vand.u32 %v10752, 4294901760
    %v10754 = vsub.f32 %v10752, %v10753
    %v10755 = vand.u32 %v10754, 4294901760
    %10756 = vmatpush1.msra.mxu0 %v10755
    %10757 = vmatprep.subr.mxu0 0.0
    %v10758 = vand.u32 %v270, 4294901760
    %v10759 = vsub.f32 %v270, %v10758
    %v10760 = vand.u32 %v10759, 4294901760
    %v10761 = vsub.f32 %v10759, %v10760
    %v10762 = vand.u32 %v10761, 4294901760
    %10763 = vmatpush1.msra.mxu0 %v10762
    %10764 = vmatprep.subr.mxu0 0.0
    %v10765 = vand.u32 %v269, 4294901760
    %v10766 = vsub.f32 %v269, %v10765
    %v10767 = vand.u32 %v10766, 4294901760
    %v10768 = vsub.f32 %v10766, %v10767
    %v10769 = vand.u32 %v10768, 4294901760
    %10770 = vmatpush1.msra.mxu0 %v10769
    %10771 = vmatprep.subr.mxu0 0.0
    %v10772 = vand.u32 %v268, 4294901760
    %v10773 = vsub.f32 %v268, %v10772
    %v10774 = vand.u32 %v10773, 4294901760
    %v10775 = vsub.f32 %v10773, %v10774
    %v10776 = vand.u32 %v10775, 4294901760
    %10777 = vmatpush1.msra.mxu0 %v10776
    %10778 = vmatprep.subr.mxu0 0.0
    %v10779 = vand.u32 %v267, 4294901760
    %v10780 = vsub.f32 %v267, %v10779
    %v10781 = vand.u32 %v10780, 4294901760
    %v10782 = vsub.f32 %v10780, %v10781
    %v10783 = vand.u32 %v10782, 4294901760
    %10784 = vmatpush1.msra.mxu0 %v10783
    %10785 = vmatprep.subr.mxu0 0.0
    %v10786 = vand.u32 %v266, 4294901760
    %v10787 = vsub.f32 %v266, %v10786
    %v10788 = vand.u32 %v10787, 4294901760
    %v10789 = vsub.f32 %v10787, %v10788
    %v10790 = vand.u32 %v10789, 4294901760
    %10791 = vmatpush1.msra.mxu0 %v10790
    %10792 = vmatprep.subr.mxu0 0.0
    %10793 = vmatpush2.msra.mxu0 0.0
    %10794 = vmatprep.subr.mxu0 0.0
    %10795 = vmatpush2.msra.mxu0 0.0
    %10796 = vmatprep.subr.mxu0 0.0
    %10797 = vmatpush2.msra.mxu0 0.0
    %10798 = vmatprep.subr.mxu0 0.0
    %10799 = vmatpush2.msra.mxu0 0.0
    %10800 = vmatprep.subr.mxu0 0.0
    %10801 = vmatpush2.msra.mxu0 0.0
    %10802 = vmatprep.subr.mxu0 0.0
    %10803 = vmatpush2.msra.mxu0 0.0
    %10804 = vmatprep.subr.mxu0 0.0
    %10805 = vmatpush2.msra.mxu0 0.0
    %10806 = vmatprep.subr.mxu0 0.0
    %10807 = vmatpush2.msra.mxu0 0.0
    %10808 = vmatprep.subr.mxu0 0.0
    %10809 = vmatpush2.msra.mxu0 0.0
    %10810 = vmatprep.subr.mxu0 0.0
    %10811 = vmatpush2.msra.mxu0 0.0
    %10812 = vmatprep.subr.mxu0 0.0
    %10813 = vmatpush2.msra.mxu0 0.0
    %10814 = vmatprep.subr.mxu0 0.0
    %10815 = vmatpush2.msra.mxu0 0.0
    %10816 = vmatprep.subr.mxu0 0.0
    %10817 = vmatpush2.msra.mxu0 0.0
    %10818 = vmatprep.subr.mxu0 0.0
    %10819 = vmatpush2.msra.mxu0 0.0
    %10820 = vmatprep.subr.mxu0 0.0
    %10821 = vmatpush2.msra.mxu0 0.0
    %10822 = vmatprep.subr.mxu0 0.0
    %10823 = vmatpush2.msra.mxu0 0.0
    %10824 = vmatprep.mubr.f32.mxu0 0.0
    %v10825 = vand.u32 %v6436, 4294901760
    %10826 = vmatmul.mubr.f32.gmra.mxu0 %v10825
    %v10827 = vpop.f32.mrf.mxu0
    %v10828 = vadd.f32 %v10667, %v10827
    %v10829 = vpop.f32.mrf.mxu0
    %10830 = vmatprep.mubr.f32.mxu0 0.0
    %v10831 = vand.u32 %v6438, 4294901760
    %10832 = vmatmul.mubr.f32.gmra.mxu0 %v10831
    %v10833 = vpop.f32.mrf.mxu0
    %v10834 = vadd.f32 %v10677, %v10833
    %v10835 = vpop.f32.mrf.mxu0
    %10836 = vdwg.mxu0
    %10837 = vmatprep.subr.mxu0 0.0
    %v10838 = vand.u32 %v281, 4294901760
    %v10839 = vsub.f32 %v281, %v10838
    %10840 = vmatpush1.msra.mxu0 %v10839
    %10841 = vmatprep.subr.mxu0 0.0
    %v10842 = vand.u32 %v280, 4294901760
    %v10843 = vsub.f32 %v280, %v10842
    %10844 = vmatpush1.msra.mxu0 %v10843
    %10845 = vmatprep.subr.mxu0 0.0
    %v10846 = vand.u32 %v279, 4294901760
    %v10847 = vsub.f32 %v279, %v10846
    %10848 = vmatpush1.msra.mxu0 %v10847
    %10849 = vmatprep.subr.mxu0 0.0
    %v10850 = vand.u32 %v278, 4294901760
    %v10851 = vsub.f32 %v278, %v10850
    %10852 = vmatpush1.msra.mxu0 %v10851
    %10853 = vmatprep.subr.mxu0 0.0
    %v10854 = vand.u32 %v277, 4294901760
    %v10855 = vsub.f32 %v277, %v10854
    %10856 = vmatpush1.msra.mxu0 %v10855
    %10857 = vmatprep.subr.mxu0 0.0
    %v10858 = vand.u32 %v276, 4294901760
    %v10859 = vsub.f32 %v276, %v10858
    %10860 = vmatpush1.msra.mxu0 %v10859
    %10861 = vmatprep.subr.mxu0 0.0
    %v10862 = vand.u32 %v275, 4294901760
    %v10863 = vsub.f32 %v275, %v10862
    %10864 = vmatpush1.msra.mxu0 %v10863
    %10865 = vmatprep.subr.mxu0 0.0
    %v10866 = vand.u32 %v274, 4294901760
    %v10867 = vsub.f32 %v274, %v10866
    %10868 = vmatpush1.msra.mxu0 %v10867
    %10869 = vmatprep.subr.mxu0 0.0
    %v10870 = vand.u32 %v273, 4294901760
    %v10871 = vsub.f32 %v273, %v10870
    %10872 = vmatpush1.msra.mxu0 %v10871
    %10873 = vmatprep.subr.mxu0 0.0
    %v10874 = vand.u32 %v272, 4294901760
    %v10875 = vsub.f32 %v272, %v10874
    %10876 = vmatpush1.msra.mxu0 %v10875
    %10877 = vmatprep.subr.mxu0 0.0
    %v10878 = vand.u32 %v271, 4294901760
    %v10879 = vsub.f32 %v271, %v10878
    %10880 = vmatpush1.msra.mxu0 %v10879
    %10881 = vmatprep.subr.mxu0 0.0
    %v10882 = vand.u32 %v270, 4294901760
    %v10883 = vsub.f32 %v270, %v10882
    %10884 = vmatpush1.msra.mxu0 %v10883
    %10885 = vmatprep.subr.mxu0 0.0
    %v10886 = vand.u32 %v269, 4294901760
    %v10887 = vsub.f32 %v269, %v10886
    %10888 = vmatpush1.msra.mxu0 %v10887
    %10889 = vmatprep.subr.mxu0 0.0
    %v10890 = vand.u32 %v268, 4294901760
    %v10891 = vsub.f32 %v268, %v10890
    %10892 = vmatpush1.msra.mxu0 %v10891
    %10893 = vmatprep.subr.mxu0 0.0
    %v10894 = vand.u32 %v267, 4294901760
    %v10895 = vsub.f32 %v267, %v10894
    %10896 = vmatpush1.msra.mxu0 %v10895
    %10897 = vmatprep.subr.mxu0 0.0
    %v10898 = vand.u32 %v266, 4294901760
    %v10899 = vsub.f32 %v266, %v10898
    %10900 = vmatpush1.msra.mxu0 %v10899
    %10901 = vmatprep.subr.mxu0 0.0
    %10902 = vmatpush2.msra.mxu0 0.0
    %10903 = vmatprep.subr.mxu0 0.0
    %10904 = vmatpush2.msra.mxu0 0.0
    %10905 = vmatprep.subr.mxu0 0.0
    %10906 = vmatpush2.msra.mxu0 0.0
    %10907 = vmatprep.subr.mxu0 0.0
    %10908 = vmatpush2.msra.mxu0 0.0
    %10909 = vmatprep.subr.mxu0 0.0
    %10910 = vmatpush2.msra.mxu0 0.0
    %10911 = vmatprep.subr.mxu0 0.0
    %10912 = vmatpush2.msra.mxu0 0.0
    %10913 = vmatprep.subr.mxu0 0.0
    %10914 = vmatpush2.msra.mxu0 0.0
    %10915 = vmatprep.subr.mxu0 0.0
    %10916 = vmatpush2.msra.mxu0 0.0
    %10917 = vmatprep.subr.mxu0 0.0
    %10918 = vmatpush2.msra.mxu0 0.0
    %10919 = vmatprep.subr.mxu0 0.0
    %10920 = vmatpush2.msra.mxu0 0.0
    %10921 = vmatprep.subr.mxu0 0.0
    %10922 = vmatpush2.msra.mxu0 0.0
    %10923 = vmatprep.subr.mxu0 0.0
    %10924 = vmatpush2.msra.mxu0 0.0
    %10925 = vmatprep.subr.mxu0 0.0
    %10926 = vmatpush2.msra.mxu0 0.0
    %10927 = vmatprep.subr.mxu0 0.0
    %10928 = vmatpush2.msra.mxu0 0.0
    %10929 = vmatprep.subr.mxu0 0.0
    %10930 = vmatpush2.msra.mxu0 0.0
    %10931 = vmatprep.subr.mxu0 0.0
    %10932 = vmatpush2.msra.mxu0 0.0
    %10933 = vmatprep.mubr.f32.mxu0 0.0
    %v10934 = vand.u32 %v6436, 4294901760
    %v10935 = vsub.f32 %v6436, %v10934
    %10936 = vmatmul.mubr.f32.gmra.mxu0 %v10935
    %v10937 = vpop.f32.mrf.mxu0
    %v10938 = vadd.f32 %v10828, %v10937
    %v10939 = vpop.f32.mrf.mxu0
    %10940 = vmatprep.mubr.f32.mxu0 0.0
    %v10941 = vand.u32 %v6438, 4294901760
    %v10942 = vsub.f32 %v6438, %v10941
    %10943 = vmatmul.mubr.f32.gmra.mxu0 %v10942
    %v10944 = vpop.f32.mrf.mxu0
    %v10945 = vadd.f32 %v10834, %v10944
    %v10946 = vpop.f32.mrf.mxu0
    %10947 = vdwg.mxu0
    %10948 = vmatprep.subr.mxu0 0.0
    %v10949 = vand.u32 %v281, 4294901760
    %10950 = vmatpush1.msra.mxu0 %v10949
    %10951 = vmatprep.subr.mxu0 0.0
    %v10952 = vand.u32 %v280, 4294901760
    %10953 = vmatpush1.msra.mxu0 %v10952
    %10954 = vmatprep.subr.mxu0 0.0
    %v10955 = vand.u32 %v279, 4294901760
    %10956 = vmatpush1.msra.mxu0 %v10955
    %10957 = vmatprep.subr.mxu0 0.0
    %v10958 = vand.u32 %v278, 4294901760
    %10959 = vmatpush1.msra.mxu0 %v10958
    %10960 = vmatprep.subr.mxu0 0.0
    %v10961 = vand.u32 %v277, 4294901760
    %10962 = vmatpush1.msra.mxu0 %v10961
    %10963 = vmatprep.subr.mxu0 0.0
    %v10964 = vand.u32 %v276, 4294901760
    %10965 = vmatpush1.msra.mxu0 %v10964
    %10966 = vmatprep.subr.mxu0 0.0
    %v10967 = vand.u32 %v275, 4294901760
    %10968 = vmatpush1.msra.mxu0 %v10967
    %10969 = vmatprep.subr.mxu0 0.0
    %v10970 = vand.u32 %v274, 4294901760
    %10971 = vmatpush1.msra.mxu0 %v10970
    %10972 = vmatprep.subr.mxu0 0.0
    %v10973 = vand.u32 %v273, 4294901760
    %10974 = vmatpush1.msra.mxu0 %v10973
    %10975 = vmatprep.subr.mxu0 0.0
    %v10976 = vand.u32 %v272, 4294901760
    %10977 = vmatpush1.msra.mxu0 %v10976
    %10978 = vmatprep.subr.mxu0 0.0
    %v10979 = vand.u32 %v271, 4294901760
    %10980 = vmatpush1.msra.mxu0 %v10979
    %10981 = vmatprep.subr.mxu0 0.0
    %v10982 = vand.u32 %v270, 4294901760
    %10983 = vmatpush1.msra.mxu0 %v10982
    %10984 = vmatprep.subr.mxu0 0.0
    %v10985 = vand.u32 %v269, 4294901760
    %10986 = vmatpush1.msra.mxu0 %v10985
    %10987 = vmatprep.subr.mxu0 0.0
    %v10988 = vand.u32 %v268, 4294901760
    %10989 = vmatpush1.msra.mxu0 %v10988
    %10990 = vmatprep.subr.mxu0 0.0
    %v10991 = vand.u32 %v267, 4294901760
    %10992 = vmatpush1.msra.mxu0 %v10991
    %10993 = vmatprep.subr.mxu0 0.0
    %v10994 = vand.u32 %v266, 4294901760
    %10995 = vmatpush1.msra.mxu0 %v10994
    %10996 = vmatprep.subr.mxu0 0.0
    %10997 = vmatpush2.msra.mxu0 0.0
    %10998 = vmatprep.subr.mxu0 0.0
    %10999 = vmatpush2.msra.mxu0 0.0
    %11000 = vmatprep.subr.mxu0 0.0
    %11001 = vmatpush2.msra.mxu0 0.0
    %11002 = vmatprep.subr.mxu0 0.0
    %11003 = vmatpush2.msra.mxu0 0.0
    %11004 = vmatprep.subr.mxu0 0.0
    %11005 = vmatpush2.msra.mxu0 0.0
    %11006 = vmatprep.subr.mxu0 0.0
    %11007 = vmatpush2.msra.mxu0 0.0
    %11008 = vmatprep.subr.mxu0 0.0
    %11009 = vmatpush2.msra.mxu0 0.0
    %11010 = vmatprep.subr.mxu0 0.0
    %11011 = vmatpush2.msra.mxu0 0.0
    %11012 = vmatprep.subr.mxu0 0.0
    %11013 = vmatpush2.msra.mxu0 0.0
    %11014 = vmatprep.subr.mxu0 0.0
    %11015 = vmatpush2.msra.mxu0 0.0
    %11016 = vmatprep.subr.mxu0 0.0
    %11017 = vmatpush2.msra.mxu0 0.0
    %11018 = vmatprep.subr.mxu0 0.0
    %11019 = vmatpush2.msra.mxu0 0.0
    %11020 = vmatprep.subr.mxu0 0.0
    %11021 = vmatpush2.msra.mxu0 0.0
    %11022 = vmatprep.subr.mxu0 0.0
    %11023 = vmatpush2.msra.mxu0 0.0
    %11024 = vmatprep.subr.mxu0 0.0
    %11025 = vmatpush2.msra.mxu0 0.0
    %11026 = vmatprep.subr.mxu0 0.0
    %11027 = vmatpush2.msra.mxu0 0.0
    %11028 = vmatprep.mubr.f32.mxu0 0.0
    %v11029 = vand.u32 %v6436, 4294901760
    %v11030 = vsub.f32 %v6436, %v11029
    %v11031 = vand.u32 %v11030, 4294901760
    %11032 = vmatmul.mubr.f32.gmra.mxu0 %v11031
    %v11033 = vpop.f32.mrf.mxu0
    %v11034 = vadd.f32 %v10938, %v11033
    %v11035 = vpop.f32.mrf.mxu0
    %11036 = vmatprep.mubr.f32.mxu0 0.0
    %v11037 = vand.u32 %v6438, 4294901760
    %v11038 = vsub.f32 %v6438, %v11037
    %v11039 = vand.u32 %v11038, 4294901760
    %11040 = vmatmul.mubr.f32.gmra.mxu0 %v11039
    %v11041 = vpop.f32.mrf.mxu0
    %v11042 = vadd.f32 %v10945, %v11041
    %v11043 = vpop.f32.mrf.mxu0
    %11044 = vdwg.mxu0
    %11045 = vmatprep.subr.mxu0 0.0
    %v11046 = vand.u32 %v281, 4294901760
    %v11047 = vsub.f32 %v281, %v11046
    %v11048 = vand.u32 %v11047, 4294901760
    %11049 = vmatpush1.msra.mxu0 %v11048
    %11050 = vmatprep.subr.mxu0 0.0
    %v11051 = vand.u32 %v280, 4294901760
    %v11052 = vsub.f32 %v280, %v11051
    %v11053 = vand.u32 %v11052, 4294901760
    %11054 = vmatpush1.msra.mxu0 %v11053
    %11055 = vmatprep.subr.mxu0 0.0
    %v11056 = vand.u32 %v279, 4294901760
    %v11057 = vsub.f32 %v279, %v11056
    %v11058 = vand.u32 %v11057, 4294901760
    %11059 = vmatpush1.msra.mxu0 %v11058
    %11060 = vmatprep.subr.mxu0 0.0
    %v11061 = vand.u32 %v278, 4294901760
    %v11062 = vsub.f32 %v278, %v11061
    %v11063 = vand.u32 %v11062, 4294901760
    %11064 = vmatpush1.msra.mxu0 %v11063
    %11065 = vmatprep.subr.mxu0 0.0
    %v11066 = vand.u32 %v277, 4294901760
    %v11067 = vsub.f32 %v277, %v11066
    %v11068 = vand.u32 %v11067, 4294901760
    %11069 = vmatpush1.msra.mxu0 %v11068
    %11070 = vmatprep.subr.mxu0 0.0
    %v11071 = vand.u32 %v276, 4294901760
    %v11072 = vsub.f32 %v276, %v11071
    %v11073 = vand.u32 %v11072, 4294901760
    %11074 = vmatpush1.msra.mxu0 %v11073
    %11075 = vmatprep.subr.mxu0 0.0
    %v11076 = vand.u32 %v275, 4294901760
    %v11077 = vsub.f32 %v275, %v11076
    %v11078 = vand.u32 %v11077, 4294901760
    %11079 = vmatpush1.msra.mxu0 %v11078
    %11080 = vmatprep.subr.mxu0 0.0
    %v11081 = vand.u32 %v274, 4294901760
    %v11082 = vsub.f32 %v274, %v11081
    %v11083 = vand.u32 %v11082, 4294901760
    %11084 = vmatpush1.msra.mxu0 %v11083
    %11085 = vmatprep.subr.mxu0 0.0
    %v11086 = vand.u32 %v273, 4294901760
    %v11087 = vsub.f32 %v273, %v11086
    %v11088 = vand.u32 %v11087, 4294901760
    %11089 = vmatpush1.msra.mxu0 %v11088
    %11090 = vmatprep.subr.mxu0 0.0
    %v11091 = vand.u32 %v272, 4294901760
    %v11092 = vsub.f32 %v272, %v11091
    %v11093 = vand.u32 %v11092, 4294901760
    %11094 = vmatpush1.msra.mxu0 %v11093
    %11095 = vmatprep.subr.mxu0 0.0
    %v11096 = vand.u32 %v271, 4294901760
    %v11097 = vsub.f32 %v271, %v11096
    %v11098 = vand.u32 %v11097, 4294901760
    %11099 = vmatpush1.msra.mxu0 %v11098
    %11100 = vmatprep.subr.mxu0 0.0
    %v11101 = vand.u32 %v270, 4294901760
    %v11102 = vsub.f32 %v270, %v11101
    %v11103 = vand.u32 %v11102, 4294901760
    %11104 = vmatpush1.msra.mxu0 %v11103
    %11105 = vmatprep.subr.mxu0 0.0
    %v11106 = vand.u32 %v269, 4294901760
    %v11107 = vsub.f32 %v269, %v11106
    %v11108 = vand.u32 %v11107, 4294901760
    %11109 = vmatpush1.msra.mxu0 %v11108
    %11110 = vmatprep.subr.mxu0 0.0
    %v11111 = vand.u32 %v268, 4294901760
    %v11112 = vsub.f32 %v268, %v11111
    %v11113 = vand.u32 %v11112, 4294901760
    %11114 = vmatpush1.msra.mxu0 %v11113
    %11115 = vmatprep.subr.mxu0 0.0
    %v11116 = vand.u32 %v267, 4294901760
    %v11117 = vsub.f32 %v267, %v11116
    %v11118 = vand.u32 %v11117, 4294901760
    %11119 = vmatpush1.msra.mxu0 %v11118
    %11120 = vmatprep.subr.mxu0 0.0
    %v11121 = vand.u32 %v266, 4294901760
    %v11122 = vsub.f32 %v266, %v11121
    %v11123 = vand.u32 %v11122, 4294901760
    %11124 = vmatpush1.msra.mxu0 %v11123
    %11125 = vmatprep.subr.mxu0 0.0
    %11126 = vmatpush2.msra.mxu0 0.0
    %11127 = vmatprep.subr.mxu0 0.0
    %11128 = vmatpush2.msra.mxu0 0.0
    %11129 = vmatprep.subr.mxu0 0.0
    %11130 = vmatpush2.msra.mxu0 0.0
    %11131 = vmatprep.subr.mxu0 0.0
    %11132 = vmatpush2.msra.mxu0 0.0
    %11133 = vmatprep.subr.mxu0 0.0
    %11134 = vmatpush2.msra.mxu0 0.0
    %11135 = vmatprep.subr.mxu0 0.0
    %11136 = vmatpush2.msra.mxu0 0.0
    %11137 = vmatprep.subr.mxu0 0.0
    %11138 = vmatpush2.msra.mxu0 0.0
    %11139 = vmatprep.subr.mxu0 0.0
    %11140 = vmatpush2.msra.mxu0 0.0
    %11141 = vmatprep.subr.mxu0 0.0
    %11142 = vmatpush2.msra.mxu0 0.0
    %11143 = vmatprep.subr.mxu0 0.0
    %11144 = vmatpush2.msra.mxu0 0.0
    %11145 = vmatprep.subr.mxu0 0.0
    %11146 = vmatpush2.msra.mxu0 0.0
    %11147 = vmatprep.subr.mxu0 0.0
    %11148 = vmatpush2.msra.mxu0 0.0
    %11149 = vmatprep.subr.mxu0 0.0
    %11150 = vmatpush2.msra.mxu0 0.0
    %11151 = vmatprep.subr.mxu0 0.0
    %11152 = vmatpush2.msra.mxu0 0.0
    %11153 = vmatprep.subr.mxu0 0.0
    %11154 = vmatpush2.msra.mxu0 0.0
    %11155 = vmatprep.subr.mxu0 0.0
    %11156 = vmatpush2.msra.mxu0 0.0
    %11157 = vmatprep.mubr.f32.mxu0 0.0
    %v11158 = vand.u32 %v6436, 4294901760
    %11159 = vmatmul.mubr.f32.gmra.mxu0 %v11158
    %v11160 = vpop.f32.mrf.mxu0
    %v11161 = vadd.f32 %v11034, %v11160
    %v11162 = vpop.f32.mrf.mxu0
    %11163 = vmatprep.mubr.f32.mxu0 0.0
    %v11164 = vand.u32 %v6438, 4294901760
    %11165 = vmatmul.mubr.f32.gmra.mxu0 %v11164
    %v11166 = vpop.f32.mrf.mxu0
    %v11167 = vadd.f32 %v11042, %v11166
    %v11168 = vpop.f32.mrf.mxu0
    %11169 = vdwg.mxu0
    %11170 = vmatprep.subr.mxu0 0.0
    %v11171 = vand.u32 %v281, 4294901760
    %11172 = vmatpush1.msra.mxu0 %v11171
    %11173 = vmatprep.subr.mxu0 0.0
    %v11174 = vand.u32 %v280, 4294901760
    %11175 = vmatpush1.msra.mxu0 %v11174
    %11176 = vmatprep.subr.mxu0 0.0
    %v11177 = vand.u32 %v279, 4294901760
    %11178 = vmatpush1.msra.mxu0 %v11177
    %11179 = vmatprep.subr.mxu0 0.0
    %v11180 = vand.u32 %v278, 4294901760
    %11181 = vmatpush1.msra.mxu0 %v11180
    %11182 = vmatprep.subr.mxu0 0.0
    %v11183 = vand.u32 %v277, 4294901760
    %11184 = vmatpush1.msra.mxu0 %v11183
    %11185 = vmatprep.subr.mxu0 0.0
    %v11186 = vand.u32 %v276, 4294901760
    %11187 = vmatpush1.msra.mxu0 %v11186
    %11188 = vmatprep.subr.mxu0 0.0
    %v11189 = vand.u32 %v275, 4294901760
    %11190 = vmatpush1.msra.mxu0 %v11189
    %11191 = vmatprep.subr.mxu0 0.0
    %v11192 = vand.u32 %v274, 4294901760
    %11193 = vmatpush1.msra.mxu0 %v11192
    %11194 = vmatprep.subr.mxu0 0.0
    %v11195 = vand.u32 %v273, 4294901760
    %11196 = vmatpush1.msra.mxu0 %v11195
    %11197 = vmatprep.subr.mxu0 0.0
    %v11198 = vand.u32 %v272, 4294901760
    %11199 = vmatpush1.msra.mxu0 %v11198
    %11200 = vmatprep.subr.mxu0 0.0
    %v11201 = vand.u32 %v271, 4294901760
    %11202 = vmatpush1.msra.mxu0 %v11201
    %11203 = vmatprep.subr.mxu0 0.0
    %v11204 = vand.u32 %v270, 4294901760
    %11205 = vmatpush1.msra.mxu0 %v11204
    %11206 = vmatprep.subr.mxu0 0.0
    %v11207 = vand.u32 %v269, 4294901760
    %11208 = vmatpush1.msra.mxu0 %v11207
    %11209 = vmatprep.subr.mxu0 0.0
    %v11210 = vand.u32 %v268, 4294901760
    %11211 = vmatpush1.msra.mxu0 %v11210
    %11212 = vmatprep.subr.mxu0 0.0
    %v11213 = vand.u32 %v267, 4294901760
    %11214 = vmatpush1.msra.mxu0 %v11213
    %11215 = vmatprep.subr.mxu0 0.0
    %v11216 = vand.u32 %v266, 4294901760
    %11217 = vmatpush1.msra.mxu0 %v11216
    %11218 = vmatprep.subr.mxu0 0.0
    %11219 = vmatpush2.msra.mxu0 0.0
    %11220 = vmatprep.subr.mxu0 0.0
    %11221 = vmatpush2.msra.mxu0 0.0
    %11222 = vmatprep.subr.mxu0 0.0
    %11223 = vmatpush2.msra.mxu0 0.0
    %11224 = vmatprep.subr.mxu0 0.0
    %11225 = vmatpush2.msra.mxu0 0.0
    %11226 = vmatprep.subr.mxu0 0.0
    %11227 = vmatpush2.msra.mxu0 0.0
    %11228 = vmatprep.subr.mxu0 0.0
    %11229 = vmatpush2.msra.mxu0 0.0
    %11230 = vmatprep.subr.mxu0 0.0
    %11231 = vmatpush2.msra.mxu0 0.0
    %11232 = vmatprep.subr.mxu0 0.0
    %11233 = vmatpush2.msra.mxu0 0.0
    %11234 = vmatprep.subr.mxu0 0.0
    %11235 = vmatpush2.msra.mxu0 0.0
    %11236 = vmatprep.subr.mxu0 0.0
    %11237 = vmatpush2.msra.mxu0 0.0
    %11238 = vmatprep.subr.mxu0 0.0
    %11239 = vmatpush2.msra.mxu0 0.0
    %11240 = vmatprep.subr.mxu0 0.0
    %11241 = vmatpush2.msra.mxu0 0.0
    %11242 = vmatprep.subr.mxu0 0.0
    %11243 = vmatpush2.msra.mxu0 0.0
    %11244 = vmatprep.subr.mxu0 0.0
    %11245 = vmatpush2.msra.mxu0 0.0
    %11246 = vmatprep.subr.mxu0 0.0
    %11247 = vmatpush2.msra.mxu0 0.0
    %11248 = vmatprep.subr.mxu0 0.0
    %11249 = vmatpush2.msra.mxu0 0.0
    %11250 = vmatprep.mubr.f32.mxu0 0.0
    %v11251 = vand.u32 %v6436, 4294901760
    %11252 = vmatmul.mubr.f32.gmra.mxu0 %v11251
    %v11253 = vpop.f32.mrf.mxu0
    %v11254 = vadd.f32 %v11161, %v11253
    %v11255 = vpop.f32.mrf.mxu0
    %11256 = vmatprep.mubr.f32.mxu0 0.0
    %v11257 = vand.u32 %v6438, 4294901760
    %11258 = vmatmul.mubr.f32.gmra.mxu0 %v11257
    %v11259 = vpop.f32.mrf.mxu0
    %v11260 = vadd.f32 %v11167, %v11259
    %v11261 = vpop.f32.mrf.mxu0
    %11262 = vdwg.mxu0
    %11263 = vmatprep.subr.mxu0 0.0
    %v11264 = vand.u32 %v297, 4294901760
    %11265 = vmatpush1.msra.mxu0 %v11264
    %11266 = vmatprep.subr.mxu0 0.0
    %v11267 = vand.u32 %v296, 4294901760
    %11268 = vmatpush1.msra.mxu0 %v11267
    %11269 = vmatprep.subr.mxu0 0.0
    %v11270 = vand.u32 %v295, 4294901760
    %11271 = vmatpush1.msra.mxu0 %v11270
    %11272 = vmatprep.subr.mxu0 0.0
    %v11273 = vand.u32 %v294, 4294901760
    %11274 = vmatpush1.msra.mxu0 %v11273
    %11275 = vmatprep.subr.mxu0 0.0
    %v11276 = vand.u32 %v293, 4294901760
    %11277 = vmatpush1.msra.mxu0 %v11276
    %11278 = vmatprep.subr.mxu0 0.0
    %v11279 = vand.u32 %v292, 4294901760
    %11280 = vmatpush1.msra.mxu0 %v11279
    %11281 = vmatprep.subr.mxu0 0.0
    %v11282 = vand.u32 %v291, 4294901760
    %11283 = vmatpush1.msra.mxu0 %v11282
    %11284 = vmatprep.subr.mxu0 0.0
    %v11285 = vand.u32 %v290, 4294901760
    %11286 = vmatpush1.msra.mxu0 %v11285
    %11287 = vmatprep.subr.mxu0 0.0
    %v11288 = vand.u32 %v289, 4294901760
    %11289 = vmatpush1.msra.mxu0 %v11288
    %11290 = vmatprep.subr.mxu0 0.0
    %v11291 = vand.u32 %v288, 4294901760
    %11292 = vmatpush1.msra.mxu0 %v11291
    %11293 = vmatprep.subr.mxu0 0.0
    %v11294 = vand.u32 %v287, 4294901760
    %11295 = vmatpush1.msra.mxu0 %v11294
    %11296 = vmatprep.subr.mxu0 0.0
    %v11297 = vand.u32 %v286, 4294901760
    %11298 = vmatpush1.msra.mxu0 %v11297
    %11299 = vmatprep.subr.mxu0 0.0
    %v11300 = vand.u32 %v285, 4294901760
    %11301 = vmatpush1.msra.mxu0 %v11300
    %11302 = vmatprep.subr.mxu0 0.0
    %v11303 = vand.u32 %v284, 4294901760
    %11304 = vmatpush1.msra.mxu0 %v11303
    %11305 = vmatprep.subr.mxu0 0.0
    %v11306 = vand.u32 %v283, 4294901760
    %11307 = vmatpush1.msra.mxu0 %v11306
    %11308 = vmatprep.subr.mxu0 0.0
    %v11309 = vand.u32 %v282, 4294901760
    %11310 = vmatpush1.msra.mxu0 %v11309
    %11311 = vmatprep.subr.mxu0 0.0
    %11312 = vmatpush2.msra.mxu0 0.0
    %11313 = vmatprep.subr.mxu0 0.0
    %11314 = vmatpush2.msra.mxu0 0.0
    %11315 = vmatprep.subr.mxu0 0.0
    %11316 = vmatpush2.msra.mxu0 0.0
    %11317 = vmatprep.subr.mxu0 0.0
    %11318 = vmatpush2.msra.mxu0 0.0
    %11319 = vmatprep.subr.mxu0 0.0
    %11320 = vmatpush2.msra.mxu0 0.0
    %11321 = vmatprep.subr.mxu0 0.0
    %11322 = vmatpush2.msra.mxu0 0.0
    %11323 = vmatprep.subr.mxu0 0.0
    %11324 = vmatpush2.msra.mxu0 0.0
    %11325 = vmatprep.subr.mxu0 0.0
    %11326 = vmatpush2.msra.mxu0 0.0
    %11327 = vmatprep.subr.mxu0 0.0
    %11328 = vmatpush2.msra.mxu0 0.0
    %11329 = vmatprep.subr.mxu0 0.0
    %11330 = vmatpush2.msra.mxu0 0.0
    %11331 = vmatprep.subr.mxu0 0.0
    %11332 = vmatpush2.msra.mxu0 0.0
    %11333 = vmatprep.subr.mxu0 0.0
    %11334 = vmatpush2.msra.mxu0 0.0
    %11335 = vmatprep.subr.mxu0 0.0
    %11336 = vmatpush2.msra.mxu0 0.0
    %11337 = vmatprep.subr.mxu0 0.0
    %11338 = vmatpush2.msra.mxu0 0.0
    %11339 = vmatprep.subr.mxu0 0.0
    %11340 = vmatpush2.msra.mxu0 0.0
    %11341 = vmatprep.subr.mxu0 0.0
    %11342 = vmatpush2.msra.mxu0 0.0
    %11343 = vmatprep.mubr.f32.mxu0 0.0
    %v11344 = vand.u32 %v6440, 4294901760
    %v11345 = vsub.f32 %v6440, %v11344
    %v11346 = vand.u32 %v11345, 4294901760
    %v11347 = vsub.f32 %v11345, %v11346
    %v11348 = vand.u32 %v11347, 4294901760
    %11349 = vmatmul.mubr.f32.gmra.mxu0 %v11348
    %v11350 = vpop.f32.mrf.mxu0
    %v11351 = vadd.f32 0.0, %v11350
    %v11352 = vpop.f32.mrf.mxu0
    %11353 = vmatprep.mubr.f32.mxu0 0.0
    %v11354 = vand.u32 %v6442, 4294901760
    %v11355 = vsub.f32 %v6442, %v11354
    %v11356 = vand.u32 %v11355, 4294901760
    %v11357 = vsub.f32 %v11355, %v11356
    %v11358 = vand.u32 %v11357, 4294901760
    %11359 = vmatmul.mubr.f32.gmra.mxu0 %v11358
    %v11360 = vpop.f32.mrf.mxu0
    %v11361 = vadd.f32 0.0, %v11360
    %v11362 = vpop.f32.mrf.mxu0
    %11363 = vdwg.mxu0
    %11364 = vmatprep.subr.mxu0 0.0
    %v11365 = vand.u32 %v297, 4294901760
    %v11366 = vsub.f32 %v297, %v11365
    %v11367 = vand.u32 %v11366, 4294901760
    %v11368 = vsub.f32 %v11366, %v11367
    %v11369 = vand.u32 %v11368, 4294901760
    %11370 = vmatpush1.msra.mxu0 %v11369
    %11371 = vmatprep.subr.mxu0 0.0
    %v11372 = vand.u32 %v296, 4294901760
    %v11373 = vsub.f32 %v296, %v11372
    %v11374 = vand.u32 %v11373, 4294901760
    %v11375 = vsub.f32 %v11373, %v11374
    %v11376 = vand.u32 %v11375, 4294901760
    %11377 = vmatpush1.msra.mxu0 %v11376
    %11378 = vmatprep.subr.mxu0 0.0
    %v11379 = vand.u32 %v295, 4294901760
    %v11380 = vsub.f32 %v295, %v11379
    %v11381 = vand.u32 %v11380, 4294901760
    %v11382 = vsub.f32 %v11380, %v11381
    %v11383 = vand.u32 %v11382, 4294901760
    %11384 = vmatpush1.msra.mxu0 %v11383
    %11385 = vmatprep.subr.mxu0 0.0
    %v11386 = vand.u32 %v294, 4294901760
    %v11387 = vsub.f32 %v294, %v11386
    %v11388 = vand.u32 %v11387, 4294901760
    %v11389 = vsub.f32 %v11387, %v11388
    %v11390 = vand.u32 %v11389, 4294901760
    %11391 = vmatpush1.msra.mxu0 %v11390
    %11392 = vmatprep.subr.mxu0 0.0
    %v11393 = vand.u32 %v293, 4294901760
    %v11394 = vsub.f32 %v293, %v11393
    %v11395 = vand.u32 %v11394, 4294901760
    %v11396 = vsub.f32 %v11394, %v11395
    %v11397 = vand.u32 %v11396, 4294901760
    %11398 = vmatpush1.msra.mxu0 %v11397
    %11399 = vmatprep.subr.mxu0 0.0
    %v11400 = vand.u32 %v292, 4294901760
    %v11401 = vsub.f32 %v292, %v11400
    %v11402 = vand.u32 %v11401, 4294901760
    %v11403 = vsub.f32 %v11401, %v11402
    %v11404 = vand.u32 %v11403, 4294901760
    %11405 = vmatpush1.msra.mxu0 %v11404
    %11406 = vmatprep.subr.mxu0 0.0
    %v11407 = vand.u32 %v291, 4294901760
    %v11408 = vsub.f32 %v291, %v11407
    %v11409 = vand.u32 %v11408, 4294901760
    %v11410 = vsub.f32 %v11408, %v11409
    %v11411 = vand.u32 %v11410, 4294901760
    %11412 = vmatpush1.msra.mxu0 %v11411
    %11413 = vmatprep.subr.mxu0 0.0
    %v11414 = vand.u32 %v290, 4294901760
    %v11415 = vsub.f32 %v290, %v11414
    %v11416 = vand.u32 %v11415, 4294901760
    %v11417 = vsub.f32 %v11415, %v11416
    %v11418 = vand.u32 %v11417, 4294901760
    %11419 = vmatpush1.msra.mxu0 %v11418
    %11420 = vmatprep.subr.mxu0 0.0
    %v11421 = vand.u32 %v289, 4294901760
    %v11422 = vsub.f32 %v289, %v11421
    %v11423 = vand.u32 %v11422, 4294901760
    %v11424 = vsub.f32 %v11422, %v11423
    %v11425 = vand.u32 %v11424, 4294901760
    %11426 = vmatpush1.msra.mxu0 %v11425
    %11427 = vmatprep.subr.mxu0 0.0
    %v11428 = vand.u32 %v288, 4294901760
    %v11429 = vsub.f32 %v288, %v11428
    %v11430 = vand.u32 %v11429, 4294901760
    %v11431 = vsub.f32 %v11429, %v11430
    %v11432 = vand.u32 %v11431, 4294901760
    %11433 = vmatpush1.msra.mxu0 %v11432
    %11434 = vmatprep.subr.mxu0 0.0
    %v11435 = vand.u32 %v287, 4294901760
    %v11436 = vsub.f32 %v287, %v11435
    %v11437 = vand.u32 %v11436, 4294901760
    %v11438 = vsub.f32 %v11436, %v11437
    %v11439 = vand.u32 %v11438, 4294901760
    %11440 = vmatpush1.msra.mxu0 %v11439
    %11441 = vmatprep.subr.mxu0 0.0
    %v11442 = vand.u32 %v286, 4294901760
    %v11443 = vsub.f32 %v286, %v11442
    %v11444 = vand.u32 %v11443, 4294901760
    %v11445 = vsub.f32 %v11443, %v11444
    %v11446 = vand.u32 %v11445, 4294901760
    %11447 = vmatpush1.msra.mxu0 %v11446
    %11448 = vmatprep.subr.mxu0 0.0
    %v11449 = vand.u32 %v285, 4294901760
    %v11450 = vsub.f32 %v285, %v11449
    %v11451 = vand.u32 %v11450, 4294901760
    %v11452 = vsub.f32 %v11450, %v11451
    %v11453 = vand.u32 %v11452, 4294901760
    %11454 = vmatpush1.msra.mxu0 %v11453
    %11455 = vmatprep.subr.mxu0 0.0
    %v11456 = vand.u32 %v284, 4294901760
    %v11457 = vsub.f32 %v284, %v11456
    %v11458 = vand.u32 %v11457, 4294901760
    %v11459 = vsub.f32 %v11457, %v11458
    %v11460 = vand.u32 %v11459, 4294901760
    %11461 = vmatpush1.msra.mxu0 %v11460
    %11462 = vmatprep.subr.mxu0 0.0
    %v11463 = vand.u32 %v283, 4294901760
    %v11464 = vsub.f32 %v283, %v11463
    %v11465 = vand.u32 %v11464, 4294901760
    %v11466 = vsub.f32 %v11464, %v11465
    %v11467 = vand.u32 %v11466, 4294901760
    %11468 = vmatpush1.msra.mxu0 %v11467
    %11469 = vmatprep.subr.mxu0 0.0
    %v11470 = vand.u32 %v282, 4294901760
    %v11471 = vsub.f32 %v282, %v11470
    %v11472 = vand.u32 %v11471, 4294901760
    %v11473 = vsub.f32 %v11471, %v11472
    %v11474 = vand.u32 %v11473, 4294901760
    %11475 = vmatpush1.msra.mxu0 %v11474
    %11476 = vmatprep.subr.mxu0 0.0
    %11477 = vmatpush2.msra.mxu0 0.0
    %11478 = vmatprep.subr.mxu0 0.0
    %11479 = vmatpush2.msra.mxu0 0.0
    %11480 = vmatprep.subr.mxu0 0.0
    %11481 = vmatpush2.msra.mxu0 0.0
    %11482 = vmatprep.subr.mxu0 0.0
    %11483 = vmatpush2.msra.mxu0 0.0
    %11484 = vmatprep.subr.mxu0 0.0
    %11485 = vmatpush2.msra.mxu0 0.0
    %11486 = vmatprep.subr.mxu0 0.0
    %11487 = vmatpush2.msra.mxu0 0.0
    %11488 = vmatprep.subr.mxu0 0.0
    %11489 = vmatpush2.msra.mxu0 0.0
    %11490 = vmatprep.subr.mxu0 0.0
    %11491 = vmatpush2.msra.mxu0 0.0
    %11492 = vmatprep.subr.mxu0 0.0
    %11493 = vmatpush2.msra.mxu0 0.0
    %11494 = vmatprep.subr.mxu0 0.0
    %11495 = vmatpush2.msra.mxu0 0.0
    %11496 = vmatprep.subr.mxu0 0.0
    %11497 = vmatpush2.msra.mxu0 0.0
    %11498 = vmatprep.subr.mxu0 0.0
    %11499 = vmatpush2.msra.mxu0 0.0
    %11500 = vmatprep.subr.mxu0 0.0
    %11501 = vmatpush2.msra.mxu0 0.0
    %11502 = vmatprep.subr.mxu0 0.0
    %11503 = vmatpush2.msra.mxu0 0.0
    %11504 = vmatprep.subr.mxu0 0.0
    %11505 = vmatpush2.msra.mxu0 0.0
    %11506 = vmatprep.subr.mxu0 0.0
    %11507 = vmatpush2.msra.mxu0 0.0
    %11508 = vmatprep.mubr.f32.mxu0 0.0
    %v11509 = vand.u32 %v6440, 4294901760
    %11510 = vmatmul.mubr.f32.gmra.mxu0 %v11509
    %v11511 = vpop.f32.mrf.mxu0
    %v11512 = vadd.f32 %v11351, %v11511
    %v11513 = vpop.f32.mrf.mxu0
    %11514 = vmatprep.mubr.f32.mxu0 0.0
    %v11515 = vand.u32 %v6442, 4294901760
    %11516 = vmatmul.mubr.f32.gmra.mxu0 %v11515
    %v11517 = vpop.f32.mrf.mxu0
    %v11518 = vadd.f32 %v11361, %v11517
    %v11519 = vpop.f32.mrf.mxu0
    %11520 = vdwg.mxu0
    %11521 = vmatprep.subr.mxu0 0.0
    %v11522 = vand.u32 %v297, 4294901760
    %v11523 = vsub.f32 %v297, %v11522
    %11524 = vmatpush1.msra.mxu0 %v11523
    %11525 = vmatprep.subr.mxu0 0.0
    %v11526 = vand.u32 %v296, 4294901760
    %v11527 = vsub.f32 %v296, %v11526
    %11528 = vmatpush1.msra.mxu0 %v11527
    %11529 = vmatprep.subr.mxu0 0.0
    %v11530 = vand.u32 %v295, 4294901760
    %v11531 = vsub.f32 %v295, %v11530
    %11532 = vmatpush1.msra.mxu0 %v11531
    %11533 = vmatprep.subr.mxu0 0.0
    %v11534 = vand.u32 %v294, 4294901760
    %v11535 = vsub.f32 %v294, %v11534
    %11536 = vmatpush1.msra.mxu0 %v11535
    %11537 = vmatprep.subr.mxu0 0.0
    %v11538 = vand.u32 %v293, 4294901760
    %v11539 = vsub.f32 %v293, %v11538
    %11540 = vmatpush1.msra.mxu0 %v11539
    %11541 = vmatprep.subr.mxu0 0.0
    %v11542 = vand.u32 %v292, 4294901760
    %v11543 = vsub.f32 %v292, %v11542
    %11544 = vmatpush1.msra.mxu0 %v11543
    %11545 = vmatprep.subr.mxu0 0.0
    %v11546 = vand.u32 %v291, 4294901760
    %v11547 = vsub.f32 %v291, %v11546
    %11548 = vmatpush1.msra.mxu0 %v11547
    %11549 = vmatprep.subr.mxu0 0.0
    %v11550 = vand.u32 %v290, 4294901760
    %v11551 = vsub.f32 %v290, %v11550
    %11552 = vmatpush1.msra.mxu0 %v11551
    %11553 = vmatprep.subr.mxu0 0.0
    %v11554 = vand.u32 %v289, 4294901760
    %v11555 = vsub.f32 %v289, %v11554
    %11556 = vmatpush1.msra.mxu0 %v11555
    %11557 = vmatprep.subr.mxu0 0.0
    %v11558 = vand.u32 %v288, 4294901760
    %v11559 = vsub.f32 %v288, %v11558
    %11560 = vmatpush1.msra.mxu0 %v11559
    %11561 = vmatprep.subr.mxu0 0.0
    %v11562 = vand.u32 %v287, 4294901760
    %v11563 = vsub.f32 %v287, %v11562
    %11564 = vmatpush1.msra.mxu0 %v11563
    %11565 = vmatprep.subr.mxu0 0.0
    %v11566 = vand.u32 %v286, 4294901760
    %v11567 = vsub.f32 %v286, %v11566
    %11568 = vmatpush1.msra.mxu0 %v11567
    %11569 = vmatprep.subr.mxu0 0.0
    %v11570 = vand.u32 %v285, 4294901760
    %v11571 = vsub.f32 %v285, %v11570
    %11572 = vmatpush1.msra.mxu0 %v11571
    %11573 = vmatprep.subr.mxu0 0.0
    %v11574 = vand.u32 %v284, 4294901760
    %v11575 = vsub.f32 %v284, %v11574
    %11576 = vmatpush1.msra.mxu0 %v11575
    %11577 = vmatprep.subr.mxu0 0.0
    %v11578 = vand.u32 %v283, 4294901760
    %v11579 = vsub.f32 %v283, %v11578
    %11580 = vmatpush1.msra.mxu0 %v11579
    %11581 = vmatprep.subr.mxu0 0.0
    %v11582 = vand.u32 %v282, 4294901760
    %v11583 = vsub.f32 %v282, %v11582
    %11584 = vmatpush1.msra.mxu0 %v11583
    %11585 = vmatprep.subr.mxu0 0.0
    %11586 = vmatpush2.msra.mxu0 0.0
    %11587 = vmatprep.subr.mxu0 0.0
    %11588 = vmatpush2.msra.mxu0 0.0
    %11589 = vmatprep.subr.mxu0 0.0
    %11590 = vmatpush2.msra.mxu0 0.0
    %11591 = vmatprep.subr.mxu0 0.0
    %11592 = vmatpush2.msra.mxu0 0.0
    %11593 = vmatprep.subr.mxu0 0.0
    %11594 = vmatpush2.msra.mxu0 0.0
    %11595 = vmatprep.subr.mxu0 0.0
    %11596 = vmatpush2.msra.mxu0 0.0
    %11597 = vmatprep.subr.mxu0 0.0
    %11598 = vmatpush2.msra.mxu0 0.0
    %11599 = vmatprep.subr.mxu0 0.0
    %11600 = vmatpush2.msra.mxu0 0.0
    %11601 = vmatprep.subr.mxu0 0.0
    %11602 = vmatpush2.msra.mxu0 0.0
    %11603 = vmatprep.subr.mxu0 0.0
    %11604 = vmatpush2.msra.mxu0 0.0
    %11605 = vmatprep.subr.mxu0 0.0
    %11606 = vmatpush2.msra.mxu0 0.0
    %11607 = vmatprep.subr.mxu0 0.0
    %11608 = vmatpush2.msra.mxu0 0.0
    %11609 = vmatprep.subr.mxu0 0.0
    %11610 = vmatpush2.msra.mxu0 0.0
    %11611 = vmatprep.subr.mxu0 0.0
    %11612 = vmatpush2.msra.mxu0 0.0
    %11613 = vmatprep.subr.mxu0 0.0
    %11614 = vmatpush2.msra.mxu0 0.0
    %11615 = vmatprep.subr.mxu0 0.0
    %11616 = vmatpush2.msra.mxu0 0.0
    %11617 = vmatprep.mubr.f32.mxu0 0.0
    %v11618 = vand.u32 %v6440, 4294901760
    %v11619 = vsub.f32 %v6440, %v11618
    %11620 = vmatmul.mubr.f32.gmra.mxu0 %v11619
    %v11621 = vpop.f32.mrf.mxu0
    %v11622 = vadd.f32 %v11512, %v11621
    %v11623 = vpop.f32.mrf.mxu0
    %11624 = vmatprep.mubr.f32.mxu0 0.0
    %v11625 = vand.u32 %v6442, 4294901760
    %v11626 = vsub.f32 %v6442, %v11625
    %11627 = vmatmul.mubr.f32.gmra.mxu0 %v11626
    %v11628 = vpop.f32.mrf.mxu0
    %v11629 = vadd.f32 %v11518, %v11628
    %v11630 = vpop.f32.mrf.mxu0
    %11631 = vdwg.mxu0
    %11632 = vmatprep.subr.mxu0 0.0
    %v11633 = vand.u32 %v297, 4294901760
    %11634 = vmatpush1.msra.mxu0 %v11633
    %11635 = vmatprep.subr.mxu0 0.0
    %v11636 = vand.u32 %v296, 4294901760
    %11637 = vmatpush1.msra.mxu0 %v11636
    %11638 = vmatprep.subr.mxu0 0.0
    %v11639 = vand.u32 %v295, 4294901760
    %11640 = vmatpush1.msra.mxu0 %v11639
    %11641 = vmatprep.subr.mxu0 0.0
    %v11642 = vand.u32 %v294, 4294901760
    %11643 = vmatpush1.msra.mxu0 %v11642
    %11644 = vmatprep.subr.mxu0 0.0
    %v11645 = vand.u32 %v293, 4294901760
    %11646 = vmatpush1.msra.mxu0 %v11645
    %11647 = vmatprep.subr.mxu0 0.0
    %v11648 = vand.u32 %v292, 4294901760
    %11649 = vmatpush1.msra.mxu0 %v11648
    %11650 = vmatprep.subr.mxu0 0.0
    %v11651 = vand.u32 %v291, 4294901760
    %11652 = vmatpush1.msra.mxu0 %v11651
    %11653 = vmatprep.subr.mxu0 0.0
    %v11654 = vand.u32 %v290, 4294901760
    %11655 = vmatpush1.msra.mxu0 %v11654
    %11656 = vmatprep.subr.mxu0 0.0
    %v11657 = vand.u32 %v289, 4294901760
    %11658 = vmatpush1.msra.mxu0 %v11657
    %11659 = vmatprep.subr.mxu0 0.0
    %v11660 = vand.u32 %v288, 4294901760
    %11661 = vmatpush1.msra.mxu0 %v11660
    %11662 = vmatprep.subr.mxu0 0.0
    %v11663 = vand.u32 %v287, 4294901760
    %11664 = vmatpush1.msra.mxu0 %v11663
    %11665 = vmatprep.subr.mxu0 0.0
    %v11666 = vand.u32 %v286, 4294901760
    %11667 = vmatpush1.msra.mxu0 %v11666
    %11668 = vmatprep.subr.mxu0 0.0
    %v11669 = vand.u32 %v285, 4294901760
    %11670 = vmatpush1.msra.mxu0 %v11669
    %11671 = vmatprep.subr.mxu0 0.0
    %v11672 = vand.u32 %v284, 4294901760
    %11673 = vmatpush1.msra.mxu0 %v11672
    %11674 = vmatprep.subr.mxu0 0.0
    %v11675 = vand.u32 %v283, 4294901760
    %11676 = vmatpush1.msra.mxu0 %v11675
    %11677 = vmatprep.subr.mxu0 0.0
    %v11678 = vand.u32 %v282, 4294901760
    %11679 = vmatpush1.msra.mxu0 %v11678
    %11680 = vmatprep.subr.mxu0 0.0
    %11681 = vmatpush2.msra.mxu0 0.0
    %11682 = vmatprep.subr.mxu0 0.0
    %11683 = vmatpush2.msra.mxu0 0.0
    %11684 = vmatprep.subr.mxu0 0.0
    %11685 = vmatpush2.msra.mxu0 0.0
    %11686 = vmatprep.subr.mxu0 0.0
    %11687 = vmatpush2.msra.mxu0 0.0
    %11688 = vmatprep.subr.mxu0 0.0
    %11689 = vmatpush2.msra.mxu0 0.0
    %11690 = vmatprep.subr.mxu0 0.0
    %11691 = vmatpush2.msra.mxu0 0.0
    %11692 = vmatprep.subr.mxu0 0.0
    %11693 = vmatpush2.msra.mxu0 0.0
    %11694 = vmatprep.subr.mxu0 0.0
    %11695 = vmatpush2.msra.mxu0 0.0
    %11696 = vmatprep.subr.mxu0 0.0
    %11697 = vmatpush2.msra.mxu0 0.0
    %11698 = vmatprep.subr.mxu0 0.0
    %11699 = vmatpush2.msra.mxu0 0.0
    %11700 = vmatprep.subr.mxu0 0.0
    %11701 = vmatpush2.msra.mxu0 0.0
    %11702 = vmatprep.subr.mxu0 0.0
    %11703 = vmatpush2.msra.mxu0 0.0
    %11704 = vmatprep.subr.mxu0 0.0
    %11705 = vmatpush2.msra.mxu0 0.0
    %11706 = vmatprep.subr.mxu0 0.0
    %11707 = vmatpush2.msra.mxu0 0.0
    %11708 = vmatprep.subr.mxu0 0.0
    %11709 = vmatpush2.msra.mxu0 0.0
    %11710 = vmatprep.subr.mxu0 0.0
    %11711 = vmatpush2.msra.mxu0 0.0
    %11712 = vmatprep.mubr.f32.mxu0 0.0
    %v11713 = vand.u32 %v6440, 4294901760
    %v11714 = vsub.f32 %v6440, %v11713
    %v11715 = vand.u32 %v11714, 4294901760
    %11716 = vmatmul.mubr.f32.gmra.mxu0 %v11715
    %v11717 = vpop.f32.mrf.mxu0
    %v11718 = vadd.f32 %v11622, %v11717
    %v11719 = vpop.f32.mrf.mxu0
    %11720 = vmatprep.mubr.f32.mxu0 0.0
    %v11721 = vand.u32 %v6442, 4294901760
    %v11722 = vsub.f32 %v6442, %v11721
    %v11723 = vand.u32 %v11722, 4294901760
    %11724 = vmatmul.mubr.f32.gmra.mxu0 %v11723
    %v11725 = vpop.f32.mrf.mxu0
    %v11726 = vadd.f32 %v11629, %v11725
    %v11727 = vpop.f32.mrf.mxu0
    %11728 = vdwg.mxu0
    %11729 = vmatprep.subr.mxu0 0.0
    %v11730 = vand.u32 %v297, 4294901760
    %v11731 = vsub.f32 %v297, %v11730
    %v11732 = vand.u32 %v11731, 4294901760
    %11733 = vmatpush1.msra.mxu0 %v11732
    %11734 = vmatprep.subr.mxu0 0.0
    %v11735 = vand.u32 %v296, 4294901760
    %v11736 = vsub.f32 %v296, %v11735
    %v11737 = vand.u32 %v11736, 4294901760
    %11738 = vmatpush1.msra.mxu0 %v11737
    %11739 = vmatprep.subr.mxu0 0.0
    %v11740 = vand.u32 %v295, 4294901760
    %v11741 = vsub.f32 %v295, %v11740
    %v11742 = vand.u32 %v11741, 4294901760
    %11743 = vmatpush1.msra.mxu0 %v11742
    %11744 = vmatprep.subr.mxu0 0.0
    %v11745 = vand.u32 %v294, 4294901760
    %v11746 = vsub.f32 %v294, %v11745
    %v11747 = vand.u32 %v11746, 4294901760
    %11748 = vmatpush1.msra.mxu0 %v11747
    %11749 = vmatprep.subr.mxu0 0.0
    %v11750 = vand.u32 %v293, 4294901760
    %v11751 = vsub.f32 %v293, %v11750
    %v11752 = vand.u32 %v11751, 4294901760
    %11753 = vmatpush1.msra.mxu0 %v11752
    %11754 = vmatprep.subr.mxu0 0.0
    %v11755 = vand.u32 %v292, 4294901760
    %v11756 = vsub.f32 %v292, %v11755
    %v11757 = vand.u32 %v11756, 4294901760
    %11758 = vmatpush1.msra.mxu0 %v11757
    %11759 = vmatprep.subr.mxu0 0.0
    %v11760 = vand.u32 %v291, 4294901760
    %v11761 = vsub.f32 %v291, %v11760
    %v11762 = vand.u32 %v11761, 4294901760
    %11763 = vmatpush1.msra.mxu0 %v11762
    %11764 = vmatprep.subr.mxu0 0.0
    %v11765 = vand.u32 %v290, 4294901760
    %v11766 = vsub.f32 %v290, %v11765
    %v11767 = vand.u32 %v11766, 4294901760
    %11768 = vmatpush1.msra.mxu0 %v11767
    %11769 = vmatprep.subr.mxu0 0.0
    %v11770 = vand.u32 %v289, 4294901760
    %v11771 = vsub.f32 %v289, %v11770
    %v11772 = vand.u32 %v11771, 4294901760
    %11773 = vmatpush1.msra.mxu0 %v11772
    %11774 = vmatprep.subr.mxu0 0.0
    %v11775 = vand.u32 %v288, 4294901760
    %v11776 = vsub.f32 %v288, %v11775
    %v11777 = vand.u32 %v11776, 4294901760
    %11778 = vmatpush1.msra.mxu0 %v11777
    %11779 = vmatprep.subr.mxu0 0.0
    %v11780 = vand.u32 %v287, 4294901760
    %v11781 = vsub.f32 %v287, %v11780
    %v11782 = vand.u32 %v11781, 4294901760
    %11783 = vmatpush1.msra.mxu0 %v11782
    %11784 = vmatprep.subr.mxu0 0.0
    %v11785 = vand.u32 %v286, 4294901760
    %v11786 = vsub.f32 %v286, %v11785
    %v11787 = vand.u32 %v11786, 4294901760
    %11788 = vmatpush1.msra.mxu0 %v11787
    %11789 = vmatprep.subr.mxu0 0.0
    %v11790 = vand.u32 %v285, 4294901760
    %v11791 = vsub.f32 %v285, %v11790
    %v11792 = vand.u32 %v11791, 4294901760
    %11793 = vmatpush1.msra.mxu0 %v11792
    %11794 = vmatprep.subr.mxu0 0.0
    %v11795 = vand.u32 %v284, 4294901760
    %v11796 = vsub.f32 %v284, %v11795
    %v11797 = vand.u32 %v11796, 4294901760
    %11798 = vmatpush1.msra.mxu0 %v11797
    %11799 = vmatprep.subr.mxu0 0.0
    %v11800 = vand.u32 %v283, 4294901760
    %v11801 = vsub.f32 %v283, %v11800
    %v11802 = vand.u32 %v11801, 4294901760
    %11803 = vmatpush1.msra.mxu0 %v11802
    %11804 = vmatprep.subr.mxu0 0.0
    %v11805 = vand.u32 %v282, 4294901760
    %v11806 = vsub.f32 %v282, %v11805
    %v11807 = vand.u32 %v11806, 4294901760
    %11808 = vmatpush1.msra.mxu0 %v11807
    %11809 = vmatprep.subr.mxu0 0.0
    %11810 = vmatpush2.msra.mxu0 0.0
    %11811 = vmatprep.subr.mxu0 0.0
    %11812 = vmatpush2.msra.mxu0 0.0
    %11813 = vmatprep.subr.mxu0 0.0
    %11814 = vmatpush2.msra.mxu0 0.0
    %11815 = vmatprep.subr.mxu0 0.0
    %11816 = vmatpush2.msra.mxu0 0.0
    %11817 = vmatprep.subr.mxu0 0.0
    %11818 = vmatpush2.msra.mxu0 0.0
    %11819 = vmatprep.subr.mxu0 0.0
    %11820 = vmatpush2.msra.mxu0 0.0
    %11821 = vmatprep.subr.mxu0 0.0
    %11822 = vmatpush2.msra.mxu0 0.0
    %11823 = vmatprep.subr.mxu0 0.0
    %11824 = vmatpush2.msra.mxu0 0.0
    %11825 = vmatprep.subr.mxu0 0.0
    %11826 = vmatpush2.msra.mxu0 0.0
    %11827 = vmatprep.subr.mxu0 0.0
    %11828 = vmatpush2.msra.mxu0 0.0
    %11829 = vmatprep.subr.mxu0 0.0
    %11830 = vmatpush2.msra.mxu0 0.0
    %11831 = vmatprep.subr.mxu0 0.0
    %11832 = vmatpush2.msra.mxu0 0.0
    %11833 = vmatprep.subr.mxu0 0.0
    %11834 = vmatpush2.msra.mxu0 0.0
    %11835 = vmatprep.subr.mxu0 0.0
    %11836 = vmatpush2.msra.mxu0 0.0
    %11837 = vmatprep.subr.mxu0 0.0
    %11838 = vmatpush2.msra.mxu0 0.0
    %11839 = vmatprep.subr.mxu0 0.0
    %11840 = vmatpush2.msra.mxu0 0.0
    %11841 = vmatprep.mubr.f32.mxu0 0.0
    %v11842 = vand.u32 %v6440, 4294901760
    %11843 = vmatmul.mubr.f32.gmra.mxu0 %v11842
    %v11844 = vpop.f32.mrf.mxu0
    %v11845 = vadd.f32 %v11718, %v11844
    %v11846 = vpop.f32.mrf.mxu0
    %11847 = vmatprep.mubr.f32.mxu0 0.0
    %v11848 = vand.u32 %v6442, 4294901760
    %11849 = vmatmul.mubr.f32.gmra.mxu0 %v11848
    %v11850 = vpop.f32.mrf.mxu0
    %v11851 = vadd.f32 %v11726, %v11850
    %v11852 = vpop.f32.mrf.mxu0
    %11853 = vdwg.mxu0
    %11854 = vmatprep.subr.mxu0 0.0
    %v11855 = vand.u32 %v297, 4294901760
    %11856 = vmatpush1.msra.mxu0 %v11855
    %11857 = vmatprep.subr.mxu0 0.0
    %v11858 = vand.u32 %v296, 4294901760
    %11859 = vmatpush1.msra.mxu0 %v11858
    %11860 = vmatprep.subr.mxu0 0.0
    %v11861 = vand.u32 %v295, 4294901760
    %11862 = vmatpush1.msra.mxu0 %v11861
    %11863 = vmatprep.subr.mxu0 0.0
    %v11864 = vand.u32 %v294, 4294901760
    %11865 = vmatpush1.msra.mxu0 %v11864
    %11866 = vmatprep.subr.mxu0 0.0
    %v11867 = vand.u32 %v293, 4294901760
    %11868 = vmatpush1.msra.mxu0 %v11867
    %11869 = vmatprep.subr.mxu0 0.0
    %v11870 = vand.u32 %v292, 4294901760
    %11871 = vmatpush1.msra.mxu0 %v11870
    %11872 = vmatprep.subr.mxu0 0.0
    %v11873 = vand.u32 %v291, 4294901760
    %11874 = vmatpush1.msra.mxu0 %v11873
    %11875 = vmatprep.subr.mxu0 0.0
    %v11876 = vand.u32 %v290, 4294901760
    %11877 = vmatpush1.msra.mxu0 %v11876
    %11878 = vmatprep.subr.mxu0 0.0
    %v11879 = vand.u32 %v289, 4294901760
    %11880 = vmatpush1.msra.mxu0 %v11879
    %11881 = vmatprep.subr.mxu0 0.0
    %v11882 = vand.u32 %v288, 4294901760
    %11883 = vmatpush1.msra.mxu0 %v11882
    %11884 = vmatprep.subr.mxu0 0.0
    %v11885 = vand.u32 %v287, 4294901760
    %11886 = vmatpush1.msra.mxu0 %v11885
    %11887 = vmatprep.subr.mxu0 0.0
    %v11888 = vand.u32 %v286, 4294901760
    %11889 = vmatpush1.msra.mxu0 %v11888
    %11890 = vmatprep.subr.mxu0 0.0
    %v11891 = vand.u32 %v285, 4294901760
    %11892 = vmatpush1.msra.mxu0 %v11891
    %11893 = vmatprep.subr.mxu0 0.0
    %v11894 = vand.u32 %v284, 4294901760
    %11895 = vmatpush1.msra.mxu0 %v11894
    %11896 = vmatprep.subr.mxu0 0.0
    %v11897 = vand.u32 %v283, 4294901760
    %11898 = vmatpush1.msra.mxu0 %v11897
    %11899 = vmatprep.subr.mxu0 0.0
    %v11900 = vand.u32 %v282, 4294901760
    %11901 = vmatpush1.msra.mxu0 %v11900
    %11902 = vmatprep.subr.mxu0 0.0
    %11903 = vmatpush2.msra.mxu0 0.0
    %11904 = vmatprep.subr.mxu0 0.0
    %11905 = vmatpush2.msra.mxu0 0.0
    %11906 = vmatprep.subr.mxu0 0.0
    %11907 = vmatpush2.msra.mxu0 0.0
    %11908 = vmatprep.subr.mxu0 0.0
    %11909 = vmatpush2.msra.mxu0 0.0
    %11910 = vmatprep.subr.mxu0 0.0
    %11911 = vmatpush2.msra.mxu0 0.0
    %11912 = vmatprep.subr.mxu0 0.0
    %11913 = vmatpush2.msra.mxu0 0.0
    %11914 = vmatprep.subr.mxu0 0.0
    %11915 = vmatpush2.msra.mxu0 0.0
    %11916 = vmatprep.subr.mxu0 0.0
    %11917 = vmatpush2.msra.mxu0 0.0
    %11918 = vmatprep.subr.mxu0 0.0
    %11919 = vmatpush2.msra.mxu0 0.0
    %11920 = vmatprep.subr.mxu0 0.0
    %11921 = vmatpush2.msra.mxu0 0.0
    %11922 = vmatprep.subr.mxu0 0.0
    %11923 = vmatpush2.msra.mxu0 0.0
    %11924 = vmatprep.subr.mxu0 0.0
    %11925 = vmatpush2.msra.mxu0 0.0
    %11926 = vmatprep.subr.mxu0 0.0
    %11927 = vmatpush2.msra.mxu0 0.0
    %11928 = vmatprep.subr.mxu0 0.0
    %11929 = vmatpush2.msra.mxu0 0.0
    %11930 = vmatprep.subr.mxu0 0.0
    %11931 = vmatpush2.msra.mxu0 0.0
    %11932 = vmatprep.subr.mxu0 0.0
    %11933 = vmatpush2.msra.mxu0 0.0
    %11934 = vmatprep.mubr.f32.mxu0 0.0
    %v11935 = vand.u32 %v6440, 4294901760
    %11936 = vmatmul.mubr.f32.gmra.mxu0 %v11935
    %v11937 = vpop.f32.mrf.mxu0
    %v11938 = vadd.f32 %v11845, %v11937
    %v11939 = vpop.f32.mrf.mxu0
    %11940 = vmatprep.mubr.f32.mxu0 0.0
    %v11941 = vand.u32 %v6442, 4294901760
    %11942 = vmatmul.mubr.f32.gmra.mxu0 %v11941
    %v11943 = vpop.f32.mrf.mxu0
    %v11944 = vadd.f32 %v11851, %v11943
    %v11945 = vpop.f32.mrf.mxu0
    %11946 = vdwg.mxu0
    %v11947 = vrcp.pop %v6444
    %v11948 = vrcp.pop %v6446
    %v11949 = vrcp.pop %v6448
    %v11950 = vrcp.pop %v6450
    %v11951 = vrcp.pop %v6452
    %v11952 = vrcp.pop %v6454
    %v11953 = vrcp.pop %v6456
    %v11954 = vrcp.pop %v6458
    %v11955 = vrcp.pop %v6460
    %v11956 = vrcp.pop %v6462
    %v11957 = vrcp.pop %v6464
    %v11958 = vrcp.pop %v6466
    %v11959 = vrcp.pop %v6468
    %v11960 = vrcp.pop %v6470
    %v11961 = vrcp.pop %v6472
    %v11962 = vrcp.pop %v6474
    %v11963 = vmul.f32 %v7150, %v11947
    %v11964 = vmul.f32 %v7156, %v11948
    %v11965 = vmul.f32 %v7834, %v11949
    %v11966 = vmul.f32 %v7840, %v11950
    %v11967 = vmul.f32 %v8518, %v11951
    %v11968 = vmul.f32 %v8524, %v11952
    %v11969 = vmul.f32 %v9202, %v11953
    %v11970 = vmul.f32 %v9208, %v11954
    %v11971 = vmul.f32 %v9886, %v11955
    %v11972 = vmul.f32 %v9892, %v11956
    %v11973 = vmul.f32 %v10570, %v11957
    %v11974 = vmul.f32 %v10576, %v11958
    %v11975 = vmul.f32 %v11254, %v11959
    %v11976 = vmul.f32 %v11260, %v11960
    %v11977 = vmul.f32 %v11938, %v11961
    %v11978 = vmul.f32 %v11944, %v11962
    %11979 = vst.msk [vmem:[#allocation2] sm:$0xff] %vm298, %v11963
    %11980 = vst.msk [vmem:[#allocation2 + $0x8] sm:$0xff] %vm298, %v11964
    %11981 = vst.msk [vmem:[#allocation2 + $0x10] sm:$0xff] %vm298, %v11965
    %11982 = vst.msk [vmem:[#allocation2 + $0x18] sm:$0xff] %vm298, %v11966
    %11983 = vst.msk [vmem:[#allocation2 + $0x20] sm:$0xff] %vm298, %v11967
    %11984 = vst.msk [vmem:[#allocation2 + $0x28] sm:$0xff] %vm298, %v11968
    %11985 = vst.msk [vmem:[#allocation2 + $0x30] sm:$0xff] %vm298, %v11969
    %11986 = vst.msk [vmem:[#allocation2 + $0x38] sm:$0xff] %vm298, %v11970
    %11987 = vst.msk [vmem:[#allocation2 + $0x40] sm:$0xff] %vm298, %v11971
    %11988 = vst.msk [vmem:[#allocation2 + $0x48] sm:$0xff] %vm298, %v11972
    %11989 = vst.msk [vmem:[#allocation2 + $0x50] sm:$0xff] %vm298, %v11973
    %11990 = vst.msk [vmem:[#allocation2 + $0x58] sm:$0xff] %vm298, %v11974
    %11991 = vst.msk [vmem:[#allocation2 + $0x60] sm:$0xff] %vm298, %v11975
    %11992 = vst.msk [vmem:[#allocation2 + $0x68] sm:$0xff] %vm298, %v11976
    %11993 = vst.msk [vmem:[#allocation2 + $0x70] sm:$0xff] %vm298, %v11977
    %11994 = vst.msk [vmem:[#allocation2 + $0x78] sm:$0xff] %vm298, %v11978
    // Predicated region
    $region22: #{tpu_custom_call.1} parent=1 // pred_check
      _
    $region23: #{tpu_custom_call.1} parent=1 // pred_check_branch
      %11996 = sbr.rel (0) target = $region25
    $region24: #{tpu_custom_call.1} parent=1 // pred_region
      %s11998 = ssub.s32 2048, 2048
      %11999 = vsyncadd [#allocation3], %s11998
      %s12000 = sshll.u32 [#allocation2], 4
      %s12001 = int_to_ptr.vmem [resolvable:$true] %s12000
      %12006 = dma.vmem_to_hbm [thread:$0]  %s12001, 2048, %s5, [#allocation3], 128, 128, 8
    $region25: #{tpu_custom_call.1} parent=1 // pred_fallthru
      _
    // Predicated region
    $region26: #{tpu_custom_call.1} parent=1 // pred_check
      _
    $region27: #{tpu_custom_call.1} parent=1 // pred_check_branch
      %12008 = sbr.rel (0) target = $region29
    $region28: #{tpu_custom_call.1} parent=1 // pred_region
      %s12010 = ssub.s32 2048, 2048
      %12011 = vsyncadd [#allocation5], %s12010
      %s12012 = sshll.u32 [#allocation4], 4
      %s12013 = int_to_ptr.vmem [resolvable:$true] %s12012
      %12018 = dma.vmem_to_hbm [thread:$0]  %s12013, 2048, %s6, [#allocation5], 128, 128, 8
    $region29: #{tpu_custom_call.1} parent=1 // pred_fallthru
      _
    // Predicated region
    $region30: #{tpu_custom_call.1} parent=1 // pred_check
      _
    $region31: #{tpu_custom_call.1} parent=1 // pred_check_branch
      %12020 = sbr.rel (0) target = $region33
    $region32: #{tpu_custom_call.1} parent=1 // pred_region
      %12021 = dma.done [#allocation3], 2048
    $region33: #{tpu_custom_call.1} parent=1 // pred_fallthru
      _
    // Predicated region
    $region34: #{tpu_custom_call.1} parent=1 // pred_check
      _
    $region35: #{tpu_custom_call.1} parent=1 // pred_check_branch
      %12023 = sbr.rel (0) target = $region37
    $region36: #{tpu_custom_call.1} parent=1 // pred_region
      %12024 = dma.done [#allocation5], 2048
    $region37: #{tpu_custom_call.1} parent=1 // pred_fallthru
      _
    %12025 = vsyncpa [#allocation3], 1
    %12026 = vsyncpa [#allocation5], 1

</llo_original>
